<compile_context>
chip_gen: v6e
topology: v6e:2x2x1
jax: 0.10.0
libtpu: 0.0.40
codegen_flags: <defaults>
</compile_context>

<pallas_src>
import functools

import jax
import jax.numpy as jnp
from jax.experimental import pallas as pl
from jax.experimental.pallas import tpu as pltpu

EPS = 1e-5                              # nn.BatchNorm2d default eps
_PREC = jax.lax.Precision.HIGHEST       # exact-f32 MXU contraction (BN / residual stay f32)


def _conv_bn(v, not_top, not_bot, m_ref, bias_ref, g_ref, be_ref,
             pool_ref, bcast_ref, inv_count):
    """3x3 'same' conv as 3 banded MXU matmuls, then train-mode BatchNorm."""
    R, WC = v.shape
    zrow = jnp.zeros((1, WC), jnp.float32)

    # Vertical taps: read row y-1 / y+1, zero at the per-image border.
    v_dn = jnp.where(not_top, jnp.concatenate([zrow, v[:R - 1, :]], axis=0), 0.0)
    v_up = jnp.where(not_bot, jnp.concatenate([v[1:, :], zrow], axis=0), 0.0)

    # Horizontal taps + channel mixing + left/right padding are all encoded in
    # the banded (W*C, W*C) weight matrices -> pure MXU work, no lane shuffles.
    y = (jnp.dot(v_dn, m_ref[0], precision=_PREC, preferred_element_type=jnp.float32)
         + jnp.dot(v,    m_ref[1], precision=_PREC, preferred_element_type=jnp.float32)
         + jnp.dot(v_up, m_ref[2], precision=_PREC, preferred_element_type=jnp.float32)
         + bias_ref[...])

    # Single-pass batch statistics: per-channel sum / sum-of-squares via the
    # (W*C, C) channel-pooling matrix, then a fused per-channel scale/shift FMA.
    s1 = jnp.dot(jnp.sum(y, axis=0, keepdims=True), pool_ref[...],
                 precision=_PREC, preferred_element_type=jnp.float32)       # (1, C)
    s2 = jnp.dot(jnp.sum(y * y, axis=0, keepdims=True), pool_ref[...],
                 precision=_PREC, preferred_element_type=jnp.float32)       # (1, C)
    mean = s1 * inv_count
    var = s2 * inv_count - mean * mean          # biased variance (train mode)
    scale = g_ref[...] * jax.lax.rsqrt(var + EPS)                           # (1, C)
    shift = be_ref[...] - mean * scale                                      # (1, C)
    scale_f = jnp.dot(scale, bcast_ref[...], precision=_PREC,
                      preferred_element_type=jnp.float32)                   # (1, WC)
    shift_f = jnp.dot(shift, bcast_ref[...], precision=_PREC,
                      preferred_element_type=jnp.float32)                   # (1, WC)
    return y * scale_f + shift_f


def residual_block_kernel(x_ref, m1_ref, b1_ref, g1_ref, be1_ref,
                          m2_ref, b2_ref, g2_ref, be2_ref,
                          pool_ref, bcast_ref, out_ref, *, H, inv_count):
    R, WC = x_ref.shape
    x = x_ref[...]                       # residual, read in place (aligned)

    # Per-image vertical border masks (rows are (n, h) flattened).
    h_ids = jax.lax.broadcasted_iota(jnp.int32, (R, WC), 0) % H
    not_top = h_ids != 0                 # row has a valid y-1 neighbour
    not_bot = h_ids != (H - 1)           # row has a valid y+1 neighbour

    out = _conv_bn(x, not_top, not_bot, m1_ref, b1_ref, g1_ref, be1_ref,
                   pool_ref, bcast_ref, inv_count)
    out = jnp.maximum(out, 0.0)                                   # ReLU
    out = _conv_bn(out, not_top, not_bot, m2_ref, b2_ref, g2_ref, be2_ref,
                   pool_ref, bcast_ref, inv_count)
    out_ref[...] = jnp.maximum(out + x, 0.0)                      # +res, ReLU

    # TODO(synk): BatchNorm running_mean/running_var buffer updates (training
    # side-effect only; they do not affect this forward output) are not emitted.


def _band_weights(w_oihw, W, C):
    """Fold the 3 horizontal taps (+ left/right zero padding) of a 3x3 conv
    into one banded block matrix per vertical tap.

    Returns (3, W*C, W*C) with
      M[dy][xi*C+ci, xo*C+co] = W_torch[co, ci, dy, dx]  when xi == xo + dx - 1.
    """
    w = jnp.asarray(w_oihw, jnp.float32)          # (Cout, Cin, 3, 3)
    mats = []
    for dy in range(3):
        m = jnp.zeros((W * C, W * C), jnp.float32)
        for dx in range(3):
            m = m + jnp.kron(jnp.eye(W, k=1 - dx, dtype=jnp.float32),
                             w[:, :, dy, dx].T)   # (Cin, Cout) block on band
        mats.append(m)
    return jnp.stack(mats, axis=0)


def residual_block(x_nchw, params):
    """Pallas implementation of ResidualBlock.forward. Input/output are NCHW."""
    N, C, H, W = x_nchw.shape
    R, WC = N * H, W * C

    # NCHW -> lane-dense fused layout: rows = (n, h), lanes = (w, c).
    x = jnp.transpose(x_nchw, (0, 2, 3, 1)).astype(jnp.float32).reshape(R, WC)

    eye_c = jnp.eye(C, dtype=jnp.float32)
    pool = jnp.tile(eye_c, (W, 1))      # (WC, C): fused-lane -> per-channel sum
    bcast = jnp.tile(eye_c, (1, W))     # (C, WC): per-channel -> fused-lane bcast

    def vec_c(p):
        return jnp.asarray(p, jnp.float32).reshape(1, C)

    def tiled_bias(b):
        return jnp.tile(vec_c(b), (1, W))        # (1, WC), channel fastest

    args = (
        x,
        _band_weights(params["w1"], W, C), tiled_bias(params["b1"]),
        vec_c(params["g1"]), vec_c(params["be1"]),
        _band_weights(params["w2"], W, C), tiled_bias(params["b2"]),
        vec_c(params["g2"]), vec_c(params["be2"]),
        pool, bcast,
    )

    kernel = functools.partial(residual_block_kernel, H=H,
                               inv_count=1.0 / float(N * H * W))
    vmem = pl.BlockSpec(memory_space=pltpu.MemorySpace.VMEM)
    out_fused = pl.pallas_call(
        kernel,
        out_shape=jax.ShapeDtypeStruct((R, WC), jnp.float32),
        in_specs=[vmem] * len(args),
        out_specs=vmem,
    )(*args)
    # TODO(synk): for production-size activations this should be gridded over
    # H-strips (two-pass BN or cross-tile partial sums, halo rows), with
    # dimension_semantics=("parallel", ...) to pipeline HBM<->VMEM and use both
    # v7x TensorCores; at these shapes everything fits in one VMEM block.

    return jnp.transpose(out_fused.reshape(N, H, W, C), (0, 3, 1, 2))


def residual_block_ref(x, p):
    """Pure-JAX reference (mirrors the PyTorch forward in train mode)."""
    def conv(x, w, b):
        y = jax.lax.conv_general_dilated(
            x, w, window_strides=(1, 1), padding=((1, 1), (1, 1)),
            dimension_numbers=("NCHW", "OIHW", "NCHW"),
            precision=jax.lax.Precision.HIGHEST)
        return y + b.reshape(1, -1, 1, 1)

    def bn(x, g, be):
        m = jnp.mean(x, axis=(0, 2, 3), keepdims=True)
        v = jnp.mean(jnp.square(x - m), axis=(0, 2, 3), keepdims=True)
        return (x - m) * jax.lax.rsqrt(v + EPS) * g.reshape(1, -1, 1, 1) \
            + be.reshape(1, -1, 1, 1)

    out = jnp.maximum(bn(conv(x, p["w1"], p["b1"]), p["g1"], p["be1"]), 0.0)
    out = bn(conv(out, p["w2"], p["b2"]), p["g2"], p["be2"])
    return jnp.maximum(out + x, 0.0)


def init_params(key, C):
    """Deterministic init mimicking nn.Conv2d defaults (uniform +-1/sqrt(fan_in))."""
    k1, k2, k3, k4 = jax.random.split(key, 4)
    bound = 1.0 / jnp.sqrt(jnp.float32(C * 9))
    return dict(
        w1=jax.random.uniform(k1, (C, C, 3, 3), jnp.float32, -bound, bound),
        b1=jax.random.uniform(k2, (C,), jnp.float32, -bound, bound),
        g1=jnp.ones((C,), jnp.float32), be1=jnp.zeros((C,), jnp.float32),
        w2=jax.random.uniform(k3, (C, C, 3, 3), jnp.float32, -bound, bound),
        b2=jax.random.uniform(k4, (C,), jnp.float32, -bound, bound),
        g2=jnp.ones((C,), jnp.float32), be2=jnp.zeros((C,), jnp.float32),
    )


if __name__ == "__main__":
    key = jax.random.PRNGKey(0)
    kx, kp = jax.random.split(key)
    N, C, H, W = 2, 4, 16, 16
    x = jax.random.normal(kx, (N, C, H, W), jnp.float32)
    params = init_params(kp, C)

    out = jax.block_until_ready(residual_block(x, params))

    ref = residual_block_ref(x, params)
    err = float(jnp.max(jnp.abs(out - ref)))
    assert out.shape == (N, C, H, W), out.shape
    assert err < 1e-3, f"max abs err vs reference: {err}"
    print("KERNEL_OK")
</pallas_src>

<mosaic_0001>
module attributes {stable_mosaic.version = 11 : i64} {
  func.func @residual_block_kernel(%arg0: memref<32x64xf32, #tpu.memory_space<vmem>>, %arg1: memref<3x64x64xf32, #tpu.memory_space<vmem>>, %arg2: memref<1x64xf32, #tpu.memory_space<vmem>>, %arg3: memref<1x4xf32, #tpu.memory_space<vmem>>, %arg4: memref<1x4xf32, #tpu.memory_space<vmem>>, %arg5: memref<3x64x64xf32, #tpu.memory_space<vmem>>, %arg6: memref<1x64xf32, #tpu.memory_space<vmem>>, %arg7: memref<1x4xf32, #tpu.memory_space<vmem>>, %arg8: memref<1x4xf32, #tpu.memory_space<vmem>>, %arg9: memref<64x4xf32, #tpu.memory_space<vmem>>, %arg10: memref<4x64xf32, #tpu.memory_space<vmem>>, %arg11: memref<32x64xf32, #tpu.memory_space<vmem>>) attributes {dimension_semantics = [], scalar_prefetch = 0 : i64, scratch_operands = 0 : i64, tpu.core_type = #tpu.core_type<tc>} {
    %c0 = arith.constant 0 : index
    %c0_0 = arith.constant 0 : index
    %0 = vector.load %arg0[%c0, %c0_0] : memref<32x64xf32, #tpu.memory_space<vmem>>, vector<32x64xf32>
    %1 = tpu.iota {dimensions = array<i32: 0>} : vector<32x64xi32>
    %c16_i32 = arith.constant 16 : i32
    %c0_i32 = arith.constant 0 : i32
    %2 = arith.cmpi eq, %c16_i32, %c0_i32 : i32
    %c1_i32 = arith.constant 1 : i32
    %3 = arith.select %2, %c1_i32, %c16_i32 : i32
    %4 = vector.broadcast %3 : i32 to vector<32x64xi32>
    %5 = arith.remsi %1, %4 : vector<32x64xi32>
    %c0_i32_1 = arith.constant 0 : i32
    %6 = vector.broadcast %c0_i32_1 : i32 to vector<32x64xi32>
    %7 = arith.cmpi ne, %5, %6 : vector<32x64xi32>
    %c0_i32_2 = arith.constant 0 : i32
    %8 = vector.broadcast %c0_i32_2 : i32 to vector<32x64xi32>
    %9 = arith.cmpi slt, %5, %8 : vector<32x64xi32>
    %c0_i32_3 = arith.constant 0 : i32
    %10 = arith.cmpi slt, %3, %c0_i32_3 : i32
    %11 = vector.broadcast %10 : i1 to vector<32x64xi1>
    %12 = vector.broadcast %11 : vector<32x64xi1> to vector<32x64xi1>
    %13 = arith.xori %9, %12 : vector<32x64xi1>
    %14 = arith.andi %13, %7 : vector<32x64xi1>
    %15 = vector.broadcast %3 : i32 to vector<32x64xi32>
    %16 = arith.addi %5, %15 : vector<32x64xi32>
    %17 = arith.select %14, %16, %5 : vector<32x64xi1>, vector<32x64xi32>
    %c0_i32_4 = arith.constant 0 : i32
    %18 = vector.broadcast %c0_i32_4 : i32 to vector<32x64xi32>
    %19 = arith.cmpi ne, %17, %18 : vector<32x64xi32>
    %c15_i32 = arith.constant 15 : i32
    %20 = vector.broadcast %c15_i32 : i32 to vector<32x64xi32>
    %21 = arith.cmpi ne, %17, %20 : vector<32x64xi32>
    %cst = arith.constant 0.000000e+00 : f32
    %22 = vector.broadcast %cst : f32 to vector<1x64xf32>
    %23 = vector.extract_strided_slice %0 {offsets = [0, 0], sizes = [31, 64], strides = [1, 1]} : vector<32x64xf32> to vector<31x64xf32>
    %24 = tpu.concatenate %22, %23 in 0 : vector<1x64xf32>, vector<31x64xf32> -> vector<32x64xf32>
    %cst_5 = arith.constant 0.000000e+00 : f32
    %25 = vector.broadcast %cst_5 : f32 to vector<32x64xf32>
    %26 = arith.select %19, %24, %25 : vector<32x64xi1>, vector<32x64xf32>
    %27 = vector.extract_strided_slice %0 {offsets = [1, 0], sizes = [31, 64], strides = [1, 1]} : vector<32x64xf32> to vector<31x64xf32>
    %28 = tpu.concatenate %27, %22 in 0 : vector<31x64xf32>, vector<1x64xf32> -> vector<32x64xf32>
    %cst_6 = arith.constant 0.000000e+00 : f32
    %29 = vector.broadcast %cst_6 : f32 to vector<32x64xf32>
    %30 = arith.select %21, %28, %29 : vector<32x64xi1>, vector<32x64xf32>
    %c0_7 = arith.constant 0 : index
    %c0_8 = arith.constant 0 : index
    %c0_9 = arith.constant 0 : index
    %31 = vector.load %arg1[%c0_7, %c0_8, %c0_9] : memref<3x64x64xf32, #tpu.memory_space<vmem>>, vector<1x64x64xf32>
    %32 = vector.shape_cast %31 : vector<1x64x64xf32> to vector<64x64xf32>
    %cst_10 = arith.constant dense<0.000000e+00> : vector<32x64xf32>
    %33 = tpu.matmul %26, %32, %cst_10 {dimension_numbers = #tpu.dot_dimension_numbers<[1], [0], [0], [1], [0, 0, 1, 1], [], []>, precision = #tpu.contract_precision<fp32>} : vector<32x64xf32>, vector<64x64xf32>, vector<32x64xf32> -> vector<32x64xf32>
    %c1 = arith.constant 1 : index
    %c0_11 = arith.constant 0 : index
    %c0_12 = arith.constant 0 : index
    %34 = vector.load %arg1[%c1, %c0_11, %c0_12] : memref<3x64x64xf32, #tpu.memory_space<vmem>>, vector<1x64x64xf32>
    %35 = vector.shape_cast %34 : vector<1x64x64xf32> to vector<64x64xf32>
    %cst_13 = arith.constant dense<0.000000e+00> : vector<32x64xf32>
    %36 = tpu.matmul %0, %35, %cst_13 {dimension_numbers = #tpu.dot_dimension_numbers<[1], [0], [0], [1], [0, 0, 1, 1], [], []>, precision = #tpu.contract_precision<fp32>} : vector<32x64xf32>, vector<64x64xf32>, vector<32x64xf32> -> vector<32x64xf32>
    %37 = arith.addf %33, %36 : vector<32x64xf32>
    %c2 = arith.constant 2 : index
    %c0_14 = arith.constant 0 : index
    %c0_15 = arith.constant 0 : index
    %38 = vector.load %arg1[%c2, %c0_14, %c0_15] : memref<3x64x64xf32, #tpu.memory_space<vmem>>, vector<1x64x64xf32>
    %39 = vector.shape_cast %38 : vector<1x64x64xf32> to vector<64x64xf32>
    %cst_16 = arith.constant dense<0.000000e+00> : vector<32x64xf32>
    %40 = tpu.matmul %30, %39, %cst_16 {dimension_numbers = #tpu.dot_dimension_numbers<[1], [0], [0], [1], [0, 0, 1, 1], [], []>, precision = #tpu.contract_precision<fp32>} : vector<32x64xf32>, vector<64x64xf32>, vector<32x64xf32> -> vector<32x64xf32>
    %41 = arith.addf %37, %40 : vector<32x64xf32>
    %c0_17 = arith.constant 0 : index
    %c0_18 = arith.constant 0 : index
    %42 = vector.load %arg2[%c0_17, %c0_18] : memref<1x64xf32, #tpu.memory_space<vmem>>, vector<1x64xf32>
    %43 = vector.broadcast %42 : vector<1x64xf32> to vector<32x64xf32>
    %44 = arith.addf %41, %43 : vector<32x64xf32>
    %cst_19 = arith.constant dense<0.000000e+00> : vector<64xf32>
    %45 = vector.multi_reduction <add>, %44, %cst_19 [0] : vector<32x64xf32> to vector<64xf32>
    %46 = vector.shape_cast %45 : vector<64xf32> to vector<1x64xf32>
    %c0_20 = arith.constant 0 : index
    %c0_21 = arith.constant 0 : index
    %47 = vector.load %arg9[%c0_20, %c0_21] : memref<64x4xf32, #tpu.memory_space<vmem>>, vector<64x4xf32>
    %cst_22 = arith.constant dense<0.000000e+00> : vector<1x4xf32>
    %48 = tpu.matmul %46, %47, %cst_22 {dimension_numbers = #tpu.dot_dimension_numbers<[1], [0], [0], [1], [0, 0, 1, 1], [], []>, precision = #tpu.contract_precision<fp32>} : vector<1x64xf32>, vector<64x4xf32>, vector<1x4xf32> -> vector<1x4xf32>
    %49 = arith.mulf %44, %44 : vector<32x64xf32>
    %cst_23 = arith.constant dense<0.000000e+00> : vector<64xf32>
    %50 = vector.multi_reduction <add>, %49, %cst_23 [0] : vector<32x64xf32> to vector<64xf32>
    %51 = vector.shape_cast %50 : vector<64xf32> to vector<1x64xf32>
    %c0_24 = arith.constant 0 : index
    %c0_25 = arith.constant 0 : index
    %52 = vector.load %arg9[%c0_24, %c0_25] : memref<64x4xf32, #tpu.memory_space<vmem>>, vector<64x4xf32>
    %cst_26 = arith.constant dense<0.000000e+00> : vector<1x4xf32>
    %53 = tpu.matmul %51, %52, %cst_26 {dimension_numbers = #tpu.dot_dimension_numbers<[1], [0], [0], [1], [0, 0, 1, 1], [], []>, precision = #tpu.contract_precision<fp32>} : vector<1x64xf32>, vector<64x4xf32>, vector<1x4xf32> -> vector<1x4xf32>
    %cst_27 = arith.constant 0.001953125 : f32
    %54 = vector.broadcast %cst_27 : f32 to vector<1x4xf32>
    %55 = arith.mulf %48, %54 : vector<1x4xf32>
    %cst_28 = arith.constant 0.001953125 : f32
    %56 = vector.broadcast %cst_28 : f32 to vector<1x4xf32>
    %57 = arith.mulf %53, %56 : vector<1x4xf32>
    %58 = arith.mulf %55, %55 : vector<1x4xf32>
    %59 = arith.subf %57, %58 : vector<1x4xf32>
    %c0_29 = arith.constant 0 : index
    %c0_30 = arith.constant 0 : index
    %60 = vector.load %arg3[%c0_29, %c0_30] : memref<1x4xf32, #tpu.memory_space<vmem>>, vector<1x4xf32>
    %cst_31 = arith.constant 9.99999974E-6 : f32
    %61 = vector.broadcast %cst_31 : f32 to vector<1x4xf32>
    %62 = arith.addf %59, %61 : vector<1x4xf32>
    %63 = math.rsqrt %62 : vector<1x4xf32>
    %64 = arith.mulf %60, %63 : vector<1x4xf32>
    %c0_32 = arith.constant 0 : index
    %c0_33 = arith.constant 0 : index
    %65 = vector.load %arg4[%c0_32, %c0_33] : memref<1x4xf32, #tpu.memory_space<vmem>>, vector<1x4xf32>
    %66 = arith.mulf %55, %64 : vector<1x4xf32>
    %67 = arith.subf %65, %66 : vector<1x4xf32>
    %c0_34 = arith.constant 0 : index
    %c0_35 = arith.constant 0 : index
    %68 = vector.load %arg10[%c0_34, %c0_35] : memref<4x64xf32, #tpu.memory_space<vmem>>, vector<4x64xf32>
    %cst_36 = arith.constant dense<0.000000e+00> : vector<1x64xf32>
    %69 = tpu.matmul %64, %68, %cst_36 {dimension_numbers = #tpu.dot_dimension_numbers<[1], [0], [0], [1], [0, 0, 1, 1], [], []>, precision = #tpu.contract_precision<fp32>} : vector<1x4xf32>, vector<4x64xf32>, vector<1x64xf32> -> vector<1x64xf32>
    %c0_37 = arith.constant 0 : index
    %c0_38 = arith.constant 0 : index
    %70 = vector.load %arg10[%c0_37, %c0_38] : memref<4x64xf32, #tpu.memory_space<vmem>>, vector<4x64xf32>
    %cst_39 = arith.constant dense<0.000000e+00> : vector<1x64xf32>
    %71 = tpu.matmul %67, %70, %cst_39 {dimension_numbers = #tpu.dot_dimension_numbers<[1], [0], [0], [1], [0, 0, 1, 1], [], []>, precision = #tpu.contract_precision<fp32>} : vector<1x4xf32>, vector<4x64xf32>, vector<1x64xf32> -> vector<1x64xf32>
    %72 = vector.broadcast %69 : vector<1x64xf32> to vector<32x64xf32>
    %73 = arith.mulf %44, %72 : vector<32x64xf32>
    %74 = vector.broadcast %71 : vector<1x64xf32> to vector<32x64xf32>
    %75 = arith.addf %73, %74 : vector<32x64xf32>
    %cst_40 = arith.constant 0.000000e+00 : f32
    %76 = vector.broadcast %cst_40 : f32 to vector<32x64xf32>
    %77 = arith.maximumf %75, %76 : vector<32x64xf32>
    %cst_41 = arith.constant 0.000000e+00 : f32
    %78 = vector.broadcast %cst_41 : f32 to vector<1x64xf32>
    %79 = vector.extract_strided_slice %77 {offsets = [0, 0], sizes = [31, 64], strides = [1, 1]} : vector<32x64xf32> to vector<31x64xf32>
    %80 = tpu.concatenate %78, %79 in 0 : vector<1x64xf32>, vector<31x64xf32> -> vector<32x64xf32>
    %cst_42 = arith.constant 0.000000e+00 : f32
    %81 = vector.broadcast %cst_42 : f32 to vector<32x64xf32>
    %82 = arith.select %19, %80, %81 : vector<32x64xi1>, vector<32x64xf32>
    %83 = vector.extract_strided_slice %77 {offsets = [1, 0], sizes = [31, 64], strides = [1, 1]} : vector<32x64xf32> to vector<31x64xf32>
    %84 = tpu.concatenate %83, %78 in 0 : vector<31x64xf32>, vector<1x64xf32> -> vector<32x64xf32>
    %cst_43 = arith.constant 0.000000e+00 : f32
    %85 = vector.broadcast %cst_43 : f32 to vector<32x64xf32>
    %86 = arith.select %21, %84, %85 : vector<32x64xi1>, vector<32x64xf32>
    %c0_44 = arith.constant 0 : index
    %c0_45 = arith.constant 0 : index
    %c0_46 = arith.constant 0 : index
    %87 = vector.load %arg5[%c0_44, %c0_45, %c0_46] : memref<3x64x64xf32, #tpu.memory_space<vmem>>, vector<1x64x64xf32>
    %88 = vector.shape_cast %87 : vector<1x64x64xf32> to vector<64x64xf32>
    %cst_47 = arith.constant dense<0.000000e+00> : vector<32x64xf32>
    %89 = tpu.matmul %82, %88, %cst_47 {dimension_numbers = #tpu.dot_dimension_numbers<[1], [0], [0], [1], [0, 0, 1, 1], [], []>, precision = #tpu.contract_precision<fp32>} : vector<32x64xf32>, vector<64x64xf32>, vector<32x64xf32> -> vector<32x64xf32>
    %c1_48 = arith.constant 1 : index
    %c0_49 = arith.constant 0 : index
    %c0_50 = arith.constant 0 : index
    %90 = vector.load %arg5[%c1_48, %c0_49, %c0_50] : memref<3x64x64xf32, #tpu.memory_space<vmem>>, vector<1x64x64xf32>
    %91 = vector.shape_cast %90 : vector<1x64x64xf32> to vector<64x64xf32>
    %cst_51 = arith.constant dense<0.000000e+00> : vector<32x64xf32>
    %92 = tpu.matmul %77, %91, %cst_51 {dimension_numbers = #tpu.dot_dimension_numbers<[1], [0], [0], [1], [0, 0, 1, 1], [], []>, precision = #tpu.contract_precision<fp32>} : vector<32x64xf32>, vector<64x64xf32>, vector<32x64xf32> -> vector<32x64xf32>
    %93 = arith.addf %89, %92 : vector<32x64xf32>
    %c2_52 = arith.constant 2 : index
    %c0_53 = arith.constant 0 : index
    %c0_54 = arith.constant 0 : index
    %94 = vector.load %arg5[%c2_52, %c0_53, %c0_54] : memref<3x64x64xf32, #tpu.memory_space<vmem>>, vector<1x64x64xf32>
    %95 = vector.shape_cast %94 : vector<1x64x64xf32> to vector<64x64xf32>
    %cst_55 = arith.constant dense<0.000000e+00> : vector<32x64xf32>
    %96 = tpu.matmul %86, %95, %cst_55 {dimension_numbers = #tpu.dot_dimension_numbers<[1], [0], [0], [1], [0, 0, 1, 1], [], []>, precision = #tpu.contract_precision<fp32>} : vector<32x64xf32>, vector<64x64xf32>, vector<32x64xf32> -> vector<32x64xf32>
    %97 = arith.addf %93, %96 : vector<32x64xf32>
    %c0_56 = arith.constant 0 : index
    %c0_57 = arith.constant 0 : index
    %98 = vector.load %arg6[%c0_56, %c0_57] : memref<1x64xf32, #tpu.memory_space<vmem>>, vector<1x64xf32>
    %99 = vector.broadcast %98 : vector<1x64xf32> to vector<32x64xf32>
    %100 = arith.addf %97, %99 : vector<32x64xf32>
    %cst_58 = arith.constant dense<0.000000e+00> : vector<64xf32>
    %101 = vector.multi_reduction <add>, %100, %cst_58 [0] : vector<32x64xf32> to vector<64xf32>
    %102 = vector.shape_cast %101 : vector<64xf32> to vector<1x64xf32>
    %c0_59 = arith.constant 0 : index
    %c0_60 = arith.constant 0 : index
    %103 = vector.load %arg9[%c0_59, %c0_60] : memref<64x4xf32, #tpu.memory_space<vmem>>, vector<64x4xf32>
    %cst_61 = arith.constant dense<0.000000e+00> : vector<1x4xf32>
    %104 = tpu.matmul %102, %103, %cst_61 {dimension_numbers = #tpu.dot_dimension_numbers<[1], [0], [0], [1], [0, 0, 1, 1], [], []>, precision = #tpu.contract_precision<fp32>} : vector<1x64xf32>, vector<64x4xf32>, vector<1x4xf32> -> vector<1x4xf32>
    %105 = arith.mulf %100, %100 : vector<32x64xf32>
    %cst_62 = arith.constant dense<0.000000e+00> : vector<64xf32>
    %106 = vector.multi_reduction <add>, %105, %cst_62 [0] : vector<32x64xf32> to vector<64xf32>
    %107 = vector.shape_cast %106 : vector<64xf32> to vector<1x64xf32>
    %c0_63 = arith.constant 0 : index
    %c0_64 = arith.constant 0 : index
    %108 = vector.load %arg9[%c0_63, %c0_64] : memref<64x4xf32, #tpu.memory_space<vmem>>, vector<64x4xf32>
    %cst_65 = arith.constant dense<0.000000e+00> : vector<1x4xf32>
    %109 = tpu.matmul %107, %108, %cst_65 {dimension_numbers = #tpu.dot_dimension_numbers<[1], [0], [0], [1], [0, 0, 1, 1], [], []>, precision = #tpu.contract_precision<fp32>} : vector<1x64xf32>, vector<64x4xf32>, vector<1x4xf32> -> vector<1x4xf32>
    %cst_66 = arith.constant 0.001953125 : f32
    %110 = vector.broadcast %cst_66 : f32 to vector<1x4xf32>
    %111 = arith.mulf %104, %110 : vector<1x4xf32>
    %cst_67 = arith.constant 0.001953125 : f32
    %112 = vector.broadcast %cst_67 : f32 to vector<1x4xf32>
    %113 = arith.mulf %109, %112 : vector<1x4xf32>
    %114 = arith.mulf %111, %111 : vector<1x4xf32>
    %115 = arith.subf %113, %114 : vector<1x4xf32>
    %c0_68 = arith.constant 0 : index
    %c0_69 = arith.constant 0 : index
    %116 = vector.load %arg7[%c0_68, %c0_69] : memref<1x4xf32, #tpu.memory_space<vmem>>, vector<1x4xf32>
    %cst_70 = arith.constant 9.99999974E-6 : f32
    %117 = vector.broadcast %cst_70 : f32 to vector<1x4xf32>
    %118 = arith.addf %115, %117 : vector<1x4xf32>
    %119 = math.rsqrt %118 : vector<1x4xf32>
    %120 = arith.mulf %116, %119 : vector<1x4xf32>
    %c0_71 = arith.constant 0 : index
    %c0_72 = arith.constant 0 : index
    %121 = vector.load %arg8[%c0_71, %c0_72] : memref<1x4xf32, #tpu.memory_space<vmem>>, vector<1x4xf32>
    %122 = arith.mulf %111, %120 : vector<1x4xf32>
    %123 = arith.subf %121, %122 : vector<1x4xf32>
    %c0_73 = arith.constant 0 : index
    %c0_74 = arith.constant 0 : index
    %124 = vector.load %arg10[%c0_73, %c0_74] : memref<4x64xf32, #tpu.memory_space<vmem>>, vector<4x64xf32>
    %cst_75 = arith.constant dense<0.000000e+00> : vector<1x64xf32>
    %125 = tpu.matmul %120, %124, %cst_75 {dimension_numbers = #tpu.dot_dimension_numbers<[1], [0], [0], [1], [0, 0, 1, 1], [], []>, precision = #tpu.contract_precision<fp32>} : vector<1x4xf32>, vector<4x64xf32>, vector<1x64xf32> -> vector<1x64xf32>
    %c0_76 = arith.constant 0 : index
    %c0_77 = arith.constant 0 : index
    %126 = vector.load %arg10[%c0_76, %c0_77] : memref<4x64xf32, #tpu.memory_space<vmem>>, vector<4x64xf32>
    %cst_78 = arith.constant dense<0.000000e+00> : vector<1x64xf32>
    %127 = tpu.matmul %123, %126, %cst_78 {dimension_numbers = #tpu.dot_dimension_numbers<[1], [0], [0], [1], [0, 0, 1, 1], [], []>, precision = #tpu.contract_precision<fp32>} : vector<1x4xf32>, vector<4x64xf32>, vector<1x64xf32> -> vector<1x64xf32>
    %128 = vector.broadcast %125 : vector<1x64xf32> to vector<32x64xf32>
    %129 = arith.mulf %100, %128 : vector<32x64xf32>
    %130 = vector.broadcast %127 : vector<1x64xf32> to vector<32x64xf32>
    %131 = arith.addf %129, %130 : vector<32x64xf32>
    %132 = arith.addf %131, %0 : vector<32x64xf32>
    %cst_79 = arith.constant 0.000000e+00 : f32
    %133 = vector.broadcast %cst_79 : f32 to vector<32x64xf32>
    %134 = arith.maximumf %132, %133 : vector<32x64xf32>
    %c0_80 = arith.constant 0 : index
    %c0_81 = arith.constant 0 : index
    %135 = vector.load %arg11[%c0_80, %c0_81] : memref<32x64xf32, #tpu.memory_space<vmem>>, vector<32x64xf32>
    tpu.vector_store %arg11[%c0_80, %c0_81], %134 {strides = array<i32>} : memref<32x64xf32, #tpu.memory_space<vmem>>, vector<32x64xf32>,
    return
  }
}

</mosaic_0001>

<llo_original>
// kernel: tpu_custom_call.1
$region0: #{tpu_custom_call.1}
  #allocation0 [shape = 'u32[]', space=smem, size = 0x4, offset = 0x4, fixed_abs, tag = 'smem constant byte address 0x4 - core index']
  #allocation1 [shape = 'u32[144,128]{1,0:T(1,128)}', space=vmem, size = 0x12000, scoped, tag = 'internal scratch']
  %s0 = inlined_call_operand.vmem [shape: f32[32,64], index: 0, kind: input, shape index: {}]
  %s1 = inlined_call_operand.hbm [shape: f32[3,64,64], index: 1, kind: input, shape index: {}]
  %s2 = inlined_call_operand.vmem [shape: f32[1,64], index: 2, kind: input, shape index: {}]
  %s3 = inlined_call_operand.vmem [shape: f32[1,4], index: 3, kind: input, shape index: {}]
  %s4 = inlined_call_operand.vmem [shape: f32[1,4], index: 4, kind: input, shape index: {}]
  %s5 = inlined_call_operand.hbm [shape: f32[3,64,64], index: 5, kind: input, shape index: {}]
  %s6 = inlined_call_operand.vmem [shape: f32[1,64], index: 6, kind: input, shape index: {}]
  %s7 = inlined_call_operand.vmem [shape: f32[1,4], index: 7, kind: input, shape index: {}]
  %s8 = inlined_call_operand.vmem [shape: f32[1,4], index: 8, kind: input, shape index: {}]
  %s9 = inlined_call_operand.vmem [shape: f32[64,4], index: 9, kind: input, shape index: {}]
  %s10 = inlined_call_operand.vmem [shape: f32[4,64], index: 10, kind: input, shape index: {}]
  %s11 = inlined_call_operand.hbm [shape: f32[32,64], index: 11, kind: output, shape index: {}]
  %s12 = sld [smem:[#allocation0]]
  $region62: #{tpu_custom_call.1} parent=0
    _
  %s14 = ssub.s32 1, %s12
  %s15 = scalar_select 0, %s14, %s12
  $region1: #{tpu_custom_call.1} parent=0
    #allocation2 [shape = 'u8[98304]{0}', space=vmem, size = 0x18000, scoped, tag = 'input window, operand 1, single buffered']
    #allocation3 [shape = 's32[1]{0}', space=sflag, size = 0x4, scoped, tag = 'scoped memory for tpu_custom_call.1']
    #allocation4 [shape = 's32[1]{0}', space=sflag, size = 0x4, scoped, tag = 'scoped memory for tpu_custom_call.1']
    #allocation5 [shape = 'u8[98304]{0}', space=vmem, size = 0x18000, scoped, tag = 'input window, operand 5, single buffered']
    #allocation6 [shape = 's32[1]{0}', space=sflag, size = 0x4, scoped, tag = 'scoped memory for tpu_custom_call.1']
    #allocation7 [shape = 'u8[16384]{0}', space=vmem, size = 0x4000, scoped, tag = 'output window, operand 0, single buffered']
    %16 = vsyncpa [#allocation3], 0
    %17 = vsyncpa [#allocation6], 0
    %18 = vsyncpa [#allocation4], 0
    // Predicated region
    $region2: #{tpu_custom_call.1} parent=1 // pred_check
      _
    $region3: #{tpu_custom_call.1} parent=1 // pred_check_branch
      %20 = sbr.rel (0) target = $region5
    $region4: #{tpu_custom_call.1} parent=1 // pred_region
      _
    $region5: #{tpu_custom_call.1} parent=1 // pred_fallthru
      _
    // Predicated region
    $region6: #{tpu_custom_call.1} parent=1 // pred_check
      _
    $region7: #{tpu_custom_call.1} parent=1 // pred_check_branch
      %22 = sbr.rel (0) target = $region9
    $region8: #{tpu_custom_call.1} parent=1 // pred_region
      %s24 = ssub.s32 3072, 3072
      %25 = vsyncadd [#allocation3], %s24
      %s26 = sshll.u32 [#allocation2], 4
      %s27 = int_to_ptr.vmem [resolvable:$true] %s26
      %32 = dma.hbm_to_vmem [thread:$0]  %s1, 3072, %s27, [#allocation3], 128, 128, 8
    $region9: #{tpu_custom_call.1} parent=1 // pred_fallthru
      _
    // Predicated region
    $region10: #{tpu_custom_call.1} parent=1 // pred_check
      _
    $region11: #{tpu_custom_call.1} parent=1 // pred_check_branch
      %34 = sbr.rel (0) target = $region13
    $region12: #{tpu_custom_call.1} parent=1 // pred_region
      _
    $region13: #{tpu_custom_call.1} parent=1 // pred_fallthru
      _
    // Predicated region
    $region14: #{tpu_custom_call.1} parent=1 // pred_check
      _
    $region15: #{tpu_custom_call.1} parent=1 // pred_check_branch
      %36 = sbr.rel (0) target = $region17
    $region16: #{tpu_custom_call.1} parent=1 // pred_region
      _
    $region17: #{tpu_custom_call.1} parent=1 // pred_fallthru
      _
    // Predicated region
    $region18: #{tpu_custom_call.1} parent=1 // pred_check
      _
    $region19: #{tpu_custom_call.1} parent=1 // pred_check_branch
      %38 = sbr.rel (0) target = $region21
    $region20: #{tpu_custom_call.1} parent=1 // pred_region
      _
    $region21: #{tpu_custom_call.1} parent=1 // pred_fallthru
      _
    // Predicated region
    $region22: #{tpu_custom_call.1} parent=1 // pred_check
      _
    $region23: #{tpu_custom_call.1} parent=1 // pred_check_branch
      %40 = sbr.rel (0) target = $region25
    $region24: #{tpu_custom_call.1} parent=1 // pred_region
      %s42 = ssub.s32 3072, 3072
      %43 = vsyncadd [#allocation6], %s42
      %s44 = sshll.u32 [#allocation5], 4
      %s45 = int_to_ptr.vmem [resolvable:$true] %s44
      %50 = dma.hbm_to_vmem [thread:$0]  %s5, 3072, %s45, [#allocation6], 128, 128, 8
    $region25: #{tpu_custom_call.1} parent=1 // pred_fallthru
      _
    // Predicated region
    $region26: #{tpu_custom_call.1} parent=1 // pred_check
      _
    $region27: #{tpu_custom_call.1} parent=1 // pred_check_branch
      %52 = sbr.rel (0) target = $region29
    $region28: #{tpu_custom_call.1} parent=1 // pred_region
      _
    $region29: #{tpu_custom_call.1} parent=1 // pred_fallthru
      _
    // Predicated region
    $region30: #{tpu_custom_call.1} parent=1 // pred_check
      _
    $region31: #{tpu_custom_call.1} parent=1 // pred_check_branch
      %54 = sbr.rel (0) target = $region33
    $region32: #{tpu_custom_call.1} parent=1 // pred_region
      _
    $region33: #{tpu_custom_call.1} parent=1 // pred_fallthru
      _
    // Predicated region
    $region34: #{tpu_custom_call.1} parent=1 // pred_check
      _
    $region35: #{tpu_custom_call.1} parent=1 // pred_check_branch
      %56 = sbr.rel (0) target = $region37
    $region36: #{tpu_custom_call.1} parent=1 // pred_region
      _
    $region37: #{tpu_custom_call.1} parent=1 // pred_fallthru
      _
    // Predicated region
    $region38: #{tpu_custom_call.1} parent=1 // pred_check
      _
    $region39: #{tpu_custom_call.1} parent=1 // pred_check_branch
      %58 = sbr.rel (0) target = $region41
    $region40: #{tpu_custom_call.1} parent=1 // pred_region
      _
    $region41: #{tpu_custom_call.1} parent=1 // pred_fallthru
      _
    // Predicated region
    $region42: #{tpu_custom_call.1} parent=1 // pred_check
      _
    $region43: #{tpu_custom_call.1} parent=1 // pred_check_branch
      %60 = sbr.rel (0) target = $region45
    $region44: #{tpu_custom_call.1} parent=1 // pred_region
      _
    $region45: #{tpu_custom_call.1} parent=1 // pred_fallthru
      _
    // Predicated region
    $region46: #{tpu_custom_call.1} parent=1 // pred_check
      _
    $region47: #{tpu_custom_call.1} parent=1 // pred_check_branch
      %62 = sbr.rel (0) target = $region49
    $region48: #{tpu_custom_call.1} parent=1 // pred_region
      %63 = dma.done [#allocation3], 3072
    $region49: #{tpu_custom_call.1} parent=1 // pred_fallthru
      _
    // Predicated region
    $region50: #{tpu_custom_call.1} parent=1 // pred_check
      _
    $region51: #{tpu_custom_call.1} parent=1 // pred_check_branch
      %65 = sbr.rel (0) target = $region53
    $region52: #{tpu_custom_call.1} parent=1 // pred_region
      %66 = dma.done [#allocation6], 3072
    $region53: #{tpu_custom_call.1} parent=1 // pred_fallthru
      _
    %v67 = vld [vmem:[%s0] sm:$0xff]
    %v68 = vld [vmem:[%s0 + $0x8] sm:$0xff]
    %v69 = vld [vmem:[%s0 + $0x10] sm:$0xff]
    %v70 = vld [vmem:[%s0 + $0x18] sm:$0xff]
    %v71 = vlaneseq
    %v72 = vshrl.u32 %v71, 7
    %v73 = vadd.s32 %v72, 8
    %v74 = vadd.s32 %v72, 16
    %v75 = vadd.s32 %v72, 24
    %vm76 = vcmp.lt.s32.totalorder %v72, 0
    %v77 = vsub.s32 0, %v72
    %v78 = vsel %vm76, %v77, %v72
    %v79 = vshrl.u32 %v78, 4
    %v80 = vand.u32 %v78, 15
    %v81 = vsub.s32 0, %v80
    %v82 = vsel %vm76, %v81, %v80
    %vm83 = vcmp.lt.s32.totalorder %v73, 0
    %v84 = vsub.s32 0, %v73
    %v85 = vsel %vm83, %v84, %v73
    %v86 = vshrl.u32 %v85, 4
    %v87 = vand.u32 %v85, 15
    %v88 = vsub.s32 0, %v87
    %v89 = vsel %vm83, %v88, %v87
    %vm90 = vcmp.lt.s32.totalorder %v74, 0
    %v91 = vsub.s32 0, %v74
    %v92 = vsel %vm90, %v91, %v74
    %v93 = vshrl.u32 %v92, 4
    %v94 = vand.u32 %v92, 15
    %v95 = vsub.s32 0, %v94
    %v96 = vsel %vm90, %v95, %v94
    %vm97 = vcmp.lt.s32.totalorder %v75, 0
    %v98 = vsub.s32 0, %v75
    %v99 = vsel %vm97, %v98, %v75
    %v100 = vshrl.u32 %v99, 4
    %v101 = vand.u32 %v99, 15
    %v102 = vsub.s32 0, %v101
    %v103 = vsel %vm97, %v102, %v101
    %vm104 = vcmp.ne.s32.totalorder %v82, 0
    %vm105 = vcmp.ne.s32.totalorder %v89, 0
    %vm106 = vcmp.ne.s32.totalorder %v96, 0
    %vm107 = vcmp.ne.s32.totalorder %v103, 0
    %vm108 = vcmp.lt.s32.totalorder %v82, 0
    %vm109 = vcmp.lt.s32.totalorder %v89, 0
    %vm110 = vcmp.lt.s32.totalorder %v96, 0
    %vm111 = vcmp.lt.s32.totalorder %v103, 0
    %vm112 = vmand %vm108, %vm104
    %vm113 = vmand %vm109, %vm105
    %vm114 = vmand %vm110, %vm106
    %vm115 = vmand %vm111, %vm107
    %v116 = vadd.s32 %v82, 16
    %v117 = vadd.s32 %v89, 16
    %v118 = vadd.s32 %v96, 16
    %v119 = vadd.s32 %v103, 16
    %v120 = vsel %vm112, %v116, %v82
    %v121 = vsel %vm113, %v117, %v89
    %v122 = vsel %vm114, %v118, %v96
    %v123 = vsel %vm115, %v119, %v103
    %vm124 = vcmp.ne.s32.totalorder %v120, 0
    %vm125 = vcmp.ne.s32.totalorder %v121, 0
    %vm126 = vcmp.ne.s32.totalorder %v122, 0
    %vm127 = vcmp.ne.s32.totalorder %v123, 0
    %vm128 = vcmp.ne.s32.totalorder %v120, 15
    %vm129 = vcmp.ne.s32.totalorder %v121, 15
    %vm130 = vcmp.ne.s32.totalorder %v122, 15
    %vm131 = vcmp.ne.s32.totalorder %v123, 15
    %vm136 = vcmask 1040384
    %v137 = vrot.slane %v67, 7
    %v138 = vrot.slane %v68, 7
    %v139 = vsel %vm136, %v137, %v138
    %v140 = vrot.slane %v69, 7
    %v141 = vsel %vm136, %v138, %v140
    %v142 = vrot.slane %v70, 7
    %v143 = vsel %vm136, %v140, %v142
    %v148 = vsel %vm136, 0.0, %v137
    %v149 = vsel %vm124, %v148, 0.0
    %v150 = vsel %vm125, %v139, 0.0
    %v151 = vsel %vm126, %v141, 0.0
    %v152 = vsel %vm127, %v143, 0.0
    %vm153 = vcmask 1046528
    %v154 = vrot.slane %v67, 1
    %v155 = vrot.slane %v68, 1
    %v156 = vsel %vm153, %v154, %v155
    %v157 = vrot.slane %v69, 1
    %v158 = vsel %vm153, %v155, %v157
    %v159 = vrot.slane %v70, 1
    %v160 = vsel %vm153, %v157, %v159
    %v165 = vsel %vm153, %v159, 0.0
    %v166 = vsel %vm128, %v156, 0.0
    %v167 = vsel %vm129, %v158, 0.0
    %v168 = vsel %vm130, %v160, 0.0
    %v169 = vsel %vm131, %v165, 0.0
    %v170 = vld [vmem:[#allocation2] sm:$0xff]
    %v171 = vld [vmem:[#allocation2 + $0x8] sm:$0xff]
    %v172 = vld [vmem:[#allocation2 + $0x10] sm:$0xff]
    %v173 = vld [vmem:[#allocation2 + $0x18] sm:$0xff]
    %v174 = vld [vmem:[#allocation2 + $0x20] sm:$0xff]
    %v175 = vld [vmem:[#allocation2 + $0x28] sm:$0xff]
    %v176 = vld [vmem:[#allocation2 + $0x30] sm:$0xff]
    %v177 = vld [vmem:[#allocation2 + $0x38] sm:$0xff]
    %s178 = scalar_lea.vmem [#allocation2], 64
    %v179 = vld [vmem:[%s178] sm:$0xff]
    %v180 = vld [vmem:[%s178 + $0x8] sm:$0xff]
    %v181 = vld [vmem:[%s178 + $0x10] sm:$0xff]
    %v182 = vld [vmem:[%s178 + $0x18] sm:$0xff]
    %v183 = vld [vmem:[%s178 + $0x20] sm:$0xff]
    %v184 = vld [vmem:[%s178 + $0x28] sm:$0xff]
    %v185 = vld [vmem:[%s178 + $0x30] sm:$0xff]
    %v186 = vld [vmem:[%s178 + $0x38] sm:$0xff]
    %vm187 = vcmask 523264
    %v188 = vsel %vm187, %v67, 0
    %v190 = vsel %vm187, %v68, 0
    %v192 = vsel %vm187, %v69, 0
    %v194 = vsel %vm187, %v70, 0
    %196 = vmatprep.subr.mxu0 0.0
    %197 = vmatpush1.msra.mxu0 0.0
    %198 = vmatprep.subr.mxu0 0.0
    %199 = vmatpush1.msra.mxu0 0.0
    %200 = vmatprep.subr.mxu0 0.0
    %201 = vmatpush1.msra.mxu0 0.0
    %202 = vmatprep.subr.mxu0 0.0
    %203 = vmatpush1.msra.mxu0 0.0
    %204 = vmatprep.subr.mxu0 0.0
    %205 = vmatpush1.msra.mxu0 0.0
    %206 = vmatprep.subr.mxu0 0.0
    %207 = vmatpush1.msra.mxu0 0.0
    %208 = vmatprep.subr.mxu0 0.0
    %209 = vmatpush1.msra.mxu0 0.0
    %210 = vmatprep.subr.mxu0 0.0
    %211 = vmatpush1.msra.mxu0 0.0
    %212 = vmatprep.subr.mxu0 0.0
    %v213 = vand.u32 %v186, 4294901760
    %214 = vmatpush1.msra.mxu0 %v213
    %215 = vmatprep.subr.mxu0 0.0
    %v216 = vand.u32 %v185, 4294901760
    %217 = vmatpush1.msra.mxu0 %v216
    %218 = vmatprep.subr.mxu0 0.0
    %v219 = vand.u32 %v184, 4294901760
    %220 = vmatpush1.msra.mxu0 %v219
    %221 = vmatprep.subr.mxu0 0.0
    %v222 = vand.u32 %v183, 4294901760
    %223 = vmatpush1.msra.mxu0 %v222
    %224 = vmatprep.subr.mxu0 0.0
    %v225 = vand.u32 %v182, 4294901760
    %226 = vmatpush1.msra.mxu0 %v225
    %227 = vmatprep.subr.mxu0 0.0
    %v228 = vand.u32 %v181, 4294901760
    %229 = vmatpush1.msra.mxu0 %v228
    %230 = vmatprep.subr.mxu0 0.0
    %v231 = vand.u32 %v180, 4294901760
    %232 = vmatpush1.msra.mxu0 %v231
    %233 = vmatprep.subr.mxu0 0.0
    %v234 = vand.u32 %v179, 4294901760
    %235 = vmatpush1.msra.mxu0 %v234
    %236 = vmatprep.subr.mxu0 0.0
    %237 = vmatpush2.msra.mxu0 0.0
    %238 = vmatprep.subr.mxu0 0.0
    %239 = vmatpush2.msra.mxu0 0.0
    %240 = vmatprep.subr.mxu0 0.0
    %241 = vmatpush2.msra.mxu0 0.0
    %242 = vmatprep.subr.mxu0 0.0
    %243 = vmatpush2.msra.mxu0 0.0
    %244 = vmatprep.subr.mxu0 0.0
    %245 = vmatpush2.msra.mxu0 0.0
    %246 = vmatprep.subr.mxu0 0.0
    %247 = vmatpush2.msra.mxu0 0.0
    %248 = vmatprep.subr.mxu0 0.0
    %249 = vmatpush2.msra.mxu0 0.0
    %250 = vmatprep.subr.mxu0 0.0
    %251 = vmatpush2.msra.mxu0 0.0
    %252 = vmatprep.subr.mxu0 0.0
    %253 = vmatpush2.msra.mxu0 0.0
    %254 = vmatprep.subr.mxu0 0.0
    %255 = vmatpush2.msra.mxu0 0.0
    %256 = vmatprep.subr.mxu0 0.0
    %257 = vmatpush2.msra.mxu0 0.0
    %258 = vmatprep.subr.mxu0 0.0
    %259 = vmatpush2.msra.mxu0 0.0
    %260 = vmatprep.subr.mxu0 0.0
    %261 = vmatpush2.msra.mxu0 0.0
    %262 = vmatprep.subr.mxu0 0.0
    %263 = vmatpush2.msra.mxu0 0.0
    %264 = vmatprep.subr.mxu0 0.0
    %265 = vmatpush2.msra.mxu0 0.0
    %266 = vmatprep.subr.mxu0 0.0
    %267 = vmatpush2.msra.mxu0 0.0
    %268 = vmatprep.mubr.f32.mxu0 0.0
    %v269 = vand.u32 %v188, 4294901760
    %v270 = vsub.f32 %v188, %v269
    %v271 = vand.u32 %v270, 4294901760
    %v272 = vsub.f32 %v270, %v271
    %v273 = vand.u32 %v272, 4294901760
    %274 = vmatmul.mubr.f32.gmra.mxu0 %v273
    %v275 = vpop.f32.mrf.mxu0
    %v276 = vadd.f32 0.0, %v275
    %v277 = vpop.f32.mrf.mxu0
    %278 = vmatprep.mubr.f32.mxu0 0.0
    %v279 = vand.u32 %v190, 4294901760
    %v280 = vsub.f32 %v190, %v279
    %v281 = vand.u32 %v280, 4294901760
    %v282 = vsub.f32 %v280, %v281
    %v283 = vand.u32 %v282, 4294901760
    %284 = vmatmul.mubr.f32.gmra.mxu0 %v283
    %v285 = vpop.f32.mrf.mxu0
    %v286 = vadd.f32 0.0, %v285
    %v287 = vpop.f32.mrf.mxu0
    %288 = vmatprep.mubr.f32.mxu0 0.0
    %v289 = vand.u32 %v192, 4294901760
    %v290 = vsub.f32 %v192, %v289
    %v291 = vand.u32 %v290, 4294901760
    %v292 = vsub.f32 %v290, %v291
    %v293 = vand.u32 %v292, 4294901760
    %294 = vmatmul.mubr.f32.gmra.mxu0 %v293
    %v295 = vpop.f32.mrf.mxu0
    %v296 = vadd.f32 0.0, %v295
    %v297 = vpop.f32.mrf.mxu0
    %298 = vmatprep.mubr.f32.mxu0 0.0
    %v299 = vand.u32 %v194, 4294901760
    %v300 = vsub.f32 %v194, %v299
    %v301 = vand.u32 %v300, 4294901760
    %v302 = vsub.f32 %v300, %v301
    %v303 = vand.u32 %v302, 4294901760
    %304 = vmatmul.mubr.f32.gmra.mxu0 %v303
    %v305 = vpop.f32.mrf.mxu0
    %v306 = vadd.f32 0.0, %v305
    %v307 = vpop.f32.mrf.mxu0
    %308 = vdwg.mxu0
    %309 = vmatprep.subr.mxu0 0.0
    %310 = vmatpush1.msra.mxu0 0.0
    %311 = vmatprep.subr.mxu0 0.0
    %312 = vmatpush1.msra.mxu0 0.0
    %313 = vmatprep.subr.mxu0 0.0
    %314 = vmatpush1.msra.mxu0 0.0
    %315 = vmatprep.subr.mxu0 0.0
    %316 = vmatpush1.msra.mxu0 0.0
    %317 = vmatprep.subr.mxu0 0.0
    %318 = vmatpush1.msra.mxu0 0.0
    %319 = vmatprep.subr.mxu0 0.0
    %320 = vmatpush1.msra.mxu0 0.0
    %321 = vmatprep.subr.mxu0 0.0
    %322 = vmatpush1.msra.mxu0 0.0
    %323 = vmatprep.subr.mxu0 0.0
    %324 = vmatpush1.msra.mxu0 0.0
    %325 = vmatprep.subr.mxu0 0.0
    %v326 = vand.u32 %v186, 4294901760
    %v327 = vsub.f32 %v186, %v326
    %v328 = vand.u32 %v327, 4294901760
    %v329 = vsub.f32 %v327, %v328
    %v330 = vand.u32 %v329, 4294901760
    %331 = vmatpush1.msra.mxu0 %v330
    %332 = vmatprep.subr.mxu0 0.0
    %v333 = vand.u32 %v185, 4294901760
    %v334 = vsub.f32 %v185, %v333
    %v335 = vand.u32 %v334, 4294901760
    %v336 = vsub.f32 %v334, %v335
    %v337 = vand.u32 %v336, 4294901760
    %338 = vmatpush1.msra.mxu0 %v337
    %339 = vmatprep.subr.mxu0 0.0
    %v340 = vand.u32 %v184, 4294901760
    %v341 = vsub.f32 %v184, %v340
    %v342 = vand.u32 %v341, 4294901760
    %v343 = vsub.f32 %v341, %v342
    %v344 = vand.u32 %v343, 4294901760
    %345 = vmatpush1.msra.mxu0 %v344
    %346 = vmatprep.subr.mxu0 0.0
    %v347 = vand.u32 %v183, 4294901760
    %v348 = vsub.f32 %v183, %v347
    %v349 = vand.u32 %v348, 4294901760
    %v350 = vsub.f32 %v348, %v349
    %v351 = vand.u32 %v350, 4294901760
    %352 = vmatpush1.msra.mxu0 %v351
    %353 = vmatprep.subr.mxu0 0.0
    %v354 = vand.u32 %v182, 4294901760
    %v355 = vsub.f32 %v182, %v354
    %v356 = vand.u32 %v355, 4294901760
    %v357 = vsub.f32 %v355, %v356
    %v358 = vand.u32 %v357, 4294901760
    %359 = vmatpush1.msra.mxu0 %v358
    %360 = vmatprep.subr.mxu0 0.0
    %v361 = vand.u32 %v181, 4294901760
    %v362 = vsub.f32 %v181, %v361
    %v363 = vand.u32 %v362, 4294901760
    %v364 = vsub.f32 %v362, %v363
    %v365 = vand.u32 %v364, 4294901760
    %366 = vmatpush1.msra.mxu0 %v365
    %367 = vmatprep.subr.mxu0 0.0
    %v368 = vand.u32 %v180, 4294901760
    %v369 = vsub.f32 %v180, %v368
    %v370 = vand.u32 %v369, 4294901760
    %v371 = vsub.f32 %v369, %v370
    %v372 = vand.u32 %v371, 4294901760
    %373 = vmatpush1.msra.mxu0 %v372
    %374 = vmatprep.subr.mxu0 0.0
    %v375 = vand.u32 %v179, 4294901760
    %v376 = vsub.f32 %v179, %v375
    %v377 = vand.u32 %v376, 4294901760
    %v378 = vsub.f32 %v376, %v377
    %v379 = vand.u32 %v378, 4294901760
    %380 = vmatpush1.msra.mxu0 %v379
    %381 = vmatprep.subr.mxu0 0.0
    %382 = vmatpush2.msra.mxu0 0.0
    %383 = vmatprep.subr.mxu0 0.0
    %384 = vmatpush2.msra.mxu0 0.0
    %385 = vmatprep.subr.mxu0 0.0
    %386 = vmatpush2.msra.mxu0 0.0
    %387 = vmatprep.subr.mxu0 0.0
    %388 = vmatpush2.msra.mxu0 0.0
    %389 = vmatprep.subr.mxu0 0.0
    %390 = vmatpush2.msra.mxu0 0.0
    %391 = vmatprep.subr.mxu0 0.0
    %392 = vmatpush2.msra.mxu0 0.0
    %393 = vmatprep.subr.mxu0 0.0
    %394 = vmatpush2.msra.mxu0 0.0
    %395 = vmatprep.subr.mxu0 0.0
    %396 = vmatpush2.msra.mxu0 0.0
    %397 = vmatprep.subr.mxu0 0.0
    %398 = vmatpush2.msra.mxu0 0.0
    %399 = vmatprep.subr.mxu0 0.0
    %400 = vmatpush2.msra.mxu0 0.0
    %401 = vmatprep.subr.mxu0 0.0
    %402 = vmatpush2.msra.mxu0 0.0
    %403 = vmatprep.subr.mxu0 0.0
    %404 = vmatpush2.msra.mxu0 0.0
    %405 = vmatprep.subr.mxu0 0.0
    %406 = vmatpush2.msra.mxu0 0.0
    %407 = vmatprep.subr.mxu0 0.0
    %408 = vmatpush2.msra.mxu0 0.0
    %409 = vmatprep.subr.mxu0 0.0
    %410 = vmatpush2.msra.mxu0 0.0
    %411 = vmatprep.subr.mxu0 0.0
    %412 = vmatpush2.msra.mxu0 0.0
    %413 = vmatprep.mubr.f32.mxu0 0.0
    %v414 = vand.u32 %v188, 4294901760
    %415 = vmatmul.mubr.f32.gmra.mxu0 %v414
    %v416 = vpop.f32.mrf.mxu0
    %v417 = vadd.f32 %v276, %v416
    %v418 = vpop.f32.mrf.mxu0
    %419 = vmatprep.mubr.f32.mxu0 0.0
    %v420 = vand.u32 %v190, 4294901760
    %421 = vmatmul.mubr.f32.gmra.mxu0 %v420
    %v422 = vpop.f32.mrf.mxu0
    %v423 = vadd.f32 %v286, %v422
    %v424 = vpop.f32.mrf.mxu0
    %425 = vmatprep.mubr.f32.mxu0 0.0
    %v426 = vand.u32 %v192, 4294901760
    %427 = vmatmul.mubr.f32.gmra.mxu0 %v426
    %v428 = vpop.f32.mrf.mxu0
    %v429 = vadd.f32 %v296, %v428
    %v430 = vpop.f32.mrf.mxu0
    %431 = vmatprep.mubr.f32.mxu0 0.0
    %v432 = vand.u32 %v194, 4294901760
    %433 = vmatmul.mubr.f32.gmra.mxu0 %v432
    %v434 = vpop.f32.mrf.mxu0
    %v435 = vadd.f32 %v306, %v434
    %v436 = vpop.f32.mrf.mxu0
    %437 = vdwg.mxu0
    %438 = vmatprep.subr.mxu0 0.0
    %439 = vmatpush1.msra.mxu0 0.0
    %440 = vmatprep.subr.mxu0 0.0
    %441 = vmatpush1.msra.mxu0 0.0
    %442 = vmatprep.subr.mxu0 0.0
    %443 = vmatpush1.msra.mxu0 0.0
    %444 = vmatprep.subr.mxu0 0.0
    %445 = vmatpush1.msra.mxu0 0.0
    %446 = vmatprep.subr.mxu0 0.0
    %447 = vmatpush1.msra.mxu0 0.0
    %448 = vmatprep.subr.mxu0 0.0
    %449 = vmatpush1.msra.mxu0 0.0
    %450 = vmatprep.subr.mxu0 0.0
    %451 = vmatpush1.msra.mxu0 0.0
    %452 = vmatprep.subr.mxu0 0.0
    %453 = vmatpush1.msra.mxu0 0.0
    %454 = vmatprep.subr.mxu0 0.0
    %v455 = vand.u32 %v186, 4294901760
    %v456 = vsub.f32 %v186, %v455
    %457 = vmatpush1.msra.mxu0 %v456
    %458 = vmatprep.subr.mxu0 0.0
    %v459 = vand.u32 %v185, 4294901760
    %v460 = vsub.f32 %v185, %v459
    %461 = vmatpush1.msra.mxu0 %v460
    %462 = vmatprep.subr.mxu0 0.0
    %v463 = vand.u32 %v184, 4294901760
    %v464 = vsub.f32 %v184, %v463
    %465 = vmatpush1.msra.mxu0 %v464
    %466 = vmatprep.subr.mxu0 0.0
    %v467 = vand.u32 %v183, 4294901760
    %v468 = vsub.f32 %v183, %v467
    %469 = vmatpush1.msra.mxu0 %v468
    %470 = vmatprep.subr.mxu0 0.0
    %v471 = vand.u32 %v182, 4294901760
    %v472 = vsub.f32 %v182, %v471
    %473 = vmatpush1.msra.mxu0 %v472
    %474 = vmatprep.subr.mxu0 0.0
    %v475 = vand.u32 %v181, 4294901760
    %v476 = vsub.f32 %v181, %v475
    %477 = vmatpush1.msra.mxu0 %v476
    %478 = vmatprep.subr.mxu0 0.0
    %v479 = vand.u32 %v180, 4294901760
    %v480 = vsub.f32 %v180, %v479
    %481 = vmatpush1.msra.mxu0 %v480
    %482 = vmatprep.subr.mxu0 0.0
    %v483 = vand.u32 %v179, 4294901760
    %v484 = vsub.f32 %v179, %v483
    %485 = vmatpush1.msra.mxu0 %v484
    %486 = vmatprep.subr.mxu0 0.0
    %487 = vmatpush2.msra.mxu0 0.0
    %488 = vmatprep.subr.mxu0 0.0
    %489 = vmatpush2.msra.mxu0 0.0
    %490 = vmatprep.subr.mxu0 0.0
    %491 = vmatpush2.msra.mxu0 0.0
    %492 = vmatprep.subr.mxu0 0.0
    %493 = vmatpush2.msra.mxu0 0.0
    %494 = vmatprep.subr.mxu0 0.0
    %495 = vmatpush2.msra.mxu0 0.0
    %496 = vmatprep.subr.mxu0 0.0
    %497 = vmatpush2.msra.mxu0 0.0
    %498 = vmatprep.subr.mxu0 0.0
    %499 = vmatpush2.msra.mxu0 0.0
    %500 = vmatprep.subr.mxu0 0.0
    %501 = vmatpush2.msra.mxu0 0.0
    %502 = vmatprep.subr.mxu0 0.0
    %503 = vmatpush2.msra.mxu0 0.0
    %504 = vmatprep.subr.mxu0 0.0
    %505 = vmatpush2.msra.mxu0 0.0
    %506 = vmatprep.subr.mxu0 0.0
    %507 = vmatpush2.msra.mxu0 0.0
    %508 = vmatprep.subr.mxu0 0.0
    %509 = vmatpush2.msra.mxu0 0.0
    %510 = vmatprep.subr.mxu0 0.0
    %511 = vmatpush2.msra.mxu0 0.0
    %512 = vmatprep.subr.mxu0 0.0
    %513 = vmatpush2.msra.mxu0 0.0
    %514 = vmatprep.subr.mxu0 0.0
    %515 = vmatpush2.msra.mxu0 0.0
    %516 = vmatprep.subr.mxu0 0.0
    %517 = vmatpush2.msra.mxu0 0.0
    %518 = vmatprep.mubr.f32.mxu0 0.0
    %v519 = vand.u32 %v188, 4294901760
    %v520 = vsub.f32 %v188, %v519
    %521 = vmatmul.mubr.f32.gmra.mxu0 %v520
    %v522 = vpop.f32.mrf.mxu0
    %v523 = vadd.f32 %v417, %v522
    %v524 = vpop.f32.mrf.mxu0
    %525 = vmatprep.mubr.f32.mxu0 0.0
    %v526 = vand.u32 %v190, 4294901760
    %v527 = vsub.f32 %v190, %v526
    %528 = vmatmul.mubr.f32.gmra.mxu0 %v527
    %v529 = vpop.f32.mrf.mxu0
    %v530 = vadd.f32 %v423, %v529
    %v531 = vpop.f32.mrf.mxu0
    %532 = vmatprep.mubr.f32.mxu0 0.0
    %v533 = vand.u32 %v192, 4294901760
    %v534 = vsub.f32 %v192, %v533
    %535 = vmatmul.mubr.f32.gmra.mxu0 %v534
    %v536 = vpop.f32.mrf.mxu0
    %v537 = vadd.f32 %v429, %v536
    %v538 = vpop.f32.mrf.mxu0
    %539 = vmatprep.mubr.f32.mxu0 0.0
    %v540 = vand.u32 %v194, 4294901760
    %v541 = vsub.f32 %v194, %v540
    %542 = vmatmul.mubr.f32.gmra.mxu0 %v541
    %v543 = vpop.f32.mrf.mxu0
    %v544 = vadd.f32 %v435, %v543
    %v545 = vpop.f32.mrf.mxu0
    %546 = vdwg.mxu0
    %547 = vmatprep.subr.mxu0 0.0
    %548 = vmatpush1.msra.mxu0 0.0
    %549 = vmatprep.subr.mxu0 0.0
    %550 = vmatpush1.msra.mxu0 0.0
    %551 = vmatprep.subr.mxu0 0.0
    %552 = vmatpush1.msra.mxu0 0.0
    %553 = vmatprep.subr.mxu0 0.0
    %554 = vmatpush1.msra.mxu0 0.0
    %555 = vmatprep.subr.mxu0 0.0
    %556 = vmatpush1.msra.mxu0 0.0
    %557 = vmatprep.subr.mxu0 0.0
    %558 = vmatpush1.msra.mxu0 0.0
    %559 = vmatprep.subr.mxu0 0.0
    %560 = vmatpush1.msra.mxu0 0.0
    %561 = vmatprep.subr.mxu0 0.0
    %562 = vmatpush1.msra.mxu0 0.0
    %563 = vmatprep.subr.mxu0 0.0
    %v564 = vand.u32 %v186, 4294901760
    %565 = vmatpush1.msra.mxu0 %v564
    %566 = vmatprep.subr.mxu0 0.0
    %v567 = vand.u32 %v185, 4294901760
    %568 = vmatpush1.msra.mxu0 %v567
    %569 = vmatprep.subr.mxu0 0.0
    %v570 = vand.u32 %v184, 4294901760
    %571 = vmatpush1.msra.mxu0 %v570
    %572 = vmatprep.subr.mxu0 0.0
    %v573 = vand.u32 %v183, 4294901760
    %574 = vmatpush1.msra.mxu0 %v573
    %575 = vmatprep.subr.mxu0 0.0
    %v576 = vand.u32 %v182, 4294901760
    %577 = vmatpush1.msra.mxu0 %v576
    %578 = vmatprep.subr.mxu0 0.0
    %v579 = vand.u32 %v181, 4294901760
    %580 = vmatpush1.msra.mxu0 %v579
    %581 = vmatprep.subr.mxu0 0.0
    %v582 = vand.u32 %v180, 4294901760
    %583 = vmatpush1.msra.mxu0 %v582
    %584 = vmatprep.subr.mxu0 0.0
    %v585 = vand.u32 %v179, 4294901760
    %586 = vmatpush1.msra.mxu0 %v585
    %587 = vmatprep.subr.mxu0 0.0
    %588 = vmatpush2.msra.mxu0 0.0
    %589 = vmatprep.subr.mxu0 0.0
    %590 = vmatpush2.msra.mxu0 0.0
    %591 = vmatprep.subr.mxu0 0.0
    %592 = vmatpush2.msra.mxu0 0.0
    %593 = vmatprep.subr.mxu0 0.0
    %594 = vmatpush2.msra.mxu0 0.0
    %595 = vmatprep.subr.mxu0 0.0
    %596 = vmatpush2.msra.mxu0 0.0
    %597 = vmatprep.subr.mxu0 0.0
    %598 = vmatpush2.msra.mxu0 0.0
    %599 = vmatprep.subr.mxu0 0.0
    %600 = vmatpush2.msra.mxu0 0.0
    %601 = vmatprep.subr.mxu0 0.0
    %602 = vmatpush2.msra.mxu0 0.0
    %603 = vmatprep.subr.mxu0 0.0
    %604 = vmatpush2.msra.mxu0 0.0
    %605 = vmatprep.subr.mxu0 0.0
    %606 = vmatpush2.msra.mxu0 0.0
    %607 = vmatprep.subr.mxu0 0.0
    %608 = vmatpush2.msra.mxu0 0.0
    %609 = vmatprep.subr.mxu0 0.0
    %610 = vmatpush2.msra.mxu0 0.0
    %611 = vmatprep.subr.mxu0 0.0
    %612 = vmatpush2.msra.mxu0 0.0
    %613 = vmatprep.subr.mxu0 0.0
    %614 = vmatpush2.msra.mxu0 0.0
    %615 = vmatprep.subr.mxu0 0.0
    %616 = vmatpush2.msra.mxu0 0.0
    %617 = vmatprep.subr.mxu0 0.0
    %618 = vmatpush2.msra.mxu0 0.0
    %619 = vmatprep.mubr.f32.mxu0 0.0
    %v620 = vand.u32 %v188, 4294901760
    %v621 = vsub.f32 %v188, %v620
    %v622 = vand.u32 %v621, 4294901760
    %623 = vmatmul.mubr.f32.gmra.mxu0 %v622
    %v624 = vpop.f32.mrf.mxu0
    %v625 = vadd.f32 %v523, %v624
    %v626 = vpop.f32.mrf.mxu0
    %627 = vmatprep.mubr.f32.mxu0 0.0
    %v628 = vand.u32 %v190, 4294901760
    %v629 = vsub.f32 %v190, %v628
    %v630 = vand.u32 %v629, 4294901760
    %631 = vmatmul.mubr.f32.gmra.mxu0 %v630
    %v632 = vpop.f32.mrf.mxu0
    %v633 = vadd.f32 %v530, %v632
    %v634 = vpop.f32.mrf.mxu0
    %635 = vmatprep.mubr.f32.mxu0 0.0
    %v636 = vand.u32 %v192, 4294901760
    %v637 = vsub.f32 %v192, %v636
    %v638 = vand.u32 %v637, 4294901760
    %639 = vmatmul.mubr.f32.gmra.mxu0 %v638
    %v640 = vpop.f32.mrf.mxu0
    %v641 = vadd.f32 %v537, %v640
    %v642 = vpop.f32.mrf.mxu0
    %643 = vmatprep.mubr.f32.mxu0 0.0
    %v644 = vand.u32 %v194, 4294901760
    %v645 = vsub.f32 %v194, %v644
    %v646 = vand.u32 %v645, 4294901760
    %647 = vmatmul.mubr.f32.gmra.mxu0 %v646
    %v648 = vpop.f32.mrf.mxu0
    %v649 = vadd.f32 %v544, %v648
    %v650 = vpop.f32.mrf.mxu0
    %651 = vdwg.mxu0
    %652 = vmatprep.subr.mxu0 0.0
    %653 = vmatpush1.msra.mxu0 0.0
    %654 = vmatprep.subr.mxu0 0.0
    %655 = vmatpush1.msra.mxu0 0.0
    %656 = vmatprep.subr.mxu0 0.0
    %657 = vmatpush1.msra.mxu0 0.0
    %658 = vmatprep.subr.mxu0 0.0
    %659 = vmatpush1.msra.mxu0 0.0
    %660 = vmatprep.subr.mxu0 0.0
    %661 = vmatpush1.msra.mxu0 0.0
    %662 = vmatprep.subr.mxu0 0.0
    %663 = vmatpush1.msra.mxu0 0.0
    %664 = vmatprep.subr.mxu0 0.0
    %665 = vmatpush1.msra.mxu0 0.0
    %666 = vmatprep.subr.mxu0 0.0
    %667 = vmatpush1.msra.mxu0 0.0
    %668 = vmatprep.subr.mxu0 0.0
    %v669 = vand.u32 %v186, 4294901760
    %v670 = vsub.f32 %v186, %v669
    %v671 = vand.u32 %v670, 4294901760
    %672 = vmatpush1.msra.mxu0 %v671
    %673 = vmatprep.subr.mxu0 0.0
    %v674 = vand.u32 %v185, 4294901760
    %v675 = vsub.f32 %v185, %v674
    %v676 = vand.u32 %v675, 4294901760
    %677 = vmatpush1.msra.mxu0 %v676
    %678 = vmatprep.subr.mxu0 0.0
    %v679 = vand.u32 %v184, 4294901760
    %v680 = vsub.f32 %v184, %v679
    %v681 = vand.u32 %v680, 4294901760
    %682 = vmatpush1.msra.mxu0 %v681
    %683 = vmatprep.subr.mxu0 0.0
    %v684 = vand.u32 %v183, 4294901760
    %v685 = vsub.f32 %v183, %v684
    %v686 = vand.u32 %v685, 4294901760
    %687 = vmatpush1.msra.mxu0 %v686
    %688 = vmatprep.subr.mxu0 0.0
    %v689 = vand.u32 %v182, 4294901760
    %v690 = vsub.f32 %v182, %v689
    %v691 = vand.u32 %v690, 4294901760
    %692 = vmatpush1.msra.mxu0 %v691
    %693 = vmatprep.subr.mxu0 0.0
    %v694 = vand.u32 %v181, 4294901760
    %v695 = vsub.f32 %v181, %v694
    %v696 = vand.u32 %v695, 4294901760
    %697 = vmatpush1.msra.mxu0 %v696
    %698 = vmatprep.subr.mxu0 0.0
    %v699 = vand.u32 %v180, 4294901760
    %v700 = vsub.f32 %v180, %v699
    %v701 = vand.u32 %v700, 4294901760
    %702 = vmatpush1.msra.mxu0 %v701
    %703 = vmatprep.subr.mxu0 0.0
    %v704 = vand.u32 %v179, 4294901760
    %v705 = vsub.f32 %v179, %v704
    %v706 = vand.u32 %v705, 4294901760
    %707 = vmatpush1.msra.mxu0 %v706
    %708 = vmatprep.subr.mxu0 0.0
    %709 = vmatpush2.msra.mxu0 0.0
    %710 = vmatprep.subr.mxu0 0.0
    %711 = vmatpush2.msra.mxu0 0.0
    %712 = vmatprep.subr.mxu0 0.0
    %713 = vmatpush2.msra.mxu0 0.0
    %714 = vmatprep.subr.mxu0 0.0
    %715 = vmatpush2.msra.mxu0 0.0
    %716 = vmatprep.subr.mxu0 0.0
    %717 = vmatpush2.msra.mxu0 0.0
    %718 = vmatprep.subr.mxu0 0.0
    %719 = vmatpush2.msra.mxu0 0.0
    %720 = vmatprep.subr.mxu0 0.0
    %721 = vmatpush2.msra.mxu0 0.0
    %722 = vmatprep.subr.mxu0 0.0
    %723 = vmatpush2.msra.mxu0 0.0
    %724 = vmatprep.subr.mxu0 0.0
    %725 = vmatpush2.msra.mxu0 0.0
    %726 = vmatprep.subr.mxu0 0.0
    %727 = vmatpush2.msra.mxu0 0.0
    %728 = vmatprep.subr.mxu0 0.0
    %729 = vmatpush2.msra.mxu0 0.0
    %730 = vmatprep.subr.mxu0 0.0
    %731 = vmatpush2.msra.mxu0 0.0
    %732 = vmatprep.subr.mxu0 0.0
    %733 = vmatpush2.msra.mxu0 0.0
    %734 = vmatprep.subr.mxu0 0.0
    %735 = vmatpush2.msra.mxu0 0.0
    %736 = vmatprep.subr.mxu0 0.0
    %737 = vmatpush2.msra.mxu0 0.0
    %738 = vmatprep.subr.mxu0 0.0
    %739 = vmatpush2.msra.mxu0 0.0
    %740 = vmatprep.mubr.f32.mxu0 0.0
    %v741 = vand.u32 %v188, 4294901760
    %742 = vmatmul.mubr.f32.gmra.mxu0 %v741
    %v743 = vpop.f32.mrf.mxu0
    %v744 = vadd.f32 %v625, %v743
    %v745 = vpop.f32.mrf.mxu0
    %746 = vmatprep.mubr.f32.mxu0 0.0
    %v747 = vand.u32 %v190, 4294901760
    %748 = vmatmul.mubr.f32.gmra.mxu0 %v747
    %v749 = vpop.f32.mrf.mxu0
    %v750 = vadd.f32 %v633, %v749
    %v751 = vpop.f32.mrf.mxu0
    %752 = vmatprep.mubr.f32.mxu0 0.0
    %v753 = vand.u32 %v192, 4294901760
    %754 = vmatmul.mubr.f32.gmra.mxu0 %v753
    %v755 = vpop.f32.mrf.mxu0
    %v756 = vadd.f32 %v641, %v755
    %v757 = vpop.f32.mrf.mxu0
    %758 = vmatprep.mubr.f32.mxu0 0.0
    %v759 = vand.u32 %v194, 4294901760
    %760 = vmatmul.mubr.f32.gmra.mxu0 %v759
    %v761 = vpop.f32.mrf.mxu0
    %v762 = vadd.f32 %v649, %v761
    %v763 = vpop.f32.mrf.mxu0
    %764 = vdwg.mxu0
    %765 = vmatprep.subr.mxu0 0.0
    %766 = vmatpush1.msra.mxu0 0.0
    %767 = vmatprep.subr.mxu0 0.0
    %768 = vmatpush1.msra.mxu0 0.0
    %769 = vmatprep.subr.mxu0 0.0
    %770 = vmatpush1.msra.mxu0 0.0
    %771 = vmatprep.subr.mxu0 0.0
    %772 = vmatpush1.msra.mxu0 0.0
    %773 = vmatprep.subr.mxu0 0.0
    %774 = vmatpush1.msra.mxu0 0.0
    %775 = vmatprep.subr.mxu0 0.0
    %776 = vmatpush1.msra.mxu0 0.0
    %777 = vmatprep.subr.mxu0 0.0
    %778 = vmatpush1.msra.mxu0 0.0
    %779 = vmatprep.subr.mxu0 0.0
    %780 = vmatpush1.msra.mxu0 0.0
    %781 = vmatprep.subr.mxu0 0.0
    %v782 = vand.u32 %v186, 4294901760
    %783 = vmatpush1.msra.mxu0 %v782
    %784 = vmatprep.subr.mxu0 0.0
    %v785 = vand.u32 %v185, 4294901760
    %786 = vmatpush1.msra.mxu0 %v785
    %787 = vmatprep.subr.mxu0 0.0
    %v788 = vand.u32 %v184, 4294901760
    %789 = vmatpush1.msra.mxu0 %v788
    %790 = vmatprep.subr.mxu0 0.0
    %v791 = vand.u32 %v183, 4294901760
    %792 = vmatpush1.msra.mxu0 %v791
    %793 = vmatprep.subr.mxu0 0.0
    %v794 = vand.u32 %v182, 4294901760
    %795 = vmatpush1.msra.mxu0 %v794
    %796 = vmatprep.subr.mxu0 0.0
    %v797 = vand.u32 %v181, 4294901760
    %798 = vmatpush1.msra.mxu0 %v797
    %799 = vmatprep.subr.mxu0 0.0
    %v800 = vand.u32 %v180, 4294901760
    %801 = vmatpush1.msra.mxu0 %v800
    %802 = vmatprep.subr.mxu0 0.0
    %v803 = vand.u32 %v179, 4294901760
    %804 = vmatpush1.msra.mxu0 %v803
    %805 = vmatprep.subr.mxu0 0.0
    %806 = vmatpush2.msra.mxu0 0.0
    %807 = vmatprep.subr.mxu0 0.0
    %808 = vmatpush2.msra.mxu0 0.0
    %809 = vmatprep.subr.mxu0 0.0
    %810 = vmatpush2.msra.mxu0 0.0
    %811 = vmatprep.subr.mxu0 0.0
    %812 = vmatpush2.msra.mxu0 0.0
    %813 = vmatprep.subr.mxu0 0.0
    %814 = vmatpush2.msra.mxu0 0.0
    %815 = vmatprep.subr.mxu0 0.0
    %816 = vmatpush2.msra.mxu0 0.0
    %817 = vmatprep.subr.mxu0 0.0
    %818 = vmatpush2.msra.mxu0 0.0
    %819 = vmatprep.subr.mxu0 0.0
    %820 = vmatpush2.msra.mxu0 0.0
    %821 = vmatprep.subr.mxu0 0.0
    %822 = vmatpush2.msra.mxu0 0.0
    %823 = vmatprep.subr.mxu0 0.0
    %824 = vmatpush2.msra.mxu0 0.0
    %825 = vmatprep.subr.mxu0 0.0
    %826 = vmatpush2.msra.mxu0 0.0
    %827 = vmatprep.subr.mxu0 0.0
    %828 = vmatpush2.msra.mxu0 0.0
    %829 = vmatprep.subr.mxu0 0.0
    %830 = vmatpush2.msra.mxu0 0.0
    %831 = vmatprep.subr.mxu0 0.0
    %832 = vmatpush2.msra.mxu0 0.0
    %833 = vmatprep.subr.mxu0 0.0
    %834 = vmatpush2.msra.mxu0 0.0
    %835 = vmatprep.subr.mxu0 0.0
    %836 = vmatpush2.msra.mxu0 0.0
    %837 = vmatprep.mubr.f32.mxu0 0.0
    %v838 = vand.u32 %v188, 4294901760
    %839 = vmatmul.mubr.f32.gmra.mxu0 %v838
    %v840 = vpop.f32.mrf.mxu0
    %v841 = vadd.f32 %v744, %v840
    %v842 = vpop.f32.mrf.mxu0
    %843 = vmatprep.mubr.f32.mxu0 0.0
    %v844 = vand.u32 %v190, 4294901760
    %845 = vmatmul.mubr.f32.gmra.mxu0 %v844
    %v846 = vpop.f32.mrf.mxu0
    %v847 = vadd.f32 %v750, %v846
    %v848 = vpop.f32.mrf.mxu0
    %849 = vmatprep.mubr.f32.mxu0 0.0
    %v850 = vand.u32 %v192, 4294901760
    %851 = vmatmul.mubr.f32.gmra.mxu0 %v850
    %v852 = vpop.f32.mrf.mxu0
    %v853 = vadd.f32 %v756, %v852
    %v854 = vpop.f32.mrf.mxu0
    %855 = vmatprep.mubr.f32.mxu0 0.0
    %v856 = vand.u32 %v194, 4294901760
    %857 = vmatmul.mubr.f32.gmra.mxu0 %v856
    %v858 = vpop.f32.mrf.mxu0
    %v859 = vadd.f32 %v762, %v858
    %v860 = vpop.f32.mrf.mxu0
    %861 = vdwg.mxu0
    %v863 = vsel %vm187, %v149, 0
    %v866 = vsel %vm187, %v150, 0
    %v869 = vsel %vm187, %v151, 0
    %v872 = vsel %vm187, %v152, 0
    %874 = vmatprep.subr.mxu0 0.0
    %875 = vmatpush1.msra.mxu0 0.0
    %876 = vmatprep.subr.mxu0 0.0
    %877 = vmatpush1.msra.mxu0 0.0
    %878 = vmatprep.subr.mxu0 0.0
    %879 = vmatpush1.msra.mxu0 0.0
    %880 = vmatprep.subr.mxu0 0.0
    %881 = vmatpush1.msra.mxu0 0.0
    %882 = vmatprep.subr.mxu0 0.0
    %883 = vmatpush1.msra.mxu0 0.0
    %884 = vmatprep.subr.mxu0 0.0
    %885 = vmatpush1.msra.mxu0 0.0
    %886 = vmatprep.subr.mxu0 0.0
    %887 = vmatpush1.msra.mxu0 0.0
    %888 = vmatprep.subr.mxu0 0.0
    %889 = vmatpush1.msra.mxu0 0.0
    %890 = vmatprep.subr.mxu0 0.0
    %v891 = vand.u32 %v177, 4294901760
    %892 = vmatpush1.msra.mxu0 %v891
    %893 = vmatprep.subr.mxu0 0.0
    %v894 = vand.u32 %v176, 4294901760
    %895 = vmatpush1.msra.mxu0 %v894
    %896 = vmatprep.subr.mxu0 0.0
    %v897 = vand.u32 %v175, 4294901760
    %898 = vmatpush1.msra.mxu0 %v897
    %899 = vmatprep.subr.mxu0 0.0
    %v900 = vand.u32 %v174, 4294901760
    %901 = vmatpush1.msra.mxu0 %v900
    %902 = vmatprep.subr.mxu0 0.0
    %v903 = vand.u32 %v173, 4294901760
    %904 = vmatpush1.msra.mxu0 %v903
    %905 = vmatprep.subr.mxu0 0.0
    %v906 = vand.u32 %v172, 4294901760
    %907 = vmatpush1.msra.mxu0 %v906
    %908 = vmatprep.subr.mxu0 0.0
    %v909 = vand.u32 %v171, 4294901760
    %910 = vmatpush1.msra.mxu0 %v909
    %911 = vmatprep.subr.mxu0 0.0
    %v912 = vand.u32 %v170, 4294901760
    %913 = vmatpush1.msra.mxu0 %v912
    %914 = vmatprep.subr.mxu0 0.0
    %915 = vmatpush2.msra.mxu0 0.0
    %916 = vmatprep.subr.mxu0 0.0
    %917 = vmatpush2.msra.mxu0 0.0
    %918 = vmatprep.subr.mxu0 0.0
    %919 = vmatpush2.msra.mxu0 0.0
    %920 = vmatprep.subr.mxu0 0.0
    %921 = vmatpush2.msra.mxu0 0.0
    %922 = vmatprep.subr.mxu0 0.0
    %923 = vmatpush2.msra.mxu0 0.0
    %924 = vmatprep.subr.mxu0 0.0
    %925 = vmatpush2.msra.mxu0 0.0
    %926 = vmatprep.subr.mxu0 0.0
    %927 = vmatpush2.msra.mxu0 0.0
    %928 = vmatprep.subr.mxu0 0.0
    %929 = vmatpush2.msra.mxu0 0.0
    %930 = vmatprep.subr.mxu0 0.0
    %931 = vmatpush2.msra.mxu0 0.0
    %932 = vmatprep.subr.mxu0 0.0
    %933 = vmatpush2.msra.mxu0 0.0
    %934 = vmatprep.subr.mxu0 0.0
    %935 = vmatpush2.msra.mxu0 0.0
    %936 = vmatprep.subr.mxu0 0.0
    %937 = vmatpush2.msra.mxu0 0.0
    %938 = vmatprep.subr.mxu0 0.0
    %939 = vmatpush2.msra.mxu0 0.0
    %940 = vmatprep.subr.mxu0 0.0
    %941 = vmatpush2.msra.mxu0 0.0
    %942 = vmatprep.subr.mxu0 0.0
    %943 = vmatpush2.msra.mxu0 0.0
    %944 = vmatprep.subr.mxu0 0.0
    %945 = vmatpush2.msra.mxu0 0.0
    %946 = vmatprep.mubr.f32.mxu0 0.0
    %v947 = vand.u32 %v863, 4294901760
    %v948 = vsub.f32 %v863, %v947
    %v949 = vand.u32 %v948, 4294901760
    %v950 = vsub.f32 %v948, %v949
    %v951 = vand.u32 %v950, 4294901760
    %952 = vmatmul.mubr.f32.gmra.mxu0 %v951
    %v953 = vpop.f32.mrf.mxu0
    %v954 = vadd.f32 %v841, %v953
    %v955 = vpop.f32.mrf.mxu0
    %956 = vmatprep.mubr.f32.mxu0 0.0
    %v957 = vand.u32 %v866, 4294901760
    %v958 = vsub.f32 %v866, %v957
    %v959 = vand.u32 %v958, 4294901760
    %v960 = vsub.f32 %v958, %v959
    %v961 = vand.u32 %v960, 4294901760
    %962 = vmatmul.mubr.f32.gmra.mxu0 %v961
    %v963 = vpop.f32.mrf.mxu0
    %v964 = vadd.f32 %v847, %v963
    %v965 = vpop.f32.mrf.mxu0
    %966 = vmatprep.mubr.f32.mxu0 0.0
    %v967 = vand.u32 %v869, 4294901760
    %v968 = vsub.f32 %v869, %v967
    %v969 = vand.u32 %v968, 4294901760
    %v970 = vsub.f32 %v968, %v969
    %v971 = vand.u32 %v970, 4294901760
    %972 = vmatmul.mubr.f32.gmra.mxu0 %v971
    %v973 = vpop.f32.mrf.mxu0
    %v974 = vadd.f32 %v853, %v973
    %v975 = vpop.f32.mrf.mxu0
    %976 = vmatprep.mubr.f32.mxu0 0.0
    %v977 = vand.u32 %v872, 4294901760
    %v978 = vsub.f32 %v872, %v977
    %v979 = vand.u32 %v978, 4294901760
    %v980 = vsub.f32 %v978, %v979
    %v981 = vand.u32 %v980, 4294901760
    %982 = vmatmul.mubr.f32.gmra.mxu0 %v981
    %v983 = vpop.f32.mrf.mxu0
    %v984 = vadd.f32 %v859, %v983
    %v985 = vpop.f32.mrf.mxu0
    %986 = vdwg.mxu0
    %987 = vmatprep.subr.mxu0 0.0
    %988 = vmatpush1.msra.mxu0 0.0
    %989 = vmatprep.subr.mxu0 0.0
    %990 = vmatpush1.msra.mxu0 0.0
    %991 = vmatprep.subr.mxu0 0.0
    %992 = vmatpush1.msra.mxu0 0.0
    %993 = vmatprep.subr.mxu0 0.0
    %994 = vmatpush1.msra.mxu0 0.0
    %995 = vmatprep.subr.mxu0 0.0
    %996 = vmatpush1.msra.mxu0 0.0
    %997 = vmatprep.subr.mxu0 0.0
    %998 = vmatpush1.msra.mxu0 0.0
    %999 = vmatprep.subr.mxu0 0.0
    %1000 = vmatpush1.msra.mxu0 0.0
    %1001 = vmatprep.subr.mxu0 0.0
    %1002 = vmatpush1.msra.mxu0 0.0
    %1003 = vmatprep.subr.mxu0 0.0
    %v1004 = vand.u32 %v177, 4294901760
    %v1005 = vsub.f32 %v177, %v1004
    %v1006 = vand.u32 %v1005, 4294901760
    %v1007 = vsub.f32 %v1005, %v1006
    %v1008 = vand.u32 %v1007, 4294901760
    %1009 = vmatpush1.msra.mxu0 %v1008
    %1010 = vmatprep.subr.mxu0 0.0
    %v1011 = vand.u32 %v176, 4294901760
    %v1012 = vsub.f32 %v176, %v1011
    %v1013 = vand.u32 %v1012, 4294901760
    %v1014 = vsub.f32 %v1012, %v1013
    %v1015 = vand.u32 %v1014, 4294901760
    %1016 = vmatpush1.msra.mxu0 %v1015
    %1017 = vmatprep.subr.mxu0 0.0
    %v1018 = vand.u32 %v175, 4294901760
    %v1019 = vsub.f32 %v175, %v1018
    %v1020 = vand.u32 %v1019, 4294901760
    %v1021 = vsub.f32 %v1019, %v1020
    %v1022 = vand.u32 %v1021, 4294901760
    %1023 = vmatpush1.msra.mxu0 %v1022
    %1024 = vmatprep.subr.mxu0 0.0
    %v1025 = vand.u32 %v174, 4294901760
    %v1026 = vsub.f32 %v174, %v1025
    %v1027 = vand.u32 %v1026, 4294901760
    %v1028 = vsub.f32 %v1026, %v1027
    %v1029 = vand.u32 %v1028, 4294901760
    %1030 = vmatpush1.msra.mxu0 %v1029
    %1031 = vmatprep.subr.mxu0 0.0
    %v1032 = vand.u32 %v173, 4294901760
    %v1033 = vsub.f32 %v173, %v1032
    %v1034 = vand.u32 %v1033, 4294901760
    %v1035 = vsub.f32 %v1033, %v1034
    %v1036 = vand.u32 %v1035, 4294901760
    %1037 = vmatpush1.msra.mxu0 %v1036
    %1038 = vmatprep.subr.mxu0 0.0
    %v1039 = vand.u32 %v172, 4294901760
    %v1040 = vsub.f32 %v172, %v1039
    %v1041 = vand.u32 %v1040, 4294901760
    %v1042 = vsub.f32 %v1040, %v1041
    %v1043 = vand.u32 %v1042, 4294901760
    %1044 = vmatpush1.msra.mxu0 %v1043
    %1045 = vmatprep.subr.mxu0 0.0
    %v1046 = vand.u32 %v171, 4294901760
    %v1047 = vsub.f32 %v171, %v1046
    %v1048 = vand.u32 %v1047, 4294901760
    %v1049 = vsub.f32 %v1047, %v1048
    %v1050 = vand.u32 %v1049, 4294901760
    %1051 = vmatpush1.msra.mxu0 %v1050
    %1052 = vmatprep.subr.mxu0 0.0
    %v1053 = vand.u32 %v170, 4294901760
    %v1054 = vsub.f32 %v170, %v1053
    %v1055 = vand.u32 %v1054, 4294901760
    %v1056 = vsub.f32 %v1054, %v1055
    %v1057 = vand.u32 %v1056, 4294901760
    %1058 = vmatpush1.msra.mxu0 %v1057
    %1059 = vmatprep.subr.mxu0 0.0
    %1060 = vmatpush2.msra.mxu0 0.0
    %1061 = vmatprep.subr.mxu0 0.0
    %1062 = vmatpush2.msra.mxu0 0.0
    %1063 = vmatprep.subr.mxu0 0.0
    %1064 = vmatpush2.msra.mxu0 0.0
    %1065 = vmatprep.subr.mxu0 0.0
    %1066 = vmatpush2.msra.mxu0 0.0
    %1067 = vmatprep.subr.mxu0 0.0
    %1068 = vmatpush2.msra.mxu0 0.0
    %1069 = vmatprep.subr.mxu0 0.0
    %1070 = vmatpush2.msra.mxu0 0.0
    %1071 = vmatprep.subr.mxu0 0.0
    %1072 = vmatpush2.msra.mxu0 0.0
    %1073 = vmatprep.subr.mxu0 0.0
    %1074 = vmatpush2.msra.mxu0 0.0
    %1075 = vmatprep.subr.mxu0 0.0
    %1076 = vmatpush2.msra.mxu0 0.0
    %1077 = vmatprep.subr.mxu0 0.0
    %1078 = vmatpush2.msra.mxu0 0.0
    %1079 = vmatprep.subr.mxu0 0.0
    %1080 = vmatpush2.msra.mxu0 0.0
    %1081 = vmatprep.subr.mxu0 0.0
    %1082 = vmatpush2.msra.mxu0 0.0
    %1083 = vmatprep.subr.mxu0 0.0
    %1084 = vmatpush2.msra.mxu0 0.0
    %1085 = vmatprep.subr.mxu0 0.0
    %1086 = vmatpush2.msra.mxu0 0.0
    %1087 = vmatprep.subr.mxu0 0.0
    %1088 = vmatpush2.msra.mxu0 0.0
    %1089 = vmatprep.subr.mxu0 0.0
    %1090 = vmatpush2.msra.mxu0 0.0
    %1091 = vmatprep.mubr.f32.mxu0 0.0
    %v1092 = vand.u32 %v863, 4294901760
    %1093 = vmatmul.mubr.f32.gmra.mxu0 %v1092
    %v1094 = vpop.f32.mrf.mxu0
    %v1095 = vadd.f32 %v954, %v1094
    %v1096 = vpop.f32.mrf.mxu0
    %1097 = vmatprep.mubr.f32.mxu0 0.0
    %v1098 = vand.u32 %v866, 4294901760
    %1099 = vmatmul.mubr.f32.gmra.mxu0 %v1098
    %v1100 = vpop.f32.mrf.mxu0
    %v1101 = vadd.f32 %v964, %v1100
    %v1102 = vpop.f32.mrf.mxu0
    %1103 = vmatprep.mubr.f32.mxu0 0.0
    %v1104 = vand.u32 %v869, 4294901760
    %1105 = vmatmul.mubr.f32.gmra.mxu0 %v1104
    %v1106 = vpop.f32.mrf.mxu0
    %v1107 = vadd.f32 %v974, %v1106
    %v1108 = vpop.f32.mrf.mxu0
    %1109 = vmatprep.mubr.f32.mxu0 0.0
    %v1110 = vand.u32 %v872, 4294901760
    %1111 = vmatmul.mubr.f32.gmra.mxu0 %v1110
    %v1112 = vpop.f32.mrf.mxu0
    %v1113 = vadd.f32 %v984, %v1112
    %v1114 = vpop.f32.mrf.mxu0
    %1115 = vdwg.mxu0
    %1116 = vmatprep.subr.mxu0 0.0
    %1117 = vmatpush1.msra.mxu0 0.0
    %1118 = vmatprep.subr.mxu0 0.0
    %1119 = vmatpush1.msra.mxu0 0.0
    %1120 = vmatprep.subr.mxu0 0.0
    %1121 = vmatpush1.msra.mxu0 0.0
    %1122 = vmatprep.subr.mxu0 0.0
    %1123 = vmatpush1.msra.mxu0 0.0
    %1124 = vmatprep.subr.mxu0 0.0
    %1125 = vmatpush1.msra.mxu0 0.0
    %1126 = vmatprep.subr.mxu0 0.0
    %1127 = vmatpush1.msra.mxu0 0.0
    %1128 = vmatprep.subr.mxu0 0.0
    %1129 = vmatpush1.msra.mxu0 0.0
    %1130 = vmatprep.subr.mxu0 0.0
    %1131 = vmatpush1.msra.mxu0 0.0
    %1132 = vmatprep.subr.mxu0 0.0
    %v1133 = vand.u32 %v177, 4294901760
    %v1134 = vsub.f32 %v177, %v1133
    %1135 = vmatpush1.msra.mxu0 %v1134
    %1136 = vmatprep.subr.mxu0 0.0
    %v1137 = vand.u32 %v176, 4294901760
    %v1138 = vsub.f32 %v176, %v1137
    %1139 = vmatpush1.msra.mxu0 %v1138
    %1140 = vmatprep.subr.mxu0 0.0
    %v1141 = vand.u32 %v175, 4294901760
    %v1142 = vsub.f32 %v175, %v1141
    %1143 = vmatpush1.msra.mxu0 %v1142
    %1144 = vmatprep.subr.mxu0 0.0
    %v1145 = vand.u32 %v174, 4294901760
    %v1146 = vsub.f32 %v174, %v1145
    %1147 = vmatpush1.msra.mxu0 %v1146
    %1148 = vmatprep.subr.mxu0 0.0
    %v1149 = vand.u32 %v173, 4294901760
    %v1150 = vsub.f32 %v173, %v1149
    %1151 = vmatpush1.msra.mxu0 %v1150
    %1152 = vmatprep.subr.mxu0 0.0
    %v1153 = vand.u32 %v172, 4294901760
    %v1154 = vsub.f32 %v172, %v1153
    %1155 = vmatpush1.msra.mxu0 %v1154
    %1156 = vmatprep.subr.mxu0 0.0
    %v1157 = vand.u32 %v171, 4294901760
    %v1158 = vsub.f32 %v171, %v1157
    %1159 = vmatpush1.msra.mxu0 %v1158
    %1160 = vmatprep.subr.mxu0 0.0
    %v1161 = vand.u32 %v170, 4294901760
    %v1162 = vsub.f32 %v170, %v1161
    %1163 = vmatpush1.msra.mxu0 %v1162
    %1164 = vmatprep.subr.mxu0 0.0
    %1165 = vmatpush2.msra.mxu0 0.0
    %1166 = vmatprep.subr.mxu0 0.0
    %1167 = vmatpush2.msra.mxu0 0.0
    %1168 = vmatprep.subr.mxu0 0.0
    %1169 = vmatpush2.msra.mxu0 0.0
    %1170 = vmatprep.subr.mxu0 0.0
    %1171 = vmatpush2.msra.mxu0 0.0
    %1172 = vmatprep.subr.mxu0 0.0
    %1173 = vmatpush2.msra.mxu0 0.0
    %1174 = vmatprep.subr.mxu0 0.0
    %1175 = vmatpush2.msra.mxu0 0.0
    %1176 = vmatprep.subr.mxu0 0.0
    %1177 = vmatpush2.msra.mxu0 0.0
    %1178 = vmatprep.subr.mxu0 0.0
    %1179 = vmatpush2.msra.mxu0 0.0
    %1180 = vmatprep.subr.mxu0 0.0
    %1181 = vmatpush2.msra.mxu0 0.0
    %1182 = vmatprep.subr.mxu0 0.0
    %1183 = vmatpush2.msra.mxu0 0.0
    %1184 = vmatprep.subr.mxu0 0.0
    %1185 = vmatpush2.msra.mxu0 0.0
    %1186 = vmatprep.subr.mxu0 0.0
    %1187 = vmatpush2.msra.mxu0 0.0
    %1188 = vmatprep.subr.mxu0 0.0
    %1189 = vmatpush2.msra.mxu0 0.0
    %1190 = vmatprep.subr.mxu0 0.0
    %1191 = vmatpush2.msra.mxu0 0.0
    %1192 = vmatprep.subr.mxu0 0.0
    %1193 = vmatpush2.msra.mxu0 0.0
    %1194 = vmatprep.subr.mxu0 0.0
    %1195 = vmatpush2.msra.mxu0 0.0
    %1196 = vmatprep.mubr.f32.mxu0 0.0
    %v1197 = vand.u32 %v863, 4294901760
    %v1198 = vsub.f32 %v863, %v1197
    %1199 = vmatmul.mubr.f32.gmra.mxu0 %v1198
    %v1200 = vpop.f32.mrf.mxu0
    %v1201 = vadd.f32 %v1095, %v1200
    %v1202 = vpop.f32.mrf.mxu0
    %1203 = vmatprep.mubr.f32.mxu0 0.0
    %v1204 = vand.u32 %v866, 4294901760
    %v1205 = vsub.f32 %v866, %v1204
    %1206 = vmatmul.mubr.f32.gmra.mxu0 %v1205
    %v1207 = vpop.f32.mrf.mxu0
    %v1208 = vadd.f32 %v1101, %v1207
    %v1209 = vpop.f32.mrf.mxu0
    %1210 = vmatprep.mubr.f32.mxu0 0.0
    %v1211 = vand.u32 %v869, 4294901760
    %v1212 = vsub.f32 %v869, %v1211
    %1213 = vmatmul.mubr.f32.gmra.mxu0 %v1212
    %v1214 = vpop.f32.mrf.mxu0
    %v1215 = vadd.f32 %v1107, %v1214
    %v1216 = vpop.f32.mrf.mxu0
    %1217 = vmatprep.mubr.f32.mxu0 0.0
    %v1218 = vand.u32 %v872, 4294901760
    %v1219 = vsub.f32 %v872, %v1218
    %1220 = vmatmul.mubr.f32.gmra.mxu0 %v1219
    %v1221 = vpop.f32.mrf.mxu0
    %v1222 = vadd.f32 %v1113, %v1221
    %v1223 = vpop.f32.mrf.mxu0
    %1224 = vdwg.mxu0
    %1225 = vmatprep.subr.mxu0 0.0
    %1226 = vmatpush1.msra.mxu0 0.0
    %1227 = vmatprep.subr.mxu0 0.0
    %1228 = vmatpush1.msra.mxu0 0.0
    %1229 = vmatprep.subr.mxu0 0.0
    %1230 = vmatpush1.msra.mxu0 0.0
    %1231 = vmatprep.subr.mxu0 0.0
    %1232 = vmatpush1.msra.mxu0 0.0
    %1233 = vmatprep.subr.mxu0 0.0
    %1234 = vmatpush1.msra.mxu0 0.0
    %1235 = vmatprep.subr.mxu0 0.0
    %1236 = vmatpush1.msra.mxu0 0.0
    %1237 = vmatprep.subr.mxu0 0.0
    %1238 = vmatpush1.msra.mxu0 0.0
    %1239 = vmatprep.subr.mxu0 0.0
    %1240 = vmatpush1.msra.mxu0 0.0
    %1241 = vmatprep.subr.mxu0 0.0
    %v1242 = vand.u32 %v177, 4294901760
    %1243 = vmatpush1.msra.mxu0 %v1242
    %1244 = vmatprep.subr.mxu0 0.0
    %v1245 = vand.u32 %v176, 4294901760
    %1246 = vmatpush1.msra.mxu0 %v1245
    %1247 = vmatprep.subr.mxu0 0.0
    %v1248 = vand.u32 %v175, 4294901760
    %1249 = vmatpush1.msra.mxu0 %v1248
    %1250 = vmatprep.subr.mxu0 0.0
    %v1251 = vand.u32 %v174, 4294901760
    %1252 = vmatpush1.msra.mxu0 %v1251
    %1253 = vmatprep.subr.mxu0 0.0
    %v1254 = vand.u32 %v173, 4294901760
    %1255 = vmatpush1.msra.mxu0 %v1254
    %1256 = vmatprep.subr.mxu0 0.0
    %v1257 = vand.u32 %v172, 4294901760
    %1258 = vmatpush1.msra.mxu0 %v1257
    %1259 = vmatprep.subr.mxu0 0.0
    %v1260 = vand.u32 %v171, 4294901760
    %1261 = vmatpush1.msra.mxu0 %v1260
    %1262 = vmatprep.subr.mxu0 0.0
    %v1263 = vand.u32 %v170, 4294901760
    %1264 = vmatpush1.msra.mxu0 %v1263
    %1265 = vmatprep.subr.mxu0 0.0
    %1266 = vmatpush2.msra.mxu0 0.0
    %1267 = vmatprep.subr.mxu0 0.0
    %1268 = vmatpush2.msra.mxu0 0.0
    %1269 = vmatprep.subr.mxu0 0.0
    %1270 = vmatpush2.msra.mxu0 0.0
    %1271 = vmatprep.subr.mxu0 0.0
    %1272 = vmatpush2.msra.mxu0 0.0
    %1273 = vmatprep.subr.mxu0 0.0
    %1274 = vmatpush2.msra.mxu0 0.0
    %1275 = vmatprep.subr.mxu0 0.0
    %1276 = vmatpush2.msra.mxu0 0.0
    %1277 = vmatprep.subr.mxu0 0.0
    %1278 = vmatpush2.msra.mxu0 0.0
    %1279 = vmatprep.subr.mxu0 0.0
    %1280 = vmatpush2.msra.mxu0 0.0
    %1281 = vmatprep.subr.mxu0 0.0
    %1282 = vmatpush2.msra.mxu0 0.0
    %1283 = vmatprep.subr.mxu0 0.0
    %1284 = vmatpush2.msra.mxu0 0.0
    %1285 = vmatprep.subr.mxu0 0.0
    %1286 = vmatpush2.msra.mxu0 0.0
    %1287 = vmatprep.subr.mxu0 0.0
    %1288 = vmatpush2.msra.mxu0 0.0
    %1289 = vmatprep.subr.mxu0 0.0
    %1290 = vmatpush2.msra.mxu0 0.0
    %1291 = vmatprep.subr.mxu0 0.0
    %1292 = vmatpush2.msra.mxu0 0.0
    %1293 = vmatprep.subr.mxu0 0.0
    %1294 = vmatpush2.msra.mxu0 0.0
    %1295 = vmatprep.subr.mxu0 0.0
    %1296 = vmatpush2.msra.mxu0 0.0
    %1297 = vmatprep.mubr.f32.mxu0 0.0
    %v1298 = vand.u32 %v863, 4294901760
    %v1299 = vsub.f32 %v863, %v1298
    %v1300 = vand.u32 %v1299, 4294901760
    %1301 = vmatmul.mubr.f32.gmra.mxu0 %v1300
    %v1302 = vpop.f32.mrf.mxu0
    %v1303 = vadd.f32 %v1201, %v1302
    %v1304 = vpop.f32.mrf.mxu0
    %1305 = vmatprep.mubr.f32.mxu0 0.0
    %v1306 = vand.u32 %v866, 4294901760
    %v1307 = vsub.f32 %v866, %v1306
    %v1308 = vand.u32 %v1307, 4294901760
    %1309 = vmatmul.mubr.f32.gmra.mxu0 %v1308
    %v1310 = vpop.f32.mrf.mxu0
    %v1311 = vadd.f32 %v1208, %v1310
    %v1312 = vpop.f32.mrf.mxu0
    %1313 = vmatprep.mubr.f32.mxu0 0.0
    %v1314 = vand.u32 %v869, 4294901760
    %v1315 = vsub.f32 %v869, %v1314
    %v1316 = vand.u32 %v1315, 4294901760
    %1317 = vmatmul.mubr.f32.gmra.mxu0 %v1316
    %v1318 = vpop.f32.mrf.mxu0
    %v1319 = vadd.f32 %v1215, %v1318
    %v1320 = vpop.f32.mrf.mxu0
    %1321 = vmatprep.mubr.f32.mxu0 0.0
    %v1322 = vand.u32 %v872, 4294901760
    %v1323 = vsub.f32 %v872, %v1322
    %v1324 = vand.u32 %v1323, 4294901760
    %1325 = vmatmul.mubr.f32.gmra.mxu0 %v1324
    %v1326 = vpop.f32.mrf.mxu0
    %v1327 = vadd.f32 %v1222, %v1326
    %v1328 = vpop.f32.mrf.mxu0
    %1329 = vdwg.mxu0
    %1330 = vmatprep.subr.mxu0 0.0
    %1331 = vmatpush1.msra.mxu0 0.0
    %1332 = vmatprep.subr.mxu0 0.0
    %1333 = vmatpush1.msra.mxu0 0.0
    %1334 = vmatprep.subr.mxu0 0.0
    %1335 = vmatpush1.msra.mxu0 0.0
    %1336 = vmatprep.subr.mxu0 0.0
    %1337 = vmatpush1.msra.mxu0 0.0
    %1338 = vmatprep.subr.mxu0 0.0
    %1339 = vmatpush1.msra.mxu0 0.0
    %1340 = vmatprep.subr.mxu0 0.0
    %1341 = vmatpush1.msra.mxu0 0.0
    %1342 = vmatprep.subr.mxu0 0.0
    %1343 = vmatpush1.msra.mxu0 0.0
    %1344 = vmatprep.subr.mxu0 0.0
    %1345 = vmatpush1.msra.mxu0 0.0
    %1346 = vmatprep.subr.mxu0 0.0
    %v1347 = vand.u32 %v177, 4294901760
    %v1348 = vsub.f32 %v177, %v1347
    %v1349 = vand.u32 %v1348, 4294901760
    %1350 = vmatpush1.msra.mxu0 %v1349
    %1351 = vmatprep.subr.mxu0 0.0
    %v1352 = vand.u32 %v176, 4294901760
    %v1353 = vsub.f32 %v176, %v1352
    %v1354 = vand.u32 %v1353, 4294901760
    %1355 = vmatpush1.msra.mxu0 %v1354
    %1356 = vmatprep.subr.mxu0 0.0
    %v1357 = vand.u32 %v175, 4294901760
    %v1358 = vsub.f32 %v175, %v1357
    %v1359 = vand.u32 %v1358, 4294901760
    %1360 = vmatpush1.msra.mxu0 %v1359
    %1361 = vmatprep.subr.mxu0 0.0
    %v1362 = vand.u32 %v174, 4294901760
    %v1363 = vsub.f32 %v174, %v1362
    %v1364 = vand.u32 %v1363, 4294901760
    %1365 = vmatpush1.msra.mxu0 %v1364
    %1366 = vmatprep.subr.mxu0 0.0
    %v1367 = vand.u32 %v173, 4294901760
    %v1368 = vsub.f32 %v173, %v1367
    %v1369 = vand.u32 %v1368, 4294901760
    %1370 = vmatpush1.msra.mxu0 %v1369
    %1371 = vmatprep.subr.mxu0 0.0
    %v1372 = vand.u32 %v172, 4294901760
    %v1373 = vsub.f32 %v172, %v1372
    %v1374 = vand.u32 %v1373, 4294901760
    %1375 = vmatpush1.msra.mxu0 %v1374
    %1376 = vmatprep.subr.mxu0 0.0
    %v1377 = vand.u32 %v171, 4294901760
    %v1378 = vsub.f32 %v171, %v1377
    %v1379 = vand.u32 %v1378, 4294901760
    %1380 = vmatpush1.msra.mxu0 %v1379
    %1381 = vmatprep.subr.mxu0 0.0
    %v1382 = vand.u32 %v170, 4294901760
    %v1383 = vsub.f32 %v170, %v1382
    %v1384 = vand.u32 %v1383, 4294901760
    %1385 = vmatpush1.msra.mxu0 %v1384
    %1386 = vmatprep.subr.mxu0 0.0
    %1387 = vmatpush2.msra.mxu0 0.0
    %1388 = vmatprep.subr.mxu0 0.0
    %1389 = vmatpush2.msra.mxu0 0.0
    %1390 = vmatprep.subr.mxu0 0.0
    %1391 = vmatpush2.msra.mxu0 0.0
    %1392 = vmatprep.subr.mxu0 0.0
    %1393 = vmatpush2.msra.mxu0 0.0
    %1394 = vmatprep.subr.mxu0 0.0
    %1395 = vmatpush2.msra.mxu0 0.0
    %1396 = vmatprep.subr.mxu0 0.0
    %1397 = vmatpush2.msra.mxu0 0.0
    %1398 = vmatprep.subr.mxu0 0.0
    %1399 = vmatpush2.msra.mxu0 0.0
    %1400 = vmatprep.subr.mxu0 0.0
    %1401 = vmatpush2.msra.mxu0 0.0
    %1402 = vmatprep.subr.mxu0 0.0
    %1403 = vmatpush2.msra.mxu0 0.0
    %1404 = vmatprep.subr.mxu0 0.0
    %1405 = vmatpush2.msra.mxu0 0.0
    %1406 = vmatprep.subr.mxu0 0.0
    %1407 = vmatpush2.msra.mxu0 0.0
    %1408 = vmatprep.subr.mxu0 0.0
    %1409 = vmatpush2.msra.mxu0 0.0
    %1410 = vmatprep.subr.mxu0 0.0
    %1411 = vmatpush2.msra.mxu0 0.0
    %1412 = vmatprep.subr.mxu0 0.0
    %1413 = vmatpush2.msra.mxu0 0.0
    %1414 = vmatprep.subr.mxu0 0.0
    %1415 = vmatpush2.msra.mxu0 0.0
    %1416 = vmatprep.subr.mxu0 0.0
    %1417 = vmatpush2.msra.mxu0 0.0
    %1418 = vmatprep.mubr.f32.mxu0 0.0
    %v1419 = vand.u32 %v863, 4294901760
    %1420 = vmatmul.mubr.f32.gmra.mxu0 %v1419
    %v1421 = vpop.f32.mrf.mxu0
    %v1422 = vadd.f32 %v1303, %v1421
    %v1423 = vpop.f32.mrf.mxu0
    %1424 = vmatprep.mubr.f32.mxu0 0.0
    %v1425 = vand.u32 %v866, 4294901760
    %1426 = vmatmul.mubr.f32.gmra.mxu0 %v1425
    %v1427 = vpop.f32.mrf.mxu0
    %v1428 = vadd.f32 %v1311, %v1427
    %v1429 = vpop.f32.mrf.mxu0
    %1430 = vmatprep.mubr.f32.mxu0 0.0
    %v1431 = vand.u32 %v869, 4294901760
    %1432 = vmatmul.mubr.f32.gmra.mxu0 %v1431
    %v1433 = vpop.f32.mrf.mxu0
    %v1434 = vadd.f32 %v1319, %v1433
    %v1435 = vpop.f32.mrf.mxu0
    %1436 = vmatprep.mubr.f32.mxu0 0.0
    %v1437 = vand.u32 %v872, 4294901760
    %1438 = vmatmul.mubr.f32.gmra.mxu0 %v1437
    %v1439 = vpop.f32.mrf.mxu0
    %v1440 = vadd.f32 %v1327, %v1439
    %v1441 = vpop.f32.mrf.mxu0
    %1442 = vdwg.mxu0
    %1443 = vmatprep.subr.mxu0 0.0
    %1444 = vmatpush1.msra.mxu0 0.0
    %1445 = vmatprep.subr.mxu0 0.0
    %1446 = vmatpush1.msra.mxu0 0.0
    %1447 = vmatprep.subr.mxu0 0.0
    %1448 = vmatpush1.msra.mxu0 0.0
    %1449 = vmatprep.subr.mxu0 0.0
    %1450 = vmatpush1.msra.mxu0 0.0
    %1451 = vmatprep.subr.mxu0 0.0
    %1452 = vmatpush1.msra.mxu0 0.0
    %1453 = vmatprep.subr.mxu0 0.0
    %1454 = vmatpush1.msra.mxu0 0.0
    %1455 = vmatprep.subr.mxu0 0.0
    %1456 = vmatpush1.msra.mxu0 0.0
    %1457 = vmatprep.subr.mxu0 0.0
    %1458 = vmatpush1.msra.mxu0 0.0
    %1459 = vmatprep.subr.mxu0 0.0
    %v1460 = vand.u32 %v177, 4294901760
    %1461 = vmatpush1.msra.mxu0 %v1460
    %1462 = vmatprep.subr.mxu0 0.0
    %v1463 = vand.u32 %v176, 4294901760
    %1464 = vmatpush1.msra.mxu0 %v1463
    %1465 = vmatprep.subr.mxu0 0.0
    %v1466 = vand.u32 %v175, 4294901760
    %1467 = vmatpush1.msra.mxu0 %v1466
    %1468 = vmatprep.subr.mxu0 0.0
    %v1469 = vand.u32 %v174, 4294901760
    %1470 = vmatpush1.msra.mxu0 %v1469
    %1471 = vmatprep.subr.mxu0 0.0
    %v1472 = vand.u32 %v173, 4294901760
    %1473 = vmatpush1.msra.mxu0 %v1472
    %1474 = vmatprep.subr.mxu0 0.0
    %v1475 = vand.u32 %v172, 4294901760
    %1476 = vmatpush1.msra.mxu0 %v1475
    %1477 = vmatprep.subr.mxu0 0.0
    %v1478 = vand.u32 %v171, 4294901760
    %1479 = vmatpush1.msra.mxu0 %v1478
    %1480 = vmatprep.subr.mxu0 0.0
    %v1481 = vand.u32 %v170, 4294901760
    %1482 = vmatpush1.msra.mxu0 %v1481
    %1483 = vmatprep.subr.mxu0 0.0
    %1484 = vmatpush2.msra.mxu0 0.0
    %1485 = vmatprep.subr.mxu0 0.0
    %1486 = vmatpush2.msra.mxu0 0.0
    %1487 = vmatprep.subr.mxu0 0.0
    %1488 = vmatpush2.msra.mxu0 0.0
    %1489 = vmatprep.subr.mxu0 0.0
    %1490 = vmatpush2.msra.mxu0 0.0
    %1491 = vmatprep.subr.mxu0 0.0
    %1492 = vmatpush2.msra.mxu0 0.0
    %1493 = vmatprep.subr.mxu0 0.0
    %1494 = vmatpush2.msra.mxu0 0.0
    %1495 = vmatprep.subr.mxu0 0.0
    %1496 = vmatpush2.msra.mxu0 0.0
    %1497 = vmatprep.subr.mxu0 0.0
    %1498 = vmatpush2.msra.mxu0 0.0
    %1499 = vmatprep.subr.mxu0 0.0
    %1500 = vmatpush2.msra.mxu0 0.0
    %1501 = vmatprep.subr.mxu0 0.0
    %1502 = vmatpush2.msra.mxu0 0.0
    %1503 = vmatprep.subr.mxu0 0.0
    %1504 = vmatpush2.msra.mxu0 0.0
    %1505 = vmatprep.subr.mxu0 0.0
    %1506 = vmatpush2.msra.mxu0 0.0
    %1507 = vmatprep.subr.mxu0 0.0
    %1508 = vmatpush2.msra.mxu0 0.0
    %1509 = vmatprep.subr.mxu0 0.0
    %1510 = vmatpush2.msra.mxu0 0.0
    %1511 = vmatprep.subr.mxu0 0.0
    %1512 = vmatpush2.msra.mxu0 0.0
    %1513 = vmatprep.subr.mxu0 0.0
    %1514 = vmatpush2.msra.mxu0 0.0
    %1515 = vmatprep.mubr.f32.mxu0 0.0
    %v1516 = vand.u32 %v863, 4294901760
    %1517 = vmatmul.mubr.f32.gmra.mxu0 %v1516
    %v1518 = vpop.f32.mrf.mxu0
    %v1519 = vadd.f32 %v1422, %v1518
    %v1520 = vpop.f32.mrf.mxu0
    %1521 = vmatprep.mubr.f32.mxu0 0.0
    %v1522 = vand.u32 %v866, 4294901760
    %1523 = vmatmul.mubr.f32.gmra.mxu0 %v1522
    %v1524 = vpop.f32.mrf.mxu0
    %v1525 = vadd.f32 %v1428, %v1524
    %v1526 = vpop.f32.mrf.mxu0
    %1527 = vmatprep.mubr.f32.mxu0 0.0
    %v1528 = vand.u32 %v869, 4294901760
    %1529 = vmatmul.mubr.f32.gmra.mxu0 %v1528
    %v1530 = vpop.f32.mrf.mxu0
    %v1531 = vadd.f32 %v1434, %v1530
    %v1532 = vpop.f32.mrf.mxu0
    %1533 = vmatprep.mubr.f32.mxu0 0.0
    %v1534 = vand.u32 %v872, 4294901760
    %1535 = vmatmul.mubr.f32.gmra.mxu0 %v1534
    %v1536 = vpop.f32.mrf.mxu0
    %v1537 = vadd.f32 %v1440, %v1536
    %v1538 = vpop.f32.mrf.mxu0
    %1539 = vdwg.mxu0
    %s1540 = scalar_lea.vmem [#allocation2], 128
    %v1541 = vld [vmem:[%s1540] sm:$0xff]
    %v1542 = vld [vmem:[%s1540 + $0x8] sm:$0xff]
    %v1543 = vld [vmem:[%s1540 + $0x10] sm:$0xff]
    %v1544 = vld [vmem:[%s1540 + $0x18] sm:$0xff]
    %v1545 = vld [vmem:[%s1540 + $0x20] sm:$0xff]
    %v1546 = vld [vmem:[%s1540 + $0x28] sm:$0xff]
    %v1547 = vld [vmem:[%s1540 + $0x30] sm:$0xff]
    %v1548 = vld [vmem:[%s1540 + $0x38] sm:$0xff]
    %v1550 = vsel %vm187, %v166, 0
    %v1553 = vsel %vm187, %v167, 0
    %v1556 = vsel %vm187, %v168, 0
    %v1559 = vsel %vm187, %v169, 0
    %1561 = vmatprep.subr.mxu0 0.0
    %1562 = vmatpush1.msra.mxu0 0.0
    %1563 = vmatprep.subr.mxu0 0.0
    %1564 = vmatpush1.msra.mxu0 0.0
    %1565 = vmatprep.subr.mxu0 0.0
    %1566 = vmatpush1.msra.mxu0 0.0
    %1567 = vmatprep.subr.mxu0 0.0
    %1568 = vmatpush1.msra.mxu0 0.0
    %1569 = vmatprep.subr.mxu0 0.0
    %1570 = vmatpush1.msra.mxu0 0.0
    %1571 = vmatprep.subr.mxu0 0.0
    %1572 = vmatpush1.msra.mxu0 0.0
    %1573 = vmatprep.subr.mxu0 0.0
    %1574 = vmatpush1.msra.mxu0 0.0
    %1575 = vmatprep.subr.mxu0 0.0
    %1576 = vmatpush1.msra.mxu0 0.0
    %1577 = vmatprep.subr.mxu0 0.0
    %v1578 = vand.u32 %v1548, 4294901760
    %1579 = vmatpush1.msra.mxu0 %v1578
    %1580 = vmatprep.subr.mxu0 0.0
    %v1581 = vand.u32 %v1547, 4294901760
    %1582 = vmatpush1.msra.mxu0 %v1581
    %1583 = vmatprep.subr.mxu0 0.0
    %v1584 = vand.u32 %v1546, 4294901760
    %1585 = vmatpush1.msra.mxu0 %v1584
    %1586 = vmatprep.subr.mxu0 0.0
    %v1587 = vand.u32 %v1545, 4294901760
    %1588 = vmatpush1.msra.mxu0 %v1587
    %1589 = vmatprep.subr.mxu0 0.0
    %v1590 = vand.u32 %v1544, 4294901760
    %1591 = vmatpush1.msra.mxu0 %v1590
    %1592 = vmatprep.subr.mxu0 0.0
    %v1593 = vand.u32 %v1543, 4294901760
    %1594 = vmatpush1.msra.mxu0 %v1593
    %1595 = vmatprep.subr.mxu0 0.0
    %v1596 = vand.u32 %v1542, 4294901760
    %1597 = vmatpush1.msra.mxu0 %v1596
    %1598 = vmatprep.subr.mxu0 0.0
    %v1599 = vand.u32 %v1541, 4294901760
    %1600 = vmatpush1.msra.mxu0 %v1599
    %1601 = vmatprep.subr.mxu0 0.0
    %1602 = vmatpush2.msra.mxu0 0.0
    %1603 = vmatprep.subr.mxu0 0.0
    %1604 = vmatpush2.msra.mxu0 0.0
    %1605 = vmatprep.subr.mxu0 0.0
    %1606 = vmatpush2.msra.mxu0 0.0
    %1607 = vmatprep.subr.mxu0 0.0
    %1608 = vmatpush2.msra.mxu0 0.0
    %1609 = vmatprep.subr.mxu0 0.0
    %1610 = vmatpush2.msra.mxu0 0.0
    %1611 = vmatprep.subr.mxu0 0.0
    %1612 = vmatpush2.msra.mxu0 0.0
    %1613 = vmatprep.subr.mxu0 0.0
    %1614 = vmatpush2.msra.mxu0 0.0
    %1615 = vmatprep.subr.mxu0 0.0
    %1616 = vmatpush2.msra.mxu0 0.0
    %1617 = vmatprep.subr.mxu0 0.0
    %1618 = vmatpush2.msra.mxu0 0.0
    %1619 = vmatprep.subr.mxu0 0.0
    %1620 = vmatpush2.msra.mxu0 0.0
    %1621 = vmatprep.subr.mxu0 0.0
    %1622 = vmatpush2.msra.mxu0 0.0
    %1623 = vmatprep.subr.mxu0 0.0
    %1624 = vmatpush2.msra.mxu0 0.0
    %1625 = vmatprep.subr.mxu0 0.0
    %1626 = vmatpush2.msra.mxu0 0.0
    %1627 = vmatprep.subr.mxu0 0.0
    %1628 = vmatpush2.msra.mxu0 0.0
    %1629 = vmatprep.subr.mxu0 0.0
    %1630 = vmatpush2.msra.mxu0 0.0
    %1631 = vmatprep.subr.mxu0 0.0
    %1632 = vmatpush2.msra.mxu0 0.0
    %1633 = vmatprep.mubr.f32.mxu0 0.0
    %v1634 = vand.u32 %v1550, 4294901760
    %v1635 = vsub.f32 %v1550, %v1634
    %v1636 = vand.u32 %v1635, 4294901760
    %v1637 = vsub.f32 %v1635, %v1636
    %v1638 = vand.u32 %v1637, 4294901760
    %1639 = vmatmul.mubr.f32.gmra.mxu0 %v1638
    %v1640 = vpop.f32.mrf.mxu0
    %v1641 = vadd.f32 0.0, %v1640
    %v1642 = vpop.f32.mrf.mxu0
    %1643 = vmatprep.mubr.f32.mxu0 0.0
    %v1644 = vand.u32 %v1553, 4294901760
    %v1645 = vsub.f32 %v1553, %v1644
    %v1646 = vand.u32 %v1645, 4294901760
    %v1647 = vsub.f32 %v1645, %v1646
    %v1648 = vand.u32 %v1647, 4294901760
    %1649 = vmatmul.mubr.f32.gmra.mxu0 %v1648
    %v1650 = vpop.f32.mrf.mxu0
    %v1651 = vadd.f32 0.0, %v1650
    %v1652 = vpop.f32.mrf.mxu0
    %1653 = vmatprep.mubr.f32.mxu0 0.0
    %v1654 = vand.u32 %v1556, 4294901760
    %v1655 = vsub.f32 %v1556, %v1654
    %v1656 = vand.u32 %v1655, 4294901760
    %v1657 = vsub.f32 %v1655, %v1656
    %v1658 = vand.u32 %v1657, 4294901760
    %1659 = vmatmul.mubr.f32.gmra.mxu0 %v1658
    %v1660 = vpop.f32.mrf.mxu0
    %v1661 = vadd.f32 0.0, %v1660
    %v1662 = vpop.f32.mrf.mxu0
    %1663 = vmatprep.mubr.f32.mxu0 0.0
    %v1664 = vand.u32 %v1559, 4294901760
    %v1665 = vsub.f32 %v1559, %v1664
    %v1666 = vand.u32 %v1665, 4294901760
    %v1667 = vsub.f32 %v1665, %v1666
    %v1668 = vand.u32 %v1667, 4294901760
    %1669 = vmatmul.mubr.f32.gmra.mxu0 %v1668
    %v1670 = vpop.f32.mrf.mxu0
    %v1671 = vadd.f32 0.0, %v1670
    %v1672 = vpop.f32.mrf.mxu0
    %1673 = vdwg.mxu0
    %1674 = vmatprep.subr.mxu0 0.0
    %1675 = vmatpush1.msra.mxu0 0.0
    %1676 = vmatprep.subr.mxu0 0.0
    %1677 = vmatpush1.msra.mxu0 0.0
    %1678 = vmatprep.subr.mxu0 0.0
    %1679 = vmatpush1.msra.mxu0 0.0
    %1680 = vmatprep.subr.mxu0 0.0
    %1681 = vmatpush1.msra.mxu0 0.0
    %1682 = vmatprep.subr.mxu0 0.0
    %1683 = vmatpush1.msra.mxu0 0.0
    %1684 = vmatprep.subr.mxu0 0.0
    %1685 = vmatpush1.msra.mxu0 0.0
    %1686 = vmatprep.subr.mxu0 0.0
    %1687 = vmatpush1.msra.mxu0 0.0
    %1688 = vmatprep.subr.mxu0 0.0
    %1689 = vmatpush1.msra.mxu0 0.0
    %1690 = vmatprep.subr.mxu0 0.0
    %v1691 = vand.u32 %v1548, 4294901760
    %v1692 = vsub.f32 %v1548, %v1691
    %v1693 = vand.u32 %v1692, 4294901760
    %v1694 = vsub.f32 %v1692, %v1693
    %v1695 = vand.u32 %v1694, 4294901760
    %1696 = vmatpush1.msra.mxu0 %v1695
    %1697 = vmatprep.subr.mxu0 0.0
    %v1698 = vand.u32 %v1547, 4294901760
    %v1699 = vsub.f32 %v1547, %v1698
    %v1700 = vand.u32 %v1699, 4294901760
    %v1701 = vsub.f32 %v1699, %v1700
    %v1702 = vand.u32 %v1701, 4294901760
    %1703 = vmatpush1.msra.mxu0 %v1702
    %1704 = vmatprep.subr.mxu0 0.0
    %v1705 = vand.u32 %v1546, 4294901760
    %v1706 = vsub.f32 %v1546, %v1705
    %v1707 = vand.u32 %v1706, 4294901760
    %v1708 = vsub.f32 %v1706, %v1707
    %v1709 = vand.u32 %v1708, 4294901760
    %1710 = vmatpush1.msra.mxu0 %v1709
    %1711 = vmatprep.subr.mxu0 0.0
    %v1712 = vand.u32 %v1545, 4294901760
    %v1713 = vsub.f32 %v1545, %v1712
    %v1714 = vand.u32 %v1713, 4294901760
    %v1715 = vsub.f32 %v1713, %v1714
    %v1716 = vand.u32 %v1715, 4294901760
    %1717 = vmatpush1.msra.mxu0 %v1716
    %1718 = vmatprep.subr.mxu0 0.0
    %v1719 = vand.u32 %v1544, 4294901760
    %v1720 = vsub.f32 %v1544, %v1719
    %v1721 = vand.u32 %v1720, 4294901760
    %v1722 = vsub.f32 %v1720, %v1721
    %v1723 = vand.u32 %v1722, 4294901760
    %1724 = vmatpush1.msra.mxu0 %v1723
    %1725 = vmatprep.subr.mxu0 0.0
    %v1726 = vand.u32 %v1543, 4294901760
    %v1727 = vsub.f32 %v1543, %v1726
    %v1728 = vand.u32 %v1727, 4294901760
    %v1729 = vsub.f32 %v1727, %v1728
    %v1730 = vand.u32 %v1729, 4294901760
    %1731 = vmatpush1.msra.mxu0 %v1730
    %1732 = vmatprep.subr.mxu0 0.0
    %v1733 = vand.u32 %v1542, 4294901760
    %v1734 = vsub.f32 %v1542, %v1733
    %v1735 = vand.u32 %v1734, 4294901760
    %v1736 = vsub.f32 %v1734, %v1735
    %v1737 = vand.u32 %v1736, 4294901760
    %1738 = vmatpush1.msra.mxu0 %v1737
    %1739 = vmatprep.subr.mxu0 0.0
    %v1740 = vand.u32 %v1541, 4294901760
    %v1741 = vsub.f32 %v1541, %v1740
    %v1742 = vand.u32 %v1741, 4294901760
    %v1743 = vsub.f32 %v1741, %v1742
    %v1744 = vand.u32 %v1743, 4294901760
    %1745 = vmatpush1.msra.mxu0 %v1744
    %1746 = vmatprep.subr.mxu0 0.0
    %1747 = vmatpush2.msra.mxu0 0.0
    %1748 = vmatprep.subr.mxu0 0.0
    %1749 = vmatpush2.msra.mxu0 0.0
    %1750 = vmatprep.subr.mxu0 0.0
    %1751 = vmatpush2.msra.mxu0 0.0
    %1752 = vmatprep.subr.mxu0 0.0
    %1753 = vmatpush2.msra.mxu0 0.0
    %1754 = vmatprep.subr.mxu0 0.0
    %1755 = vmatpush2.msra.mxu0 0.0
    %1756 = vmatprep.subr.mxu0 0.0
    %1757 = vmatpush2.msra.mxu0 0.0
    %1758 = vmatprep.subr.mxu0 0.0
    %1759 = vmatpush2.msra.mxu0 0.0
    %1760 = vmatprep.subr.mxu0 0.0
    %1761 = vmatpush2.msra.mxu0 0.0
    %1762 = vmatprep.subr.mxu0 0.0
    %1763 = vmatpush2.msra.mxu0 0.0
    %1764 = vmatprep.subr.mxu0 0.0
    %1765 = vmatpush2.msra.mxu0 0.0
    %1766 = vmatprep.subr.mxu0 0.0
    %1767 = vmatpush2.msra.mxu0 0.0
    %1768 = vmatprep.subr.mxu0 0.0
    %1769 = vmatpush2.msra.mxu0 0.0
    %1770 = vmatprep.subr.mxu0 0.0
    %1771 = vmatpush2.msra.mxu0 0.0
    %1772 = vmatprep.subr.mxu0 0.0
    %1773 = vmatpush2.msra.mxu0 0.0
    %1774 = vmatprep.subr.mxu0 0.0
    %1775 = vmatpush2.msra.mxu0 0.0
    %1776 = vmatprep.subr.mxu0 0.0
    %1777 = vmatpush2.msra.mxu0 0.0
    %1778 = vmatprep.mubr.f32.mxu0 0.0
    %v1779 = vand.u32 %v1550, 4294901760
    %1780 = vmatmul.mubr.f32.gmra.mxu0 %v1779
    %v1781 = vpop.f32.mrf.mxu0
    %v1782 = vadd.f32 %v1641, %v1781
    %v1783 = vpop.f32.mrf.mxu0
    %1784 = vmatprep.mubr.f32.mxu0 0.0
    %v1785 = vand.u32 %v1553, 4294901760
    %1786 = vmatmul.mubr.f32.gmra.mxu0 %v1785
    %v1787 = vpop.f32.mrf.mxu0
    %v1788 = vadd.f32 %v1651, %v1787
    %v1789 = vpop.f32.mrf.mxu0
    %1790 = vmatprep.mubr.f32.mxu0 0.0
    %v1791 = vand.u32 %v1556, 4294901760
    %1792 = vmatmul.mubr.f32.gmra.mxu0 %v1791
    %v1793 = vpop.f32.mrf.mxu0
    %v1794 = vadd.f32 %v1661, %v1793
    %v1795 = vpop.f32.mrf.mxu0
    %1796 = vmatprep.mubr.f32.mxu0 0.0
    %v1797 = vand.u32 %v1559, 4294901760
    %1798 = vmatmul.mubr.f32.gmra.mxu0 %v1797
    %v1799 = vpop.f32.mrf.mxu0
    %v1800 = vadd.f32 %v1671, %v1799
    %v1801 = vpop.f32.mrf.mxu0
    %1802 = vdwg.mxu0
    %1803 = vmatprep.subr.mxu0 0.0
    %1804 = vmatpush1.msra.mxu0 0.0
    %1805 = vmatprep.subr.mxu0 0.0
    %1806 = vmatpush1.msra.mxu0 0.0
    %1807 = vmatprep.subr.mxu0 0.0
    %1808 = vmatpush1.msra.mxu0 0.0
    %1809 = vmatprep.subr.mxu0 0.0
    %1810 = vmatpush1.msra.mxu0 0.0
    %1811 = vmatprep.subr.mxu0 0.0
    %1812 = vmatpush1.msra.mxu0 0.0
    %1813 = vmatprep.subr.mxu0 0.0
    %1814 = vmatpush1.msra.mxu0 0.0
    %1815 = vmatprep.subr.mxu0 0.0
    %1816 = vmatpush1.msra.mxu0 0.0
    %1817 = vmatprep.subr.mxu0 0.0
    %1818 = vmatpush1.msra.mxu0 0.0
    %1819 = vmatprep.subr.mxu0 0.0
    %v1820 = vand.u32 %v1548, 4294901760
    %v1821 = vsub.f32 %v1548, %v1820
    %1822 = vmatpush1.msra.mxu0 %v1821
    %1823 = vmatprep.subr.mxu0 0.0
    %v1824 = vand.u32 %v1547, 4294901760
    %v1825 = vsub.f32 %v1547, %v1824
    %1826 = vmatpush1.msra.mxu0 %v1825
    %1827 = vmatprep.subr.mxu0 0.0
    %v1828 = vand.u32 %v1546, 4294901760
    %v1829 = vsub.f32 %v1546, %v1828
    %1830 = vmatpush1.msra.mxu0 %v1829
    %1831 = vmatprep.subr.mxu0 0.0
    %v1832 = vand.u32 %v1545, 4294901760
    %v1833 = vsub.f32 %v1545, %v1832
    %1834 = vmatpush1.msra.mxu0 %v1833
    %1835 = vmatprep.subr.mxu0 0.0
    %v1836 = vand.u32 %v1544, 4294901760
    %v1837 = vsub.f32 %v1544, %v1836
    %1838 = vmatpush1.msra.mxu0 %v1837
    %1839 = vmatprep.subr.mxu0 0.0
    %v1840 = vand.u32 %v1543, 4294901760
    %v1841 = vsub.f32 %v1543, %v1840
    %1842 = vmatpush1.msra.mxu0 %v1841
    %1843 = vmatprep.subr.mxu0 0.0
    %v1844 = vand.u32 %v1542, 4294901760
    %v1845 = vsub.f32 %v1542, %v1844
    %1846 = vmatpush1.msra.mxu0 %v1845
    %1847 = vmatprep.subr.mxu0 0.0
    %v1848 = vand.u32 %v1541, 4294901760
    %v1849 = vsub.f32 %v1541, %v1848
    %1850 = vmatpush1.msra.mxu0 %v1849
    %1851 = vmatprep.subr.mxu0 0.0
    %1852 = vmatpush2.msra.mxu0 0.0
    %1853 = vmatprep.subr.mxu0 0.0
    %1854 = vmatpush2.msra.mxu0 0.0
    %1855 = vmatprep.subr.mxu0 0.0
    %1856 = vmatpush2.msra.mxu0 0.0
    %1857 = vmatprep.subr.mxu0 0.0
    %1858 = vmatpush2.msra.mxu0 0.0
    %1859 = vmatprep.subr.mxu0 0.0
    %1860 = vmatpush2.msra.mxu0 0.0
    %1861 = vmatprep.subr.mxu0 0.0
    %1862 = vmatpush2.msra.mxu0 0.0
    %1863 = vmatprep.subr.mxu0 0.0
    %1864 = vmatpush2.msra.mxu0 0.0
    %1865 = vmatprep.subr.mxu0 0.0
    %1866 = vmatpush2.msra.mxu0 0.0
    %1867 = vmatprep.subr.mxu0 0.0
    %1868 = vmatpush2.msra.mxu0 0.0
    %1869 = vmatprep.subr.mxu0 0.0
    %1870 = vmatpush2.msra.mxu0 0.0
    %1871 = vmatprep.subr.mxu0 0.0
    %1872 = vmatpush2.msra.mxu0 0.0
    %1873 = vmatprep.subr.mxu0 0.0
    %1874 = vmatpush2.msra.mxu0 0.0
    %1875 = vmatprep.subr.mxu0 0.0
    %1876 = vmatpush2.msra.mxu0 0.0
    %1877 = vmatprep.subr.mxu0 0.0
    %1878 = vmatpush2.msra.mxu0 0.0
    %1879 = vmatprep.subr.mxu0 0.0
    %1880 = vmatpush2.msra.mxu0 0.0
    %1881 = vmatprep.subr.mxu0 0.0
    %1882 = vmatpush2.msra.mxu0 0.0
    %1883 = vmatprep.mubr.f32.mxu0 0.0
    %v1884 = vand.u32 %v1550, 4294901760
    %v1885 = vsub.f32 %v1550, %v1884
    %1886 = vmatmul.mubr.f32.gmra.mxu0 %v1885
    %v1887 = vpop.f32.mrf.mxu0
    %v1888 = vadd.f32 %v1782, %v1887
    %v1889 = vpop.f32.mrf.mxu0
    %1890 = vmatprep.mubr.f32.mxu0 0.0
    %v1891 = vand.u32 %v1553, 4294901760
    %v1892 = vsub.f32 %v1553, %v1891
    %1893 = vmatmul.mubr.f32.gmra.mxu0 %v1892
    %v1894 = vpop.f32.mrf.mxu0
    %v1895 = vadd.f32 %v1788, %v1894
    %v1896 = vpop.f32.mrf.mxu0
    %1897 = vmatprep.mubr.f32.mxu0 0.0
    %v1898 = vand.u32 %v1556, 4294901760
    %v1899 = vsub.f32 %v1556, %v1898
    %1900 = vmatmul.mubr.f32.gmra.mxu0 %v1899
    %v1901 = vpop.f32.mrf.mxu0
    %v1902 = vadd.f32 %v1794, %v1901
    %v1903 = vpop.f32.mrf.mxu0
    %1904 = vmatprep.mubr.f32.mxu0 0.0
    %v1905 = vand.u32 %v1559, 4294901760
    %v1906 = vsub.f32 %v1559, %v1905
    %1907 = vmatmul.mubr.f32.gmra.mxu0 %v1906
    %v1908 = vpop.f32.mrf.mxu0
    %v1909 = vadd.f32 %v1800, %v1908
    %v1910 = vpop.f32.mrf.mxu0
    %1911 = vdwg.mxu0
    %1912 = vmatprep.subr.mxu0 0.0
    %1913 = vmatpush1.msra.mxu0 0.0
    %1914 = vmatprep.subr.mxu0 0.0
    %1915 = vmatpush1.msra.mxu0 0.0
    %1916 = vmatprep.subr.mxu0 0.0
    %1917 = vmatpush1.msra.mxu0 0.0
    %1918 = vmatprep.subr.mxu0 0.0
    %1919 = vmatpush1.msra.mxu0 0.0
    %1920 = vmatprep.subr.mxu0 0.0
    %1921 = vmatpush1.msra.mxu0 0.0
    %1922 = vmatprep.subr.mxu0 0.0
    %1923 = vmatpush1.msra.mxu0 0.0
    %1924 = vmatprep.subr.mxu0 0.0
    %1925 = vmatpush1.msra.mxu0 0.0
    %1926 = vmatprep.subr.mxu0 0.0
    %1927 = vmatpush1.msra.mxu0 0.0
    %1928 = vmatprep.subr.mxu0 0.0
    %v1929 = vand.u32 %v1548, 4294901760
    %1930 = vmatpush1.msra.mxu0 %v1929
    %1931 = vmatprep.subr.mxu0 0.0
    %v1932 = vand.u32 %v1547, 4294901760
    %1933 = vmatpush1.msra.mxu0 %v1932
    %1934 = vmatprep.subr.mxu0 0.0
    %v1935 = vand.u32 %v1546, 4294901760
    %1936 = vmatpush1.msra.mxu0 %v1935
    %1937 = vmatprep.subr.mxu0 0.0
    %v1938 = vand.u32 %v1545, 4294901760
    %1939 = vmatpush1.msra.mxu0 %v1938
    %1940 = vmatprep.subr.mxu0 0.0
    %v1941 = vand.u32 %v1544, 4294901760
    %1942 = vmatpush1.msra.mxu0 %v1941
    %1943 = vmatprep.subr.mxu0 0.0
    %v1944 = vand.u32 %v1543, 4294901760
    %1945 = vmatpush1.msra.mxu0 %v1944
    %1946 = vmatprep.subr.mxu0 0.0
    %v1947 = vand.u32 %v1542, 4294901760
    %1948 = vmatpush1.msra.mxu0 %v1947
    %1949 = vmatprep.subr.mxu0 0.0
    %v1950 = vand.u32 %v1541, 4294901760
    %1951 = vmatpush1.msra.mxu0 %v1950
    %1952 = vmatprep.subr.mxu0 0.0
    %1953 = vmatpush2.msra.mxu0 0.0
    %1954 = vmatprep.subr.mxu0 0.0
    %1955 = vmatpush2.msra.mxu0 0.0
    %1956 = vmatprep.subr.mxu0 0.0
    %1957 = vmatpush2.msra.mxu0 0.0
    %1958 = vmatprep.subr.mxu0 0.0
    %1959 = vmatpush2.msra.mxu0 0.0
    %1960 = vmatprep.subr.mxu0 0.0
    %1961 = vmatpush2.msra.mxu0 0.0
    %1962 = vmatprep.subr.mxu0 0.0
    %1963 = vmatpush2.msra.mxu0 0.0
    %1964 = vmatprep.subr.mxu0 0.0
    %1965 = vmatpush2.msra.mxu0 0.0
    %1966 = vmatprep.subr.mxu0 0.0
    %1967 = vmatpush2.msra.mxu0 0.0
    %1968 = vmatprep.subr.mxu0 0.0
    %1969 = vmatpush2.msra.mxu0 0.0
    %1970 = vmatprep.subr.mxu0 0.0
    %1971 = vmatpush2.msra.mxu0 0.0
    %1972 = vmatprep.subr.mxu0 0.0
    %1973 = vmatpush2.msra.mxu0 0.0
    %1974 = vmatprep.subr.mxu0 0.0
    %1975 = vmatpush2.msra.mxu0 0.0
    %1976 = vmatprep.subr.mxu0 0.0
    %1977 = vmatpush2.msra.mxu0 0.0
    %1978 = vmatprep.subr.mxu0 0.0
    %1979 = vmatpush2.msra.mxu0 0.0
    %1980 = vmatprep.subr.mxu0 0.0
    %1981 = vmatpush2.msra.mxu0 0.0
    %1982 = vmatprep.subr.mxu0 0.0
    %1983 = vmatpush2.msra.mxu0 0.0
    %1984 = vmatprep.mubr.f32.mxu0 0.0
    %v1985 = vand.u32 %v1550, 4294901760
    %v1986 = vsub.f32 %v1550, %v1985
    %v1987 = vand.u32 %v1986, 4294901760
    %1988 = vmatmul.mubr.f32.gmra.mxu0 %v1987
    %v1989 = vpop.f32.mrf.mxu0
    %v1990 = vadd.f32 %v1888, %v1989
    %v1991 = vpop.f32.mrf.mxu0
    %1992 = vmatprep.mubr.f32.mxu0 0.0
    %v1993 = vand.u32 %v1553, 4294901760
    %v1994 = vsub.f32 %v1553, %v1993
    %v1995 = vand.u32 %v1994, 4294901760
    %1996 = vmatmul.mubr.f32.gmra.mxu0 %v1995
    %v1997 = vpop.f32.mrf.mxu0
    %v1998 = vadd.f32 %v1895, %v1997
    %v1999 = vpop.f32.mrf.mxu0
    %2000 = vmatprep.mubr.f32.mxu0 0.0
    %v2001 = vand.u32 %v1556, 4294901760
    %v2002 = vsub.f32 %v1556, %v2001
    %v2003 = vand.u32 %v2002, 4294901760
    %2004 = vmatmul.mubr.f32.gmra.mxu0 %v2003
    %v2005 = vpop.f32.mrf.mxu0
    %v2006 = vadd.f32 %v1902, %v2005
    %v2007 = vpop.f32.mrf.mxu0
    %2008 = vmatprep.mubr.f32.mxu0 0.0
    %v2009 = vand.u32 %v1559, 4294901760
    %v2010 = vsub.f32 %v1559, %v2009
    %v2011 = vand.u32 %v2010, 4294901760
    %2012 = vmatmul.mubr.f32.gmra.mxu0 %v2011
    %v2013 = vpop.f32.mrf.mxu0
    %v2014 = vadd.f32 %v1909, %v2013
    %v2015 = vpop.f32.mrf.mxu0
    %2016 = vdwg.mxu0
    %2017 = vmatprep.subr.mxu0 0.0
    %2018 = vmatpush1.msra.mxu0 0.0
    %2019 = vmatprep.subr.mxu0 0.0
    %2020 = vmatpush1.msra.mxu0 0.0
    %2021 = vmatprep.subr.mxu0 0.0
    %2022 = vmatpush1.msra.mxu0 0.0
    %2023 = vmatprep.subr.mxu0 0.0
    %2024 = vmatpush1.msra.mxu0 0.0
    %2025 = vmatprep.subr.mxu0 0.0
    %2026 = vmatpush1.msra.mxu0 0.0
    %2027 = vmatprep.subr.mxu0 0.0
    %2028 = vmatpush1.msra.mxu0 0.0
    %2029 = vmatprep.subr.mxu0 0.0
    %2030 = vmatpush1.msra.mxu0 0.0
    %2031 = vmatprep.subr.mxu0 0.0
    %2032 = vmatpush1.msra.mxu0 0.0
    %2033 = vmatprep.subr.mxu0 0.0
    %v2034 = vand.u32 %v1548, 4294901760
    %v2035 = vsub.f32 %v1548, %v2034
    %v2036 = vand.u32 %v2035, 4294901760
    %2037 = vmatpush1.msra.mxu0 %v2036
    %2038 = vmatprep.subr.mxu0 0.0
    %v2039 = vand.u32 %v1547, 4294901760
    %v2040 = vsub.f32 %v1547, %v2039
    %v2041 = vand.u32 %v2040, 4294901760
    %2042 = vmatpush1.msra.mxu0 %v2041
    %2043 = vmatprep.subr.mxu0 0.0
    %v2044 = vand.u32 %v1546, 4294901760
    %v2045 = vsub.f32 %v1546, %v2044
    %v2046 = vand.u32 %v2045, 4294901760
    %2047 = vmatpush1.msra.mxu0 %v2046
    %2048 = vmatprep.subr.mxu0 0.0
    %v2049 = vand.u32 %v1545, 4294901760
    %v2050 = vsub.f32 %v1545, %v2049
    %v2051 = vand.u32 %v2050, 4294901760
    %2052 = vmatpush1.msra.mxu0 %v2051
    %2053 = vmatprep.subr.mxu0 0.0
    %v2054 = vand.u32 %v1544, 4294901760
    %v2055 = vsub.f32 %v1544, %v2054
    %v2056 = vand.u32 %v2055, 4294901760
    %2057 = vmatpush1.msra.mxu0 %v2056
    %2058 = vmatprep.subr.mxu0 0.0
    %v2059 = vand.u32 %v1543, 4294901760
    %v2060 = vsub.f32 %v1543, %v2059
    %v2061 = vand.u32 %v2060, 4294901760
    %2062 = vmatpush1.msra.mxu0 %v2061
    %2063 = vmatprep.subr.mxu0 0.0
    %v2064 = vand.u32 %v1542, 4294901760
    %v2065 = vsub.f32 %v1542, %v2064
    %v2066 = vand.u32 %v2065, 4294901760
    %2067 = vmatpush1.msra.mxu0 %v2066
    %2068 = vmatprep.subr.mxu0 0.0
    %v2069 = vand.u32 %v1541, 4294901760
    %v2070 = vsub.f32 %v1541, %v2069
    %v2071 = vand.u32 %v2070, 4294901760
    %2072 = vmatpush1.msra.mxu0 %v2071
    %2073 = vmatprep.subr.mxu0 0.0
    %2074 = vmatpush2.msra.mxu0 0.0
    %2075 = vmatprep.subr.mxu0 0.0
    %2076 = vmatpush2.msra.mxu0 0.0
    %2077 = vmatprep.subr.mxu0 0.0
    %2078 = vmatpush2.msra.mxu0 0.0
    %2079 = vmatprep.subr.mxu0 0.0
    %2080 = vmatpush2.msra.mxu0 0.0
    %2081 = vmatprep.subr.mxu0 0.0
    %2082 = vmatpush2.msra.mxu0 0.0
    %2083 = vmatprep.subr.mxu0 0.0
    %2084 = vmatpush2.msra.mxu0 0.0
    %2085 = vmatprep.subr.mxu0 0.0
    %2086 = vmatpush2.msra.mxu0 0.0
    %2087 = vmatprep.subr.mxu0 0.0
    %2088 = vmatpush2.msra.mxu0 0.0
    %2089 = vmatprep.subr.mxu0 0.0
    %2090 = vmatpush2.msra.mxu0 0.0
    %2091 = vmatprep.subr.mxu0 0.0
    %2092 = vmatpush2.msra.mxu0 0.0
    %2093 = vmatprep.subr.mxu0 0.0
    %2094 = vmatpush2.msra.mxu0 0.0
    %2095 = vmatprep.subr.mxu0 0.0
    %2096 = vmatpush2.msra.mxu0 0.0
    %2097 = vmatprep.subr.mxu0 0.0
    %2098 = vmatpush2.msra.mxu0 0.0
    %2099 = vmatprep.subr.mxu0 0.0
    %2100 = vmatpush2.msra.mxu0 0.0
    %2101 = vmatprep.subr.mxu0 0.0
    %2102 = vmatpush2.msra.mxu0 0.0
    %2103 = vmatprep.subr.mxu0 0.0
    %2104 = vmatpush2.msra.mxu0 0.0
    %2105 = vmatprep.mubr.f32.mxu0 0.0
    %v2106 = vand.u32 %v1550, 4294901760
    %2107 = vmatmul.mubr.f32.gmra.mxu0 %v2106
    %v2108 = vpop.f32.mrf.mxu0
    %v2109 = vadd.f32 %v1990, %v2108
    %v2110 = vpop.f32.mrf.mxu0
    %2111 = vmatprep.mubr.f32.mxu0 0.0
    %v2112 = vand.u32 %v1553, 4294901760
    %2113 = vmatmul.mubr.f32.gmra.mxu0 %v2112
    %v2114 = vpop.f32.mrf.mxu0
    %v2115 = vadd.f32 %v1998, %v2114
    %v2116 = vpop.f32.mrf.mxu0
    %2117 = vmatprep.mubr.f32.mxu0 0.0
    %v2118 = vand.u32 %v1556, 4294901760
    %2119 = vmatmul.mubr.f32.gmra.mxu0 %v2118
    %v2120 = vpop.f32.mrf.mxu0
    %v2121 = vadd.f32 %v2006, %v2120
    %v2122 = vpop.f32.mrf.mxu0
    %2123 = vmatprep.mubr.f32.mxu0 0.0
    %v2124 = vand.u32 %v1559, 4294901760
    %2125 = vmatmul.mubr.f32.gmra.mxu0 %v2124
    %v2126 = vpop.f32.mrf.mxu0
    %v2127 = vadd.f32 %v2014, %v2126
    %v2128 = vpop.f32.mrf.mxu0
    %2129 = vdwg.mxu0
    %2130 = vmatprep.subr.mxu0 0.0
    %2131 = vmatpush1.msra.mxu0 0.0
    %2132 = vmatprep.subr.mxu0 0.0
    %2133 = vmatpush1.msra.mxu0 0.0
    %2134 = vmatprep.subr.mxu0 0.0
    %2135 = vmatpush1.msra.mxu0 0.0
    %2136 = vmatprep.subr.mxu0 0.0
    %2137 = vmatpush1.msra.mxu0 0.0
    %2138 = vmatprep.subr.mxu0 0.0
    %2139 = vmatpush1.msra.mxu0 0.0
    %2140 = vmatprep.subr.mxu0 0.0
    %2141 = vmatpush1.msra.mxu0 0.0
    %2142 = vmatprep.subr.mxu0 0.0
    %2143 = vmatpush1.msra.mxu0 0.0
    %2144 = vmatprep.subr.mxu0 0.0
    %2145 = vmatpush1.msra.mxu0 0.0
    %2146 = vmatprep.subr.mxu0 0.0
    %v2147 = vand.u32 %v1548, 4294901760
    %2148 = vmatpush1.msra.mxu0 %v2147
    %2149 = vmatprep.subr.mxu0 0.0
    %v2150 = vand.u32 %v1547, 4294901760
    %2151 = vmatpush1.msra.mxu0 %v2150
    %2152 = vmatprep.subr.mxu0 0.0
    %v2153 = vand.u32 %v1546, 4294901760
    %2154 = vmatpush1.msra.mxu0 %v2153
    %2155 = vmatprep.subr.mxu0 0.0
    %v2156 = vand.u32 %v1545, 4294901760
    %2157 = vmatpush1.msra.mxu0 %v2156
    %2158 = vmatprep.subr.mxu0 0.0
    %v2159 = vand.u32 %v1544, 4294901760
    %2160 = vmatpush1.msra.mxu0 %v2159
    %2161 = vmatprep.subr.mxu0 0.0
    %v2162 = vand.u32 %v1543, 4294901760
    %2163 = vmatpush1.msra.mxu0 %v2162
    %2164 = vmatprep.subr.mxu0 0.0
    %v2165 = vand.u32 %v1542, 4294901760
    %2166 = vmatpush1.msra.mxu0 %v2165
    %2167 = vmatprep.subr.mxu0 0.0
    %v2168 = vand.u32 %v1541, 4294901760
    %2169 = vmatpush1.msra.mxu0 %v2168
    %2170 = vmatprep.subr.mxu0 0.0
    %2171 = vmatpush2.msra.mxu0 0.0
    %2172 = vmatprep.subr.mxu0 0.0
    %2173 = vmatpush2.msra.mxu0 0.0
    %2174 = vmatprep.subr.mxu0 0.0
    %2175 = vmatpush2.msra.mxu0 0.0
    %2176 = vmatprep.subr.mxu0 0.0
    %2177 = vmatpush2.msra.mxu0 0.0
    %2178 = vmatprep.subr.mxu0 0.0
    %2179 = vmatpush2.msra.mxu0 0.0
    %2180 = vmatprep.subr.mxu0 0.0
    %2181 = vmatpush2.msra.mxu0 0.0
    %2182 = vmatprep.subr.mxu0 0.0
    %2183 = vmatpush2.msra.mxu0 0.0
    %2184 = vmatprep.subr.mxu0 0.0
    %2185 = vmatpush2.msra.mxu0 0.0
    %2186 = vmatprep.subr.mxu0 0.0
    %2187 = vmatpush2.msra.mxu0 0.0
    %2188 = vmatprep.subr.mxu0 0.0
    %2189 = vmatpush2.msra.mxu0 0.0
    %2190 = vmatprep.subr.mxu0 0.0
    %2191 = vmatpush2.msra.mxu0 0.0
    %2192 = vmatprep.subr.mxu0 0.0
    %2193 = vmatpush2.msra.mxu0 0.0
    %2194 = vmatprep.subr.mxu0 0.0
    %2195 = vmatpush2.msra.mxu0 0.0
    %2196 = vmatprep.subr.mxu0 0.0
    %2197 = vmatpush2.msra.mxu0 0.0
    %2198 = vmatprep.subr.mxu0 0.0
    %2199 = vmatpush2.msra.mxu0 0.0
    %2200 = vmatprep.subr.mxu0 0.0
    %2201 = vmatpush2.msra.mxu0 0.0
    %2202 = vmatprep.mubr.f32.mxu0 0.0
    %v2203 = vand.u32 %v1550, 4294901760
    %2204 = vmatmul.mubr.f32.gmra.mxu0 %v2203
    %v2205 = vpop.f32.mrf.mxu0
    %v2206 = vadd.f32 %v2109, %v2205
    %v2207 = vpop.f32.mrf.mxu0
    %2208 = vmatprep.mubr.f32.mxu0 0.0
    %v2209 = vand.u32 %v1553, 4294901760
    %2210 = vmatmul.mubr.f32.gmra.mxu0 %v2209
    %v2211 = vpop.f32.mrf.mxu0
    %v2212 = vadd.f32 %v2115, %v2211
    %v2213 = vpop.f32.mrf.mxu0
    %2214 = vmatprep.mubr.f32.mxu0 0.0
    %v2215 = vand.u32 %v1556, 4294901760
    %2216 = vmatmul.mubr.f32.gmra.mxu0 %v2215
    %v2217 = vpop.f32.mrf.mxu0
    %v2218 = vadd.f32 %v2121, %v2217
    %v2219 = vpop.f32.mrf.mxu0
    %2220 = vmatprep.mubr.f32.mxu0 0.0
    %v2221 = vand.u32 %v1559, 4294901760
    %2222 = vmatmul.mubr.f32.gmra.mxu0 %v2221
    %v2223 = vpop.f32.mrf.mxu0
    %v2224 = vadd.f32 %v2127, %v2223
    %v2225 = vpop.f32.mrf.mxu0
    %2226 = vdwg.mxu0
    %v2227 = vadd.f32 %v1519, %v2206
    %v2228 = vadd.f32 %v1525, %v2212
    %v2229 = vadd.f32 %v1531, %v2218
    %v2230 = vadd.f32 %v1537, %v2224
    %v2231 = vld [vmem:[%s2] sm:$0x1]
    %v2233 = vlaneseq
    %v2234 = vshrl.u32 %v2233, 7
    %v2235 = vsub.s32 0, %v2234
    %v2236 = vrot.slane %v2231, %v2235
    %v2238 = vadd.f32 %v2227, %v2236
    %v2239 = vadd.f32 %v2228, %v2236
    %v2240 = vadd.f32 %v2229, %v2236
    %v2241 = vadd.f32 %v2230, %v2236
    %v2242 = vsel %vm187, %v2238, 0.0
    %v2243 = vsel %vm187, %v2239, 0.0
    %v2244 = vadd.f32 %v2242, %v2243
    %v2245 = vsel %vm187, %v2240, 0.0
    %v2246 = vadd.f32 %v2244, %v2245
    %v2247 = vsel %vm187, %v2241, 0.0
    %v2248 = vadd.f32 %v2246, %v2247
    %v2249 = vrot.slane %v2248, 4
    %v2250 = vadd.f32 %v2248, %v2249
    %v2251 = vrot.slane %v2250, 2
    %v2252 = vadd.f32 %v2250, %v2251
    %v2253 = vrot.slane %v2252, 1
    %v2254 = vadd.f32 %v2252, %v2253
    %v2255 = vld [vmem:[%s9] sm:$0xff]
    %v2256 = vld [vmem:[%s9 + $0x8] sm:$0xff]
    %v2257 = vld [vmem:[%s9 + $0x10] sm:$0xff]
    %v2258 = vld [vmem:[%s9 + $0x18] sm:$0xff]
    %v2259 = vld [vmem:[%s9 + $0x20] sm:$0xff]
    %v2260 = vld [vmem:[%s9 + $0x28] sm:$0xff]
    %v2261 = vld [vmem:[%s9 + $0x30] sm:$0xff]
    %v2262 = vld [vmem:[%s9 + $0x38] sm:$0xff]
    %v2264 = vsel %vm187, %v2254, 0
    %2266 = vmatprep.subr.mxu0 0.0
    %2267 = vmatpush1.msra.mxu0 0.0
    %2268 = vmatprep.subr.mxu0 0.0
    %2269 = vmatpush1.msra.mxu0 0.0
    %2270 = vmatprep.subr.mxu0 0.0
    %2271 = vmatpush1.msra.mxu0 0.0
    %2272 = vmatprep.subr.mxu0 0.0
    %2273 = vmatpush1.msra.mxu0 0.0
    %2274 = vmatprep.subr.mxu0 0.0
    %2275 = vmatpush1.msra.mxu0 0.0
    %2276 = vmatprep.subr.mxu0 0.0
    %2277 = vmatpush1.msra.mxu0 0.0
    %2278 = vmatprep.subr.mxu0 0.0
    %2279 = vmatpush1.msra.mxu0 0.0
    %2280 = vmatprep.subr.mxu0 0.0
    %2281 = vmatpush1.msra.mxu0 0.0
    %2282 = vmatprep.subr.mxu0 0.0
    %v2283 = vand.u32 %v2262, 4294901760
    %2284 = vmatpush1.msra.mxu0 %v2283
    %2285 = vmatprep.subr.mxu0 0.0
    %v2286 = vand.u32 %v2261, 4294901760
    %2287 = vmatpush1.msra.mxu0 %v2286
    %2288 = vmatprep.subr.mxu0 0.0
    %v2289 = vand.u32 %v2260, 4294901760
    %2290 = vmatpush1.msra.mxu0 %v2289
    %2291 = vmatprep.subr.mxu0 0.0
    %v2292 = vand.u32 %v2259, 4294901760
    %2293 = vmatpush1.msra.mxu0 %v2292
    %2294 = vmatprep.subr.mxu0 0.0
    %v2295 = vand.u32 %v2258, 4294901760
    %2296 = vmatpush1.msra.mxu0 %v2295
    %2297 = vmatprep.subr.mxu0 0.0
    %v2298 = vand.u32 %v2257, 4294901760
    %2299 = vmatpush1.msra.mxu0 %v2298
    %2300 = vmatprep.subr.mxu0 0.0
    %v2301 = vand.u32 %v2256, 4294901760
    %2302 = vmatpush1.msra.mxu0 %v2301
    %2303 = vmatprep.subr.mxu0 0.0
    %v2304 = vand.u32 %v2255, 4294901760
    %2305 = vmatpush1.msra.mxu0 %v2304
    %2306 = vmatprep.subr.mxu0 0.0
    %2307 = vmatpush2.msra.mxu0 0.0
    %2308 = vmatprep.subr.mxu0 0.0
    %2309 = vmatpush2.msra.mxu0 0.0
    %2310 = vmatprep.subr.mxu0 0.0
    %2311 = vmatpush2.msra.mxu0 0.0
    %2312 = vmatprep.subr.mxu0 0.0
    %2313 = vmatpush2.msra.mxu0 0.0
    %2314 = vmatprep.subr.mxu0 0.0
    %2315 = vmatpush2.msra.mxu0 0.0
    %2316 = vmatprep.subr.mxu0 0.0
    %2317 = vmatpush2.msra.mxu0 0.0
    %2318 = vmatprep.subr.mxu0 0.0
    %2319 = vmatpush2.msra.mxu0 0.0
    %2320 = vmatprep.subr.mxu0 0.0
    %2321 = vmatpush2.msra.mxu0 0.0
    %2322 = vmatprep.subr.mxu0 0.0
    %2323 = vmatpush2.msra.mxu0 0.0
    %2324 = vmatprep.subr.mxu0 0.0
    %2325 = vmatpush2.msra.mxu0 0.0
    %2326 = vmatprep.subr.mxu0 0.0
    %2327 = vmatpush2.msra.mxu0 0.0
    %2328 = vmatprep.subr.mxu0 0.0
    %2329 = vmatpush2.msra.mxu0 0.0
    %2330 = vmatprep.subr.mxu0 0.0
    %2331 = vmatpush2.msra.mxu0 0.0
    %2332 = vmatprep.subr.mxu0 0.0
    %2333 = vmatpush2.msra.mxu0 0.0
    %2334 = vmatprep.subr.mxu0 0.0
    %2335 = vmatpush2.msra.mxu0 0.0
    %2336 = vmatprep.subr.mxu0 0.0
    %2337 = vmatpush2.msra.mxu0 0.0
    %2338 = vmatprep.mubr.f32.mxu0 0.0
    %v2339 = vand.u32 %v2264, 4294901760
    %v2340 = vsub.f32 %v2264, %v2339
    %v2341 = vand.u32 %v2340, 4294901760
    %v2342 = vsub.f32 %v2340, %v2341
    %v2343 = vand.u32 %v2342, 4294901760
    %2344 = vmatmul.mubr.f32.gmra.mxu0 %v2343
    %v2345 = vpop.f32.mrf.mxu0
    %v2346 = vadd.f32 0.0, %v2345
    %v2347 = vpop.f32.mrf.mxu0
    %2348 = vdwg.mxu0
    %2349 = vmatprep.subr.mxu0 0.0
    %2350 = vmatpush1.msra.mxu0 0.0
    %2351 = vmatprep.subr.mxu0 0.0
    %2352 = vmatpush1.msra.mxu0 0.0
    %2353 = vmatprep.subr.mxu0 0.0
    %2354 = vmatpush1.msra.mxu0 0.0
    %2355 = vmatprep.subr.mxu0 0.0
    %2356 = vmatpush1.msra.mxu0 0.0
    %2357 = vmatprep.subr.mxu0 0.0
    %2358 = vmatpush1.msra.mxu0 0.0
    %2359 = vmatprep.subr.mxu0 0.0
    %2360 = vmatpush1.msra.mxu0 0.0
    %2361 = vmatprep.subr.mxu0 0.0
    %2362 = vmatpush1.msra.mxu0 0.0
    %2363 = vmatprep.subr.mxu0 0.0
    %2364 = vmatpush1.msra.mxu0 0.0
    %2365 = vmatprep.subr.mxu0 0.0
    %v2366 = vand.u32 %v2262, 4294901760
    %v2367 = vsub.f32 %v2262, %v2366
    %v2368 = vand.u32 %v2367, 4294901760
    %v2369 = vsub.f32 %v2367, %v2368
    %v2370 = vand.u32 %v2369, 4294901760
    %2371 = vmatpush1.msra.mxu0 %v2370
    %2372 = vmatprep.subr.mxu0 0.0
    %v2373 = vand.u32 %v2261, 4294901760
    %v2374 = vsub.f32 %v2261, %v2373
    %v2375 = vand.u32 %v2374, 4294901760
    %v2376 = vsub.f32 %v2374, %v2375
    %v2377 = vand.u32 %v2376, 4294901760
    %2378 = vmatpush1.msra.mxu0 %v2377
    %2379 = vmatprep.subr.mxu0 0.0
    %v2380 = vand.u32 %v2260, 4294901760
    %v2381 = vsub.f32 %v2260, %v2380
    %v2382 = vand.u32 %v2381, 4294901760
    %v2383 = vsub.f32 %v2381, %v2382
    %v2384 = vand.u32 %v2383, 4294901760
    %2385 = vmatpush1.msra.mxu0 %v2384
    %2386 = vmatprep.subr.mxu0 0.0
    %v2387 = vand.u32 %v2259, 4294901760
    %v2388 = vsub.f32 %v2259, %v2387
    %v2389 = vand.u32 %v2388, 4294901760
    %v2390 = vsub.f32 %v2388, %v2389
    %v2391 = vand.u32 %v2390, 4294901760
    %2392 = vmatpush1.msra.mxu0 %v2391
    %2393 = vmatprep.subr.mxu0 0.0
    %v2394 = vand.u32 %v2258, 4294901760
    %v2395 = vsub.f32 %v2258, %v2394
    %v2396 = vand.u32 %v2395, 4294901760
    %v2397 = vsub.f32 %v2395, %v2396
    %v2398 = vand.u32 %v2397, 4294901760
    %2399 = vmatpush1.msra.mxu0 %v2398
    %2400 = vmatprep.subr.mxu0 0.0
    %v2401 = vand.u32 %v2257, 4294901760
    %v2402 = vsub.f32 %v2257, %v2401
    %v2403 = vand.u32 %v2402, 4294901760
    %v2404 = vsub.f32 %v2402, %v2403
    %v2405 = vand.u32 %v2404, 4294901760
    %2406 = vmatpush1.msra.mxu0 %v2405
    %2407 = vmatprep.subr.mxu0 0.0
    %v2408 = vand.u32 %v2256, 4294901760
    %v2409 = vsub.f32 %v2256, %v2408
    %v2410 = vand.u32 %v2409, 4294901760
    %v2411 = vsub.f32 %v2409, %v2410
    %v2412 = vand.u32 %v2411, 4294901760
    %2413 = vmatpush1.msra.mxu0 %v2412
    %2414 = vmatprep.subr.mxu0 0.0
    %v2415 = vand.u32 %v2255, 4294901760
    %v2416 = vsub.f32 %v2255, %v2415
    %v2417 = vand.u32 %v2416, 4294901760
    %v2418 = vsub.f32 %v2416, %v2417
    %v2419 = vand.u32 %v2418, 4294901760
    %2420 = vmatpush1.msra.mxu0 %v2419
    %2421 = vmatprep.subr.mxu0 0.0
    %2422 = vmatpush2.msra.mxu0 0.0
    %2423 = vmatprep.subr.mxu0 0.0
    %2424 = vmatpush2.msra.mxu0 0.0
    %2425 = vmatprep.subr.mxu0 0.0
    %2426 = vmatpush2.msra.mxu0 0.0
    %2427 = vmatprep.subr.mxu0 0.0
    %2428 = vmatpush2.msra.mxu0 0.0
    %2429 = vmatprep.subr.mxu0 0.0
    %2430 = vmatpush2.msra.mxu0 0.0
    %2431 = vmatprep.subr.mxu0 0.0
    %2432 = vmatpush2.msra.mxu0 0.0
    %2433 = vmatprep.subr.mxu0 0.0
    %2434 = vmatpush2.msra.mxu0 0.0
    %2435 = vmatprep.subr.mxu0 0.0
    %2436 = vmatpush2.msra.mxu0 0.0
    %2437 = vmatprep.subr.mxu0 0.0
    %2438 = vmatpush2.msra.mxu0 0.0
    %2439 = vmatprep.subr.mxu0 0.0
    %2440 = vmatpush2.msra.mxu0 0.0
    %2441 = vmatprep.subr.mxu0 0.0
    %2442 = vmatpush2.msra.mxu0 0.0
    %2443 = vmatprep.subr.mxu0 0.0
    %2444 = vmatpush2.msra.mxu0 0.0
    %2445 = vmatprep.subr.mxu0 0.0
    %2446 = vmatpush2.msra.mxu0 0.0
    %2447 = vmatprep.subr.mxu0 0.0
    %2448 = vmatpush2.msra.mxu0 0.0
    %2449 = vmatprep.subr.mxu0 0.0
    %2450 = vmatpush2.msra.mxu0 0.0
    %2451 = vmatprep.subr.mxu0 0.0
    %2452 = vmatpush2.msra.mxu0 0.0
    %2453 = vmatprep.mubr.f32.mxu0 0.0
    %v2454 = vand.u32 %v2264, 4294901760
    %2455 = vmatmul.mubr.f32.gmra.mxu0 %v2454
    %v2456 = vpop.f32.mrf.mxu0
    %v2457 = vadd.f32 %v2346, %v2456
    %v2458 = vpop.f32.mrf.mxu0
    %2459 = vdwg.mxu0
    %2460 = vmatprep.subr.mxu0 0.0
    %2461 = vmatpush1.msra.mxu0 0.0
    %2462 = vmatprep.subr.mxu0 0.0
    %2463 = vmatpush1.msra.mxu0 0.0
    %2464 = vmatprep.subr.mxu0 0.0
    %2465 = vmatpush1.msra.mxu0 0.0
    %2466 = vmatprep.subr.mxu0 0.0
    %2467 = vmatpush1.msra.mxu0 0.0
    %2468 = vmatprep.subr.mxu0 0.0
    %2469 = vmatpush1.msra.mxu0 0.0
    %2470 = vmatprep.subr.mxu0 0.0
    %2471 = vmatpush1.msra.mxu0 0.0
    %2472 = vmatprep.subr.mxu0 0.0
    %2473 = vmatpush1.msra.mxu0 0.0
    %2474 = vmatprep.subr.mxu0 0.0
    %2475 = vmatpush1.msra.mxu0 0.0
    %2476 = vmatprep.subr.mxu0 0.0
    %v2477 = vand.u32 %v2262, 4294901760
    %v2478 = vsub.f32 %v2262, %v2477
    %2479 = vmatpush1.msra.mxu0 %v2478
    %2480 = vmatprep.subr.mxu0 0.0
    %v2481 = vand.u32 %v2261, 4294901760
    %v2482 = vsub.f32 %v2261, %v2481
    %2483 = vmatpush1.msra.mxu0 %v2482
    %2484 = vmatprep.subr.mxu0 0.0
    %v2485 = vand.u32 %v2260, 4294901760
    %v2486 = vsub.f32 %v2260, %v2485
    %2487 = vmatpush1.msra.mxu0 %v2486
    %2488 = vmatprep.subr.mxu0 0.0
    %v2489 = vand.u32 %v2259, 4294901760
    %v2490 = vsub.f32 %v2259, %v2489
    %2491 = vmatpush1.msra.mxu0 %v2490
    %2492 = vmatprep.subr.mxu0 0.0
    %v2493 = vand.u32 %v2258, 4294901760
    %v2494 = vsub.f32 %v2258, %v2493
    %2495 = vmatpush1.msra.mxu0 %v2494
    %2496 = vmatprep.subr.mxu0 0.0
    %v2497 = vand.u32 %v2257, 4294901760
    %v2498 = vsub.f32 %v2257, %v2497
    %2499 = vmatpush1.msra.mxu0 %v2498
    %2500 = vmatprep.subr.mxu0 0.0
    %v2501 = vand.u32 %v2256, 4294901760
    %v2502 = vsub.f32 %v2256, %v2501
    %2503 = vmatpush1.msra.mxu0 %v2502
    %2504 = vmatprep.subr.mxu0 0.0
    %v2505 = vand.u32 %v2255, 4294901760
    %v2506 = vsub.f32 %v2255, %v2505
    %2507 = vmatpush1.msra.mxu0 %v2506
    %2508 = vmatprep.subr.mxu0 0.0
    %2509 = vmatpush2.msra.mxu0 0.0
    %2510 = vmatprep.subr.mxu0 0.0
    %2511 = vmatpush2.msra.mxu0 0.0
    %2512 = vmatprep.subr.mxu0 0.0
    %2513 = vmatpush2.msra.mxu0 0.0
    %2514 = vmatprep.subr.mxu0 0.0
    %2515 = vmatpush2.msra.mxu0 0.0
    %2516 = vmatprep.subr.mxu0 0.0
    %2517 = vmatpush2.msra.mxu0 0.0
    %2518 = vmatprep.subr.mxu0 0.0
    %2519 = vmatpush2.msra.mxu0 0.0
    %2520 = vmatprep.subr.mxu0 0.0
    %2521 = vmatpush2.msra.mxu0 0.0
    %2522 = vmatprep.subr.mxu0 0.0
    %2523 = vmatpush2.msra.mxu0 0.0
    %2524 = vmatprep.subr.mxu0 0.0
    %2525 = vmatpush2.msra.mxu0 0.0
    %2526 = vmatprep.subr.mxu0 0.0
    %2527 = vmatpush2.msra.mxu0 0.0
    %2528 = vmatprep.subr.mxu0 0.0
    %2529 = vmatpush2.msra.mxu0 0.0
    %2530 = vmatprep.subr.mxu0 0.0
    %2531 = vmatpush2.msra.mxu0 0.0
    %2532 = vmatprep.subr.mxu0 0.0
    %2533 = vmatpush2.msra.mxu0 0.0
    %2534 = vmatprep.subr.mxu0 0.0
    %2535 = vmatpush2.msra.mxu0 0.0
    %2536 = vmatprep.subr.mxu0 0.0
    %2537 = vmatpush2.msra.mxu0 0.0
    %2538 = vmatprep.subr.mxu0 0.0
    %2539 = vmatpush2.msra.mxu0 0.0
    %2540 = vmatprep.mubr.f32.mxu0 0.0
    %v2541 = vand.u32 %v2264, 4294901760
    %v2542 = vsub.f32 %v2264, %v2541
    %2543 = vmatmul.mubr.f32.gmra.mxu0 %v2542
    %v2544 = vpop.f32.mrf.mxu0
    %v2545 = vadd.f32 %v2457, %v2544
    %v2546 = vpop.f32.mrf.mxu0
    %2547 = vdwg.mxu0
    %2548 = vmatprep.subr.mxu0 0.0
    %2549 = vmatpush1.msra.mxu0 0.0
    %2550 = vmatprep.subr.mxu0 0.0
    %2551 = vmatpush1.msra.mxu0 0.0
    %2552 = vmatprep.subr.mxu0 0.0
    %2553 = vmatpush1.msra.mxu0 0.0
    %2554 = vmatprep.subr.mxu0 0.0
    %2555 = vmatpush1.msra.mxu0 0.0
    %2556 = vmatprep.subr.mxu0 0.0
    %2557 = vmatpush1.msra.mxu0 0.0
    %2558 = vmatprep.subr.mxu0 0.0
    %2559 = vmatpush1.msra.mxu0 0.0
    %2560 = vmatprep.subr.mxu0 0.0
    %2561 = vmatpush1.msra.mxu0 0.0
    %2562 = vmatprep.subr.mxu0 0.0
    %2563 = vmatpush1.msra.mxu0 0.0
    %2564 = vmatprep.subr.mxu0 0.0
    %v2565 = vand.u32 %v2262, 4294901760
    %2566 = vmatpush1.msra.mxu0 %v2565
    %2567 = vmatprep.subr.mxu0 0.0
    %v2568 = vand.u32 %v2261, 4294901760
    %2569 = vmatpush1.msra.mxu0 %v2568
    %2570 = vmatprep.subr.mxu0 0.0
    %v2571 = vand.u32 %v2260, 4294901760
    %2572 = vmatpush1.msra.mxu0 %v2571
    %2573 = vmatprep.subr.mxu0 0.0
    %v2574 = vand.u32 %v2259, 4294901760
    %2575 = vmatpush1.msra.mxu0 %v2574
    %2576 = vmatprep.subr.mxu0 0.0
    %v2577 = vand.u32 %v2258, 4294901760
    %2578 = vmatpush1.msra.mxu0 %v2577
    %2579 = vmatprep.subr.mxu0 0.0
    %v2580 = vand.u32 %v2257, 4294901760
    %2581 = vmatpush1.msra.mxu0 %v2580
    %2582 = vmatprep.subr.mxu0 0.0
    %v2583 = vand.u32 %v2256, 4294901760
    %2584 = vmatpush1.msra.mxu0 %v2583
    %2585 = vmatprep.subr.mxu0 0.0
    %v2586 = vand.u32 %v2255, 4294901760
    %2587 = vmatpush1.msra.mxu0 %v2586
    %2588 = vmatprep.subr.mxu0 0.0
    %2589 = vmatpush2.msra.mxu0 0.0
    %2590 = vmatprep.subr.mxu0 0.0
    %2591 = vmatpush2.msra.mxu0 0.0
    %2592 = vmatprep.subr.mxu0 0.0
    %2593 = vmatpush2.msra.mxu0 0.0
    %2594 = vmatprep.subr.mxu0 0.0
    %2595 = vmatpush2.msra.mxu0 0.0
    %2596 = vmatprep.subr.mxu0 0.0
    %2597 = vmatpush2.msra.mxu0 0.0
    %2598 = vmatprep.subr.mxu0 0.0
    %2599 = vmatpush2.msra.mxu0 0.0
    %2600 = vmatprep.subr.mxu0 0.0
    %2601 = vmatpush2.msra.mxu0 0.0
    %2602 = vmatprep.subr.mxu0 0.0
    %2603 = vmatpush2.msra.mxu0 0.0
    %2604 = vmatprep.subr.mxu0 0.0
    %2605 = vmatpush2.msra.mxu0 0.0
    %2606 = vmatprep.subr.mxu0 0.0
    %2607 = vmatpush2.msra.mxu0 0.0
    %2608 = vmatprep.subr.mxu0 0.0
    %2609 = vmatpush2.msra.mxu0 0.0
    %2610 = vmatprep.subr.mxu0 0.0
    %2611 = vmatpush2.msra.mxu0 0.0
    %2612 = vmatprep.subr.mxu0 0.0
    %2613 = vmatpush2.msra.mxu0 0.0
    %2614 = vmatprep.subr.mxu0 0.0
    %2615 = vmatpush2.msra.mxu0 0.0
    %2616 = vmatprep.subr.mxu0 0.0
    %2617 = vmatpush2.msra.mxu0 0.0
    %2618 = vmatprep.subr.mxu0 0.0
    %2619 = vmatpush2.msra.mxu0 0.0
    %2620 = vmatprep.mubr.f32.mxu0 0.0
    %v2621 = vand.u32 %v2264, 4294901760
    %v2622 = vsub.f32 %v2264, %v2621
    %v2623 = vand.u32 %v2622, 4294901760
    %2624 = vmatmul.mubr.f32.gmra.mxu0 %v2623
    %v2625 = vpop.f32.mrf.mxu0
    %v2626 = vadd.f32 %v2545, %v2625
    %v2627 = vpop.f32.mrf.mxu0
    %2628 = vdwg.mxu0
    %2629 = vmatprep.subr.mxu0 0.0
    %2630 = vmatpush1.msra.mxu0 0.0
    %2631 = vmatprep.subr.mxu0 0.0
    %2632 = vmatpush1.msra.mxu0 0.0
    %2633 = vmatprep.subr.mxu0 0.0
    %2634 = vmatpush1.msra.mxu0 0.0
    %2635 = vmatprep.subr.mxu0 0.0
    %2636 = vmatpush1.msra.mxu0 0.0
    %2637 = vmatprep.subr.mxu0 0.0
    %2638 = vmatpush1.msra.mxu0 0.0
    %2639 = vmatprep.subr.mxu0 0.0
    %2640 = vmatpush1.msra.mxu0 0.0
    %2641 = vmatprep.subr.mxu0 0.0
    %2642 = vmatpush1.msra.mxu0 0.0
    %2643 = vmatprep.subr.mxu0 0.0
    %2644 = vmatpush1.msra.mxu0 0.0
    %2645 = vmatprep.subr.mxu0 0.0
    %v2646 = vand.u32 %v2262, 4294901760
    %v2647 = vsub.f32 %v2262, %v2646
    %v2648 = vand.u32 %v2647, 4294901760
    %2649 = vmatpush1.msra.mxu0 %v2648
    %2650 = vmatprep.subr.mxu0 0.0
    %v2651 = vand.u32 %v2261, 4294901760
    %v2652 = vsub.f32 %v2261, %v2651
    %v2653 = vand.u32 %v2652, 4294901760
    %2654 = vmatpush1.msra.mxu0 %v2653
    %2655 = vmatprep.subr.mxu0 0.0
    %v2656 = vand.u32 %v2260, 4294901760
    %v2657 = vsub.f32 %v2260, %v2656
    %v2658 = vand.u32 %v2657, 4294901760
    %2659 = vmatpush1.msra.mxu0 %v2658
    %2660 = vmatprep.subr.mxu0 0.0
    %v2661 = vand.u32 %v2259, 4294901760
    %v2662 = vsub.f32 %v2259, %v2661
    %v2663 = vand.u32 %v2662, 4294901760
    %2664 = vmatpush1.msra.mxu0 %v2663
    %2665 = vmatprep.subr.mxu0 0.0
    %v2666 = vand.u32 %v2258, 4294901760
    %v2667 = vsub.f32 %v2258, %v2666
    %v2668 = vand.u32 %v2667, 4294901760
    %2669 = vmatpush1.msra.mxu0 %v2668
    %2670 = vmatprep.subr.mxu0 0.0
    %v2671 = vand.u32 %v2257, 4294901760
    %v2672 = vsub.f32 %v2257, %v2671
    %v2673 = vand.u32 %v2672, 4294901760
    %2674 = vmatpush1.msra.mxu0 %v2673
    %2675 = vmatprep.subr.mxu0 0.0
    %v2676 = vand.u32 %v2256, 4294901760
    %v2677 = vsub.f32 %v2256, %v2676
    %v2678 = vand.u32 %v2677, 4294901760
    %2679 = vmatpush1.msra.mxu0 %v2678
    %2680 = vmatprep.subr.mxu0 0.0
    %v2681 = vand.u32 %v2255, 4294901760
    %v2682 = vsub.f32 %v2255, %v2681
    %v2683 = vand.u32 %v2682, 4294901760
    %2684 = vmatpush1.msra.mxu0 %v2683
    %2685 = vmatprep.subr.mxu0 0.0
    %2686 = vmatpush2.msra.mxu0 0.0
    %2687 = vmatprep.subr.mxu0 0.0
    %2688 = vmatpush2.msra.mxu0 0.0
    %2689 = vmatprep.subr.mxu0 0.0
    %2690 = vmatpush2.msra.mxu0 0.0
    %2691 = vmatprep.subr.mxu0 0.0
    %2692 = vmatpush2.msra.mxu0 0.0
    %2693 = vmatprep.subr.mxu0 0.0
    %2694 = vmatpush2.msra.mxu0 0.0
    %2695 = vmatprep.subr.mxu0 0.0
    %2696 = vmatpush2.msra.mxu0 0.0
    %2697 = vmatprep.subr.mxu0 0.0
    %2698 = vmatpush2.msra.mxu0 0.0
    %2699 = vmatprep.subr.mxu0 0.0
    %2700 = vmatpush2.msra.mxu0 0.0
    %2701 = vmatprep.subr.mxu0 0.0
    %2702 = vmatpush2.msra.mxu0 0.0
    %2703 = vmatprep.subr.mxu0 0.0
    %2704 = vmatpush2.msra.mxu0 0.0
    %2705 = vmatprep.subr.mxu0 0.0
    %2706 = vmatpush2.msra.mxu0 0.0
    %2707 = vmatprep.subr.mxu0 0.0
    %2708 = vmatpush2.msra.mxu0 0.0
    %2709 = vmatprep.subr.mxu0 0.0
    %2710 = vmatpush2.msra.mxu0 0.0
    %2711 = vmatprep.subr.mxu0 0.0
    %2712 = vmatpush2.msra.mxu0 0.0
    %2713 = vmatprep.subr.mxu0 0.0
    %2714 = vmatpush2.msra.mxu0 0.0
    %2715 = vmatprep.subr.mxu0 0.0
    %2716 = vmatpush2.msra.mxu0 0.0
    %2717 = vmatprep.mubr.f32.mxu0 0.0
    %v2718 = vand.u32 %v2264, 4294901760
    %2719 = vmatmul.mubr.f32.gmra.mxu0 %v2718
    %v2720 = vpop.f32.mrf.mxu0
    %v2721 = vadd.f32 %v2626, %v2720
    %v2722 = vpop.f32.mrf.mxu0
    %2723 = vdwg.mxu0
    %2724 = vmatprep.subr.mxu0 0.0
    %2725 = vmatpush1.msra.mxu0 0.0
    %2726 = vmatprep.subr.mxu0 0.0
    %2727 = vmatpush1.msra.mxu0 0.0
    %2728 = vmatprep.subr.mxu0 0.0
    %2729 = vmatpush1.msra.mxu0 0.0
    %2730 = vmatprep.subr.mxu0 0.0
    %2731 = vmatpush1.msra.mxu0 0.0
    %2732 = vmatprep.subr.mxu0 0.0
    %2733 = vmatpush1.msra.mxu0 0.0
    %2734 = vmatprep.subr.mxu0 0.0
    %2735 = vmatpush1.msra.mxu0 0.0
    %2736 = vmatprep.subr.mxu0 0.0
    %2737 = vmatpush1.msra.mxu0 0.0
    %2738 = vmatprep.subr.mxu0 0.0
    %2739 = vmatpush1.msra.mxu0 0.0
    %2740 = vmatprep.subr.mxu0 0.0
    %v2741 = vand.u32 %v2262, 4294901760
    %2742 = vmatpush1.msra.mxu0 %v2741
    %2743 = vmatprep.subr.mxu0 0.0
    %v2744 = vand.u32 %v2261, 4294901760
    %2745 = vmatpush1.msra.mxu0 %v2744
    %2746 = vmatprep.subr.mxu0 0.0
    %v2747 = vand.u32 %v2260, 4294901760
    %2748 = vmatpush1.msra.mxu0 %v2747
    %2749 = vmatprep.subr.mxu0 0.0
    %v2750 = vand.u32 %v2259, 4294901760
    %2751 = vmatpush1.msra.mxu0 %v2750
    %2752 = vmatprep.subr.mxu0 0.0
    %v2753 = vand.u32 %v2258, 4294901760
    %2754 = vmatpush1.msra.mxu0 %v2753
    %2755 = vmatprep.subr.mxu0 0.0
    %v2756 = vand.u32 %v2257, 4294901760
    %2757 = vmatpush1.msra.mxu0 %v2756
    %2758 = vmatprep.subr.mxu0 0.0
    %v2759 = vand.u32 %v2256, 4294901760
    %2760 = vmatpush1.msra.mxu0 %v2759
    %2761 = vmatprep.subr.mxu0 0.0
    %v2762 = vand.u32 %v2255, 4294901760
    %2763 = vmatpush1.msra.mxu0 %v2762
    %2764 = vmatprep.subr.mxu0 0.0
    %2765 = vmatpush2.msra.mxu0 0.0
    %2766 = vmatprep.subr.mxu0 0.0
    %2767 = vmatpush2.msra.mxu0 0.0
    %2768 = vmatprep.subr.mxu0 0.0
    %2769 = vmatpush2.msra.mxu0 0.0
    %2770 = vmatprep.subr.mxu0 0.0
    %2771 = vmatpush2.msra.mxu0 0.0
    %2772 = vmatprep.subr.mxu0 0.0
    %2773 = vmatpush2.msra.mxu0 0.0
    %2774 = vmatprep.subr.mxu0 0.0
    %2775 = vmatpush2.msra.mxu0 0.0
    %2776 = vmatprep.subr.mxu0 0.0
    %2777 = vmatpush2.msra.mxu0 0.0
    %2778 = vmatprep.subr.mxu0 0.0
    %2779 = vmatpush2.msra.mxu0 0.0
    %2780 = vmatprep.subr.mxu0 0.0
    %2781 = vmatpush2.msra.mxu0 0.0
    %2782 = vmatprep.subr.mxu0 0.0
    %2783 = vmatpush2.msra.mxu0 0.0
    %2784 = vmatprep.subr.mxu0 0.0
    %2785 = vmatpush2.msra.mxu0 0.0
    %2786 = vmatprep.subr.mxu0 0.0
    %2787 = vmatpush2.msra.mxu0 0.0
    %2788 = vmatprep.subr.mxu0 0.0
    %2789 = vmatpush2.msra.mxu0 0.0
    %2790 = vmatprep.subr.mxu0 0.0
    %2791 = vmatpush2.msra.mxu0 0.0
    %2792 = vmatprep.subr.mxu0 0.0
    %2793 = vmatpush2.msra.mxu0 0.0
    %2794 = vmatprep.subr.mxu0 0.0
    %2795 = vmatpush2.msra.mxu0 0.0
    %2796 = vmatprep.mubr.f32.mxu0 0.0
    %v2797 = vand.u32 %v2264, 4294901760
    %2798 = vmatmul.mubr.f32.gmra.mxu0 %v2797
    %v2799 = vpop.f32.mrf.mxu0
    %v2800 = vadd.f32 %v2721, %v2799
    %v2801 = vpop.f32.mrf.mxu0
    %2802 = vdwg.mxu0
    %v2803 = vmul.f32 %v2238, %v2238
    %v2804 = vmul.f32 %v2239, %v2239
    %v2805 = vmul.f32 %v2240, %v2240
    %v2806 = vmul.f32 %v2241, %v2241
    %v2807 = vsel %vm187, %v2803, 0.0
    %v2808 = vsel %vm187, %v2804, 0.0
    %v2809 = vadd.f32 %v2807, %v2808
    %v2810 = vsel %vm187, %v2805, 0.0
    %v2811 = vadd.f32 %v2809, %v2810
    %v2812 = vsel %vm187, %v2806, 0.0
    %v2813 = vadd.f32 %v2811, %v2812
    %v2814 = vrot.slane %v2813, 4
    %v2815 = vadd.f32 %v2813, %v2814
    %v2816 = vrot.slane %v2815, 2
    %v2817 = vadd.f32 %v2815, %v2816
    %v2818 = vrot.slane %v2817, 1
    %v2819 = vadd.f32 %v2817, %v2818
    %v2821 = vsel %vm187, %v2819, 0
    %2823 = vmatprep.subr.mxu0 0.0
    %2824 = vmatpush1.msra.mxu0 0.0
    %2825 = vmatprep.subr.mxu0 0.0
    %2826 = vmatpush1.msra.mxu0 0.0
    %2827 = vmatprep.subr.mxu0 0.0
    %2828 = vmatpush1.msra.mxu0 0.0
    %2829 = vmatprep.subr.mxu0 0.0
    %2830 = vmatpush1.msra.mxu0 0.0
    %2831 = vmatprep.subr.mxu0 0.0
    %2832 = vmatpush1.msra.mxu0 0.0
    %2833 = vmatprep.subr.mxu0 0.0
    %2834 = vmatpush1.msra.mxu0 0.0
    %2835 = vmatprep.subr.mxu0 0.0
    %2836 = vmatpush1.msra.mxu0 0.0
    %2837 = vmatprep.subr.mxu0 0.0
    %2838 = vmatpush1.msra.mxu0 0.0
    %2839 = vmatprep.subr.mxu0 0.0
    %v2840 = vand.u32 %v2262, 4294901760
    %2841 = vmatpush1.msra.mxu0 %v2840
    %2842 = vmatprep.subr.mxu0 0.0
    %v2843 = vand.u32 %v2261, 4294901760
    %2844 = vmatpush1.msra.mxu0 %v2843
    %2845 = vmatprep.subr.mxu0 0.0
    %v2846 = vand.u32 %v2260, 4294901760
    %2847 = vmatpush1.msra.mxu0 %v2846
    %2848 = vmatprep.subr.mxu0 0.0
    %v2849 = vand.u32 %v2259, 4294901760
    %2850 = vmatpush1.msra.mxu0 %v2849
    %2851 = vmatprep.subr.mxu0 0.0
    %v2852 = vand.u32 %v2258, 4294901760
    %2853 = vmatpush1.msra.mxu0 %v2852
    %2854 = vmatprep.subr.mxu0 0.0
    %v2855 = vand.u32 %v2257, 4294901760
    %2856 = vmatpush1.msra.mxu0 %v2855
    %2857 = vmatprep.subr.mxu0 0.0
    %v2858 = vand.u32 %v2256, 4294901760
    %2859 = vmatpush1.msra.mxu0 %v2858
    %2860 = vmatprep.subr.mxu0 0.0
    %v2861 = vand.u32 %v2255, 4294901760
    %2862 = vmatpush1.msra.mxu0 %v2861
    %2863 = vmatprep.subr.mxu0 0.0
    %2864 = vmatpush2.msra.mxu0 0.0
    %2865 = vmatprep.subr.mxu0 0.0
    %2866 = vmatpush2.msra.mxu0 0.0
    %2867 = vmatprep.subr.mxu0 0.0
    %2868 = vmatpush2.msra.mxu0 0.0
    %2869 = vmatprep.subr.mxu0 0.0
    %2870 = vmatpush2.msra.mxu0 0.0
    %2871 = vmatprep.subr.mxu0 0.0
    %2872 = vmatpush2.msra.mxu0 0.0
    %2873 = vmatprep.subr.mxu0 0.0
    %2874 = vmatpush2.msra.mxu0 0.0
    %2875 = vmatprep.subr.mxu0 0.0
    %2876 = vmatpush2.msra.mxu0 0.0
    %2877 = vmatprep.subr.mxu0 0.0
    %2878 = vmatpush2.msra.mxu0 0.0
    %2879 = vmatprep.subr.mxu0 0.0
    %2880 = vmatpush2.msra.mxu0 0.0
    %2881 = vmatprep.subr.mxu0 0.0
    %2882 = vmatpush2.msra.mxu0 0.0
    %2883 = vmatprep.subr.mxu0 0.0
    %2884 = vmatpush2.msra.mxu0 0.0
    %2885 = vmatprep.subr.mxu0 0.0
    %2886 = vmatpush2.msra.mxu0 0.0
    %2887 = vmatprep.subr.mxu0 0.0
    %2888 = vmatpush2.msra.mxu0 0.0
    %2889 = vmatprep.subr.mxu0 0.0
    %2890 = vmatpush2.msra.mxu0 0.0
    %2891 = vmatprep.subr.mxu0 0.0
    %2892 = vmatpush2.msra.mxu0 0.0
    %2893 = vmatprep.subr.mxu0 0.0
    %2894 = vmatpush2.msra.mxu0 0.0
    %2895 = vmatprep.mubr.f32.mxu0 0.0
    %v2896 = vand.u32 %v2821, 4294901760
    %v2897 = vsub.f32 %v2821, %v2896
    %v2898 = vand.u32 %v2897, 4294901760
    %v2899 = vsub.f32 %v2897, %v2898
    %v2900 = vand.u32 %v2899, 4294901760
    %2901 = vmatmul.mubr.f32.gmra.mxu0 %v2900
    %v2902 = vpop.f32.mrf.mxu0
    %v2903 = vadd.f32 0.0, %v2902
    %v2904 = vpop.f32.mrf.mxu0
    %2905 = vdwg.mxu0
    %2906 = vmatprep.subr.mxu0 0.0
    %2907 = vmatpush1.msra.mxu0 0.0
    %2908 = vmatprep.subr.mxu0 0.0
    %2909 = vmatpush1.msra.mxu0 0.0
    %2910 = vmatprep.subr.mxu0 0.0
    %2911 = vmatpush1.msra.mxu0 0.0
    %2912 = vmatprep.subr.mxu0 0.0
    %2913 = vmatpush1.msra.mxu0 0.0
    %2914 = vmatprep.subr.mxu0 0.0
    %2915 = vmatpush1.msra.mxu0 0.0
    %2916 = vmatprep.subr.mxu0 0.0
    %2917 = vmatpush1.msra.mxu0 0.0
    %2918 = vmatprep.subr.mxu0 0.0
    %2919 = vmatpush1.msra.mxu0 0.0
    %2920 = vmatprep.subr.mxu0 0.0
    %2921 = vmatpush1.msra.mxu0 0.0
    %2922 = vmatprep.subr.mxu0 0.0
    %v2923 = vand.u32 %v2262, 4294901760
    %v2924 = vsub.f32 %v2262, %v2923
    %v2925 = vand.u32 %v2924, 4294901760
    %v2926 = vsub.f32 %v2924, %v2925
    %v2927 = vand.u32 %v2926, 4294901760
    %2928 = vmatpush1.msra.mxu0 %v2927
    %2929 = vmatprep.subr.mxu0 0.0
    %v2930 = vand.u32 %v2261, 4294901760
    %v2931 = vsub.f32 %v2261, %v2930
    %v2932 = vand.u32 %v2931, 4294901760
    %v2933 = vsub.f32 %v2931, %v2932
    %v2934 = vand.u32 %v2933, 4294901760
    %2935 = vmatpush1.msra.mxu0 %v2934
    %2936 = vmatprep.subr.mxu0 0.0
    %v2937 = vand.u32 %v2260, 4294901760
    %v2938 = vsub.f32 %v2260, %v2937
    %v2939 = vand.u32 %v2938, 4294901760
    %v2940 = vsub.f32 %v2938, %v2939
    %v2941 = vand.u32 %v2940, 4294901760
    %2942 = vmatpush1.msra.mxu0 %v2941
    %2943 = vmatprep.subr.mxu0 0.0
    %v2944 = vand.u32 %v2259, 4294901760
    %v2945 = vsub.f32 %v2259, %v2944
    %v2946 = vand.u32 %v2945, 4294901760
    %v2947 = vsub.f32 %v2945, %v2946
    %v2948 = vand.u32 %v2947, 4294901760
    %2949 = vmatpush1.msra.mxu0 %v2948
    %2950 = vmatprep.subr.mxu0 0.0
    %v2951 = vand.u32 %v2258, 4294901760
    %v2952 = vsub.f32 %v2258, %v2951
    %v2953 = vand.u32 %v2952, 4294901760
    %v2954 = vsub.f32 %v2952, %v2953
    %v2955 = vand.u32 %v2954, 4294901760
    %2956 = vmatpush1.msra.mxu0 %v2955
    %2957 = vmatprep.subr.mxu0 0.0
    %v2958 = vand.u32 %v2257, 4294901760
    %v2959 = vsub.f32 %v2257, %v2958
    %v2960 = vand.u32 %v2959, 4294901760
    %v2961 = vsub.f32 %v2959, %v2960
    %v2962 = vand.u32 %v2961, 4294901760
    %2963 = vmatpush1.msra.mxu0 %v2962
    %2964 = vmatprep.subr.mxu0 0.0
    %v2965 = vand.u32 %v2256, 4294901760
    %v2966 = vsub.f32 %v2256, %v2965
    %v2967 = vand.u32 %v2966, 4294901760
    %v2968 = vsub.f32 %v2966, %v2967
    %v2969 = vand.u32 %v2968, 4294901760
    %2970 = vmatpush1.msra.mxu0 %v2969
    %2971 = vmatprep.subr.mxu0 0.0
    %v2972 = vand.u32 %v2255, 4294901760
    %v2973 = vsub.f32 %v2255, %v2972
    %v2974 = vand.u32 %v2973, 4294901760
    %v2975 = vsub.f32 %v2973, %v2974
    %v2976 = vand.u32 %v2975, 4294901760
    %2977 = vmatpush1.msra.mxu0 %v2976
    %2978 = vmatprep.subr.mxu0 0.0
    %2979 = vmatpush2.msra.mxu0 0.0
    %2980 = vmatprep.subr.mxu0 0.0
    %2981 = vmatpush2.msra.mxu0 0.0
    %2982 = vmatprep.subr.mxu0 0.0
    %2983 = vmatpush2.msra.mxu0 0.0
    %2984 = vmatprep.subr.mxu0 0.0
    %2985 = vmatpush2.msra.mxu0 0.0
    %2986 = vmatprep.subr.mxu0 0.0
    %2987 = vmatpush2.msra.mxu0 0.0
    %2988 = vmatprep.subr.mxu0 0.0
    %2989 = vmatpush2.msra.mxu0 0.0
    %2990 = vmatprep.subr.mxu0 0.0
    %2991 = vmatpush2.msra.mxu0 0.0
    %2992 = vmatprep.subr.mxu0 0.0
    %2993 = vmatpush2.msra.mxu0 0.0
    %2994 = vmatprep.subr.mxu0 0.0
    %2995 = vmatpush2.msra.mxu0 0.0
    %2996 = vmatprep.subr.mxu0 0.0
    %2997 = vmatpush2.msra.mxu0 0.0
    %2998 = vmatprep.subr.mxu0 0.0
    %2999 = vmatpush2.msra.mxu0 0.0
    %3000 = vmatprep.subr.mxu0 0.0
    %3001 = vmatpush2.msra.mxu0 0.0
    %3002 = vmatprep.subr.mxu0 0.0
    %3003 = vmatpush2.msra.mxu0 0.0
    %3004 = vmatprep.subr.mxu0 0.0
    %3005 = vmatpush2.msra.mxu0 0.0
    %3006 = vmatprep.subr.mxu0 0.0
    %3007 = vmatpush2.msra.mxu0 0.0
    %3008 = vmatprep.subr.mxu0 0.0
    %3009 = vmatpush2.msra.mxu0 0.0
    %3010 = vmatprep.mubr.f32.mxu0 0.0
    %v3011 = vand.u32 %v2821, 4294901760
    %3012 = vmatmul.mubr.f32.gmra.mxu0 %v3011
    %v3013 = vpop.f32.mrf.mxu0
    %v3014 = vadd.f32 %v2903, %v3013
    %v3015 = vpop.f32.mrf.mxu0
    %3016 = vdwg.mxu0
    %3017 = vmatprep.subr.mxu0 0.0
    %3018 = vmatpush1.msra.mxu0 0.0
    %3019 = vmatprep.subr.mxu0 0.0
    %3020 = vmatpush1.msra.mxu0 0.0
    %3021 = vmatprep.subr.mxu0 0.0
    %3022 = vmatpush1.msra.mxu0 0.0
    %3023 = vmatprep.subr.mxu0 0.0
    %3024 = vmatpush1.msra.mxu0 0.0
    %3025 = vmatprep.subr.mxu0 0.0
    %3026 = vmatpush1.msra.mxu0 0.0
    %3027 = vmatprep.subr.mxu0 0.0
    %3028 = vmatpush1.msra.mxu0 0.0
    %3029 = vmatprep.subr.mxu0 0.0
    %3030 = vmatpush1.msra.mxu0 0.0
    %3031 = vmatprep.subr.mxu0 0.0
    %3032 = vmatpush1.msra.mxu0 0.0
    %3033 = vmatprep.subr.mxu0 0.0
    %v3034 = vand.u32 %v2262, 4294901760
    %v3035 = vsub.f32 %v2262, %v3034
    %3036 = vmatpush1.msra.mxu0 %v3035
    %3037 = vmatprep.subr.mxu0 0.0
    %v3038 = vand.u32 %v2261, 4294901760
    %v3039 = vsub.f32 %v2261, %v3038
    %3040 = vmatpush1.msra.mxu0 %v3039
    %3041 = vmatprep.subr.mxu0 0.0
    %v3042 = vand.u32 %v2260, 4294901760
    %v3043 = vsub.f32 %v2260, %v3042
    %3044 = vmatpush1.msra.mxu0 %v3043
    %3045 = vmatprep.subr.mxu0 0.0
    %v3046 = vand.u32 %v2259, 4294901760
    %v3047 = vsub.f32 %v2259, %v3046
    %3048 = vmatpush1.msra.mxu0 %v3047
    %3049 = vmatprep.subr.mxu0 0.0
    %v3050 = vand.u32 %v2258, 4294901760
    %v3051 = vsub.f32 %v2258, %v3050
    %3052 = vmatpush1.msra.mxu0 %v3051
    %3053 = vmatprep.subr.mxu0 0.0
    %v3054 = vand.u32 %v2257, 4294901760
    %v3055 = vsub.f32 %v2257, %v3054
    %3056 = vmatpush1.msra.mxu0 %v3055
    %3057 = vmatprep.subr.mxu0 0.0
    %v3058 = vand.u32 %v2256, 4294901760
    %v3059 = vsub.f32 %v2256, %v3058
    %3060 = vmatpush1.msra.mxu0 %v3059
    %3061 = vmatprep.subr.mxu0 0.0
    %v3062 = vand.u32 %v2255, 4294901760
    %v3063 = vsub.f32 %v2255, %v3062
    %3064 = vmatpush1.msra.mxu0 %v3063
    %3065 = vmatprep.subr.mxu0 0.0
    %3066 = vmatpush2.msra.mxu0 0.0
    %3067 = vmatprep.subr.mxu0 0.0
    %3068 = vmatpush2.msra.mxu0 0.0
    %3069 = vmatprep.subr.mxu0 0.0
    %3070 = vmatpush2.msra.mxu0 0.0
    %3071 = vmatprep.subr.mxu0 0.0
    %3072 = vmatpush2.msra.mxu0 0.0
    %3073 = vmatprep.subr.mxu0 0.0
    %3074 = vmatpush2.msra.mxu0 0.0
    %3075 = vmatprep.subr.mxu0 0.0
    %3076 = vmatpush2.msra.mxu0 0.0
    %3077 = vmatprep.subr.mxu0 0.0
    %3078 = vmatpush2.msra.mxu0 0.0
    %3079 = vmatprep.subr.mxu0 0.0
    %3080 = vmatpush2.msra.mxu0 0.0
    %3081 = vmatprep.subr.mxu0 0.0
    %3082 = vmatpush2.msra.mxu0 0.0
    %3083 = vmatprep.subr.mxu0 0.0
    %3084 = vmatpush2.msra.mxu0 0.0
    %3085 = vmatprep.subr.mxu0 0.0
    %3086 = vmatpush2.msra.mxu0 0.0
    %3087 = vmatprep.subr.mxu0 0.0
    %3088 = vmatpush2.msra.mxu0 0.0
    %3089 = vmatprep.subr.mxu0 0.0
    %3090 = vmatpush2.msra.mxu0 0.0
    %3091 = vmatprep.subr.mxu0 0.0
    %3092 = vmatpush2.msra.mxu0 0.0
    %3093 = vmatprep.subr.mxu0 0.0
    %3094 = vmatpush2.msra.mxu0 0.0
    %3095 = vmatprep.subr.mxu0 0.0
    %3096 = vmatpush2.msra.mxu0 0.0
    %3097 = vmatprep.mubr.f32.mxu0 0.0
    %v3098 = vand.u32 %v2821, 4294901760
    %v3099 = vsub.f32 %v2821, %v3098
    %3100 = vmatmul.mubr.f32.gmra.mxu0 %v3099
    %v3101 = vpop.f32.mrf.mxu0
    %v3102 = vadd.f32 %v3014, %v3101
    %v3103 = vpop.f32.mrf.mxu0
    %3104 = vdwg.mxu0
    %3105 = vmatprep.subr.mxu0 0.0
    %3106 = vmatpush1.msra.mxu0 0.0
    %3107 = vmatprep.subr.mxu0 0.0
    %3108 = vmatpush1.msra.mxu0 0.0
    %3109 = vmatprep.subr.mxu0 0.0
    %3110 = vmatpush1.msra.mxu0 0.0
    %3111 = vmatprep.subr.mxu0 0.0
    %3112 = vmatpush1.msra.mxu0 0.0
    %3113 = vmatprep.subr.mxu0 0.0
    %3114 = vmatpush1.msra.mxu0 0.0
    %3115 = vmatprep.subr.mxu0 0.0
    %3116 = vmatpush1.msra.mxu0 0.0
    %3117 = vmatprep.subr.mxu0 0.0
    %3118 = vmatpush1.msra.mxu0 0.0
    %3119 = vmatprep.subr.mxu0 0.0
    %3120 = vmatpush1.msra.mxu0 0.0
    %3121 = vmatprep.subr.mxu0 0.0
    %v3122 = vand.u32 %v2262, 4294901760
    %3123 = vmatpush1.msra.mxu0 %v3122
    %3124 = vmatprep.subr.mxu0 0.0
    %v3125 = vand.u32 %v2261, 4294901760
    %3126 = vmatpush1.msra.mxu0 %v3125
    %3127 = vmatprep.subr.mxu0 0.0
    %v3128 = vand.u32 %v2260, 4294901760
    %3129 = vmatpush1.msra.mxu0 %v3128
    %3130 = vmatprep.subr.mxu0 0.0
    %v3131 = vand.u32 %v2259, 4294901760
    %3132 = vmatpush1.msra.mxu0 %v3131
    %3133 = vmatprep.subr.mxu0 0.0
    %v3134 = vand.u32 %v2258, 4294901760
    %3135 = vmatpush1.msra.mxu0 %v3134
    %3136 = vmatprep.subr.mxu0 0.0
    %v3137 = vand.u32 %v2257, 4294901760
    %3138 = vmatpush1.msra.mxu0 %v3137
    %3139 = vmatprep.subr.mxu0 0.0
    %v3140 = vand.u32 %v2256, 4294901760
    %3141 = vmatpush1.msra.mxu0 %v3140
    %3142 = vmatprep.subr.mxu0 0.0
    %v3143 = vand.u32 %v2255, 4294901760
    %3144 = vmatpush1.msra.mxu0 %v3143
    %3145 = vmatprep.subr.mxu0 0.0
    %3146 = vmatpush2.msra.mxu0 0.0
    %3147 = vmatprep.subr.mxu0 0.0
    %3148 = vmatpush2.msra.mxu0 0.0
    %3149 = vmatprep.subr.mxu0 0.0
    %3150 = vmatpush2.msra.mxu0 0.0
    %3151 = vmatprep.subr.mxu0 0.0
    %3152 = vmatpush2.msra.mxu0 0.0
    %3153 = vmatprep.subr.mxu0 0.0
    %3154 = vmatpush2.msra.mxu0 0.0
    %3155 = vmatprep.subr.mxu0 0.0
    %3156 = vmatpush2.msra.mxu0 0.0
    %3157 = vmatprep.subr.mxu0 0.0
    %3158 = vmatpush2.msra.mxu0 0.0
    %3159 = vmatprep.subr.mxu0 0.0
    %3160 = vmatpush2.msra.mxu0 0.0
    %3161 = vmatprep.subr.mxu0 0.0
    %3162 = vmatpush2.msra.mxu0 0.0
    %3163 = vmatprep.subr.mxu0 0.0
    %3164 = vmatpush2.msra.mxu0 0.0
    %3165 = vmatprep.subr.mxu0 0.0
    %3166 = vmatpush2.msra.mxu0 0.0
    %3167 = vmatprep.subr.mxu0 0.0
    %3168 = vmatpush2.msra.mxu0 0.0
    %3169 = vmatprep.subr.mxu0 0.0
    %3170 = vmatpush2.msra.mxu0 0.0
    %3171 = vmatprep.subr.mxu0 0.0
    %3172 = vmatpush2.msra.mxu0 0.0
    %3173 = vmatprep.subr.mxu0 0.0
    %3174 = vmatpush2.msra.mxu0 0.0
    %3175 = vmatprep.subr.mxu0 0.0
    %3176 = vmatpush2.msra.mxu0 0.0
    %3177 = vmatprep.mubr.f32.mxu0 0.0
    %v3178 = vand.u32 %v2821, 4294901760
    %v3179 = vsub.f32 %v2821, %v3178
    %v3180 = vand.u32 %v3179, 4294901760
    %3181 = vmatmul.mubr.f32.gmra.mxu0 %v3180
    %v3182 = vpop.f32.mrf.mxu0
    %v3183 = vadd.f32 %v3102, %v3182
    %v3184 = vpop.f32.mrf.mxu0
    %3185 = vdwg.mxu0
    %3186 = vmatprep.subr.mxu0 0.0
    %3187 = vmatpush1.msra.mxu0 0.0
    %3188 = vmatprep.subr.mxu0 0.0
    %3189 = vmatpush1.msra.mxu0 0.0
    %3190 = vmatprep.subr.mxu0 0.0
    %3191 = vmatpush1.msra.mxu0 0.0
    %3192 = vmatprep.subr.mxu0 0.0
    %3193 = vmatpush1.msra.mxu0 0.0
    %3194 = vmatprep.subr.mxu0 0.0
    %3195 = vmatpush1.msra.mxu0 0.0
    %3196 = vmatprep.subr.mxu0 0.0
    %3197 = vmatpush1.msra.mxu0 0.0
    %3198 = vmatprep.subr.mxu0 0.0
    %3199 = vmatpush1.msra.mxu0 0.0
    %3200 = vmatprep.subr.mxu0 0.0
    %3201 = vmatpush1.msra.mxu0 0.0
    %3202 = vmatprep.subr.mxu0 0.0
    %v3203 = vand.u32 %v2262, 4294901760
    %v3204 = vsub.f32 %v2262, %v3203
    %v3205 = vand.u32 %v3204, 4294901760
    %3206 = vmatpush1.msra.mxu0 %v3205
    %3207 = vmatprep.subr.mxu0 0.0
    %v3208 = vand.u32 %v2261, 4294901760
    %v3209 = vsub.f32 %v2261, %v3208
    %v3210 = vand.u32 %v3209, 4294901760
    %3211 = vmatpush1.msra.mxu0 %v3210
    %3212 = vmatprep.subr.mxu0 0.0
    %v3213 = vand.u32 %v2260, 4294901760
    %v3214 = vsub.f32 %v2260, %v3213
    %v3215 = vand.u32 %v3214, 4294901760
    %3216 = vmatpush1.msra.mxu0 %v3215
    %3217 = vmatprep.subr.mxu0 0.0
    %v3218 = vand.u32 %v2259, 4294901760
    %v3219 = vsub.f32 %v2259, %v3218
    %v3220 = vand.u32 %v3219, 4294901760
    %3221 = vmatpush1.msra.mxu0 %v3220
    %3222 = vmatprep.subr.mxu0 0.0
    %v3223 = vand.u32 %v2258, 4294901760
    %v3224 = vsub.f32 %v2258, %v3223
    %v3225 = vand.u32 %v3224, 4294901760
    %3226 = vmatpush1.msra.mxu0 %v3225
    %3227 = vmatprep.subr.mxu0 0.0
    %v3228 = vand.u32 %v2257, 4294901760
    %v3229 = vsub.f32 %v2257, %v3228
    %v3230 = vand.u32 %v3229, 4294901760
    %3231 = vmatpush1.msra.mxu0 %v3230
    %3232 = vmatprep.subr.mxu0 0.0
    %v3233 = vand.u32 %v2256, 4294901760
    %v3234 = vsub.f32 %v2256, %v3233
    %v3235 = vand.u32 %v3234, 4294901760
    %3236 = vmatpush1.msra.mxu0 %v3235
    %3237 = vmatprep.subr.mxu0 0.0
    %v3238 = vand.u32 %v2255, 4294901760
    %v3239 = vsub.f32 %v2255, %v3238
    %v3240 = vand.u32 %v3239, 4294901760
    %3241 = vmatpush1.msra.mxu0 %v3240
    %3242 = vmatprep.subr.mxu0 0.0
    %3243 = vmatpush2.msra.mxu0 0.0
    %3244 = vmatprep.subr.mxu0 0.0
    %3245 = vmatpush2.msra.mxu0 0.0
    %3246 = vmatprep.subr.mxu0 0.0
    %3247 = vmatpush2.msra.mxu0 0.0
    %3248 = vmatprep.subr.mxu0 0.0
    %3249 = vmatpush2.msra.mxu0 0.0
    %3250 = vmatprep.subr.mxu0 0.0
    %3251 = vmatpush2.msra.mxu0 0.0
    %3252 = vmatprep.subr.mxu0 0.0
    %3253 = vmatpush2.msra.mxu0 0.0
    %3254 = vmatprep.subr.mxu0 0.0
    %3255 = vmatpush2.msra.mxu0 0.0
    %3256 = vmatprep.subr.mxu0 0.0
    %3257 = vmatpush2.msra.mxu0 0.0
    %3258 = vmatprep.subr.mxu0 0.0
    %3259 = vmatpush2.msra.mxu0 0.0
    %3260 = vmatprep.subr.mxu0 0.0
    %3261 = vmatpush2.msra.mxu0 0.0
    %3262 = vmatprep.subr.mxu0 0.0
    %3263 = vmatpush2.msra.mxu0 0.0
    %3264 = vmatprep.subr.mxu0 0.0
    %3265 = vmatpush2.msra.mxu0 0.0
    %3266 = vmatprep.subr.mxu0 0.0
    %3267 = vmatpush2.msra.mxu0 0.0
    %3268 = vmatprep.subr.mxu0 0.0
    %3269 = vmatpush2.msra.mxu0 0.0
    %3270 = vmatprep.subr.mxu0 0.0
    %3271 = vmatpush2.msra.mxu0 0.0
    %3272 = vmatprep.subr.mxu0 0.0
    %3273 = vmatpush2.msra.mxu0 0.0
    %3274 = vmatprep.mubr.f32.mxu0 0.0
    %v3275 = vand.u32 %v2821, 4294901760
    %3276 = vmatmul.mubr.f32.gmra.mxu0 %v3275
    %v3277 = vpop.f32.mrf.mxu0
    %v3278 = vadd.f32 %v3183, %v3277
    %v3279 = vpop.f32.mrf.mxu0
    %3280 = vdwg.mxu0
    %3281 = vmatprep.subr.mxu0 0.0
    %3282 = vmatpush1.msra.mxu0 0.0
    %3283 = vmatprep.subr.mxu0 0.0
    %3284 = vmatpush1.msra.mxu0 0.0
    %3285 = vmatprep.subr.mxu0 0.0
    %3286 = vmatpush1.msra.mxu0 0.0
    %3287 = vmatprep.subr.mxu0 0.0
    %3288 = vmatpush1.msra.mxu0 0.0
    %3289 = vmatprep.subr.mxu0 0.0
    %3290 = vmatpush1.msra.mxu0 0.0
    %3291 = vmatprep.subr.mxu0 0.0
    %3292 = vmatpush1.msra.mxu0 0.0
    %3293 = vmatprep.subr.mxu0 0.0
    %3294 = vmatpush1.msra.mxu0 0.0
    %3295 = vmatprep.subr.mxu0 0.0
    %3296 = vmatpush1.msra.mxu0 0.0
    %3297 = vmatprep.subr.mxu0 0.0
    %v3298 = vand.u32 %v2262, 4294901760
    %3299 = vmatpush1.msra.mxu0 %v3298
    %3300 = vmatprep.subr.mxu0 0.0
    %v3301 = vand.u32 %v2261, 4294901760
    %3302 = vmatpush1.msra.mxu0 %v3301
    %3303 = vmatprep.subr.mxu0 0.0
    %v3304 = vand.u32 %v2260, 4294901760
    %3305 = vmatpush1.msra.mxu0 %v3304
    %3306 = vmatprep.subr.mxu0 0.0
    %v3307 = vand.u32 %v2259, 4294901760
    %3308 = vmatpush1.msra.mxu0 %v3307
    %3309 = vmatprep.subr.mxu0 0.0
    %v3310 = vand.u32 %v2258, 4294901760
    %3311 = vmatpush1.msra.mxu0 %v3310
    %3312 = vmatprep.subr.mxu0 0.0
    %v3313 = vand.u32 %v2257, 4294901760
    %3314 = vmatpush1.msra.mxu0 %v3313
    %3315 = vmatprep.subr.mxu0 0.0
    %v3316 = vand.u32 %v2256, 4294901760
    %3317 = vmatpush1.msra.mxu0 %v3316
    %3318 = vmatprep.subr.mxu0 0.0
    %v3319 = vand.u32 %v2255, 4294901760
    %3320 = vmatpush1.msra.mxu0 %v3319
    %3321 = vmatprep.subr.mxu0 0.0
    %3322 = vmatpush2.msra.mxu0 0.0
    %3323 = vmatprep.subr.mxu0 0.0
    %3324 = vmatpush2.msra.mxu0 0.0
    %3325 = vmatprep.subr.mxu0 0.0
    %3326 = vmatpush2.msra.mxu0 0.0
    %3327 = vmatprep.subr.mxu0 0.0
    %3328 = vmatpush2.msra.mxu0 0.0
    %3329 = vmatprep.subr.mxu0 0.0
    %3330 = vmatpush2.msra.mxu0 0.0
    %3331 = vmatprep.subr.mxu0 0.0
    %3332 = vmatpush2.msra.mxu0 0.0
    %3333 = vmatprep.subr.mxu0 0.0
    %3334 = vmatpush2.msra.mxu0 0.0
    %3335 = vmatprep.subr.mxu0 0.0
    %3336 = vmatpush2.msra.mxu0 0.0
    %3337 = vmatprep.subr.mxu0 0.0
    %3338 = vmatpush2.msra.mxu0 0.0
    %3339 = vmatprep.subr.mxu0 0.0
    %3340 = vmatpush2.msra.mxu0 0.0
    %3341 = vmatprep.subr.mxu0 0.0
    %3342 = vmatpush2.msra.mxu0 0.0
    %3343 = vmatprep.subr.mxu0 0.0
    %3344 = vmatpush2.msra.mxu0 0.0
    %3345 = vmatprep.subr.mxu0 0.0
    %3346 = vmatpush2.msra.mxu0 0.0
    %3347 = vmatprep.subr.mxu0 0.0
    %3348 = vmatpush2.msra.mxu0 0.0
    %3349 = vmatprep.subr.mxu0 0.0
    %3350 = vmatpush2.msra.mxu0 0.0
    %3351 = vmatprep.subr.mxu0 0.0
    %3352 = vmatpush2.msra.mxu0 0.0
    %3353 = vmatprep.mubr.f32.mxu0 0.0
    %v3354 = vand.u32 %v2821, 4294901760
    %3355 = vmatmul.mubr.f32.gmra.mxu0 %v3354
    %v3356 = vpop.f32.mrf.mxu0
    %v3357 = vadd.f32 %v3278, %v3356
    %v3358 = vpop.f32.mrf.mxu0
    %3359 = vdwg.mxu0
    %v3360 = vmul.f32 %v2800, 0.001953125
    %v3361 = vmul.f32 %v3357, 0.001953125
    %v3362 = vmul.f32 %v3360, %v3360
    %v3363 = vsub.f32 %v3361, %v3362
    %v3364 = vld [vmem:[%s3] sm:$0x1]
    %v3365 = vadd.f32 %v3363, 1e-05
    %v3366 = vrsqrt.pop %v3365
    %v3367 = vmul.f32 %v3364, %v3366
    %v3368 = vld [vmem:[%s4] sm:$0x1]
    %v3369 = vmul.f32 %v3360, %v3367
    %v3370 = vsub.f32 %v3368, %v3369
    %v3371 = vld [vmem:[%s10] sm:$0xf]
    %vm3372 = vcmask 31744
    %v3374 = vsel %vm3372, %v3367, 0
    %vm3376 = vcmask 1043456
    %v3378 = vsel %vm3376, %v3371, 0
    %3380 = vmatprep.subr.mxu0 0.0
    %3381 = vmatpush1.msra.mxu0 0.0
    %3382 = vmatprep.subr.mxu0 0.0
    %3383 = vmatpush1.msra.mxu0 0.0
    %3384 = vmatprep.subr.mxu0 0.0
    %3385 = vmatpush1.msra.mxu0 0.0
    %3386 = vmatprep.subr.mxu0 0.0
    %3387 = vmatpush1.msra.mxu0 0.0
    %3388 = vmatprep.subr.mxu0 0.0
    %3389 = vmatpush1.msra.mxu0 0.0
    %3390 = vmatprep.subr.mxu0 0.0
    %3391 = vmatpush1.msra.mxu0 0.0
    %3392 = vmatprep.subr.mxu0 0.0
    %3393 = vmatpush1.msra.mxu0 0.0
    %3394 = vmatprep.subr.mxu0 0.0
    %3395 = vmatpush1.msra.mxu0 0.0
    %3396 = vmatprep.subr.mxu0 0.0
    %3397 = vmatpush1.msra.mxu0 0.0
    %3398 = vmatprep.subr.mxu0 0.0
    %3399 = vmatpush1.msra.mxu0 0.0
    %3400 = vmatprep.subr.mxu0 0.0
    %3401 = vmatpush1.msra.mxu0 0.0
    %3402 = vmatprep.subr.mxu0 0.0
    %3403 = vmatpush1.msra.mxu0 0.0
    %3404 = vmatprep.subr.mxu0 0.0
    %3405 = vmatpush1.msra.mxu0 0.0
    %3406 = vmatprep.subr.mxu0 0.0
    %3407 = vmatpush1.msra.mxu0 0.0
    %3408 = vmatprep.subr.mxu0 0.0
    %3409 = vmatpush1.msra.mxu0 0.0
    %3410 = vmatprep.subr.mxu0 0.0
    %v3411 = vand.u32 %v3378, 4294901760
    %3412 = vmatpush1.msra.mxu0 %v3411
    %3413 = vmatprep.subr.mxu0 0.0
    %3414 = vmatpush2.msra.mxu0 0.0
    %3415 = vmatprep.subr.mxu0 0.0
    %3416 = vmatpush2.msra.mxu0 0.0
    %3417 = vmatprep.subr.mxu0 0.0
    %3418 = vmatpush2.msra.mxu0 0.0
    %3419 = vmatprep.subr.mxu0 0.0
    %3420 = vmatpush2.msra.mxu0 0.0
    %3421 = vmatprep.subr.mxu0 0.0
    %3422 = vmatpush2.msra.mxu0 0.0
    %3423 = vmatprep.subr.mxu0 0.0
    %3424 = vmatpush2.msra.mxu0 0.0
    %3425 = vmatprep.subr.mxu0 0.0
    %3426 = vmatpush2.msra.mxu0 0.0
    %3427 = vmatprep.subr.mxu0 0.0
    %3428 = vmatpush2.msra.mxu0 0.0
    %3429 = vmatprep.subr.mxu0 0.0
    %3430 = vmatpush2.msra.mxu0 0.0
    %3431 = vmatprep.subr.mxu0 0.0
    %3432 = vmatpush2.msra.mxu0 0.0
    %3433 = vmatprep.subr.mxu0 0.0
    %3434 = vmatpush2.msra.mxu0 0.0
    %3435 = vmatprep.subr.mxu0 0.0
    %3436 = vmatpush2.msra.mxu0 0.0
    %3437 = vmatprep.subr.mxu0 0.0
    %3438 = vmatpush2.msra.mxu0 0.0
    %3439 = vmatprep.subr.mxu0 0.0
    %3440 = vmatpush2.msra.mxu0 0.0
    %3441 = vmatprep.subr.mxu0 0.0
    %3442 = vmatpush2.msra.mxu0 0.0
    %3443 = vmatprep.subr.mxu0 0.0
    %3444 = vmatpush2.msra.mxu0 0.0
    %3445 = vmatprep.mubr.f32.mxu0 0.0
    %v3446 = vand.u32 %v3374, 4294901760
    %v3447 = vsub.f32 %v3374, %v3446
    %v3448 = vand.u32 %v3447, 4294901760
    %v3449 = vsub.f32 %v3447, %v3448
    %v3450 = vand.u32 %v3449, 4294901760
    %3451 = vmatmul.mubr.f32.gmra.mxu0 %v3450
    %v3452 = vpop.f32.mrf.mxu0
    %v3453 = vadd.f32 0.0, %v3452
    %v3454 = vpop.f32.mrf.mxu0
    %3455 = vdwg.mxu0
    %3456 = vmatprep.subr.mxu0 0.0
    %3457 = vmatpush1.msra.mxu0 0.0
    %3458 = vmatprep.subr.mxu0 0.0
    %3459 = vmatpush1.msra.mxu0 0.0
    %3460 = vmatprep.subr.mxu0 0.0
    %3461 = vmatpush1.msra.mxu0 0.0
    %3462 = vmatprep.subr.mxu0 0.0
    %3463 = vmatpush1.msra.mxu0 0.0
    %3464 = vmatprep.subr.mxu0 0.0
    %3465 = vmatpush1.msra.mxu0 0.0
    %3466 = vmatprep.subr.mxu0 0.0
    %3467 = vmatpush1.msra.mxu0 0.0
    %3468 = vmatprep.subr.mxu0 0.0
    %3469 = vmatpush1.msra.mxu0 0.0
    %3470 = vmatprep.subr.mxu0 0.0
    %3471 = vmatpush1.msra.mxu0 0.0
    %3472 = vmatprep.subr.mxu0 0.0
    %3473 = vmatpush1.msra.mxu0 0.0
    %3474 = vmatprep.subr.mxu0 0.0
    %3475 = vmatpush1.msra.mxu0 0.0
    %3476 = vmatprep.subr.mxu0 0.0
    %3477 = vmatpush1.msra.mxu0 0.0
    %3478 = vmatprep.subr.mxu0 0.0
    %3479 = vmatpush1.msra.mxu0 0.0
    %3480 = vmatprep.subr.mxu0 0.0
    %3481 = vmatpush1.msra.mxu0 0.0
    %3482 = vmatprep.subr.mxu0 0.0
    %3483 = vmatpush1.msra.mxu0 0.0
    %3484 = vmatprep.subr.mxu0 0.0
    %3485 = vmatpush1.msra.mxu0 0.0
    %3486 = vmatprep.subr.mxu0 0.0
    %v3487 = vand.u32 %v3378, 4294901760
    %v3488 = vsub.f32 %v3378, %v3487
    %v3489 = vand.u32 %v3488, 4294901760
    %v3490 = vsub.f32 %v3488, %v3489
    %v3491 = vand.u32 %v3490, 4294901760
    %3492 = vmatpush1.msra.mxu0 %v3491
    %3493 = vmatprep.subr.mxu0 0.0
    %3494 = vmatpush2.msra.mxu0 0.0
    %3495 = vmatprep.subr.mxu0 0.0
    %3496 = vmatpush2.msra.mxu0 0.0
    %3497 = vmatprep.subr.mxu0 0.0
    %3498 = vmatpush2.msra.mxu0 0.0
    %3499 = vmatprep.subr.mxu0 0.0
    %3500 = vmatpush2.msra.mxu0 0.0
    %3501 = vmatprep.subr.mxu0 0.0
    %3502 = vmatpush2.msra.mxu0 0.0
    %3503 = vmatprep.subr.mxu0 0.0
    %3504 = vmatpush2.msra.mxu0 0.0
    %3505 = vmatprep.subr.mxu0 0.0
    %3506 = vmatpush2.msra.mxu0 0.0
    %3507 = vmatprep.subr.mxu0 0.0
    %3508 = vmatpush2.msra.mxu0 0.0
    %3509 = vmatprep.subr.mxu0 0.0
    %3510 = vmatpush2.msra.mxu0 0.0
    %3511 = vmatprep.subr.mxu0 0.0
    %3512 = vmatpush2.msra.mxu0 0.0
    %3513 = vmatprep.subr.mxu0 0.0
    %3514 = vmatpush2.msra.mxu0 0.0
    %3515 = vmatprep.subr.mxu0 0.0
    %3516 = vmatpush2.msra.mxu0 0.0
    %3517 = vmatprep.subr.mxu0 0.0
    %3518 = vmatpush2.msra.mxu0 0.0
    %3519 = vmatprep.subr.mxu0 0.0
    %3520 = vmatpush2.msra.mxu0 0.0
    %3521 = vmatprep.subr.mxu0 0.0
    %3522 = vmatpush2.msra.mxu0 0.0
    %3523 = vmatprep.subr.mxu0 0.0
    %3524 = vmatpush2.msra.mxu0 0.0
    %3525 = vmatprep.mubr.f32.mxu0 0.0
    %v3526 = vand.u32 %v3374, 4294901760
    %3527 = vmatmul.mubr.f32.gmra.mxu0 %v3526
    %v3528 = vpop.f32.mrf.mxu0
    %v3529 = vadd.f32 %v3453, %v3528
    %v3530 = vpop.f32.mrf.mxu0
    %3531 = vdwg.mxu0
    %3532 = vmatprep.subr.mxu0 0.0
    %3533 = vmatpush1.msra.mxu0 0.0
    %3534 = vmatprep.subr.mxu0 0.0
    %3535 = vmatpush1.msra.mxu0 0.0
    %3536 = vmatprep.subr.mxu0 0.0
    %3537 = vmatpush1.msra.mxu0 0.0
    %3538 = vmatprep.subr.mxu0 0.0
    %3539 = vmatpush1.msra.mxu0 0.0
    %3540 = vmatprep.subr.mxu0 0.0
    %3541 = vmatpush1.msra.mxu0 0.0
    %3542 = vmatprep.subr.mxu0 0.0
    %3543 = vmatpush1.msra.mxu0 0.0
    %3544 = vmatprep.subr.mxu0 0.0
    %3545 = vmatpush1.msra.mxu0 0.0
    %3546 = vmatprep.subr.mxu0 0.0
    %3547 = vmatpush1.msra.mxu0 0.0
    %3548 = vmatprep.subr.mxu0 0.0
    %3549 = vmatpush1.msra.mxu0 0.0
    %3550 = vmatprep.subr.mxu0 0.0
    %3551 = vmatpush1.msra.mxu0 0.0
    %3552 = vmatprep.subr.mxu0 0.0
    %3553 = vmatpush1.msra.mxu0 0.0
    %3554 = vmatprep.subr.mxu0 0.0
    %3555 = vmatpush1.msra.mxu0 0.0
    %3556 = vmatprep.subr.mxu0 0.0
    %3557 = vmatpush1.msra.mxu0 0.0
    %3558 = vmatprep.subr.mxu0 0.0
    %3559 = vmatpush1.msra.mxu0 0.0
    %3560 = vmatprep.subr.mxu0 0.0
    %3561 = vmatpush1.msra.mxu0 0.0
    %3562 = vmatprep.subr.mxu0 0.0
    %v3563 = vand.u32 %v3378, 4294901760
    %v3564 = vsub.f32 %v3378, %v3563
    %3565 = vmatpush1.msra.mxu0 %v3564
    %3566 = vmatprep.subr.mxu0 0.0
    %3567 = vmatpush2.msra.mxu0 0.0
    %3568 = vmatprep.subr.mxu0 0.0
    %3569 = vmatpush2.msra.mxu0 0.0
    %3570 = vmatprep.subr.mxu0 0.0
    %3571 = vmatpush2.msra.mxu0 0.0
    %3572 = vmatprep.subr.mxu0 0.0
    %3573 = vmatpush2.msra.mxu0 0.0
    %3574 = vmatprep.subr.mxu0 0.0
    %3575 = vmatpush2.msra.mxu0 0.0
    %3576 = vmatprep.subr.mxu0 0.0
    %3577 = vmatpush2.msra.mxu0 0.0
    %3578 = vmatprep.subr.mxu0 0.0
    %3579 = vmatpush2.msra.mxu0 0.0
    %3580 = vmatprep.subr.mxu0 0.0
    %3581 = vmatpush2.msra.mxu0 0.0
    %3582 = vmatprep.subr.mxu0 0.0
    %3583 = vmatpush2.msra.mxu0 0.0
    %3584 = vmatprep.subr.mxu0 0.0
    %3585 = vmatpush2.msra.mxu0 0.0
    %3586 = vmatprep.subr.mxu0 0.0
    %3587 = vmatpush2.msra.mxu0 0.0
    %3588 = vmatprep.subr.mxu0 0.0
    %3589 = vmatpush2.msra.mxu0 0.0
    %3590 = vmatprep.subr.mxu0 0.0
    %3591 = vmatpush2.msra.mxu0 0.0
    %3592 = vmatprep.subr.mxu0 0.0
    %3593 = vmatpush2.msra.mxu0 0.0
    %3594 = vmatprep.subr.mxu0 0.0
    %3595 = vmatpush2.msra.mxu0 0.0
    %3596 = vmatprep.subr.mxu0 0.0
    %3597 = vmatpush2.msra.mxu0 0.0
    %3598 = vmatprep.mubr.f32.mxu0 0.0
    %v3599 = vand.u32 %v3374, 4294901760
    %v3600 = vsub.f32 %v3374, %v3599
    %3601 = vmatmul.mubr.f32.gmra.mxu0 %v3600
    %v3602 = vpop.f32.mrf.mxu0
    %v3603 = vadd.f32 %v3529, %v3602
    %v3604 = vpop.f32.mrf.mxu0
    %3605 = vdwg.mxu0
    %3606 = vmatprep.subr.mxu0 0.0
    %3607 = vmatpush1.msra.mxu0 0.0
    %3608 = vmatprep.subr.mxu0 0.0
    %3609 = vmatpush1.msra.mxu0 0.0
    %3610 = vmatprep.subr.mxu0 0.0
    %3611 = vmatpush1.msra.mxu0 0.0
    %3612 = vmatprep.subr.mxu0 0.0
    %3613 = vmatpush1.msra.mxu0 0.0
    %3614 = vmatprep.subr.mxu0 0.0
    %3615 = vmatpush1.msra.mxu0 0.0
    %3616 = vmatprep.subr.mxu0 0.0
    %3617 = vmatpush1.msra.mxu0 0.0
    %3618 = vmatprep.subr.mxu0 0.0
    %3619 = vmatpush1.msra.mxu0 0.0
    %3620 = vmatprep.subr.mxu0 0.0
    %3621 = vmatpush1.msra.mxu0 0.0
    %3622 = vmatprep.subr.mxu0 0.0
    %3623 = vmatpush1.msra.mxu0 0.0
    %3624 = vmatprep.subr.mxu0 0.0
    %3625 = vmatpush1.msra.mxu0 0.0
    %3626 = vmatprep.subr.mxu0 0.0
    %3627 = vmatpush1.msra.mxu0 0.0
    %3628 = vmatprep.subr.mxu0 0.0
    %3629 = vmatpush1.msra.mxu0 0.0
    %3630 = vmatprep.subr.mxu0 0.0
    %3631 = vmatpush1.msra.mxu0 0.0
    %3632 = vmatprep.subr.mxu0 0.0
    %3633 = vmatpush1.msra.mxu0 0.0
    %3634 = vmatprep.subr.mxu0 0.0
    %3635 = vmatpush1.msra.mxu0 0.0
    %3636 = vmatprep.subr.mxu0 0.0
    %v3637 = vand.u32 %v3378, 4294901760
    %3638 = vmatpush1.msra.mxu0 %v3637
    %3639 = vmatprep.subr.mxu0 0.0
    %3640 = vmatpush2.msra.mxu0 0.0
    %3641 = vmatprep.subr.mxu0 0.0
    %3642 = vmatpush2.msra.mxu0 0.0
    %3643 = vmatprep.subr.mxu0 0.0
    %3644 = vmatpush2.msra.mxu0 0.0
    %3645 = vmatprep.subr.mxu0 0.0
    %3646 = vmatpush2.msra.mxu0 0.0
    %3647 = vmatprep.subr.mxu0 0.0
    %3648 = vmatpush2.msra.mxu0 0.0
    %3649 = vmatprep.subr.mxu0 0.0
    %3650 = vmatpush2.msra.mxu0 0.0
    %3651 = vmatprep.subr.mxu0 0.0
    %3652 = vmatpush2.msra.mxu0 0.0
    %3653 = vmatprep.subr.mxu0 0.0
    %3654 = vmatpush2.msra.mxu0 0.0
    %3655 = vmatprep.subr.mxu0 0.0
    %3656 = vmatpush2.msra.mxu0 0.0
    %3657 = vmatprep.subr.mxu0 0.0
    %3658 = vmatpush2.msra.mxu0 0.0
    %3659 = vmatprep.subr.mxu0 0.0
    %3660 = vmatpush2.msra.mxu0 0.0
    %3661 = vmatprep.subr.mxu0 0.0
    %3662 = vmatpush2.msra.mxu0 0.0
    %3663 = vmatprep.subr.mxu0 0.0
    %3664 = vmatpush2.msra.mxu0 0.0
    %3665 = vmatprep.subr.mxu0 0.0
    %3666 = vmatpush2.msra.mxu0 0.0
    %3667 = vmatprep.subr.mxu0 0.0
    %3668 = vmatpush2.msra.mxu0 0.0
    %3669 = vmatprep.subr.mxu0 0.0
    %3670 = vmatpush2.msra.mxu0 0.0
    %3671 = vmatprep.mubr.f32.mxu0 0.0
    %v3672 = vand.u32 %v3374, 4294901760
    %v3673 = vsub.f32 %v3374, %v3672
    %v3674 = vand.u32 %v3673, 4294901760
    %3675 = vmatmul.mubr.f32.gmra.mxu0 %v3674
    %v3676 = vpop.f32.mrf.mxu0
    %v3677 = vadd.f32 %v3603, %v3676
    %v3678 = vpop.f32.mrf.mxu0
    %3679 = vdwg.mxu0
    %3680 = vmatprep.subr.mxu0 0.0
    %3681 = vmatpush1.msra.mxu0 0.0
    %3682 = vmatprep.subr.mxu0 0.0
    %3683 = vmatpush1.msra.mxu0 0.0
    %3684 = vmatprep.subr.mxu0 0.0
    %3685 = vmatpush1.msra.mxu0 0.0
    %3686 = vmatprep.subr.mxu0 0.0
    %3687 = vmatpush1.msra.mxu0 0.0
    %3688 = vmatprep.subr.mxu0 0.0
    %3689 = vmatpush1.msra.mxu0 0.0
    %3690 = vmatprep.subr.mxu0 0.0
    %3691 = vmatpush1.msra.mxu0 0.0
    %3692 = vmatprep.subr.mxu0 0.0
    %3693 = vmatpush1.msra.mxu0 0.0
    %3694 = vmatprep.subr.mxu0 0.0
    %3695 = vmatpush1.msra.mxu0 0.0
    %3696 = vmatprep.subr.mxu0 0.0
    %3697 = vmatpush1.msra.mxu0 0.0
    %3698 = vmatprep.subr.mxu0 0.0
    %3699 = vmatpush1.msra.mxu0 0.0
    %3700 = vmatprep.subr.mxu0 0.0
    %3701 = vmatpush1.msra.mxu0 0.0
    %3702 = vmatprep.subr.mxu0 0.0
    %3703 = vmatpush1.msra.mxu0 0.0
    %3704 = vmatprep.subr.mxu0 0.0
    %3705 = vmatpush1.msra.mxu0 0.0
    %3706 = vmatprep.subr.mxu0 0.0
    %3707 = vmatpush1.msra.mxu0 0.0
    %3708 = vmatprep.subr.mxu0 0.0
    %3709 = vmatpush1.msra.mxu0 0.0
    %3710 = vmatprep.subr.mxu0 0.0
    %v3711 = vand.u32 %v3378, 4294901760
    %v3712 = vsub.f32 %v3378, %v3711
    %v3713 = vand.u32 %v3712, 4294901760
    %3714 = vmatpush1.msra.mxu0 %v3713
    %3715 = vmatprep.subr.mxu0 0.0
    %3716 = vmatpush2.msra.mxu0 0.0
    %3717 = vmatprep.subr.mxu0 0.0
    %3718 = vmatpush2.msra.mxu0 0.0
    %3719 = vmatprep.subr.mxu0 0.0
    %3720 = vmatpush2.msra.mxu0 0.0
    %3721 = vmatprep.subr.mxu0 0.0
    %3722 = vmatpush2.msra.mxu0 0.0
    %3723 = vmatprep.subr.mxu0 0.0
    %3724 = vmatpush2.msra.mxu0 0.0
    %3725 = vmatprep.subr.mxu0 0.0
    %3726 = vmatpush2.msra.mxu0 0.0
    %3727 = vmatprep.subr.mxu0 0.0
    %3728 = vmatpush2.msra.mxu0 0.0
    %3729 = vmatprep.subr.mxu0 0.0
    %3730 = vmatpush2.msra.mxu0 0.0
    %3731 = vmatprep.subr.mxu0 0.0
    %3732 = vmatpush2.msra.mxu0 0.0
    %3733 = vmatprep.subr.mxu0 0.0
    %3734 = vmatpush2.msra.mxu0 0.0
    %3735 = vmatprep.subr.mxu0 0.0
    %3736 = vmatpush2.msra.mxu0 0.0
    %3737 = vmatprep.subr.mxu0 0.0
    %3738 = vmatpush2.msra.mxu0 0.0
    %3739 = vmatprep.subr.mxu0 0.0
    %3740 = vmatpush2.msra.mxu0 0.0
    %3741 = vmatprep.subr.mxu0 0.0
    %3742 = vmatpush2.msra.mxu0 0.0
    %3743 = vmatprep.subr.mxu0 0.0
    %3744 = vmatpush2.msra.mxu0 0.0
    %3745 = vmatprep.subr.mxu0 0.0
    %3746 = vmatpush2.msra.mxu0 0.0
    %3747 = vmatprep.mubr.f32.mxu0 0.0
    %v3748 = vand.u32 %v3374, 4294901760
    %3749 = vmatmul.mubr.f32.gmra.mxu0 %v3748
    %v3750 = vpop.f32.mrf.mxu0
    %v3751 = vadd.f32 %v3677, %v3750
    %v3752 = vpop.f32.mrf.mxu0
    %3753 = vdwg.mxu0
    %3754 = vmatprep.subr.mxu0 0.0
    %3755 = vmatpush1.msra.mxu0 0.0
    %3756 = vmatprep.subr.mxu0 0.0
    %3757 = vmatpush1.msra.mxu0 0.0
    %3758 = vmatprep.subr.mxu0 0.0
    %3759 = vmatpush1.msra.mxu0 0.0
    %3760 = vmatprep.subr.mxu0 0.0
    %3761 = vmatpush1.msra.mxu0 0.0
    %3762 = vmatprep.subr.mxu0 0.0
    %3763 = vmatpush1.msra.mxu0 0.0
    %3764 = vmatprep.subr.mxu0 0.0
    %3765 = vmatpush1.msra.mxu0 0.0
    %3766 = vmatprep.subr.mxu0 0.0
    %3767 = vmatpush1.msra.mxu0 0.0
    %3768 = vmatprep.subr.mxu0 0.0
    %3769 = vmatpush1.msra.mxu0 0.0
    %3770 = vmatprep.subr.mxu0 0.0
    %3771 = vmatpush1.msra.mxu0 0.0
    %3772 = vmatprep.subr.mxu0 0.0
    %3773 = vmatpush1.msra.mxu0 0.0
    %3774 = vmatprep.subr.mxu0 0.0
    %3775 = vmatpush1.msra.mxu0 0.0
    %3776 = vmatprep.subr.mxu0 0.0
    %3777 = vmatpush1.msra.mxu0 0.0
    %3778 = vmatprep.subr.mxu0 0.0
    %3779 = vmatpush1.msra.mxu0 0.0
    %3780 = vmatprep.subr.mxu0 0.0
    %3781 = vmatpush1.msra.mxu0 0.0
    %3782 = vmatprep.subr.mxu0 0.0
    %3783 = vmatpush1.msra.mxu0 0.0
    %3784 = vmatprep.subr.mxu0 0.0
    %v3785 = vand.u32 %v3378, 4294901760
    %3786 = vmatpush1.msra.mxu0 %v3785
    %3787 = vmatprep.subr.mxu0 0.0
    %3788 = vmatpush2.msra.mxu0 0.0
    %3789 = vmatprep.subr.mxu0 0.0
    %3790 = vmatpush2.msra.mxu0 0.0
    %3791 = vmatprep.subr.mxu0 0.0
    %3792 = vmatpush2.msra.mxu0 0.0
    %3793 = vmatprep.subr.mxu0 0.0
    %3794 = vmatpush2.msra.mxu0 0.0
    %3795 = vmatprep.subr.mxu0 0.0
    %3796 = vmatpush2.msra.mxu0 0.0
    %3797 = vmatprep.subr.mxu0 0.0
    %3798 = vmatpush2.msra.mxu0 0.0
    %3799 = vmatprep.subr.mxu0 0.0
    %3800 = vmatpush2.msra.mxu0 0.0
    %3801 = vmatprep.subr.mxu0 0.0
    %3802 = vmatpush2.msra.mxu0 0.0
    %3803 = vmatprep.subr.mxu0 0.0
    %3804 = vmatpush2.msra.mxu0 0.0
    %3805 = vmatprep.subr.mxu0 0.0
    %3806 = vmatpush2.msra.mxu0 0.0
    %3807 = vmatprep.subr.mxu0 0.0
    %3808 = vmatpush2.msra.mxu0 0.0
    %3809 = vmatprep.subr.mxu0 0.0
    %3810 = vmatpush2.msra.mxu0 0.0
    %3811 = vmatprep.subr.mxu0 0.0
    %3812 = vmatpush2.msra.mxu0 0.0
    %3813 = vmatprep.subr.mxu0 0.0
    %3814 = vmatpush2.msra.mxu0 0.0
    %3815 = vmatprep.subr.mxu0 0.0
    %3816 = vmatpush2.msra.mxu0 0.0
    %3817 = vmatprep.subr.mxu0 0.0
    %3818 = vmatpush2.msra.mxu0 0.0
    %3819 = vmatprep.mubr.f32.mxu0 0.0
    %v3820 = vand.u32 %v3374, 4294901760
    %3821 = vmatmul.mubr.f32.gmra.mxu0 %v3820
    %v3822 = vpop.f32.mrf.mxu0
    %v3823 = vadd.f32 %v3751, %v3822
    %v3824 = vpop.f32.mrf.mxu0
    %3825 = vdwg.mxu0
    %v3827 = vsel %vm3372, %v3370, 0
    %3829 = vmatprep.subr.mxu0 0.0
    %3830 = vmatpush1.msra.mxu0 0.0
    %3831 = vmatprep.subr.mxu0 0.0
    %3832 = vmatpush1.msra.mxu0 0.0
    %3833 = vmatprep.subr.mxu0 0.0
    %3834 = vmatpush1.msra.mxu0 0.0
    %3835 = vmatprep.subr.mxu0 0.0
    %3836 = vmatpush1.msra.mxu0 0.0
    %3837 = vmatprep.subr.mxu0 0.0
    %3838 = vmatpush1.msra.mxu0 0.0
    %3839 = vmatprep.subr.mxu0 0.0
    %3840 = vmatpush1.msra.mxu0 0.0
    %3841 = vmatprep.subr.mxu0 0.0
    %3842 = vmatpush1.msra.mxu0 0.0
    %3843 = vmatprep.subr.mxu0 0.0
    %3844 = vmatpush1.msra.mxu0 0.0
    %3845 = vmatprep.subr.mxu0 0.0
    %3846 = vmatpush1.msra.mxu0 0.0
    %3847 = vmatprep.subr.mxu0 0.0
    %3848 = vmatpush1.msra.mxu0 0.0
    %3849 = vmatprep.subr.mxu0 0.0
    %3850 = vmatpush1.msra.mxu0 0.0
    %3851 = vmatprep.subr.mxu0 0.0
    %3852 = vmatpush1.msra.mxu0 0.0
    %3853 = vmatprep.subr.mxu0 0.0
    %3854 = vmatpush1.msra.mxu0 0.0
    %3855 = vmatprep.subr.mxu0 0.0
    %3856 = vmatpush1.msra.mxu0 0.0
    %3857 = vmatprep.subr.mxu0 0.0
    %3858 = vmatpush1.msra.mxu0 0.0
    %3859 = vmatprep.subr.mxu0 0.0
    %v3860 = vand.u32 %v3378, 4294901760
    %3861 = vmatpush1.msra.mxu0 %v3860
    %3862 = vmatprep.subr.mxu0 0.0
    %3863 = vmatpush2.msra.mxu0 0.0
    %3864 = vmatprep.subr.mxu0 0.0
    %3865 = vmatpush2.msra.mxu0 0.0
    %3866 = vmatprep.subr.mxu0 0.0
    %3867 = vmatpush2.msra.mxu0 0.0
    %3868 = vmatprep.subr.mxu0 0.0
    %3869 = vmatpush2.msra.mxu0 0.0
    %3870 = vmatprep.subr.mxu0 0.0
    %3871 = vmatpush2.msra.mxu0 0.0
    %3872 = vmatprep.subr.mxu0 0.0
    %3873 = vmatpush2.msra.mxu0 0.0
    %3874 = vmatprep.subr.mxu0 0.0
    %3875 = vmatpush2.msra.mxu0 0.0
    %3876 = vmatprep.subr.mxu0 0.0
    %3877 = vmatpush2.msra.mxu0 0.0
    %3878 = vmatprep.subr.mxu0 0.0
    %3879 = vmatpush2.msra.mxu0 0.0
    %3880 = vmatprep.subr.mxu0 0.0
    %3881 = vmatpush2.msra.mxu0 0.0
    %3882 = vmatprep.subr.mxu0 0.0
    %3883 = vmatpush2.msra.mxu0 0.0
    %3884 = vmatprep.subr.mxu0 0.0
    %3885 = vmatpush2.msra.mxu0 0.0
    %3886 = vmatprep.subr.mxu0 0.0
    %3887 = vmatpush2.msra.mxu0 0.0
    %3888 = vmatprep.subr.mxu0 0.0
    %3889 = vmatpush2.msra.mxu0 0.0
    %3890 = vmatprep.subr.mxu0 0.0
    %3891 = vmatpush2.msra.mxu0 0.0
    %3892 = vmatprep.subr.mxu0 0.0
    %3893 = vmatpush2.msra.mxu0 0.0
    %3894 = vmatprep.mubr.f32.mxu0 0.0
    %v3895 = vand.u32 %v3827, 4294901760
    %v3896 = vsub.f32 %v3827, %v3895
    %v3897 = vand.u32 %v3896, 4294901760
    %v3898 = vsub.f32 %v3896, %v3897
    %v3899 = vand.u32 %v3898, 4294901760
    %3900 = vmatmul.mubr.f32.gmra.mxu0 %v3899
    %v3901 = vpop.f32.mrf.mxu0
    %v3902 = vadd.f32 0.0, %v3901
    %v3903 = vpop.f32.mrf.mxu0
    %3904 = vdwg.mxu0
    %3905 = vmatprep.subr.mxu0 0.0
    %3906 = vmatpush1.msra.mxu0 0.0
    %3907 = vmatprep.subr.mxu0 0.0
    %3908 = vmatpush1.msra.mxu0 0.0
    %3909 = vmatprep.subr.mxu0 0.0
    %3910 = vmatpush1.msra.mxu0 0.0
    %3911 = vmatprep.subr.mxu0 0.0
    %3912 = vmatpush1.msra.mxu0 0.0
    %3913 = vmatprep.subr.mxu0 0.0
    %3914 = vmatpush1.msra.mxu0 0.0
    %3915 = vmatprep.subr.mxu0 0.0
    %3916 = vmatpush1.msra.mxu0 0.0
    %3917 = vmatprep.subr.mxu0 0.0
    %3918 = vmatpush1.msra.mxu0 0.0
    %3919 = vmatprep.subr.mxu0 0.0
    %3920 = vmatpush1.msra.mxu0 0.0
    %3921 = vmatprep.subr.mxu0 0.0
    %3922 = vmatpush1.msra.mxu0 0.0
    %3923 = vmatprep.subr.mxu0 0.0
    %3924 = vmatpush1.msra.mxu0 0.0
    %3925 = vmatprep.subr.mxu0 0.0
    %3926 = vmatpush1.msra.mxu0 0.0
    %3927 = vmatprep.subr.mxu0 0.0
    %3928 = vmatpush1.msra.mxu0 0.0
    %3929 = vmatprep.subr.mxu0 0.0
    %3930 = vmatpush1.msra.mxu0 0.0
    %3931 = vmatprep.subr.mxu0 0.0
    %3932 = vmatpush1.msra.mxu0 0.0
    %3933 = vmatprep.subr.mxu0 0.0
    %3934 = vmatpush1.msra.mxu0 0.0
    %3935 = vmatprep.subr.mxu0 0.0
    %v3936 = vand.u32 %v3378, 4294901760
    %v3937 = vsub.f32 %v3378, %v3936
    %v3938 = vand.u32 %v3937, 4294901760
    %v3939 = vsub.f32 %v3937, %v3938
    %v3940 = vand.u32 %v3939, 4294901760
    %3941 = vmatpush1.msra.mxu0 %v3940
    %3942 = vmatprep.subr.mxu0 0.0
    %3943 = vmatpush2.msra.mxu0 0.0
    %3944 = vmatprep.subr.mxu0 0.0
    %3945 = vmatpush2.msra.mxu0 0.0
    %3946 = vmatprep.subr.mxu0 0.0
    %3947 = vmatpush2.msra.mxu0 0.0
    %3948 = vmatprep.subr.mxu0 0.0
    %3949 = vmatpush2.msra.mxu0 0.0
    %3950 = vmatprep.subr.mxu0 0.0
    %3951 = vmatpush2.msra.mxu0 0.0
    %3952 = vmatprep.subr.mxu0 0.0
    %3953 = vmatpush2.msra.mxu0 0.0
    %3954 = vmatprep.subr.mxu0 0.0
    %3955 = vmatpush2.msra.mxu0 0.0
    %3956 = vmatprep.subr.mxu0 0.0
    %3957 = vmatpush2.msra.mxu0 0.0
    %3958 = vmatprep.subr.mxu0 0.0
    %3959 = vmatpush2.msra.mxu0 0.0
    %3960 = vmatprep.subr.mxu0 0.0
    %3961 = vmatpush2.msra.mxu0 0.0
    %3962 = vmatprep.subr.mxu0 0.0
    %3963 = vmatpush2.msra.mxu0 0.0
    %3964 = vmatprep.subr.mxu0 0.0
    %3965 = vmatpush2.msra.mxu0 0.0
    %3966 = vmatprep.subr.mxu0 0.0
    %3967 = vmatpush2.msra.mxu0 0.0
    %3968 = vmatprep.subr.mxu0 0.0
    %3969 = vmatpush2.msra.mxu0 0.0
    %3970 = vmatprep.subr.mxu0 0.0
    %3971 = vmatpush2.msra.mxu0 0.0
    %3972 = vmatprep.subr.mxu0 0.0
    %3973 = vmatpush2.msra.mxu0 0.0
    %3974 = vmatprep.mubr.f32.mxu0 0.0
    %v3975 = vand.u32 %v3827, 4294901760
    %3976 = vmatmul.mubr.f32.gmra.mxu0 %v3975
    %v3977 = vpop.f32.mrf.mxu0
    %v3978 = vadd.f32 %v3902, %v3977
    %v3979 = vpop.f32.mrf.mxu0
    %3980 = vdwg.mxu0
    %3981 = vmatprep.subr.mxu0 0.0
    %3982 = vmatpush1.msra.mxu0 0.0
    %3983 = vmatprep.subr.mxu0 0.0
    %3984 = vmatpush1.msra.mxu0 0.0
    %3985 = vmatprep.subr.mxu0 0.0
    %3986 = vmatpush1.msra.mxu0 0.0
    %3987 = vmatprep.subr.mxu0 0.0
    %3988 = vmatpush1.msra.mxu0 0.0
    %3989 = vmatprep.subr.mxu0 0.0
    %3990 = vmatpush1.msra.mxu0 0.0
    %3991 = vmatprep.subr.mxu0 0.0
    %3992 = vmatpush1.msra.mxu0 0.0
    %3993 = vmatprep.subr.mxu0 0.0
    %3994 = vmatpush1.msra.mxu0 0.0
    %3995 = vmatprep.subr.mxu0 0.0
    %3996 = vmatpush1.msra.mxu0 0.0
    %3997 = vmatprep.subr.mxu0 0.0
    %3998 = vmatpush1.msra.mxu0 0.0
    %3999 = vmatprep.subr.mxu0 0.0
    %4000 = vmatpush1.msra.mxu0 0.0
    %4001 = vmatprep.subr.mxu0 0.0
    %4002 = vmatpush1.msra.mxu0 0.0
    %4003 = vmatprep.subr.mxu0 0.0
    %4004 = vmatpush1.msra.mxu0 0.0
    %4005 = vmatprep.subr.mxu0 0.0
    %4006 = vmatpush1.msra.mxu0 0.0
    %4007 = vmatprep.subr.mxu0 0.0
    %4008 = vmatpush1.msra.mxu0 0.0
    %4009 = vmatprep.subr.mxu0 0.0
    %4010 = vmatpush1.msra.mxu0 0.0
    %4011 = vmatprep.subr.mxu0 0.0
    %v4012 = vand.u32 %v3378, 4294901760
    %v4013 = vsub.f32 %v3378, %v4012
    %4014 = vmatpush1.msra.mxu0 %v4013
    %4015 = vmatprep.subr.mxu0 0.0
    %4016 = vmatpush2.msra.mxu0 0.0
    %4017 = vmatprep.subr.mxu0 0.0
    %4018 = vmatpush2.msra.mxu0 0.0
    %4019 = vmatprep.subr.mxu0 0.0
    %4020 = vmatpush2.msra.mxu0 0.0
    %4021 = vmatprep.subr.mxu0 0.0
    %4022 = vmatpush2.msra.mxu0 0.0
    %4023 = vmatprep.subr.mxu0 0.0
    %4024 = vmatpush2.msra.mxu0 0.0
    %4025 = vmatprep.subr.mxu0 0.0
    %4026 = vmatpush2.msra.mxu0 0.0
    %4027 = vmatprep.subr.mxu0 0.0
    %4028 = vmatpush2.msra.mxu0 0.0
    %4029 = vmatprep.subr.mxu0 0.0
    %4030 = vmatpush2.msra.mxu0 0.0
    %4031 = vmatprep.subr.mxu0 0.0
    %4032 = vmatpush2.msra.mxu0 0.0
    %4033 = vmatprep.subr.mxu0 0.0
    %4034 = vmatpush2.msra.mxu0 0.0
    %4035 = vmatprep.subr.mxu0 0.0
    %4036 = vmatpush2.msra.mxu0 0.0
    %4037 = vmatprep.subr.mxu0 0.0
    %4038 = vmatpush2.msra.mxu0 0.0
    %4039 = vmatprep.subr.mxu0 0.0
    %4040 = vmatpush2.msra.mxu0 0.0
    %4041 = vmatprep.subr.mxu0 0.0
    %4042 = vmatpush2.msra.mxu0 0.0
    %4043 = vmatprep.subr.mxu0 0.0
    %4044 = vmatpush2.msra.mxu0 0.0
    %4045 = vmatprep.subr.mxu0 0.0
    %4046 = vmatpush2.msra.mxu0 0.0
    %4047 = vmatprep.mubr.f32.mxu0 0.0
    %v4048 = vand.u32 %v3827, 4294901760
    %v4049 = vsub.f32 %v3827, %v4048
    %4050 = vmatmul.mubr.f32.gmra.mxu0 %v4049
    %v4051 = vpop.f32.mrf.mxu0
    %v4052 = vadd.f32 %v3978, %v4051
    %v4053 = vpop.f32.mrf.mxu0
    %4054 = vdwg.mxu0
    %4055 = vmatprep.subr.mxu0 0.0
    %4056 = vmatpush1.msra.mxu0 0.0
    %4057 = vmatprep.subr.mxu0 0.0
    %4058 = vmatpush1.msra.mxu0 0.0
    %4059 = vmatprep.subr.mxu0 0.0
    %4060 = vmatpush1.msra.mxu0 0.0
    %4061 = vmatprep.subr.mxu0 0.0
    %4062 = vmatpush1.msra.mxu0 0.0
    %4063 = vmatprep.subr.mxu0 0.0
    %4064 = vmatpush1.msra.mxu0 0.0
    %4065 = vmatprep.subr.mxu0 0.0
    %4066 = vmatpush1.msra.mxu0 0.0
    %4067 = vmatprep.subr.mxu0 0.0
    %4068 = vmatpush1.msra.mxu0 0.0
    %4069 = vmatprep.subr.mxu0 0.0
    %4070 = vmatpush1.msra.mxu0 0.0
    %4071 = vmatprep.subr.mxu0 0.0
    %4072 = vmatpush1.msra.mxu0 0.0
    %4073 = vmatprep.subr.mxu0 0.0
    %4074 = vmatpush1.msra.mxu0 0.0
    %4075 = vmatprep.subr.mxu0 0.0
    %4076 = vmatpush1.msra.mxu0 0.0
    %4077 = vmatprep.subr.mxu0 0.0
    %4078 = vmatpush1.msra.mxu0 0.0
    %4079 = vmatprep.subr.mxu0 0.0
    %4080 = vmatpush1.msra.mxu0 0.0
    %4081 = vmatprep.subr.mxu0 0.0
    %4082 = vmatpush1.msra.mxu0 0.0
    %4083 = vmatprep.subr.mxu0 0.0
    %4084 = vmatpush1.msra.mxu0 0.0
    %4085 = vmatprep.subr.mxu0 0.0
    %v4086 = vand.u32 %v3378, 4294901760
    %4087 = vmatpush1.msra.mxu0 %v4086
    %4088 = vmatprep.subr.mxu0 0.0
    %4089 = vmatpush2.msra.mxu0 0.0
    %4090 = vmatprep.subr.mxu0 0.0
    %4091 = vmatpush2.msra.mxu0 0.0
    %4092 = vmatprep.subr.mxu0 0.0
    %4093 = vmatpush2.msra.mxu0 0.0
    %4094 = vmatprep.subr.mxu0 0.0
    %4095 = vmatpush2.msra.mxu0 0.0
    %4096 = vmatprep.subr.mxu0 0.0
    %4097 = vmatpush2.msra.mxu0 0.0
    %4098 = vmatprep.subr.mxu0 0.0
    %4099 = vmatpush2.msra.mxu0 0.0
    %4100 = vmatprep.subr.mxu0 0.0
    %4101 = vmatpush2.msra.mxu0 0.0
    %4102 = vmatprep.subr.mxu0 0.0
    %4103 = vmatpush2.msra.mxu0 0.0
    %4104 = vmatprep.subr.mxu0 0.0
    %4105 = vmatpush2.msra.mxu0 0.0
    %4106 = vmatprep.subr.mxu0 0.0
    %4107 = vmatpush2.msra.mxu0 0.0
    %4108 = vmatprep.subr.mxu0 0.0
    %4109 = vmatpush2.msra.mxu0 0.0
    %4110 = vmatprep.subr.mxu0 0.0
    %4111 = vmatpush2.msra.mxu0 0.0
    %4112 = vmatprep.subr.mxu0 0.0
    %4113 = vmatpush2.msra.mxu0 0.0
    %4114 = vmatprep.subr.mxu0 0.0
    %4115 = vmatpush2.msra.mxu0 0.0
    %4116 = vmatprep.subr.mxu0 0.0
    %4117 = vmatpush2.msra.mxu0 0.0
    %4118 = vmatprep.subr.mxu0 0.0
    %4119 = vmatpush2.msra.mxu0 0.0
    %4120 = vmatprep.mubr.f32.mxu0 0.0
    %v4121 = vand.u32 %v3827, 4294901760
    %v4122 = vsub.f32 %v3827, %v4121
    %v4123 = vand.u32 %v4122, 4294901760
    %4124 = vmatmul.mubr.f32.gmra.mxu0 %v4123
    %v4125 = vpop.f32.mrf.mxu0
    %v4126 = vadd.f32 %v4052, %v4125
    %v4127 = vpop.f32.mrf.mxu0
    %4128 = vdwg.mxu0
    %4129 = vmatprep.subr.mxu0 0.0
    %4130 = vmatpush1.msra.mxu0 0.0
    %4131 = vmatprep.subr.mxu0 0.0
    %4132 = vmatpush1.msra.mxu0 0.0
    %4133 = vmatprep.subr.mxu0 0.0
    %4134 = vmatpush1.msra.mxu0 0.0
    %4135 = vmatprep.subr.mxu0 0.0
    %4136 = vmatpush1.msra.mxu0 0.0
    %4137 = vmatprep.subr.mxu0 0.0
    %4138 = vmatpush1.msra.mxu0 0.0
    %4139 = vmatprep.subr.mxu0 0.0
    %4140 = vmatpush1.msra.mxu0 0.0
    %4141 = vmatprep.subr.mxu0 0.0
    %4142 = vmatpush1.msra.mxu0 0.0
    %4143 = vmatprep.subr.mxu0 0.0
    %4144 = vmatpush1.msra.mxu0 0.0
    %4145 = vmatprep.subr.mxu0 0.0
    %4146 = vmatpush1.msra.mxu0 0.0
    %4147 = vmatprep.subr.mxu0 0.0
    %4148 = vmatpush1.msra.mxu0 0.0
    %4149 = vmatprep.subr.mxu0 0.0
    %4150 = vmatpush1.msra.mxu0 0.0
    %4151 = vmatprep.subr.mxu0 0.0
    %4152 = vmatpush1.msra.mxu0 0.0
    %4153 = vmatprep.subr.mxu0 0.0
    %4154 = vmatpush1.msra.mxu0 0.0
    %4155 = vmatprep.subr.mxu0 0.0
    %4156 = vmatpush1.msra.mxu0 0.0
    %4157 = vmatprep.subr.mxu0 0.0
    %4158 = vmatpush1.msra.mxu0 0.0
    %4159 = vmatprep.subr.mxu0 0.0
    %v4160 = vand.u32 %v3378, 4294901760
    %v4161 = vsub.f32 %v3378, %v4160
    %v4162 = vand.u32 %v4161, 4294901760
    %4163 = vmatpush1.msra.mxu0 %v4162
    %4164 = vmatprep.subr.mxu0 0.0
    %4165 = vmatpush2.msra.mxu0 0.0
    %4166 = vmatprep.subr.mxu0 0.0
    %4167 = vmatpush2.msra.mxu0 0.0
    %4168 = vmatprep.subr.mxu0 0.0
    %4169 = vmatpush2.msra.mxu0 0.0
    %4170 = vmatprep.subr.mxu0 0.0
    %4171 = vmatpush2.msra.mxu0 0.0
    %4172 = vmatprep.subr.mxu0 0.0
    %4173 = vmatpush2.msra.mxu0 0.0
    %4174 = vmatprep.subr.mxu0 0.0
    %4175 = vmatpush2.msra.mxu0 0.0
    %4176 = vmatprep.subr.mxu0 0.0
    %4177 = vmatpush2.msra.mxu0 0.0
    %4178 = vmatprep.subr.mxu0 0.0
    %4179 = vmatpush2.msra.mxu0 0.0
    %4180 = vmatprep.subr.mxu0 0.0
    %4181 = vmatpush2.msra.mxu0 0.0
    %4182 = vmatprep.subr.mxu0 0.0
    %4183 = vmatpush2.msra.mxu0 0.0
    %4184 = vmatprep.subr.mxu0 0.0
    %4185 = vmatpush2.msra.mxu0 0.0
    %4186 = vmatprep.subr.mxu0 0.0
    %4187 = vmatpush2.msra.mxu0 0.0
    %4188 = vmatprep.subr.mxu0 0.0
    %4189 = vmatpush2.msra.mxu0 0.0
    %4190 = vmatprep.subr.mxu0 0.0
    %4191 = vmatpush2.msra.mxu0 0.0
    %4192 = vmatprep.subr.mxu0 0.0
    %4193 = vmatpush2.msra.mxu0 0.0
    %4194 = vmatprep.subr.mxu0 0.0
    %4195 = vmatpush2.msra.mxu0 0.0
    %4196 = vmatprep.mubr.f32.mxu0 0.0
    %v4197 = vand.u32 %v3827, 4294901760
    %4198 = vmatmul.mubr.f32.gmra.mxu0 %v4197
    %v4199 = vpop.f32.mrf.mxu0
    %v4200 = vadd.f32 %v4126, %v4199
    %v4201 = vpop.f32.mrf.mxu0
    %4202 = vdwg.mxu0
    %4203 = vmatprep.subr.mxu0 0.0
    %4204 = vmatpush1.msra.mxu0 0.0
    %4205 = vmatprep.subr.mxu0 0.0
    %4206 = vmatpush1.msra.mxu0 0.0
    %4207 = vmatprep.subr.mxu0 0.0
    %4208 = vmatpush1.msra.mxu0 0.0
    %4209 = vmatprep.subr.mxu0 0.0
    %4210 = vmatpush1.msra.mxu0 0.0
    %4211 = vmatprep.subr.mxu0 0.0
    %4212 = vmatpush1.msra.mxu0 0.0
    %4213 = vmatprep.subr.mxu0 0.0
    %4214 = vmatpush1.msra.mxu0 0.0
    %4215 = vmatprep.subr.mxu0 0.0
    %4216 = vmatpush1.msra.mxu0 0.0
    %4217 = vmatprep.subr.mxu0 0.0
    %4218 = vmatpush1.msra.mxu0 0.0
    %4219 = vmatprep.subr.mxu0 0.0
    %4220 = vmatpush1.msra.mxu0 0.0
    %4221 = vmatprep.subr.mxu0 0.0
    %4222 = vmatpush1.msra.mxu0 0.0
    %4223 = vmatprep.subr.mxu0 0.0
    %4224 = vmatpush1.msra.mxu0 0.0
    %4225 = vmatprep.subr.mxu0 0.0
    %4226 = vmatpush1.msra.mxu0 0.0
    %4227 = vmatprep.subr.mxu0 0.0
    %4228 = vmatpush1.msra.mxu0 0.0
    %4229 = vmatprep.subr.mxu0 0.0
    %4230 = vmatpush1.msra.mxu0 0.0
    %4231 = vmatprep.subr.mxu0 0.0
    %4232 = vmatpush1.msra.mxu0 0.0
    %4233 = vmatprep.subr.mxu0 0.0
    %v4234 = vand.u32 %v3378, 4294901760
    %4235 = vmatpush1.msra.mxu0 %v4234
    %4236 = vmatprep.subr.mxu0 0.0
    %4237 = vmatpush2.msra.mxu0 0.0
    %4238 = vmatprep.subr.mxu0 0.0
    %4239 = vmatpush2.msra.mxu0 0.0
    %4240 = vmatprep.subr.mxu0 0.0
    %4241 = vmatpush2.msra.mxu0 0.0
    %4242 = vmatprep.subr.mxu0 0.0
    %4243 = vmatpush2.msra.mxu0 0.0
    %4244 = vmatprep.subr.mxu0 0.0
    %4245 = vmatpush2.msra.mxu0 0.0
    %4246 = vmatprep.subr.mxu0 0.0
    %4247 = vmatpush2.msra.mxu0 0.0
    %4248 = vmatprep.subr.mxu0 0.0
    %4249 = vmatpush2.msra.mxu0 0.0
    %4250 = vmatprep.subr.mxu0 0.0
    %4251 = vmatpush2.msra.mxu0 0.0
    %4252 = vmatprep.subr.mxu0 0.0
    %4253 = vmatpush2.msra.mxu0 0.0
    %4254 = vmatprep.subr.mxu0 0.0
    %4255 = vmatpush2.msra.mxu0 0.0
    %4256 = vmatprep.subr.mxu0 0.0
    %4257 = vmatpush2.msra.mxu0 0.0
    %4258 = vmatprep.subr.mxu0 0.0
    %4259 = vmatpush2.msra.mxu0 0.0
    %4260 = vmatprep.subr.mxu0 0.0
    %4261 = vmatpush2.msra.mxu0 0.0
    %4262 = vmatprep.subr.mxu0 0.0
    %4263 = vmatpush2.msra.mxu0 0.0
    %4264 = vmatprep.subr.mxu0 0.0
    %4265 = vmatpush2.msra.mxu0 0.0
    %4266 = vmatprep.subr.mxu0 0.0
    %4267 = vmatpush2.msra.mxu0 0.0
    %4268 = vmatprep.mubr.f32.mxu0 0.0
    %v4269 = vand.u32 %v3827, 4294901760
    %4270 = vmatmul.mubr.f32.gmra.mxu0 %v4269
    %v4271 = vpop.f32.mrf.mxu0
    %v4272 = vadd.f32 %v4200, %v4271
    %v4273 = vpop.f32.mrf.mxu0
    %4274 = vdwg.mxu0
    %v4275 = vlaneseq
    %v4276 = vshrl.u32 %v4275, 7
    %v4277 = vsub.s32 0, %v4276
    %v4278 = vrot.slane %v3823, %v4277
    %v4279 = vmul.f32 %v2238, %v4278
    %v4280 = vmul.f32 %v2239, %v4278
    %v4281 = vmul.f32 %v2240, %v4278
    %v4282 = vmul.f32 %v2241, %v4278
    %v4283 = vlaneseq
    %v4284 = vshrl.u32 %v4283, 7
    %v4285 = vsub.s32 0, %v4284
    %v4286 = vrot.slane %v4272, %v4285
    %v4287 = vadd.f32 %v4279, %v4286
    %v4288 = vadd.f32 %v4280, %v4286
    %v4289 = vadd.f32 %v4281, %v4286
    %v4290 = vadd.f32 %v4282, %v4286
    %v4291 = vmax.f32 %v4287, 0.0
    %v4292 = vmax.f32 %v4288, 0.0
    %v4293 = vmax.f32 %v4289, 0.0
    %v4294 = vmax.f32 %v4290, 0.0
    %v4299 = vrot.slane %v4291, 7
    %v4300 = vrot.slane %v4292, 7
    %v4301 = vsel %vm136, %v4299, %v4300
    %v4302 = vrot.slane %v4293, 7
    %v4303 = vsel %vm136, %v4300, %v4302
    %v4304 = vrot.slane %v4294, 7
    %v4305 = vsel %vm136, %v4302, %v4304
    %v4310 = vsel %vm136, 0.0, %v4299
    %v4311 = vsel %vm124, %v4310, 0.0
    %v4312 = vsel %vm125, %v4301, 0.0
    %v4313 = vsel %vm126, %v4303, 0.0
    %v4314 = vsel %vm127, %v4305, 0.0
    %v4315 = vrot.slane %v4291, 1
    %v4316 = vrot.slane %v4292, 1
    %v4317 = vsel %vm153, %v4315, %v4316
    %v4318 = vrot.slane %v4293, 1
    %v4319 = vsel %vm153, %v4316, %v4318
    %v4320 = vrot.slane %v4294, 1
    %v4321 = vsel %vm153, %v4318, %v4320
    %v4326 = vsel %vm153, %v4320, 0.0
    %v4327 = vsel %vm128, %v4317, 0.0
    %v4328 = vsel %vm129, %v4319, 0.0
    %v4329 = vsel %vm130, %v4321, 0.0
    %v4330 = vsel %vm131, %v4326, 0.0
    %v4331 = vld [vmem:[#allocation5] sm:$0xff]
    %v4332 = vld [vmem:[#allocation5 + $0x8] sm:$0xff]
    %v4333 = vld [vmem:[#allocation5 + $0x10] sm:$0xff]
    %v4334 = vld [vmem:[#allocation5 + $0x18] sm:$0xff]
    %v4335 = vld [vmem:[#allocation5 + $0x20] sm:$0xff]
    %v4336 = vld [vmem:[#allocation5 + $0x28] sm:$0xff]
    %v4337 = vld [vmem:[#allocation5 + $0x30] sm:$0xff]
    %v4338 = vld [vmem:[#allocation5 + $0x38] sm:$0xff]
    %s4339 = scalar_lea.vmem [#allocation5], 64
    %v4340 = vld [vmem:[%s4339] sm:$0xff]
    %v4341 = vld [vmem:[%s4339 + $0x8] sm:$0xff]
    %v4342 = vld [vmem:[%s4339 + $0x10] sm:$0xff]
    %v4343 = vld [vmem:[%s4339 + $0x18] sm:$0xff]
    %v4344 = vld [vmem:[%s4339 + $0x20] sm:$0xff]
    %v4345 = vld [vmem:[%s4339 + $0x28] sm:$0xff]
    %v4346 = vld [vmem:[%s4339 + $0x30] sm:$0xff]
    %v4347 = vld [vmem:[%s4339 + $0x38] sm:$0xff]
    %v4348 = vsel %vm187, %v4291, 0
    %v4350 = vsel %vm187, %v4292, 0
    %v4352 = vsel %vm187, %v4293, 0
    %v4354 = vsel %vm187, %v4294, 0
    %4356 = vmatprep.subr.mxu0 0.0
    %4357 = vmatpush1.msra.mxu0 0.0
    %4358 = vmatprep.subr.mxu0 0.0
    %4359 = vmatpush1.msra.mxu0 0.0
    %4360 = vmatprep.subr.mxu0 0.0
    %4361 = vmatpush1.msra.mxu0 0.0
    %4362 = vmatprep.subr.mxu0 0.0
    %4363 = vmatpush1.msra.mxu0 0.0
    %4364 = vmatprep.subr.mxu0 0.0
    %4365 = vmatpush1.msra.mxu0 0.0
    %4366 = vmatprep.subr.mxu0 0.0
    %4367 = vmatpush1.msra.mxu0 0.0
    %4368 = vmatprep.subr.mxu0 0.0
    %4369 = vmatpush1.msra.mxu0 0.0
    %4370 = vmatprep.subr.mxu0 0.0
    %4371 = vmatpush1.msra.mxu0 0.0
    %4372 = vmatprep.subr.mxu0 0.0
    %v4373 = vand.u32 %v4347, 4294901760
    %4374 = vmatpush1.msra.mxu0 %v4373
    %4375 = vmatprep.subr.mxu0 0.0
    %v4376 = vand.u32 %v4346, 4294901760
    %4377 = vmatpush1.msra.mxu0 %v4376
    %4378 = vmatprep.subr.mxu0 0.0
    %v4379 = vand.u32 %v4345, 4294901760
    %4380 = vmatpush1.msra.mxu0 %v4379
    %4381 = vmatprep.subr.mxu0 0.0
    %v4382 = vand.u32 %v4344, 4294901760
    %4383 = vmatpush1.msra.mxu0 %v4382
    %4384 = vmatprep.subr.mxu0 0.0
    %v4385 = vand.u32 %v4343, 4294901760
    %4386 = vmatpush1.msra.mxu0 %v4385
    %4387 = vmatprep.subr.mxu0 0.0
    %v4388 = vand.u32 %v4342, 4294901760
    %4389 = vmatpush1.msra.mxu0 %v4388
    %4390 = vmatprep.subr.mxu0 0.0
    %v4391 = vand.u32 %v4341, 4294901760
    %4392 = vmatpush1.msra.mxu0 %v4391
    %4393 = vmatprep.subr.mxu0 0.0
    %v4394 = vand.u32 %v4340, 4294901760
    %4395 = vmatpush1.msra.mxu0 %v4394
    %4396 = vmatprep.subr.mxu0 0.0
    %4397 = vmatpush2.msra.mxu0 0.0
    %4398 = vmatprep.subr.mxu0 0.0
    %4399 = vmatpush2.msra.mxu0 0.0
    %4400 = vmatprep.subr.mxu0 0.0
    %4401 = vmatpush2.msra.mxu0 0.0
    %4402 = vmatprep.subr.mxu0 0.0
    %4403 = vmatpush2.msra.mxu0 0.0
    %4404 = vmatprep.subr.mxu0 0.0
    %4405 = vmatpush2.msra.mxu0 0.0
    %4406 = vmatprep.subr.mxu0 0.0
    %4407 = vmatpush2.msra.mxu0 0.0
    %4408 = vmatprep.subr.mxu0 0.0
    %4409 = vmatpush2.msra.mxu0 0.0
    %4410 = vmatprep.subr.mxu0 0.0
    %4411 = vmatpush2.msra.mxu0 0.0
    %4412 = vmatprep.subr.mxu0 0.0
    %4413 = vmatpush2.msra.mxu0 0.0
    %4414 = vmatprep.subr.mxu0 0.0
    %4415 = vmatpush2.msra.mxu0 0.0
    %4416 = vmatprep.subr.mxu0 0.0
    %4417 = vmatpush2.msra.mxu0 0.0
    %4418 = vmatprep.subr.mxu0 0.0
    %4419 = vmatpush2.msra.mxu0 0.0
    %4420 = vmatprep.subr.mxu0 0.0
    %4421 = vmatpush2.msra.mxu0 0.0
    %4422 = vmatprep.subr.mxu0 0.0
    %4423 = vmatpush2.msra.mxu0 0.0
    %4424 = vmatprep.subr.mxu0 0.0
    %4425 = vmatpush2.msra.mxu0 0.0
    %4426 = vmatprep.subr.mxu0 0.0
    %4427 = vmatpush2.msra.mxu0 0.0
    %4428 = vmatprep.mubr.f32.mxu0 0.0
    %v4429 = vand.u32 %v4348, 4294901760
    %v4430 = vsub.f32 %v4348, %v4429
    %v4431 = vand.u32 %v4430, 4294901760
    %v4432 = vsub.f32 %v4430, %v4431
    %v4433 = vand.u32 %v4432, 4294901760
    %4434 = vmatmul.mubr.f32.gmra.mxu0 %v4433
    %v4435 = vpop.f32.mrf.mxu0
    %v4436 = vadd.f32 0.0, %v4435
    %v4437 = vpop.f32.mrf.mxu0
    %4438 = vmatprep.mubr.f32.mxu0 0.0
    %v4439 = vand.u32 %v4350, 4294901760
    %v4440 = vsub.f32 %v4350, %v4439
    %v4441 = vand.u32 %v4440, 4294901760
    %v4442 = vsub.f32 %v4440, %v4441
    %v4443 = vand.u32 %v4442, 4294901760
    %4444 = vmatmul.mubr.f32.gmra.mxu0 %v4443
    %v4445 = vpop.f32.mrf.mxu0
    %v4446 = vadd.f32 0.0, %v4445
    %v4447 = vpop.f32.mrf.mxu0
    %4448 = vmatprep.mubr.f32.mxu0 0.0
    %v4449 = vand.u32 %v4352, 4294901760
    %v4450 = vsub.f32 %v4352, %v4449
    %v4451 = vand.u32 %v4450, 4294901760
    %v4452 = vsub.f32 %v4450, %v4451
    %v4453 = vand.u32 %v4452, 4294901760
    %4454 = vmatmul.mubr.f32.gmra.mxu0 %v4453
    %v4455 = vpop.f32.mrf.mxu0
    %v4456 = vadd.f32 0.0, %v4455
    %v4457 = vpop.f32.mrf.mxu0
    %4458 = vmatprep.mubr.f32.mxu0 0.0
    %v4459 = vand.u32 %v4354, 4294901760
    %v4460 = vsub.f32 %v4354, %v4459
    %v4461 = vand.u32 %v4460, 4294901760
    %v4462 = vsub.f32 %v4460, %v4461
    %v4463 = vand.u32 %v4462, 4294901760
    %4464 = vmatmul.mubr.f32.gmra.mxu0 %v4463
    %v4465 = vpop.f32.mrf.mxu0
    %v4466 = vadd.f32 0.0, %v4465
    %v4467 = vpop.f32.mrf.mxu0
    %4468 = vdwg.mxu0
    %4469 = vmatprep.subr.mxu0 0.0
    %4470 = vmatpush1.msra.mxu0 0.0
    %4471 = vmatprep.subr.mxu0 0.0
    %4472 = vmatpush1.msra.mxu0 0.0
    %4473 = vmatprep.subr.mxu0 0.0
    %4474 = vmatpush1.msra.mxu0 0.0
    %4475 = vmatprep.subr.mxu0 0.0
    %4476 = vmatpush1.msra.mxu0 0.0
    %4477 = vmatprep.subr.mxu0 0.0
    %4478 = vmatpush1.msra.mxu0 0.0
    %4479 = vmatprep.subr.mxu0 0.0
    %4480 = vmatpush1.msra.mxu0 0.0
    %4481 = vmatprep.subr.mxu0 0.0
    %4482 = vmatpush1.msra.mxu0 0.0
    %4483 = vmatprep.subr.mxu0 0.0
    %4484 = vmatpush1.msra.mxu0 0.0
    %4485 = vmatprep.subr.mxu0 0.0
    %v4486 = vand.u32 %v4347, 4294901760
    %v4487 = vsub.f32 %v4347, %v4486
    %v4488 = vand.u32 %v4487, 4294901760
    %v4489 = vsub.f32 %v4487, %v4488
    %v4490 = vand.u32 %v4489, 4294901760
    %4491 = vmatpush1.msra.mxu0 %v4490
    %4492 = vmatprep.subr.mxu0 0.0
    %v4493 = vand.u32 %v4346, 4294901760
    %v4494 = vsub.f32 %v4346, %v4493
    %v4495 = vand.u32 %v4494, 4294901760
    %v4496 = vsub.f32 %v4494, %v4495
    %v4497 = vand.u32 %v4496, 4294901760
    %4498 = vmatpush1.msra.mxu0 %v4497
    %4499 = vmatprep.subr.mxu0 0.0
    %v4500 = vand.u32 %v4345, 4294901760
    %v4501 = vsub.f32 %v4345, %v4500
    %v4502 = vand.u32 %v4501, 4294901760
    %v4503 = vsub.f32 %v4501, %v4502
    %v4504 = vand.u32 %v4503, 4294901760
    %4505 = vmatpush1.msra.mxu0 %v4504
    %4506 = vmatprep.subr.mxu0 0.0
    %v4507 = vand.u32 %v4344, 4294901760
    %v4508 = vsub.f32 %v4344, %v4507
    %v4509 = vand.u32 %v4508, 4294901760
    %v4510 = vsub.f32 %v4508, %v4509
    %v4511 = vand.u32 %v4510, 4294901760
    %4512 = vmatpush1.msra.mxu0 %v4511
    %4513 = vmatprep.subr.mxu0 0.0
    %v4514 = vand.u32 %v4343, 4294901760
    %v4515 = vsub.f32 %v4343, %v4514
    %v4516 = vand.u32 %v4515, 4294901760
    %v4517 = vsub.f32 %v4515, %v4516
    %v4518 = vand.u32 %v4517, 4294901760
    %4519 = vmatpush1.msra.mxu0 %v4518
    %4520 = vmatprep.subr.mxu0 0.0
    %v4521 = vand.u32 %v4342, 4294901760
    %v4522 = vsub.f32 %v4342, %v4521
    %v4523 = vand.u32 %v4522, 4294901760
    %v4524 = vsub.f32 %v4522, %v4523
    %v4525 = vand.u32 %v4524, 4294901760
    %4526 = vmatpush1.msra.mxu0 %v4525
    %4527 = vmatprep.subr.mxu0 0.0
    %v4528 = vand.u32 %v4341, 4294901760
    %v4529 = vsub.f32 %v4341, %v4528
    %v4530 = vand.u32 %v4529, 4294901760
    %v4531 = vsub.f32 %v4529, %v4530
    %v4532 = vand.u32 %v4531, 4294901760
    %4533 = vmatpush1.msra.mxu0 %v4532
    %4534 = vmatprep.subr.mxu0 0.0
    %v4535 = vand.u32 %v4340, 4294901760
    %v4536 = vsub.f32 %v4340, %v4535
    %v4537 = vand.u32 %v4536, 4294901760
    %v4538 = vsub.f32 %v4536, %v4537
    %v4539 = vand.u32 %v4538, 4294901760
    %4540 = vmatpush1.msra.mxu0 %v4539
    %4541 = vmatprep.subr.mxu0 0.0
    %4542 = vmatpush2.msra.mxu0 0.0
    %4543 = vmatprep.subr.mxu0 0.0
    %4544 = vmatpush2.msra.mxu0 0.0
    %4545 = vmatprep.subr.mxu0 0.0
    %4546 = vmatpush2.msra.mxu0 0.0
    %4547 = vmatprep.subr.mxu0 0.0
    %4548 = vmatpush2.msra.mxu0 0.0
    %4549 = vmatprep.subr.mxu0 0.0
    %4550 = vmatpush2.msra.mxu0 0.0
    %4551 = vmatprep.subr.mxu0 0.0
    %4552 = vmatpush2.msra.mxu0 0.0
    %4553 = vmatprep.subr.mxu0 0.0
    %4554 = vmatpush2.msra.mxu0 0.0
    %4555 = vmatprep.subr.mxu0 0.0
    %4556 = vmatpush2.msra.mxu0 0.0
    %4557 = vmatprep.subr.mxu0 0.0
    %4558 = vmatpush2.msra.mxu0 0.0
    %4559 = vmatprep.subr.mxu0 0.0
    %4560 = vmatpush2.msra.mxu0 0.0
    %4561 = vmatprep.subr.mxu0 0.0
    %4562 = vmatpush2.msra.mxu0 0.0
    %4563 = vmatprep.subr.mxu0 0.0
    %4564 = vmatpush2.msra.mxu0 0.0
    %4565 = vmatprep.subr.mxu0 0.0
    %4566 = vmatpush2.msra.mxu0 0.0
    %4567 = vmatprep.subr.mxu0 0.0
    %4568 = vmatpush2.msra.mxu0 0.0
    %4569 = vmatprep.subr.mxu0 0.0
    %4570 = vmatpush2.msra.mxu0 0.0
    %4571 = vmatprep.subr.mxu0 0.0
    %4572 = vmatpush2.msra.mxu0 0.0
    %4573 = vmatprep.mubr.f32.mxu0 0.0
    %v4574 = vand.u32 %v4348, 4294901760
    %4575 = vmatmul.mubr.f32.gmra.mxu0 %v4574
    %v4576 = vpop.f32.mrf.mxu0
    %v4577 = vadd.f32 %v4436, %v4576
    %v4578 = vpop.f32.mrf.mxu0
    %4579 = vmatprep.mubr.f32.mxu0 0.0
    %v4580 = vand.u32 %v4350, 4294901760
    %4581 = vmatmul.mubr.f32.gmra.mxu0 %v4580
    %v4582 = vpop.f32.mrf.mxu0
    %v4583 = vadd.f32 %v4446, %v4582
    %v4584 = vpop.f32.mrf.mxu0
    %4585 = vmatprep.mubr.f32.mxu0 0.0
    %v4586 = vand.u32 %v4352, 4294901760
    %4587 = vmatmul.mubr.f32.gmra.mxu0 %v4586
    %v4588 = vpop.f32.mrf.mxu0
    %v4589 = vadd.f32 %v4456, %v4588
    %v4590 = vpop.f32.mrf.mxu0
    %4591 = vmatprep.mubr.f32.mxu0 0.0
    %v4592 = vand.u32 %v4354, 4294901760
    %4593 = vmatmul.mubr.f32.gmra.mxu0 %v4592
    %v4594 = vpop.f32.mrf.mxu0
    %v4595 = vadd.f32 %v4466, %v4594
    %v4596 = vpop.f32.mrf.mxu0
    %4597 = vdwg.mxu0
    %4598 = vmatprep.subr.mxu0 0.0
    %4599 = vmatpush1.msra.mxu0 0.0
    %4600 = vmatprep.subr.mxu0 0.0
    %4601 = vmatpush1.msra.mxu0 0.0
    %4602 = vmatprep.subr.mxu0 0.0
    %4603 = vmatpush1.msra.mxu0 0.0
    %4604 = vmatprep.subr.mxu0 0.0
    %4605 = vmatpush1.msra.mxu0 0.0
    %4606 = vmatprep.subr.mxu0 0.0
    %4607 = vmatpush1.msra.mxu0 0.0
    %4608 = vmatprep.subr.mxu0 0.0
    %4609 = vmatpush1.msra.mxu0 0.0
    %4610 = vmatprep.subr.mxu0 0.0
    %4611 = vmatpush1.msra.mxu0 0.0
    %4612 = vmatprep.subr.mxu0 0.0
    %4613 = vmatpush1.msra.mxu0 0.0
    %4614 = vmatprep.subr.mxu0 0.0
    %v4615 = vand.u32 %v4347, 4294901760
    %v4616 = vsub.f32 %v4347, %v4615
    %4617 = vmatpush1.msra.mxu0 %v4616
    %4618 = vmatprep.subr.mxu0 0.0
    %v4619 = vand.u32 %v4346, 4294901760
    %v4620 = vsub.f32 %v4346, %v4619
    %4621 = vmatpush1.msra.mxu0 %v4620
    %4622 = vmatprep.subr.mxu0 0.0
    %v4623 = vand.u32 %v4345, 4294901760
    %v4624 = vsub.f32 %v4345, %v4623
    %4625 = vmatpush1.msra.mxu0 %v4624
    %4626 = vmatprep.subr.mxu0 0.0
    %v4627 = vand.u32 %v4344, 4294901760
    %v4628 = vsub.f32 %v4344, %v4627
    %4629 = vmatpush1.msra.mxu0 %v4628
    %4630 = vmatprep.subr.mxu0 0.0
    %v4631 = vand.u32 %v4343, 4294901760
    %v4632 = vsub.f32 %v4343, %v4631
    %4633 = vmatpush1.msra.mxu0 %v4632
    %4634 = vmatprep.subr.mxu0 0.0
    %v4635 = vand.u32 %v4342, 4294901760
    %v4636 = vsub.f32 %v4342, %v4635
    %4637 = vmatpush1.msra.mxu0 %v4636
    %4638 = vmatprep.subr.mxu0 0.0
    %v4639 = vand.u32 %v4341, 4294901760
    %v4640 = vsub.f32 %v4341, %v4639
    %4641 = vmatpush1.msra.mxu0 %v4640
    %4642 = vmatprep.subr.mxu0 0.0
    %v4643 = vand.u32 %v4340, 4294901760
    %v4644 = vsub.f32 %v4340, %v4643
    %4645 = vmatpush1.msra.mxu0 %v4644
    %4646 = vmatprep.subr.mxu0 0.0
    %4647 = vmatpush2.msra.mxu0 0.0
    %4648 = vmatprep.subr.mxu0 0.0
    %4649 = vmatpush2.msra.mxu0 0.0
    %4650 = vmatprep.subr.mxu0 0.0
    %4651 = vmatpush2.msra.mxu0 0.0
    %4652 = vmatprep.subr.mxu0 0.0
    %4653 = vmatpush2.msra.mxu0 0.0
    %4654 = vmatprep.subr.mxu0 0.0
    %4655 = vmatpush2.msra.mxu0 0.0
    %4656 = vmatprep.subr.mxu0 0.0
    %4657 = vmatpush2.msra.mxu0 0.0
    %4658 = vmatprep.subr.mxu0 0.0
    %4659 = vmatpush2.msra.mxu0 0.0
    %4660 = vmatprep.subr.mxu0 0.0
    %4661 = vmatpush2.msra.mxu0 0.0
    %4662 = vmatprep.subr.mxu0 0.0
    %4663 = vmatpush2.msra.mxu0 0.0
    %4664 = vmatprep.subr.mxu0 0.0
    %4665 = vmatpush2.msra.mxu0 0.0
    %4666 = vmatprep.subr.mxu0 0.0
    %4667 = vmatpush2.msra.mxu0 0.0
    %4668 = vmatprep.subr.mxu0 0.0
    %4669 = vmatpush2.msra.mxu0 0.0
    %4670 = vmatprep.subr.mxu0 0.0
    %4671 = vmatpush2.msra.mxu0 0.0
    %4672 = vmatprep.subr.mxu0 0.0
    %4673 = vmatpush2.msra.mxu0 0.0
    %4674 = vmatprep.subr.mxu0 0.0
    %4675 = vmatpush2.msra.mxu0 0.0
    %4676 = vmatprep.subr.mxu0 0.0
    %4677 = vmatpush2.msra.mxu0 0.0
    %4678 = vmatprep.mubr.f32.mxu0 0.0
    %v4679 = vand.u32 %v4348, 4294901760
    %v4680 = vsub.f32 %v4348, %v4679
    %4681 = vmatmul.mubr.f32.gmra.mxu0 %v4680
    %v4682 = vpop.f32.mrf.mxu0
    %v4683 = vadd.f32 %v4577, %v4682
    %v4684 = vpop.f32.mrf.mxu0
    %4685 = vmatprep.mubr.f32.mxu0 0.0
    %v4686 = vand.u32 %v4350, 4294901760
    %v4687 = vsub.f32 %v4350, %v4686
    %4688 = vmatmul.mubr.f32.gmra.mxu0 %v4687
    %v4689 = vpop.f32.mrf.mxu0
    %v4690 = vadd.f32 %v4583, %v4689
    %v4691 = vpop.f32.mrf.mxu0
    %4692 = vmatprep.mubr.f32.mxu0 0.0
    %v4693 = vand.u32 %v4352, 4294901760
    %v4694 = vsub.f32 %v4352, %v4693
    %4695 = vmatmul.mubr.f32.gmra.mxu0 %v4694
    %v4696 = vpop.f32.mrf.mxu0
    %v4697 = vadd.f32 %v4589, %v4696
    %v4698 = vpop.f32.mrf.mxu0
    %4699 = vmatprep.mubr.f32.mxu0 0.0
    %v4700 = vand.u32 %v4354, 4294901760
    %v4701 = vsub.f32 %v4354, %v4700
    %4702 = vmatmul.mubr.f32.gmra.mxu0 %v4701
    %v4703 = vpop.f32.mrf.mxu0
    %v4704 = vadd.f32 %v4595, %v4703
    %v4705 = vpop.f32.mrf.mxu0
    %4706 = vdwg.mxu0
    %4707 = vmatprep.subr.mxu0 0.0
    %4708 = vmatpush1.msra.mxu0 0.0
    %4709 = vmatprep.subr.mxu0 0.0
    %4710 = vmatpush1.msra.mxu0 0.0
    %4711 = vmatprep.subr.mxu0 0.0
    %4712 = vmatpush1.msra.mxu0 0.0
    %4713 = vmatprep.subr.mxu0 0.0
    %4714 = vmatpush1.msra.mxu0 0.0
    %4715 = vmatprep.subr.mxu0 0.0
    %4716 = vmatpush1.msra.mxu0 0.0
    %4717 = vmatprep.subr.mxu0 0.0
    %4718 = vmatpush1.msra.mxu0 0.0
    %4719 = vmatprep.subr.mxu0 0.0
    %4720 = vmatpush1.msra.mxu0 0.0
    %4721 = vmatprep.subr.mxu0 0.0
    %4722 = vmatpush1.msra.mxu0 0.0
    %4723 = vmatprep.subr.mxu0 0.0
    %v4724 = vand.u32 %v4347, 4294901760
    %4725 = vmatpush1.msra.mxu0 %v4724
    %4726 = vmatprep.subr.mxu0 0.0
    %v4727 = vand.u32 %v4346, 4294901760
    %4728 = vmatpush1.msra.mxu0 %v4727
    %4729 = vmatprep.subr.mxu0 0.0
    %v4730 = vand.u32 %v4345, 4294901760
    %4731 = vmatpush1.msra.mxu0 %v4730
    %4732 = vmatprep.subr.mxu0 0.0
    %v4733 = vand.u32 %v4344, 4294901760
    %4734 = vmatpush1.msra.mxu0 %v4733
    %4735 = vmatprep.subr.mxu0 0.0
    %v4736 = vand.u32 %v4343, 4294901760
    %4737 = vmatpush1.msra.mxu0 %v4736
    %4738 = vmatprep.subr.mxu0 0.0
    %v4739 = vand.u32 %v4342, 4294901760
    %4740 = vmatpush1.msra.mxu0 %v4739
    %4741 = vmatprep.subr.mxu0 0.0
    %v4742 = vand.u32 %v4341, 4294901760
    %4743 = vmatpush1.msra.mxu0 %v4742
    %4744 = vmatprep.subr.mxu0 0.0
    %v4745 = vand.u32 %v4340, 4294901760
    %4746 = vmatpush1.msra.mxu0 %v4745
    %4747 = vmatprep.subr.mxu0 0.0
    %4748 = vmatpush2.msra.mxu0 0.0
    %4749 = vmatprep.subr.mxu0 0.0
    %4750 = vmatpush2.msra.mxu0 0.0
    %4751 = vmatprep.subr.mxu0 0.0
    %4752 = vmatpush2.msra.mxu0 0.0
    %4753 = vmatprep.subr.mxu0 0.0
    %4754 = vmatpush2.msra.mxu0 0.0
    %4755 = vmatprep.subr.mxu0 0.0
    %4756 = vmatpush2.msra.mxu0 0.0
    %4757 = vmatprep.subr.mxu0 0.0
    %4758 = vmatpush2.msra.mxu0 0.0
    %4759 = vmatprep.subr.mxu0 0.0
    %4760 = vmatpush2.msra.mxu0 0.0
    %4761 = vmatprep.subr.mxu0 0.0
    %4762 = vmatpush2.msra.mxu0 0.0
    %4763 = vmatprep.subr.mxu0 0.0
    %4764 = vmatpush2.msra.mxu0 0.0
    %4765 = vmatprep.subr.mxu0 0.0
    %4766 = vmatpush2.msra.mxu0 0.0
    %4767 = vmatprep.subr.mxu0 0.0
    %4768 = vmatpush2.msra.mxu0 0.0
    %4769 = vmatprep.subr.mxu0 0.0
    %4770 = vmatpush2.msra.mxu0 0.0
    %4771 = vmatprep.subr.mxu0 0.0
    %4772 = vmatpush2.msra.mxu0 0.0
    %4773 = vmatprep.subr.mxu0 0.0
    %4774 = vmatpush2.msra.mxu0 0.0
    %4775 = vmatprep.subr.mxu0 0.0
    %4776 = vmatpush2.msra.mxu0 0.0
    %4777 = vmatprep.subr.mxu0 0.0
    %4778 = vmatpush2.msra.mxu0 0.0
    %4779 = vmatprep.mubr.f32.mxu0 0.0
    %v4780 = vand.u32 %v4348, 4294901760
    %v4781 = vsub.f32 %v4348, %v4780
    %v4782 = vand.u32 %v4781, 4294901760
    %4783 = vmatmul.mubr.f32.gmra.mxu0 %v4782
    %v4784 = vpop.f32.mrf.mxu0
    %v4785 = vadd.f32 %v4683, %v4784
    %v4786 = vpop.f32.mrf.mxu0
    %4787 = vmatprep.mubr.f32.mxu0 0.0
    %v4788 = vand.u32 %v4350, 4294901760
    %v4789 = vsub.f32 %v4350, %v4788
    %v4790 = vand.u32 %v4789, 4294901760
    %4791 = vmatmul.mubr.f32.gmra.mxu0 %v4790
    %v4792 = vpop.f32.mrf.mxu0
    %v4793 = vadd.f32 %v4690, %v4792
    %v4794 = vpop.f32.mrf.mxu0
    %4795 = vmatprep.mubr.f32.mxu0 0.0
    %v4796 = vand.u32 %v4352, 4294901760
    %v4797 = vsub.f32 %v4352, %v4796
    %v4798 = vand.u32 %v4797, 4294901760
    %4799 = vmatmul.mubr.f32.gmra.mxu0 %v4798
    %v4800 = vpop.f32.mrf.mxu0
    %v4801 = vadd.f32 %v4697, %v4800
    %v4802 = vpop.f32.mrf.mxu0
    %4803 = vmatprep.mubr.f32.mxu0 0.0
    %v4804 = vand.u32 %v4354, 4294901760
    %v4805 = vsub.f32 %v4354, %v4804
    %v4806 = vand.u32 %v4805, 4294901760
    %4807 = vmatmul.mubr.f32.gmra.mxu0 %v4806
    %v4808 = vpop.f32.mrf.mxu0
    %v4809 = vadd.f32 %v4704, %v4808
    %v4810 = vpop.f32.mrf.mxu0
    %4811 = vdwg.mxu0
    %4812 = vmatprep.subr.mxu0 0.0
    %4813 = vmatpush1.msra.mxu0 0.0
    %4814 = vmatprep.subr.mxu0 0.0
    %4815 = vmatpush1.msra.mxu0 0.0
    %4816 = vmatprep.subr.mxu0 0.0
    %4817 = vmatpush1.msra.mxu0 0.0
    %4818 = vmatprep.subr.mxu0 0.0
    %4819 = vmatpush1.msra.mxu0 0.0
    %4820 = vmatprep.subr.mxu0 0.0
    %4821 = vmatpush1.msra.mxu0 0.0
    %4822 = vmatprep.subr.mxu0 0.0
    %4823 = vmatpush1.msra.mxu0 0.0
    %4824 = vmatprep.subr.mxu0 0.0
    %4825 = vmatpush1.msra.mxu0 0.0
    %4826 = vmatprep.subr.mxu0 0.0
    %4827 = vmatpush1.msra.mxu0 0.0
    %4828 = vmatprep.subr.mxu0 0.0
    %v4829 = vand.u32 %v4347, 4294901760
    %v4830 = vsub.f32 %v4347, %v4829
    %v4831 = vand.u32 %v4830, 4294901760
    %4832 = vmatpush1.msra.mxu0 %v4831
    %4833 = vmatprep.subr.mxu0 0.0
    %v4834 = vand.u32 %v4346, 4294901760
    %v4835 = vsub.f32 %v4346, %v4834
    %v4836 = vand.u32 %v4835, 4294901760
    %4837 = vmatpush1.msra.mxu0 %v4836
    %4838 = vmatprep.subr.mxu0 0.0
    %v4839 = vand.u32 %v4345, 4294901760
    %v4840 = vsub.f32 %v4345, %v4839
    %v4841 = vand.u32 %v4840, 4294901760
    %4842 = vmatpush1.msra.mxu0 %v4841
    %4843 = vmatprep.subr.mxu0 0.0
    %v4844 = vand.u32 %v4344, 4294901760
    %v4845 = vsub.f32 %v4344, %v4844
    %v4846 = vand.u32 %v4845, 4294901760
    %4847 = vmatpush1.msra.mxu0 %v4846
    %4848 = vmatprep.subr.mxu0 0.0
    %v4849 = vand.u32 %v4343, 4294901760
    %v4850 = vsub.f32 %v4343, %v4849
    %v4851 = vand.u32 %v4850, 4294901760
    %4852 = vmatpush1.msra.mxu0 %v4851
    %4853 = vmatprep.subr.mxu0 0.0
    %v4854 = vand.u32 %v4342, 4294901760
    %v4855 = vsub.f32 %v4342, %v4854
    %v4856 = vand.u32 %v4855, 4294901760
    %4857 = vmatpush1.msra.mxu0 %v4856
    %4858 = vmatprep.subr.mxu0 0.0
    %v4859 = vand.u32 %v4341, 4294901760
    %v4860 = vsub.f32 %v4341, %v4859
    %v4861 = vand.u32 %v4860, 4294901760
    %4862 = vmatpush1.msra.mxu0 %v4861
    %4863 = vmatprep.subr.mxu0 0.0
    %v4864 = vand.u32 %v4340, 4294901760
    %v4865 = vsub.f32 %v4340, %v4864
    %v4866 = vand.u32 %v4865, 4294901760
    %4867 = vmatpush1.msra.mxu0 %v4866
    %4868 = vmatprep.subr.mxu0 0.0
    %4869 = vmatpush2.msra.mxu0 0.0
    %4870 = vmatprep.subr.mxu0 0.0
    %4871 = vmatpush2.msra.mxu0 0.0
    %4872 = vmatprep.subr.mxu0 0.0
    %4873 = vmatpush2.msra.mxu0 0.0
    %4874 = vmatprep.subr.mxu0 0.0
    %4875 = vmatpush2.msra.mxu0 0.0
    %4876 = vmatprep.subr.mxu0 0.0
    %4877 = vmatpush2.msra.mxu0 0.0
    %4878 = vmatprep.subr.mxu0 0.0
    %4879 = vmatpush2.msra.mxu0 0.0
    %4880 = vmatprep.subr.mxu0 0.0
    %4881 = vmatpush2.msra.mxu0 0.0
    %4882 = vmatprep.subr.mxu0 0.0
    %4883 = vmatpush2.msra.mxu0 0.0
    %4884 = vmatprep.subr.mxu0 0.0
    %4885 = vmatpush2.msra.mxu0 0.0
    %4886 = vmatprep.subr.mxu0 0.0
    %4887 = vmatpush2.msra.mxu0 0.0
    %4888 = vmatprep.subr.mxu0 0.0
    %4889 = vmatpush2.msra.mxu0 0.0
    %4890 = vmatprep.subr.mxu0 0.0
    %4891 = vmatpush2.msra.mxu0 0.0
    %4892 = vmatprep.subr.mxu0 0.0
    %4893 = vmatpush2.msra.mxu0 0.0
    %4894 = vmatprep.subr.mxu0 0.0
    %4895 = vmatpush2.msra.mxu0 0.0
    %4896 = vmatprep.subr.mxu0 0.0
    %4897 = vmatpush2.msra.mxu0 0.0
    %4898 = vmatprep.subr.mxu0 0.0
    %4899 = vmatpush2.msra.mxu0 0.0
    %4900 = vmatprep.mubr.f32.mxu0 0.0
    %v4901 = vand.u32 %v4348, 4294901760
    %4902 = vmatmul.mubr.f32.gmra.mxu0 %v4901
    %v4903 = vpop.f32.mrf.mxu0
    %v4904 = vadd.f32 %v4785, %v4903
    %v4905 = vpop.f32.mrf.mxu0
    %4906 = vmatprep.mubr.f32.mxu0 0.0
    %v4907 = vand.u32 %v4350, 4294901760
    %4908 = vmatmul.mubr.f32.gmra.mxu0 %v4907
    %v4909 = vpop.f32.mrf.mxu0
    %v4910 = vadd.f32 %v4793, %v4909
    %v4911 = vpop.f32.mrf.mxu0
    %4912 = vmatprep.mubr.f32.mxu0 0.0
    %v4913 = vand.u32 %v4352, 4294901760
    %4914 = vmatmul.mubr.f32.gmra.mxu0 %v4913
    %v4915 = vpop.f32.mrf.mxu0
    %v4916 = vadd.f32 %v4801, %v4915
    %v4917 = vpop.f32.mrf.mxu0
    %4918 = vmatprep.mubr.f32.mxu0 0.0
    %v4919 = vand.u32 %v4354, 4294901760
    %4920 = vmatmul.mubr.f32.gmra.mxu0 %v4919
    %v4921 = vpop.f32.mrf.mxu0
    %v4922 = vadd.f32 %v4809, %v4921
    %v4923 = vpop.f32.mrf.mxu0
    %4924 = vdwg.mxu0
    %4925 = vmatprep.subr.mxu0 0.0
    %4926 = vmatpush1.msra.mxu0 0.0
    %4927 = vmatprep.subr.mxu0 0.0
    %4928 = vmatpush1.msra.mxu0 0.0
    %4929 = vmatprep.subr.mxu0 0.0
    %4930 = vmatpush1.msra.mxu0 0.0
    %4931 = vmatprep.subr.mxu0 0.0
    %4932 = vmatpush1.msra.mxu0 0.0
    %4933 = vmatprep.subr.mxu0 0.0
    %4934 = vmatpush1.msra.mxu0 0.0
    %4935 = vmatprep.subr.mxu0 0.0
    %4936 = vmatpush1.msra.mxu0 0.0
    %4937 = vmatprep.subr.mxu0 0.0
    %4938 = vmatpush1.msra.mxu0 0.0
    %4939 = vmatprep.subr.mxu0 0.0
    %4940 = vmatpush1.msra.mxu0 0.0
    %4941 = vmatprep.subr.mxu0 0.0
    %v4942 = vand.u32 %v4347, 4294901760
    %4943 = vmatpush1.msra.mxu0 %v4942
    %4944 = vmatprep.subr.mxu0 0.0
    %v4945 = vand.u32 %v4346, 4294901760
    %4946 = vmatpush1.msra.mxu0 %v4945
    %4947 = vmatprep.subr.mxu0 0.0
    %v4948 = vand.u32 %v4345, 4294901760
    %4949 = vmatpush1.msra.mxu0 %v4948
    %4950 = vmatprep.subr.mxu0 0.0
    %v4951 = vand.u32 %v4344, 4294901760
    %4952 = vmatpush1.msra.mxu0 %v4951
    %4953 = vmatprep.subr.mxu0 0.0
    %v4954 = vand.u32 %v4343, 4294901760
    %4955 = vmatpush1.msra.mxu0 %v4954
    %4956 = vmatprep.subr.mxu0 0.0
    %v4957 = vand.u32 %v4342, 4294901760
    %4958 = vmatpush1.msra.mxu0 %v4957
    %4959 = vmatprep.subr.mxu0 0.0
    %v4960 = vand.u32 %v4341, 4294901760
    %4961 = vmatpush1.msra.mxu0 %v4960
    %4962 = vmatprep.subr.mxu0 0.0
    %v4963 = vand.u32 %v4340, 4294901760
    %4964 = vmatpush1.msra.mxu0 %v4963
    %4965 = vmatprep.subr.mxu0 0.0
    %4966 = vmatpush2.msra.mxu0 0.0
    %4967 = vmatprep.subr.mxu0 0.0
    %4968 = vmatpush2.msra.mxu0 0.0
    %4969 = vmatprep.subr.mxu0 0.0
    %4970 = vmatpush2.msra.mxu0 0.0
    %4971 = vmatprep.subr.mxu0 0.0
    %4972 = vmatpush2.msra.mxu0 0.0
    %4973 = vmatprep.subr.mxu0 0.0
    %4974 = vmatpush2.msra.mxu0 0.0
    %4975 = vmatprep.subr.mxu0 0.0
    %4976 = vmatpush2.msra.mxu0 0.0
    %4977 = vmatprep.subr.mxu0 0.0
    %4978 = vmatpush2.msra.mxu0 0.0
    %4979 = vmatprep.subr.mxu0 0.0
    %4980 = vmatpush2.msra.mxu0 0.0
    %4981 = vmatprep.subr.mxu0 0.0
    %4982 = vmatpush2.msra.mxu0 0.0
    %4983 = vmatprep.subr.mxu0 0.0
    %4984 = vmatpush2.msra.mxu0 0.0
    %4985 = vmatprep.subr.mxu0 0.0
    %4986 = vmatpush2.msra.mxu0 0.0
    %4987 = vmatprep.subr.mxu0 0.0
    %4988 = vmatpush2.msra.mxu0 0.0
    %4989 = vmatprep.subr.mxu0 0.0
    %4990 = vmatpush2.msra.mxu0 0.0
    %4991 = vmatprep.subr.mxu0 0.0
    %4992 = vmatpush2.msra.mxu0 0.0
    %4993 = vmatprep.subr.mxu0 0.0
    %4994 = vmatpush2.msra.mxu0 0.0
    %4995 = vmatprep.subr.mxu0 0.0
    %4996 = vmatpush2.msra.mxu0 0.0
    %4997 = vmatprep.mubr.f32.mxu0 0.0
    %v4998 = vand.u32 %v4348, 4294901760
    %4999 = vmatmul.mubr.f32.gmra.mxu0 %v4998
    %v5000 = vpop.f32.mrf.mxu0
    %v5001 = vadd.f32 %v4904, %v5000
    %v5002 = vpop.f32.mrf.mxu0
    %5003 = vmatprep.mubr.f32.mxu0 0.0
    %v5004 = vand.u32 %v4350, 4294901760
    %5005 = vmatmul.mubr.f32.gmra.mxu0 %v5004
    %v5006 = vpop.f32.mrf.mxu0
    %v5007 = vadd.f32 %v4910, %v5006
    %v5008 = vpop.f32.mrf.mxu0
    %5009 = vmatprep.mubr.f32.mxu0 0.0
    %v5010 = vand.u32 %v4352, 4294901760
    %5011 = vmatmul.mubr.f32.gmra.mxu0 %v5010
    %v5012 = vpop.f32.mrf.mxu0
    %v5013 = vadd.f32 %v4916, %v5012
    %v5014 = vpop.f32.mrf.mxu0
    %5015 = vmatprep.mubr.f32.mxu0 0.0
    %v5016 = vand.u32 %v4354, 4294901760
    %5017 = vmatmul.mubr.f32.gmra.mxu0 %v5016
    %v5018 = vpop.f32.mrf.mxu0
    %v5019 = vadd.f32 %v4922, %v5018
    %v5020 = vpop.f32.mrf.mxu0
    %5021 = vdwg.mxu0
    %v5023 = vsel %vm187, %v4311, 0
    %v5026 = vsel %vm187, %v4312, 0
    %v5029 = vsel %vm187, %v4313, 0
    %v5032 = vsel %vm187, %v4314, 0
    %5034 = vmatprep.subr.mxu0 0.0
    %5035 = vmatpush1.msra.mxu0 0.0
    %5036 = vmatprep.subr.mxu0 0.0
    %5037 = vmatpush1.msra.mxu0 0.0
    %5038 = vmatprep.subr.mxu0 0.0
    %5039 = vmatpush1.msra.mxu0 0.0
    %5040 = vmatprep.subr.mxu0 0.0
    %5041 = vmatpush1.msra.mxu0 0.0
    %5042 = vmatprep.subr.mxu0 0.0
    %5043 = vmatpush1.msra.mxu0 0.0
    %5044 = vmatprep.subr.mxu0 0.0
    %5045 = vmatpush1.msra.mxu0 0.0
    %5046 = vmatprep.subr.mxu0 0.0
    %5047 = vmatpush1.msra.mxu0 0.0
    %5048 = vmatprep.subr.mxu0 0.0
    %5049 = vmatpush1.msra.mxu0 0.0
    %5050 = vmatprep.subr.mxu0 0.0
    %v5051 = vand.u32 %v4338, 4294901760
    %5052 = vmatpush1.msra.mxu0 %v5051
    %5053 = vmatprep.subr.mxu0 0.0
    %v5054 = vand.u32 %v4337, 4294901760
    %5055 = vmatpush1.msra.mxu0 %v5054
    %5056 = vmatprep.subr.mxu0 0.0
    %v5057 = vand.u32 %v4336, 4294901760
    %5058 = vmatpush1.msra.mxu0 %v5057
    %5059 = vmatprep.subr.mxu0 0.0
    %v5060 = vand.u32 %v4335, 4294901760
    %5061 = vmatpush1.msra.mxu0 %v5060
    %5062 = vmatprep.subr.mxu0 0.0
    %v5063 = vand.u32 %v4334, 4294901760
    %5064 = vmatpush1.msra.mxu0 %v5063
    %5065 = vmatprep.subr.mxu0 0.0
    %v5066 = vand.u32 %v4333, 4294901760
    %5067 = vmatpush1.msra.mxu0 %v5066
    %5068 = vmatprep.subr.mxu0 0.0
    %v5069 = vand.u32 %v4332, 4294901760
    %5070 = vmatpush1.msra.mxu0 %v5069
    %5071 = vmatprep.subr.mxu0 0.0
    %v5072 = vand.u32 %v4331, 4294901760
    %5073 = vmatpush1.msra.mxu0 %v5072
    %5074 = vmatprep.subr.mxu0 0.0
    %5075 = vmatpush2.msra.mxu0 0.0
    %5076 = vmatprep.subr.mxu0 0.0
    %5077 = vmatpush2.msra.mxu0 0.0
    %5078 = vmatprep.subr.mxu0 0.0
    %5079 = vmatpush2.msra.mxu0 0.0
    %5080 = vmatprep.subr.mxu0 0.0
    %5081 = vmatpush2.msra.mxu0 0.0
    %5082 = vmatprep.subr.mxu0 0.0
    %5083 = vmatpush2.msra.mxu0 0.0
    %5084 = vmatprep.subr.mxu0 0.0
    %5085 = vmatpush2.msra.mxu0 0.0
    %5086 = vmatprep.subr.mxu0 0.0
    %5087 = vmatpush2.msra.mxu0 0.0
    %5088 = vmatprep.subr.mxu0 0.0
    %5089 = vmatpush2.msra.mxu0 0.0
    %5090 = vmatprep.subr.mxu0 0.0
    %5091 = vmatpush2.msra.mxu0 0.0
    %5092 = vmatprep.subr.mxu0 0.0
    %5093 = vmatpush2.msra.mxu0 0.0
    %5094 = vmatprep.subr.mxu0 0.0
    %5095 = vmatpush2.msra.mxu0 0.0
    %5096 = vmatprep.subr.mxu0 0.0
    %5097 = vmatpush2.msra.mxu0 0.0
    %5098 = vmatprep.subr.mxu0 0.0
    %5099 = vmatpush2.msra.mxu0 0.0
    %5100 = vmatprep.subr.mxu0 0.0
    %5101 = vmatpush2.msra.mxu0 0.0
    %5102 = vmatprep.subr.mxu0 0.0
    %5103 = vmatpush2.msra.mxu0 0.0
    %5104 = vmatprep.subr.mxu0 0.0
    %5105 = vmatpush2.msra.mxu0 0.0
    %5106 = vmatprep.mubr.f32.mxu0 0.0
    %v5107 = vand.u32 %v5023, 4294901760
    %v5108 = vsub.f32 %v5023, %v5107
    %v5109 = vand.u32 %v5108, 4294901760
    %v5110 = vsub.f32 %v5108, %v5109
    %v5111 = vand.u32 %v5110, 4294901760
    %5112 = vmatmul.mubr.f32.gmra.mxu0 %v5111
    %v5113 = vpop.f32.mrf.mxu0
    %v5114 = vadd.f32 %v5001, %v5113
    %v5115 = vpop.f32.mrf.mxu0
    %5116 = vmatprep.mubr.f32.mxu0 0.0
    %v5117 = vand.u32 %v5026, 4294901760
    %v5118 = vsub.f32 %v5026, %v5117
    %v5119 = vand.u32 %v5118, 4294901760
    %v5120 = vsub.f32 %v5118, %v5119
    %v5121 = vand.u32 %v5120, 4294901760
    %5122 = vmatmul.mubr.f32.gmra.mxu0 %v5121
    %v5123 = vpop.f32.mrf.mxu0
    %v5124 = vadd.f32 %v5007, %v5123
    %v5125 = vpop.f32.mrf.mxu0
    %5126 = vmatprep.mubr.f32.mxu0 0.0
    %v5127 = vand.u32 %v5029, 4294901760
    %v5128 = vsub.f32 %v5029, %v5127
    %v5129 = vand.u32 %v5128, 4294901760
    %v5130 = vsub.f32 %v5128, %v5129
    %v5131 = vand.u32 %v5130, 4294901760
    %5132 = vmatmul.mubr.f32.gmra.mxu0 %v5131
    %v5133 = vpop.f32.mrf.mxu0
    %v5134 = vadd.f32 %v5013, %v5133
    %v5135 = vpop.f32.mrf.mxu0
    %5136 = vmatprep.mubr.f32.mxu0 0.0
    %v5137 = vand.u32 %v5032, 4294901760
    %v5138 = vsub.f32 %v5032, %v5137
    %v5139 = vand.u32 %v5138, 4294901760
    %v5140 = vsub.f32 %v5138, %v5139
    %v5141 = vand.u32 %v5140, 4294901760
    %5142 = vmatmul.mubr.f32.gmra.mxu0 %v5141
    %v5143 = vpop.f32.mrf.mxu0
    %v5144 = vadd.f32 %v5019, %v5143
    %v5145 = vpop.f32.mrf.mxu0
    %5146 = vdwg.mxu0
    %5147 = vmatprep.subr.mxu0 0.0
    %5148 = vmatpush1.msra.mxu0 0.0
    %5149 = vmatprep.subr.mxu0 0.0
    %5150 = vmatpush1.msra.mxu0 0.0
    %5151 = vmatprep.subr.mxu0 0.0
    %5152 = vmatpush1.msra.mxu0 0.0
    %5153 = vmatprep.subr.mxu0 0.0
    %5154 = vmatpush1.msra.mxu0 0.0
    %5155 = vmatprep.subr.mxu0 0.0
    %5156 = vmatpush1.msra.mxu0 0.0
    %5157 = vmatprep.subr.mxu0 0.0
    %5158 = vmatpush1.msra.mxu0 0.0
    %5159 = vmatprep.subr.mxu0 0.0
    %5160 = vmatpush1.msra.mxu0 0.0
    %5161 = vmatprep.subr.mxu0 0.0
    %5162 = vmatpush1.msra.mxu0 0.0
    %5163 = vmatprep.subr.mxu0 0.0
    %v5164 = vand.u32 %v4338, 4294901760
    %v5165 = vsub.f32 %v4338, %v5164
    %v5166 = vand.u32 %v5165, 4294901760
    %v5167 = vsub.f32 %v5165, %v5166
    %v5168 = vand.u32 %v5167, 4294901760
    %5169 = vmatpush1.msra.mxu0 %v5168
    %5170 = vmatprep.subr.mxu0 0.0
    %v5171 = vand.u32 %v4337, 4294901760
    %v5172 = vsub.f32 %v4337, %v5171
    %v5173 = vand.u32 %v5172, 4294901760
    %v5174 = vsub.f32 %v5172, %v5173
    %v5175 = vand.u32 %v5174, 4294901760
    %5176 = vmatpush1.msra.mxu0 %v5175
    %5177 = vmatprep.subr.mxu0 0.0
    %v5178 = vand.u32 %v4336, 4294901760
    %v5179 = vsub.f32 %v4336, %v5178
    %v5180 = vand.u32 %v5179, 4294901760
    %v5181 = vsub.f32 %v5179, %v5180
    %v5182 = vand.u32 %v5181, 4294901760
    %5183 = vmatpush1.msra.mxu0 %v5182
    %5184 = vmatprep.subr.mxu0 0.0
    %v5185 = vand.u32 %v4335, 4294901760
    %v5186 = vsub.f32 %v4335, %v5185
    %v5187 = vand.u32 %v5186, 4294901760
    %v5188 = vsub.f32 %v5186, %v5187
    %v5189 = vand.u32 %v5188, 4294901760
    %5190 = vmatpush1.msra.mxu0 %v5189
    %5191 = vmatprep.subr.mxu0 0.0
    %v5192 = vand.u32 %v4334, 4294901760
    %v5193 = vsub.f32 %v4334, %v5192
    %v5194 = vand.u32 %v5193, 4294901760
    %v5195 = vsub.f32 %v5193, %v5194
    %v5196 = vand.u32 %v5195, 4294901760
    %5197 = vmatpush1.msra.mxu0 %v5196
    %5198 = vmatprep.subr.mxu0 0.0
    %v5199 = vand.u32 %v4333, 4294901760
    %v5200 = vsub.f32 %v4333, %v5199
    %v5201 = vand.u32 %v5200, 4294901760
    %v5202 = vsub.f32 %v5200, %v5201
    %v5203 = vand.u32 %v5202, 4294901760
    %5204 = vmatpush1.msra.mxu0 %v5203
    %5205 = vmatprep.subr.mxu0 0.0
    %v5206 = vand.u32 %v4332, 4294901760
    %v5207 = vsub.f32 %v4332, %v5206
    %v5208 = vand.u32 %v5207, 4294901760
    %v5209 = vsub.f32 %v5207, %v5208
    %v5210 = vand.u32 %v5209, 4294901760
    %5211 = vmatpush1.msra.mxu0 %v5210
    %5212 = vmatprep.subr.mxu0 0.0
    %v5213 = vand.u32 %v4331, 4294901760
    %v5214 = vsub.f32 %v4331, %v5213
    %v5215 = vand.u32 %v5214, 4294901760
    %v5216 = vsub.f32 %v5214, %v5215
    %v5217 = vand.u32 %v5216, 4294901760
    %5218 = vmatpush1.msra.mxu0 %v5217
    %5219 = vmatprep.subr.mxu0 0.0
    %5220 = vmatpush2.msra.mxu0 0.0
    %5221 = vmatprep.subr.mxu0 0.0
    %5222 = vmatpush2.msra.mxu0 0.0
    %5223 = vmatprep.subr.mxu0 0.0
    %5224 = vmatpush2.msra.mxu0 0.0
    %5225 = vmatprep.subr.mxu0 0.0
    %5226 = vmatpush2.msra.mxu0 0.0
    %5227 = vmatprep.subr.mxu0 0.0
    %5228 = vmatpush2.msra.mxu0 0.0
    %5229 = vmatprep.subr.mxu0 0.0
    %5230 = vmatpush2.msra.mxu0 0.0
    %5231 = vmatprep.subr.mxu0 0.0
    %5232 = vmatpush2.msra.mxu0 0.0
    %5233 = vmatprep.subr.mxu0 0.0
    %5234 = vmatpush2.msra.mxu0 0.0
    %5235 = vmatprep.subr.mxu0 0.0
    %5236 = vmatpush2.msra.mxu0 0.0
    %5237 = vmatprep.subr.mxu0 0.0
    %5238 = vmatpush2.msra.mxu0 0.0
    %5239 = vmatprep.subr.mxu0 0.0
    %5240 = vmatpush2.msra.mxu0 0.0
    %5241 = vmatprep.subr.mxu0 0.0
    %5242 = vmatpush2.msra.mxu0 0.0
    %5243 = vmatprep.subr.mxu0 0.0
    %5244 = vmatpush2.msra.mxu0 0.0
    %5245 = vmatprep.subr.mxu0 0.0
    %5246 = vmatpush2.msra.mxu0 0.0
    %5247 = vmatprep.subr.mxu0 0.0
    %5248 = vmatpush2.msra.mxu0 0.0
    %5249 = vmatprep.subr.mxu0 0.0
    %5250 = vmatpush2.msra.mxu0 0.0
    %5251 = vmatprep.mubr.f32.mxu0 0.0
    %v5252 = vand.u32 %v5023, 4294901760
    %5253 = vmatmul.mubr.f32.gmra.mxu0 %v5252
    %v5254 = vpop.f32.mrf.mxu0
    %v5255 = vadd.f32 %v5114, %v5254
    %v5256 = vpop.f32.mrf.mxu0
    %5257 = vmatprep.mubr.f32.mxu0 0.0
    %v5258 = vand.u32 %v5026, 4294901760
    %5259 = vmatmul.mubr.f32.gmra.mxu0 %v5258
    %v5260 = vpop.f32.mrf.mxu0
    %v5261 = vadd.f32 %v5124, %v5260
    %v5262 = vpop.f32.mrf.mxu0
    %5263 = vmatprep.mubr.f32.mxu0 0.0
    %v5264 = vand.u32 %v5029, 4294901760
    %5265 = vmatmul.mubr.f32.gmra.mxu0 %v5264
    %v5266 = vpop.f32.mrf.mxu0
    %v5267 = vadd.f32 %v5134, %v5266
    %v5268 = vpop.f32.mrf.mxu0
    %5269 = vmatprep.mubr.f32.mxu0 0.0
    %v5270 = vand.u32 %v5032, 4294901760
    %5271 = vmatmul.mubr.f32.gmra.mxu0 %v5270
    %v5272 = vpop.f32.mrf.mxu0
    %v5273 = vadd.f32 %v5144, %v5272
    %v5274 = vpop.f32.mrf.mxu0
    %5275 = vdwg.mxu0
    %5276 = vmatprep.subr.mxu0 0.0
    %5277 = vmatpush1.msra.mxu0 0.0
    %5278 = vmatprep.subr.mxu0 0.0
    %5279 = vmatpush1.msra.mxu0 0.0
    %5280 = vmatprep.subr.mxu0 0.0
    %5281 = vmatpush1.msra.mxu0 0.0
    %5282 = vmatprep.subr.mxu0 0.0
    %5283 = vmatpush1.msra.mxu0 0.0
    %5284 = vmatprep.subr.mxu0 0.0
    %5285 = vmatpush1.msra.mxu0 0.0
    %5286 = vmatprep.subr.mxu0 0.0
    %5287 = vmatpush1.msra.mxu0 0.0
    %5288 = vmatprep.subr.mxu0 0.0
    %5289 = vmatpush1.msra.mxu0 0.0
    %5290 = vmatprep.subr.mxu0 0.0
    %5291 = vmatpush1.msra.mxu0 0.0
    %5292 = vmatprep.subr.mxu0 0.0
    %v5293 = vand.u32 %v4338, 4294901760
    %v5294 = vsub.f32 %v4338, %v5293
    %5295 = vmatpush1.msra.mxu0 %v5294
    %5296 = vmatprep.subr.mxu0 0.0
    %v5297 = vand.u32 %v4337, 4294901760
    %v5298 = vsub.f32 %v4337, %v5297
    %5299 = vmatpush1.msra.mxu0 %v5298
    %5300 = vmatprep.subr.mxu0 0.0
    %v5301 = vand.u32 %v4336, 4294901760
    %v5302 = vsub.f32 %v4336, %v5301
    %5303 = vmatpush1.msra.mxu0 %v5302
    %5304 = vmatprep.subr.mxu0 0.0
    %v5305 = vand.u32 %v4335, 4294901760
    %v5306 = vsub.f32 %v4335, %v5305
    %5307 = vmatpush1.msra.mxu0 %v5306
    %5308 = vmatprep.subr.mxu0 0.0
    %v5309 = vand.u32 %v4334, 4294901760
    %v5310 = vsub.f32 %v4334, %v5309
    %5311 = vmatpush1.msra.mxu0 %v5310
    %5312 = vmatprep.subr.mxu0 0.0
    %v5313 = vand.u32 %v4333, 4294901760
    %v5314 = vsub.f32 %v4333, %v5313
    %5315 = vmatpush1.msra.mxu0 %v5314
    %5316 = vmatprep.subr.mxu0 0.0
    %v5317 = vand.u32 %v4332, 4294901760
    %v5318 = vsub.f32 %v4332, %v5317
    %5319 = vmatpush1.msra.mxu0 %v5318
    %5320 = vmatprep.subr.mxu0 0.0
    %v5321 = vand.u32 %v4331, 4294901760
    %v5322 = vsub.f32 %v4331, %v5321
    %5323 = vmatpush1.msra.mxu0 %v5322
    %5324 = vmatprep.subr.mxu0 0.0
    %5325 = vmatpush2.msra.mxu0 0.0
    %5326 = vmatprep.subr.mxu0 0.0
    %5327 = vmatpush2.msra.mxu0 0.0
    %5328 = vmatprep.subr.mxu0 0.0
    %5329 = vmatpush2.msra.mxu0 0.0
    %5330 = vmatprep.subr.mxu0 0.0
    %5331 = vmatpush2.msra.mxu0 0.0
    %5332 = vmatprep.subr.mxu0 0.0
    %5333 = vmatpush2.msra.mxu0 0.0
    %5334 = vmatprep.subr.mxu0 0.0
    %5335 = vmatpush2.msra.mxu0 0.0
    %5336 = vmatprep.subr.mxu0 0.0
    %5337 = vmatpush2.msra.mxu0 0.0
    %5338 = vmatprep.subr.mxu0 0.0
    %5339 = vmatpush2.msra.mxu0 0.0
    %5340 = vmatprep.subr.mxu0 0.0
    %5341 = vmatpush2.msra.mxu0 0.0
    %5342 = vmatprep.subr.mxu0 0.0
    %5343 = vmatpush2.msra.mxu0 0.0
    %5344 = vmatprep.subr.mxu0 0.0
    %5345 = vmatpush2.msra.mxu0 0.0
    %5346 = vmatprep.subr.mxu0 0.0
    %5347 = vmatpush2.msra.mxu0 0.0
    %5348 = vmatprep.subr.mxu0 0.0
    %5349 = vmatpush2.msra.mxu0 0.0
    %5350 = vmatprep.subr.mxu0 0.0
    %5351 = vmatpush2.msra.mxu0 0.0
    %5352 = vmatprep.subr.mxu0 0.0
    %5353 = vmatpush2.msra.mxu0 0.0
    %5354 = vmatprep.subr.mxu0 0.0
    %5355 = vmatpush2.msra.mxu0 0.0
    %5356 = vmatprep.mubr.f32.mxu0 0.0
    %v5357 = vand.u32 %v5023, 4294901760
    %v5358 = vsub.f32 %v5023, %v5357
    %5359 = vmatmul.mubr.f32.gmra.mxu0 %v5358
    %v5360 = vpop.f32.mrf.mxu0
    %v5361 = vadd.f32 %v5255, %v5360
    %v5362 = vpop.f32.mrf.mxu0
    %5363 = vmatprep.mubr.f32.mxu0 0.0
    %v5364 = vand.u32 %v5026, 4294901760
    %v5365 = vsub.f32 %v5026, %v5364
    %5366 = vmatmul.mubr.f32.gmra.mxu0 %v5365
    %v5367 = vpop.f32.mrf.mxu0
    %v5368 = vadd.f32 %v5261, %v5367
    %v5369 = vpop.f32.mrf.mxu0
    %5370 = vmatprep.mubr.f32.mxu0 0.0
    %v5371 = vand.u32 %v5029, 4294901760
    %v5372 = vsub.f32 %v5029, %v5371
    %5373 = vmatmul.mubr.f32.gmra.mxu0 %v5372
    %v5374 = vpop.f32.mrf.mxu0
    %v5375 = vadd.f32 %v5267, %v5374
    %v5376 = vpop.f32.mrf.mxu0
    %5377 = vmatprep.mubr.f32.mxu0 0.0
    %v5378 = vand.u32 %v5032, 4294901760
    %v5379 = vsub.f32 %v5032, %v5378
    %5380 = vmatmul.mubr.f32.gmra.mxu0 %v5379
    %v5381 = vpop.f32.mrf.mxu0
    %v5382 = vadd.f32 %v5273, %v5381
    %v5383 = vpop.f32.mrf.mxu0
    %5384 = vdwg.mxu0
    %5385 = vmatprep.subr.mxu0 0.0
    %5386 = vmatpush1.msra.mxu0 0.0
    %5387 = vmatprep.subr.mxu0 0.0
    %5388 = vmatpush1.msra.mxu0 0.0
    %5389 = vmatprep.subr.mxu0 0.0
    %5390 = vmatpush1.msra.mxu0 0.0
    %5391 = vmatprep.subr.mxu0 0.0
    %5392 = vmatpush1.msra.mxu0 0.0
    %5393 = vmatprep.subr.mxu0 0.0
    %5394 = vmatpush1.msra.mxu0 0.0
    %5395 = vmatprep.subr.mxu0 0.0
    %5396 = vmatpush1.msra.mxu0 0.0
    %5397 = vmatprep.subr.mxu0 0.0
    %5398 = vmatpush1.msra.mxu0 0.0
    %5399 = vmatprep.subr.mxu0 0.0
    %5400 = vmatpush1.msra.mxu0 0.0
    %5401 = vmatprep.subr.mxu0 0.0
    %v5402 = vand.u32 %v4338, 4294901760
    %5403 = vmatpush1.msra.mxu0 %v5402
    %5404 = vmatprep.subr.mxu0 0.0
    %v5405 = vand.u32 %v4337, 4294901760
    %5406 = vmatpush1.msra.mxu0 %v5405
    %5407 = vmatprep.subr.mxu0 0.0
    %v5408 = vand.u32 %v4336, 4294901760
    %5409 = vmatpush1.msra.mxu0 %v5408
    %5410 = vmatprep.subr.mxu0 0.0
    %v5411 = vand.u32 %v4335, 4294901760
    %5412 = vmatpush1.msra.mxu0 %v5411
    %5413 = vmatprep.subr.mxu0 0.0
    %v5414 = vand.u32 %v4334, 4294901760
    %5415 = vmatpush1.msra.mxu0 %v5414
    %5416 = vmatprep.subr.mxu0 0.0
    %v5417 = vand.u32 %v4333, 4294901760
    %5418 = vmatpush1.msra.mxu0 %v5417
    %5419 = vmatprep.subr.mxu0 0.0
    %v5420 = vand.u32 %v4332, 4294901760
    %5421 = vmatpush1.msra.mxu0 %v5420
    %5422 = vmatprep.subr.mxu0 0.0
    %v5423 = vand.u32 %v4331, 4294901760
    %5424 = vmatpush1.msra.mxu0 %v5423
    %5425 = vmatprep.subr.mxu0 0.0
    %5426 = vmatpush2.msra.mxu0 0.0
    %5427 = vmatprep.subr.mxu0 0.0
    %5428 = vmatpush2.msra.mxu0 0.0
    %5429 = vmatprep.subr.mxu0 0.0
    %5430 = vmatpush2.msra.mxu0 0.0
    %5431 = vmatprep.subr.mxu0 0.0
    %5432 = vmatpush2.msra.mxu0 0.0
    %5433 = vmatprep.subr.mxu0 0.0
    %5434 = vmatpush2.msra.mxu0 0.0
    %5435 = vmatprep.subr.mxu0 0.0
    %5436 = vmatpush2.msra.mxu0 0.0
    %5437 = vmatprep.subr.mxu0 0.0
    %5438 = vmatpush2.msra.mxu0 0.0
    %5439 = vmatprep.subr.mxu0 0.0
    %5440 = vmatpush2.msra.mxu0 0.0
    %5441 = vmatprep.subr.mxu0 0.0
    %5442 = vmatpush2.msra.mxu0 0.0
    %5443 = vmatprep.subr.mxu0 0.0
    %5444 = vmatpush2.msra.mxu0 0.0
    %5445 = vmatprep.subr.mxu0 0.0
    %5446 = vmatpush2.msra.mxu0 0.0
    %5447 = vmatprep.subr.mxu0 0.0
    %5448 = vmatpush2.msra.mxu0 0.0
    %5449 = vmatprep.subr.mxu0 0.0
    %5450 = vmatpush2.msra.mxu0 0.0
    %5451 = vmatprep.subr.mxu0 0.0
    %5452 = vmatpush2.msra.mxu0 0.0
    %5453 = vmatprep.subr.mxu0 0.0
    %5454 = vmatpush2.msra.mxu0 0.0
    %5455 = vmatprep.subr.mxu0 0.0
    %5456 = vmatpush2.msra.mxu0 0.0
    %5457 = vmatprep.mubr.f32.mxu0 0.0
    %v5458 = vand.u32 %v5023, 4294901760
    %v5459 = vsub.f32 %v5023, %v5458
    %v5460 = vand.u32 %v5459, 4294901760
    %5461 = vmatmul.mubr.f32.gmra.mxu0 %v5460
    %v5462 = vpop.f32.mrf.mxu0
    %v5463 = vadd.f32 %v5361, %v5462
    %v5464 = vpop.f32.mrf.mxu0
    %5465 = vmatprep.mubr.f32.mxu0 0.0
    %v5466 = vand.u32 %v5026, 4294901760
    %v5467 = vsub.f32 %v5026, %v5466
    %v5468 = vand.u32 %v5467, 4294901760
    %5469 = vmatmul.mubr.f32.gmra.mxu0 %v5468
    %v5470 = vpop.f32.mrf.mxu0
    %v5471 = vadd.f32 %v5368, %v5470
    %v5472 = vpop.f32.mrf.mxu0
    %5473 = vmatprep.mubr.f32.mxu0 0.0
    %v5474 = vand.u32 %v5029, 4294901760
    %v5475 = vsub.f32 %v5029, %v5474
    %v5476 = vand.u32 %v5475, 4294901760
    %5477 = vmatmul.mubr.f32.gmra.mxu0 %v5476
    %v5478 = vpop.f32.mrf.mxu0
    %v5479 = vadd.f32 %v5375, %v5478
    %v5480 = vpop.f32.mrf.mxu0
    %5481 = vmatprep.mubr.f32.mxu0 0.0
    %v5482 = vand.u32 %v5032, 4294901760
    %v5483 = vsub.f32 %v5032, %v5482
    %v5484 = vand.u32 %v5483, 4294901760
    %5485 = vmatmul.mubr.f32.gmra.mxu0 %v5484
    %v5486 = vpop.f32.mrf.mxu0
    %v5487 = vadd.f32 %v5382, %v5486
    %v5488 = vpop.f32.mrf.mxu0
    %5489 = vdwg.mxu0
    %5490 = vmatprep.subr.mxu0 0.0
    %5491 = vmatpush1.msra.mxu0 0.0
    %5492 = vmatprep.subr.mxu0 0.0
    %5493 = vmatpush1.msra.mxu0 0.0
    %5494 = vmatprep.subr.mxu0 0.0
    %5495 = vmatpush1.msra.mxu0 0.0
    %5496 = vmatprep.subr.mxu0 0.0
    %5497 = vmatpush1.msra.mxu0 0.0
    %5498 = vmatprep.subr.mxu0 0.0
    %5499 = vmatpush1.msra.mxu0 0.0
    %5500 = vmatprep.subr.mxu0 0.0
    %5501 = vmatpush1.msra.mxu0 0.0
    %5502 = vmatprep.subr.mxu0 0.0
    %5503 = vmatpush1.msra.mxu0 0.0
    %5504 = vmatprep.subr.mxu0 0.0
    %5505 = vmatpush1.msra.mxu0 0.0
    %5506 = vmatprep.subr.mxu0 0.0
    %v5507 = vand.u32 %v4338, 4294901760
    %v5508 = vsub.f32 %v4338, %v5507
    %v5509 = vand.u32 %v5508, 4294901760
    %5510 = vmatpush1.msra.mxu0 %v5509
    %5511 = vmatprep.subr.mxu0 0.0
    %v5512 = vand.u32 %v4337, 4294901760
    %v5513 = vsub.f32 %v4337, %v5512
    %v5514 = vand.u32 %v5513, 4294901760
    %5515 = vmatpush1.msra.mxu0 %v5514
    %5516 = vmatprep.subr.mxu0 0.0
    %v5517 = vand.u32 %v4336, 4294901760
    %v5518 = vsub.f32 %v4336, %v5517
    %v5519 = vand.u32 %v5518, 4294901760
    %5520 = vmatpush1.msra.mxu0 %v5519
    %5521 = vmatprep.subr.mxu0 0.0
    %v5522 = vand.u32 %v4335, 4294901760
    %v5523 = vsub.f32 %v4335, %v5522
    %v5524 = vand.u32 %v5523, 4294901760
    %5525 = vmatpush1.msra.mxu0 %v5524
    %5526 = vmatprep.subr.mxu0 0.0
    %v5527 = vand.u32 %v4334, 4294901760
    %v5528 = vsub.f32 %v4334, %v5527
    %v5529 = vand.u32 %v5528, 4294901760
    %5530 = vmatpush1.msra.mxu0 %v5529
    %5531 = vmatprep.subr.mxu0 0.0
    %v5532 = vand.u32 %v4333, 4294901760
    %v5533 = vsub.f32 %v4333, %v5532
    %v5534 = vand.u32 %v5533, 4294901760
    %5535 = vmatpush1.msra.mxu0 %v5534
    %5536 = vmatprep.subr.mxu0 0.0
    %v5537 = vand.u32 %v4332, 4294901760
    %v5538 = vsub.f32 %v4332, %v5537
    %v5539 = vand.u32 %v5538, 4294901760
    %5540 = vmatpush1.msra.mxu0 %v5539
    %5541 = vmatprep.subr.mxu0 0.0
    %v5542 = vand.u32 %v4331, 4294901760
    %v5543 = vsub.f32 %v4331, %v5542
    %v5544 = vand.u32 %v5543, 4294901760
    %5545 = vmatpush1.msra.mxu0 %v5544
    %5546 = vmatprep.subr.mxu0 0.0
    %5547 = vmatpush2.msra.mxu0 0.0
    %5548 = vmatprep.subr.mxu0 0.0
    %5549 = vmatpush2.msra.mxu0 0.0
    %5550 = vmatprep.subr.mxu0 0.0
    %5551 = vmatpush2.msra.mxu0 0.0
    %5552 = vmatprep.subr.mxu0 0.0
    %5553 = vmatpush2.msra.mxu0 0.0
    %5554 = vmatprep.subr.mxu0 0.0
    %5555 = vmatpush2.msra.mxu0 0.0
    %5556 = vmatprep.subr.mxu0 0.0
    %5557 = vmatpush2.msra.mxu0 0.0
    %5558 = vmatprep.subr.mxu0 0.0
    %5559 = vmatpush2.msra.mxu0 0.0
    %5560 = vmatprep.subr.mxu0 0.0
    %5561 = vmatpush2.msra.mxu0 0.0
    %5562 = vmatprep.subr.mxu0 0.0
    %5563 = vmatpush2.msra.mxu0 0.0
    %5564 = vmatprep.subr.mxu0 0.0
    %5565 = vmatpush2.msra.mxu0 0.0
    %5566 = vmatprep.subr.mxu0 0.0
    %5567 = vmatpush2.msra.mxu0 0.0
    %5568 = vmatprep.subr.mxu0 0.0
    %5569 = vmatpush2.msra.mxu0 0.0
    %5570 = vmatprep.subr.mxu0 0.0
    %5571 = vmatpush2.msra.mxu0 0.0
    %5572 = vmatprep.subr.mxu0 0.0
    %5573 = vmatpush2.msra.mxu0 0.0
    %5574 = vmatprep.subr.mxu0 0.0
    %5575 = vmatpush2.msra.mxu0 0.0
    %5576 = vmatprep.subr.mxu0 0.0
    %5577 = vmatpush2.msra.mxu0 0.0
    %5578 = vmatprep.mubr.f32.mxu0 0.0
    %v5579 = vand.u32 %v5023, 4294901760
    %5580 = vmatmul.mubr.f32.gmra.mxu0 %v5579
    %v5581 = vpop.f32.mrf.mxu0
    %v5582 = vadd.f32 %v5463, %v5581
    %v5583 = vpop.f32.mrf.mxu0
    %5584 = vmatprep.mubr.f32.mxu0 0.0
    %v5585 = vand.u32 %v5026, 4294901760
    %5586 = vmatmul.mubr.f32.gmra.mxu0 %v5585
    %v5587 = vpop.f32.mrf.mxu0
    %v5588 = vadd.f32 %v5471, %v5587
    %v5589 = vpop.f32.mrf.mxu0
    %5590 = vmatprep.mubr.f32.mxu0 0.0
    %v5591 = vand.u32 %v5029, 4294901760
    %5592 = vmatmul.mubr.f32.gmra.mxu0 %v5591
    %v5593 = vpop.f32.mrf.mxu0
    %v5594 = vadd.f32 %v5479, %v5593
    %v5595 = vpop.f32.mrf.mxu0
    %5596 = vmatprep.mubr.f32.mxu0 0.0
    %v5597 = vand.u32 %v5032, 4294901760
    %5598 = vmatmul.mubr.f32.gmra.mxu0 %v5597
    %v5599 = vpop.f32.mrf.mxu0
    %v5600 = vadd.f32 %v5487, %v5599
    %v5601 = vpop.f32.mrf.mxu0
    %5602 = vdwg.mxu0
    %5603 = vmatprep.subr.mxu0 0.0
    %5604 = vmatpush1.msra.mxu0 0.0
    %5605 = vmatprep.subr.mxu0 0.0
    %5606 = vmatpush1.msra.mxu0 0.0
    %5607 = vmatprep.subr.mxu0 0.0
    %5608 = vmatpush1.msra.mxu0 0.0
    %5609 = vmatprep.subr.mxu0 0.0
    %5610 = vmatpush1.msra.mxu0 0.0
    %5611 = vmatprep.subr.mxu0 0.0
    %5612 = vmatpush1.msra.mxu0 0.0
    %5613 = vmatprep.subr.mxu0 0.0
    %5614 = vmatpush1.msra.mxu0 0.0
    %5615 = vmatprep.subr.mxu0 0.0
    %5616 = vmatpush1.msra.mxu0 0.0
    %5617 = vmatprep.subr.mxu0 0.0
    %5618 = vmatpush1.msra.mxu0 0.0
    %5619 = vmatprep.subr.mxu0 0.0
    %v5620 = vand.u32 %v4338, 4294901760
    %5621 = vmatpush1.msra.mxu0 %v5620
    %5622 = vmatprep.subr.mxu0 0.0
    %v5623 = vand.u32 %v4337, 4294901760
    %5624 = vmatpush1.msra.mxu0 %v5623
    %5625 = vmatprep.subr.mxu0 0.0
    %v5626 = vand.u32 %v4336, 4294901760
    %5627 = vmatpush1.msra.mxu0 %v5626
    %5628 = vmatprep.subr.mxu0 0.0
    %v5629 = vand.u32 %v4335, 4294901760
    %5630 = vmatpush1.msra.mxu0 %v5629
    %5631 = vmatprep.subr.mxu0 0.0
    %v5632 = vand.u32 %v4334, 4294901760
    %5633 = vmatpush1.msra.mxu0 %v5632
    %5634 = vmatprep.subr.mxu0 0.0
    %v5635 = vand.u32 %v4333, 4294901760
    %5636 = vmatpush1.msra.mxu0 %v5635
    %5637 = vmatprep.subr.mxu0 0.0
    %v5638 = vand.u32 %v4332, 4294901760
    %5639 = vmatpush1.msra.mxu0 %v5638
    %5640 = vmatprep.subr.mxu0 0.0
    %v5641 = vand.u32 %v4331, 4294901760
    %5642 = vmatpush1.msra.mxu0 %v5641
    %5643 = vmatprep.subr.mxu0 0.0
    %5644 = vmatpush2.msra.mxu0 0.0
    %5645 = vmatprep.subr.mxu0 0.0
    %5646 = vmatpush2.msra.mxu0 0.0
    %5647 = vmatprep.subr.mxu0 0.0
    %5648 = vmatpush2.msra.mxu0 0.0
    %5649 = vmatprep.subr.mxu0 0.0
    %5650 = vmatpush2.msra.mxu0 0.0
    %5651 = vmatprep.subr.mxu0 0.0
    %5652 = vmatpush2.msra.mxu0 0.0
    %5653 = vmatprep.subr.mxu0 0.0
    %5654 = vmatpush2.msra.mxu0 0.0
    %5655 = vmatprep.subr.mxu0 0.0
    %5656 = vmatpush2.msra.mxu0 0.0
    %5657 = vmatprep.subr.mxu0 0.0
    %5658 = vmatpush2.msra.mxu0 0.0
    %5659 = vmatprep.subr.mxu0 0.0
    %5660 = vmatpush2.msra.mxu0 0.0
    %5661 = vmatprep.subr.mxu0 0.0
    %5662 = vmatpush2.msra.mxu0 0.0
    %5663 = vmatprep.subr.mxu0 0.0
    %5664 = vmatpush2.msra.mxu0 0.0
    %5665 = vmatprep.subr.mxu0 0.0
    %5666 = vmatpush2.msra.mxu0 0.0
    %5667 = vmatprep.subr.mxu0 0.0
    %5668 = vmatpush2.msra.mxu0 0.0
    %5669 = vmatprep.subr.mxu0 0.0
    %5670 = vmatpush2.msra.mxu0 0.0
    %5671 = vmatprep.subr.mxu0 0.0
    %5672 = vmatpush2.msra.mxu0 0.0
    %5673 = vmatprep.subr.mxu0 0.0
    %5674 = vmatpush2.msra.mxu0 0.0
    %5675 = vmatprep.mubr.f32.mxu0 0.0
    %v5676 = vand.u32 %v5023, 4294901760
    %5677 = vmatmul.mubr.f32.gmra.mxu0 %v5676
    %v5678 = vpop.f32.mrf.mxu0
    %v5679 = vadd.f32 %v5582, %v5678
    %v5680 = vpop.f32.mrf.mxu0
    %5681 = vmatprep.mubr.f32.mxu0 0.0
    %v5682 = vand.u32 %v5026, 4294901760
    %5683 = vmatmul.mubr.f32.gmra.mxu0 %v5682
    %v5684 = vpop.f32.mrf.mxu0
    %v5685 = vadd.f32 %v5588, %v5684
    %v5686 = vpop.f32.mrf.mxu0
    %5687 = vmatprep.mubr.f32.mxu0 0.0
    %v5688 = vand.u32 %v5029, 4294901760
    %5689 = vmatmul.mubr.f32.gmra.mxu0 %v5688
    %v5690 = vpop.f32.mrf.mxu0
    %v5691 = vadd.f32 %v5594, %v5690
    %v5692 = vpop.f32.mrf.mxu0
    %5693 = vmatprep.mubr.f32.mxu0 0.0
    %v5694 = vand.u32 %v5032, 4294901760
    %5695 = vmatmul.mubr.f32.gmra.mxu0 %v5694
    %v5696 = vpop.f32.mrf.mxu0
    %v5697 = vadd.f32 %v5600, %v5696
    %v5698 = vpop.f32.mrf.mxu0
    %5699 = vdwg.mxu0
    %s5700 = scalar_lea.vmem [#allocation5], 128
    %v5701 = vld [vmem:[%s5700] sm:$0xff]
    %v5702 = vld [vmem:[%s5700 + $0x8] sm:$0xff]
    %v5703 = vld [vmem:[%s5700 + $0x10] sm:$0xff]
    %v5704 = vld [vmem:[%s5700 + $0x18] sm:$0xff]
    %v5705 = vld [vmem:[%s5700 + $0x20] sm:$0xff]
    %v5706 = vld [vmem:[%s5700 + $0x28] sm:$0xff]
    %v5707 = vld [vmem:[%s5700 + $0x30] sm:$0xff]
    %v5708 = vld [vmem:[%s5700 + $0x38] sm:$0xff]
    %v5710 = vsel %vm187, %v4327, 0
    %v5713 = vsel %vm187, %v4328, 0
    %v5716 = vsel %vm187, %v4329, 0
    %v5719 = vsel %vm187, %v4330, 0
    %5721 = vmatprep.subr.mxu0 0.0
    %5722 = vmatpush1.msra.mxu0 0.0
    %5723 = vmatprep.subr.mxu0 0.0
    %5724 = vmatpush1.msra.mxu0 0.0
    %5725 = vmatprep.subr.mxu0 0.0
    %5726 = vmatpush1.msra.mxu0 0.0
    %5727 = vmatprep.subr.mxu0 0.0
    %5728 = vmatpush1.msra.mxu0 0.0
    %5729 = vmatprep.subr.mxu0 0.0
    %5730 = vmatpush1.msra.mxu0 0.0
    %5731 = vmatprep.subr.mxu0 0.0
    %5732 = vmatpush1.msra.mxu0 0.0
    %5733 = vmatprep.subr.mxu0 0.0
    %5734 = vmatpush1.msra.mxu0 0.0
    %5735 = vmatprep.subr.mxu0 0.0
    %5736 = vmatpush1.msra.mxu0 0.0
    %5737 = vmatprep.subr.mxu0 0.0
    %v5738 = vand.u32 %v5708, 4294901760
    %5739 = vmatpush1.msra.mxu0 %v5738
    %5740 = vmatprep.subr.mxu0 0.0
    %v5741 = vand.u32 %v5707, 4294901760
    %5742 = vmatpush1.msra.mxu0 %v5741
    %5743 = vmatprep.subr.mxu0 0.0
    %v5744 = vand.u32 %v5706, 4294901760
    %5745 = vmatpush1.msra.mxu0 %v5744
    %5746 = vmatprep.subr.mxu0 0.0
    %v5747 = vand.u32 %v5705, 4294901760
    %5748 = vmatpush1.msra.mxu0 %v5747
    %5749 = vmatprep.subr.mxu0 0.0
    %v5750 = vand.u32 %v5704, 4294901760
    %5751 = vmatpush1.msra.mxu0 %v5750
    %5752 = vmatprep.subr.mxu0 0.0
    %v5753 = vand.u32 %v5703, 4294901760
    %5754 = vmatpush1.msra.mxu0 %v5753
    %5755 = vmatprep.subr.mxu0 0.0
    %v5756 = vand.u32 %v5702, 4294901760
    %5757 = vmatpush1.msra.mxu0 %v5756
    %5758 = vmatprep.subr.mxu0 0.0
    %v5759 = vand.u32 %v5701, 4294901760
    %5760 = vmatpush1.msra.mxu0 %v5759
    %5761 = vmatprep.subr.mxu0 0.0
    %5762 = vmatpush2.msra.mxu0 0.0
    %5763 = vmatprep.subr.mxu0 0.0
    %5764 = vmatpush2.msra.mxu0 0.0
    %5765 = vmatprep.subr.mxu0 0.0
    %5766 = vmatpush2.msra.mxu0 0.0
    %5767 = vmatprep.subr.mxu0 0.0
    %5768 = vmatpush2.msra.mxu0 0.0
    %5769 = vmatprep.subr.mxu0 0.0
    %5770 = vmatpush2.msra.mxu0 0.0
    %5771 = vmatprep.subr.mxu0 0.0
    %5772 = vmatpush2.msra.mxu0 0.0
    %5773 = vmatprep.subr.mxu0 0.0
    %5774 = vmatpush2.msra.mxu0 0.0
    %5775 = vmatprep.subr.mxu0 0.0
    %5776 = vmatpush2.msra.mxu0 0.0
    %5777 = vmatprep.subr.mxu0 0.0
    %5778 = vmatpush2.msra.mxu0 0.0
    %5779 = vmatprep.subr.mxu0 0.0
    %5780 = vmatpush2.msra.mxu0 0.0
    %5781 = vmatprep.subr.mxu0 0.0
    %5782 = vmatpush2.msra.mxu0 0.0
    %5783 = vmatprep.subr.mxu0 0.0
    %5784 = vmatpush2.msra.mxu0 0.0
    %5785 = vmatprep.subr.mxu0 0.0
    %5786 = vmatpush2.msra.mxu0 0.0
    %5787 = vmatprep.subr.mxu0 0.0
    %5788 = vmatpush2.msra.mxu0 0.0
    %5789 = vmatprep.subr.mxu0 0.0
    %5790 = vmatpush2.msra.mxu0 0.0
    %5791 = vmatprep.subr.mxu0 0.0
    %5792 = vmatpush2.msra.mxu0 0.0
    %5793 = vmatprep.mubr.f32.mxu0 0.0
    %v5794 = vand.u32 %v5710, 4294901760
    %v5795 = vsub.f32 %v5710, %v5794
    %v5796 = vand.u32 %v5795, 4294901760
    %v5797 = vsub.f32 %v5795, %v5796
    %v5798 = vand.u32 %v5797, 4294901760
    %5799 = vmatmul.mubr.f32.gmra.mxu0 %v5798
    %v5800 = vpop.f32.mrf.mxu0
    %v5801 = vadd.f32 0.0, %v5800
    %v5802 = vpop.f32.mrf.mxu0
    %5803 = vmatprep.mubr.f32.mxu0 0.0
    %v5804 = vand.u32 %v5713, 4294901760
    %v5805 = vsub.f32 %v5713, %v5804
    %v5806 = vand.u32 %v5805, 4294901760
    %v5807 = vsub.f32 %v5805, %v5806
    %v5808 = vand.u32 %v5807, 4294901760
    %5809 = vmatmul.mubr.f32.gmra.mxu0 %v5808
    %v5810 = vpop.f32.mrf.mxu0
    %v5811 = vadd.f32 0.0, %v5810
    %v5812 = vpop.f32.mrf.mxu0
    %5813 = vmatprep.mubr.f32.mxu0 0.0
    %v5814 = vand.u32 %v5716, 4294901760
    %v5815 = vsub.f32 %v5716, %v5814
    %v5816 = vand.u32 %v5815, 4294901760
    %v5817 = vsub.f32 %v5815, %v5816
    %v5818 = vand.u32 %v5817, 4294901760
    %5819 = vmatmul.mubr.f32.gmra.mxu0 %v5818
    %v5820 = vpop.f32.mrf.mxu0
    %v5821 = vadd.f32 0.0, %v5820
    %v5822 = vpop.f32.mrf.mxu0
    %5823 = vmatprep.mubr.f32.mxu0 0.0
    %v5824 = vand.u32 %v5719, 4294901760
    %v5825 = vsub.f32 %v5719, %v5824
    %v5826 = vand.u32 %v5825, 4294901760
    %v5827 = vsub.f32 %v5825, %v5826
    %v5828 = vand.u32 %v5827, 4294901760
    %5829 = vmatmul.mubr.f32.gmra.mxu0 %v5828
    %v5830 = vpop.f32.mrf.mxu0
    %v5831 = vadd.f32 0.0, %v5830
    %v5832 = vpop.f32.mrf.mxu0
    %5833 = vdwg.mxu0
    %5834 = vmatprep.subr.mxu0 0.0
    %5835 = vmatpush1.msra.mxu0 0.0
    %5836 = vmatprep.subr.mxu0 0.0
    %5837 = vmatpush1.msra.mxu0 0.0
    %5838 = vmatprep.subr.mxu0 0.0
    %5839 = vmatpush1.msra.mxu0 0.0
    %5840 = vmatprep.subr.mxu0 0.0
    %5841 = vmatpush1.msra.mxu0 0.0
    %5842 = vmatprep.subr.mxu0 0.0
    %5843 = vmatpush1.msra.mxu0 0.0
    %5844 = vmatprep.subr.mxu0 0.0
    %5845 = vmatpush1.msra.mxu0 0.0
    %5846 = vmatprep.subr.mxu0 0.0
    %5847 = vmatpush1.msra.mxu0 0.0
    %5848 = vmatprep.subr.mxu0 0.0
    %5849 = vmatpush1.msra.mxu0 0.0
    %5850 = vmatprep.subr.mxu0 0.0
    %v5851 = vand.u32 %v5708, 4294901760
    %v5852 = vsub.f32 %v5708, %v5851
    %v5853 = vand.u32 %v5852, 4294901760
    %v5854 = vsub.f32 %v5852, %v5853
    %v5855 = vand.u32 %v5854, 4294901760
    %5856 = vmatpush1.msra.mxu0 %v5855
    %5857 = vmatprep.subr.mxu0 0.0
    %v5858 = vand.u32 %v5707, 4294901760
    %v5859 = vsub.f32 %v5707, %v5858
    %v5860 = vand.u32 %v5859, 4294901760
    %v5861 = vsub.f32 %v5859, %v5860
    %v5862 = vand.u32 %v5861, 4294901760
    %5863 = vmatpush1.msra.mxu0 %v5862
    %5864 = vmatprep.subr.mxu0 0.0
    %v5865 = vand.u32 %v5706, 4294901760
    %v5866 = vsub.f32 %v5706, %v5865
    %v5867 = vand.u32 %v5866, 4294901760
    %v5868 = vsub.f32 %v5866, %v5867
    %v5869 = vand.u32 %v5868, 4294901760
    %5870 = vmatpush1.msra.mxu0 %v5869
    %5871 = vmatprep.subr.mxu0 0.0
    %v5872 = vand.u32 %v5705, 4294901760
    %v5873 = vsub.f32 %v5705, %v5872
    %v5874 = vand.u32 %v5873, 4294901760
    %v5875 = vsub.f32 %v5873, %v5874
    %v5876 = vand.u32 %v5875, 4294901760
    %5877 = vmatpush1.msra.mxu0 %v5876
    %5878 = vmatprep.subr.mxu0 0.0
    %v5879 = vand.u32 %v5704, 4294901760
    %v5880 = vsub.f32 %v5704, %v5879
    %v5881 = vand.u32 %v5880, 4294901760
    %v5882 = vsub.f32 %v5880, %v5881
    %v5883 = vand.u32 %v5882, 4294901760
    %5884 = vmatpush1.msra.mxu0 %v5883
    %5885 = vmatprep.subr.mxu0 0.0
    %v5886 = vand.u32 %v5703, 4294901760
    %v5887 = vsub.f32 %v5703, %v5886
    %v5888 = vand.u32 %v5887, 4294901760
    %v5889 = vsub.f32 %v5887, %v5888
    %v5890 = vand.u32 %v5889, 4294901760
    %5891 = vmatpush1.msra.mxu0 %v5890
    %5892 = vmatprep.subr.mxu0 0.0
    %v5893 = vand.u32 %v5702, 4294901760
    %v5894 = vsub.f32 %v5702, %v5893
    %v5895 = vand.u32 %v5894, 4294901760
    %v5896 = vsub.f32 %v5894, %v5895
    %v5897 = vand.u32 %v5896, 4294901760
    %5898 = vmatpush1.msra.mxu0 %v5897
    %5899 = vmatprep.subr.mxu0 0.0
    %v5900 = vand.u32 %v5701, 4294901760
    %v5901 = vsub.f32 %v5701, %v5900
    %v5902 = vand.u32 %v5901, 4294901760
    %v5903 = vsub.f32 %v5901, %v5902
    %v5904 = vand.u32 %v5903, 4294901760
    %5905 = vmatpush1.msra.mxu0 %v5904
    %5906 = vmatprep.subr.mxu0 0.0
    %5907 = vmatpush2.msra.mxu0 0.0
    %5908 = vmatprep.subr.mxu0 0.0
    %5909 = vmatpush2.msra.mxu0 0.0
    %5910 = vmatprep.subr.mxu0 0.0
    %5911 = vmatpush2.msra.mxu0 0.0
    %5912 = vmatprep.subr.mxu0 0.0
    %5913 = vmatpush2.msra.mxu0 0.0
    %5914 = vmatprep.subr.mxu0 0.0
    %5915 = vmatpush2.msra.mxu0 0.0
    %5916 = vmatprep.subr.mxu0 0.0
    %5917 = vmatpush2.msra.mxu0 0.0
    %5918 = vmatprep.subr.mxu0 0.0
    %5919 = vmatpush2.msra.mxu0 0.0
    %5920 = vmatprep.subr.mxu0 0.0
    %5921 = vmatpush2.msra.mxu0 0.0
    %5922 = vmatprep.subr.mxu0 0.0
    %5923 = vmatpush2.msra.mxu0 0.0
    %5924 = vmatprep.subr.mxu0 0.0
    %5925 = vmatpush2.msra.mxu0 0.0
    %5926 = vmatprep.subr.mxu0 0.0
    %5927 = vmatpush2.msra.mxu0 0.0
    %5928 = vmatprep.subr.mxu0 0.0
    %5929 = vmatpush2.msra.mxu0 0.0
    %5930 = vmatprep.subr.mxu0 0.0
    %5931 = vmatpush2.msra.mxu0 0.0
    %5932 = vmatprep.subr.mxu0 0.0
    %5933 = vmatpush2.msra.mxu0 0.0
    %5934 = vmatprep.subr.mxu0 0.0
    %5935 = vmatpush2.msra.mxu0 0.0
    %5936 = vmatprep.subr.mxu0 0.0
    %5937 = vmatpush2.msra.mxu0 0.0
    %5938 = vmatprep.mubr.f32.mxu0 0.0
    %v5939 = vand.u32 %v5710, 4294901760
    %5940 = vmatmul.mubr.f32.gmra.mxu0 %v5939
    %v5941 = vpop.f32.mrf.mxu0
    %v5942 = vadd.f32 %v5801, %v5941
    %v5943 = vpop.f32.mrf.mxu0
    %5944 = vmatprep.mubr.f32.mxu0 0.0
    %v5945 = vand.u32 %v5713, 4294901760
    %5946 = vmatmul.mubr.f32.gmra.mxu0 %v5945
    %v5947 = vpop.f32.mrf.mxu0
    %v5948 = vadd.f32 %v5811, %v5947
    %v5949 = vpop.f32.mrf.mxu0
    %5950 = vmatprep.mubr.f32.mxu0 0.0
    %v5951 = vand.u32 %v5716, 4294901760
    %5952 = vmatmul.mubr.f32.gmra.mxu0 %v5951
    %v5953 = vpop.f32.mrf.mxu0
    %v5954 = vadd.f32 %v5821, %v5953
    %v5955 = vpop.f32.mrf.mxu0
    %5956 = vmatprep.mubr.f32.mxu0 0.0
    %v5957 = vand.u32 %v5719, 4294901760
    %5958 = vmatmul.mubr.f32.gmra.mxu0 %v5957
    %v5959 = vpop.f32.mrf.mxu0
    %v5960 = vadd.f32 %v5831, %v5959
    %v5961 = vpop.f32.mrf.mxu0
    %5962 = vdwg.mxu0
    %5963 = vmatprep.subr.mxu0 0.0
    %5964 = vmatpush1.msra.mxu0 0.0
    %5965 = vmatprep.subr.mxu0 0.0
    %5966 = vmatpush1.msra.mxu0 0.0
    %5967 = vmatprep.subr.mxu0 0.0
    %5968 = vmatpush1.msra.mxu0 0.0
    %5969 = vmatprep.subr.mxu0 0.0
    %5970 = vmatpush1.msra.mxu0 0.0
    %5971 = vmatprep.subr.mxu0 0.0
    %5972 = vmatpush1.msra.mxu0 0.0
    %5973 = vmatprep.subr.mxu0 0.0
    %5974 = vmatpush1.msra.mxu0 0.0
    %5975 = vmatprep.subr.mxu0 0.0
    %5976 = vmatpush1.msra.mxu0 0.0
    %5977 = vmatprep.subr.mxu0 0.0
    %5978 = vmatpush1.msra.mxu0 0.0
    %5979 = vmatprep.subr.mxu0 0.0
    %v5980 = vand.u32 %v5708, 4294901760
    %v5981 = vsub.f32 %v5708, %v5980
    %5982 = vmatpush1.msra.mxu0 %v5981
    %5983 = vmatprep.subr.mxu0 0.0
    %v5984 = vand.u32 %v5707, 4294901760
    %v5985 = vsub.f32 %v5707, %v5984
    %5986 = vmatpush1.msra.mxu0 %v5985
    %5987 = vmatprep.subr.mxu0 0.0
    %v5988 = vand.u32 %v5706, 4294901760
    %v5989 = vsub.f32 %v5706, %v5988
    %5990 = vmatpush1.msra.mxu0 %v5989
    %5991 = vmatprep.subr.mxu0 0.0
    %v5992 = vand.u32 %v5705, 4294901760
    %v5993 = vsub.f32 %v5705, %v5992
    %5994 = vmatpush1.msra.mxu0 %v5993
    %5995 = vmatprep.subr.mxu0 0.0
    %v5996 = vand.u32 %v5704, 4294901760
    %v5997 = vsub.f32 %v5704, %v5996
    %5998 = vmatpush1.msra.mxu0 %v5997
    %5999 = vmatprep.subr.mxu0 0.0
    %v6000 = vand.u32 %v5703, 4294901760
    %v6001 = vsub.f32 %v5703, %v6000
    %6002 = vmatpush1.msra.mxu0 %v6001
    %6003 = vmatprep.subr.mxu0 0.0
    %v6004 = vand.u32 %v5702, 4294901760
    %v6005 = vsub.f32 %v5702, %v6004
    %6006 = vmatpush1.msra.mxu0 %v6005
    %6007 = vmatprep.subr.mxu0 0.0
    %v6008 = vand.u32 %v5701, 4294901760
    %v6009 = vsub.f32 %v5701, %v6008
    %6010 = vmatpush1.msra.mxu0 %v6009
    %6011 = vmatprep.subr.mxu0 0.0
    %6012 = vmatpush2.msra.mxu0 0.0
    %6013 = vmatprep.subr.mxu0 0.0
    %6014 = vmatpush2.msra.mxu0 0.0
    %6015 = vmatprep.subr.mxu0 0.0
    %6016 = vmatpush2.msra.mxu0 0.0
    %6017 = vmatprep.subr.mxu0 0.0
    %6018 = vmatpush2.msra.mxu0 0.0
    %6019 = vmatprep.subr.mxu0 0.0
    %6020 = vmatpush2.msra.mxu0 0.0
    %6021 = vmatprep.subr.mxu0 0.0
    %6022 = vmatpush2.msra.mxu0 0.0
    %6023 = vmatprep.subr.mxu0 0.0
    %6024 = vmatpush2.msra.mxu0 0.0
    %6025 = vmatprep.subr.mxu0 0.0
    %6026 = vmatpush2.msra.mxu0 0.0
    %6027 = vmatprep.subr.mxu0 0.0
    %6028 = vmatpush2.msra.mxu0 0.0
    %6029 = vmatprep.subr.mxu0 0.0
    %6030 = vmatpush2.msra.mxu0 0.0
    %6031 = vmatprep.subr.mxu0 0.0
    %6032 = vmatpush2.msra.mxu0 0.0
    %6033 = vmatprep.subr.mxu0 0.0
    %6034 = vmatpush2.msra.mxu0 0.0
    %6035 = vmatprep.subr.mxu0 0.0
    %6036 = vmatpush2.msra.mxu0 0.0
    %6037 = vmatprep.subr.mxu0 0.0
    %6038 = vmatpush2.msra.mxu0 0.0
    %6039 = vmatprep.subr.mxu0 0.0
    %6040 = vmatpush2.msra.mxu0 0.0
    %6041 = vmatprep.subr.mxu0 0.0
    %6042 = vmatpush2.msra.mxu0 0.0
    %6043 = vmatprep.mubr.f32.mxu0 0.0
    %v6044 = vand.u32 %v5710, 4294901760
    %v6045 = vsub.f32 %v5710, %v6044
    %6046 = vmatmul.mubr.f32.gmra.mxu0 %v6045
    %v6047 = vpop.f32.mrf.mxu0
    %v6048 = vadd.f32 %v5942, %v6047
    %v6049 = vpop.f32.mrf.mxu0
    %6050 = vmatprep.mubr.f32.mxu0 0.0
    %v6051 = vand.u32 %v5713, 4294901760
    %v6052 = vsub.f32 %v5713, %v6051
    %6053 = vmatmul.mubr.f32.gmra.mxu0 %v6052
    %v6054 = vpop.f32.mrf.mxu0
    %v6055 = vadd.f32 %v5948, %v6054
    %v6056 = vpop.f32.mrf.mxu0
    %6057 = vmatprep.mubr.f32.mxu0 0.0
    %v6058 = vand.u32 %v5716, 4294901760
    %v6059 = vsub.f32 %v5716, %v6058
    %6060 = vmatmul.mubr.f32.gmra.mxu0 %v6059
    %v6061 = vpop.f32.mrf.mxu0
    %v6062 = vadd.f32 %v5954, %v6061
    %v6063 = vpop.f32.mrf.mxu0
    %6064 = vmatprep.mubr.f32.mxu0 0.0
    %v6065 = vand.u32 %v5719, 4294901760
    %v6066 = vsub.f32 %v5719, %v6065
    %6067 = vmatmul.mubr.f32.gmra.mxu0 %v6066
    %v6068 = vpop.f32.mrf.mxu0
    %v6069 = vadd.f32 %v5960, %v6068
    %v6070 = vpop.f32.mrf.mxu0
    %6071 = vdwg.mxu0
    %6072 = vmatprep.subr.mxu0 0.0
    %6073 = vmatpush1.msra.mxu0 0.0
    %6074 = vmatprep.subr.mxu0 0.0
    %6075 = vmatpush1.msra.mxu0 0.0
    %6076 = vmatprep.subr.mxu0 0.0
    %6077 = vmatpush1.msra.mxu0 0.0
    %6078 = vmatprep.subr.mxu0 0.0
    %6079 = vmatpush1.msra.mxu0 0.0
    %6080 = vmatprep.subr.mxu0 0.0
    %6081 = vmatpush1.msra.mxu0 0.0
    %6082 = vmatprep.subr.mxu0 0.0
    %6083 = vmatpush1.msra.mxu0 0.0
    %6084 = vmatprep.subr.mxu0 0.0
    %6085 = vmatpush1.msra.mxu0 0.0
    %6086 = vmatprep.subr.mxu0 0.0
    %6087 = vmatpush1.msra.mxu0 0.0
    %6088 = vmatprep.subr.mxu0 0.0
    %v6089 = vand.u32 %v5708, 4294901760
    %6090 = vmatpush1.msra.mxu0 %v6089
    %6091 = vmatprep.subr.mxu0 0.0
    %v6092 = vand.u32 %v5707, 4294901760
    %6093 = vmatpush1.msra.mxu0 %v6092
    %6094 = vmatprep.subr.mxu0 0.0
    %v6095 = vand.u32 %v5706, 4294901760
    %6096 = vmatpush1.msra.mxu0 %v6095
    %6097 = vmatprep.subr.mxu0 0.0
    %v6098 = vand.u32 %v5705, 4294901760
    %6099 = vmatpush1.msra.mxu0 %v6098
    %6100 = vmatprep.subr.mxu0 0.0
    %v6101 = vand.u32 %v5704, 4294901760
    %6102 = vmatpush1.msra.mxu0 %v6101
    %6103 = vmatprep.subr.mxu0 0.0
    %v6104 = vand.u32 %v5703, 4294901760
    %6105 = vmatpush1.msra.mxu0 %v6104
    %6106 = vmatprep.subr.mxu0 0.0
    %v6107 = vand.u32 %v5702, 4294901760
    %6108 = vmatpush1.msra.mxu0 %v6107
    %6109 = vmatprep.subr.mxu0 0.0
    %v6110 = vand.u32 %v5701, 4294901760
    %6111 = vmatpush1.msra.mxu0 %v6110
    %6112 = vmatprep.subr.mxu0 0.0
    %6113 = vmatpush2.msra.mxu0 0.0
    %6114 = vmatprep.subr.mxu0 0.0
    %6115 = vmatpush2.msra.mxu0 0.0
    %6116 = vmatprep.subr.mxu0 0.0
    %6117 = vmatpush2.msra.mxu0 0.0
    %6118 = vmatprep.subr.mxu0 0.0
    %6119 = vmatpush2.msra.mxu0 0.0
    %6120 = vmatprep.subr.mxu0 0.0
    %6121 = vmatpush2.msra.mxu0 0.0
    %6122 = vmatprep.subr.mxu0 0.0
    %6123 = vmatpush2.msra.mxu0 0.0
    %6124 = vmatprep.subr.mxu0 0.0
    %6125 = vmatpush2.msra.mxu0 0.0
    %6126 = vmatprep.subr.mxu0 0.0
    %6127 = vmatpush2.msra.mxu0 0.0
    %6128 = vmatprep.subr.mxu0 0.0
    %6129 = vmatpush2.msra.mxu0 0.0
    %6130 = vmatprep.subr.mxu0 0.0
    %6131 = vmatpush2.msra.mxu0 0.0
    %6132 = vmatprep.subr.mxu0 0.0
    %6133 = vmatpush2.msra.mxu0 0.0
    %6134 = vmatprep.subr.mxu0 0.0
    %6135 = vmatpush2.msra.mxu0 0.0
    %6136 = vmatprep.subr.mxu0 0.0
    %6137 = vmatpush2.msra.mxu0 0.0
    %6138 = vmatprep.subr.mxu0 0.0
    %6139 = vmatpush2.msra.mxu0 0.0
    %6140 = vmatprep.subr.mxu0 0.0
    %6141 = vmatpush2.msra.mxu0 0.0
    %6142 = vmatprep.subr.mxu0 0.0
    %6143 = vmatpush2.msra.mxu0 0.0
    %6144 = vmatprep.mubr.f32.mxu0 0.0
    %v6145 = vand.u32 %v5710, 4294901760
    %v6146 = vsub.f32 %v5710, %v6145
    %v6147 = vand.u32 %v6146, 4294901760
    %6148 = vmatmul.mubr.f32.gmra.mxu0 %v6147
    %v6149 = vpop.f32.mrf.mxu0
    %v6150 = vadd.f32 %v6048, %v6149
    %v6151 = vpop.f32.mrf.mxu0
    %6152 = vmatprep.mubr.f32.mxu0 0.0
    %v6153 = vand.u32 %v5713, 4294901760
    %v6154 = vsub.f32 %v5713, %v6153
    %v6155 = vand.u32 %v6154, 4294901760
    %6156 = vmatmul.mubr.f32.gmra.mxu0 %v6155
    %v6157 = vpop.f32.mrf.mxu0
    %v6158 = vadd.f32 %v6055, %v6157
    %v6159 = vpop.f32.mrf.mxu0
    %6160 = vmatprep.mubr.f32.mxu0 0.0
    %v6161 = vand.u32 %v5716, 4294901760
    %v6162 = vsub.f32 %v5716, %v6161
    %v6163 = vand.u32 %v6162, 4294901760
    %6164 = vmatmul.mubr.f32.gmra.mxu0 %v6163
    %v6165 = vpop.f32.mrf.mxu0
    %v6166 = vadd.f32 %v6062, %v6165
    %v6167 = vpop.f32.mrf.mxu0
    %6168 = vmatprep.mubr.f32.mxu0 0.0
    %v6169 = vand.u32 %v5719, 4294901760
    %v6170 = vsub.f32 %v5719, %v6169
    %v6171 = vand.u32 %v6170, 4294901760
    %6172 = vmatmul.mubr.f32.gmra.mxu0 %v6171
    %v6173 = vpop.f32.mrf.mxu0
    %v6174 = vadd.f32 %v6069, %v6173
    %v6175 = vpop.f32.mrf.mxu0
    %6176 = vdwg.mxu0
    %6177 = vmatprep.subr.mxu0 0.0
    %6178 = vmatpush1.msra.mxu0 0.0
    %6179 = vmatprep.subr.mxu0 0.0
    %6180 = vmatpush1.msra.mxu0 0.0
    %6181 = vmatprep.subr.mxu0 0.0
    %6182 = vmatpush1.msra.mxu0 0.0
    %6183 = vmatprep.subr.mxu0 0.0
    %6184 = vmatpush1.msra.mxu0 0.0
    %6185 = vmatprep.subr.mxu0 0.0
    %6186 = vmatpush1.msra.mxu0 0.0
    %6187 = vmatprep.subr.mxu0 0.0
    %6188 = vmatpush1.msra.mxu0 0.0
    %6189 = vmatprep.subr.mxu0 0.0
    %6190 = vmatpush1.msra.mxu0 0.0
    %6191 = vmatprep.subr.mxu0 0.0
    %6192 = vmatpush1.msra.mxu0 0.0
    %6193 = vmatprep.subr.mxu0 0.0
    %v6194 = vand.u32 %v5708, 4294901760
    %v6195 = vsub.f32 %v5708, %v6194
    %v6196 = vand.u32 %v6195, 4294901760
    %6197 = vmatpush1.msra.mxu0 %v6196
    %6198 = vmatprep.subr.mxu0 0.0
    %v6199 = vand.u32 %v5707, 4294901760
    %v6200 = vsub.f32 %v5707, %v6199
    %v6201 = vand.u32 %v6200, 4294901760
    %6202 = vmatpush1.msra.mxu0 %v6201
    %6203 = vmatprep.subr.mxu0 0.0
    %v6204 = vand.u32 %v5706, 4294901760
    %v6205 = vsub.f32 %v5706, %v6204
    %v6206 = vand.u32 %v6205, 4294901760
    %6207 = vmatpush1.msra.mxu0 %v6206
    %6208 = vmatprep.subr.mxu0 0.0
    %v6209 = vand.u32 %v5705, 4294901760
    %v6210 = vsub.f32 %v5705, %v6209
    %v6211 = vand.u32 %v6210, 4294901760
    %6212 = vmatpush1.msra.mxu0 %v6211
    %6213 = vmatprep.subr.mxu0 0.0
    %v6214 = vand.u32 %v5704, 4294901760
    %v6215 = vsub.f32 %v5704, %v6214
    %v6216 = vand.u32 %v6215, 4294901760
    %6217 = vmatpush1.msra.mxu0 %v6216
    %6218 = vmatprep.subr.mxu0 0.0
    %v6219 = vand.u32 %v5703, 4294901760
    %v6220 = vsub.f32 %v5703, %v6219
    %v6221 = vand.u32 %v6220, 4294901760
    %6222 = vmatpush1.msra.mxu0 %v6221
    %6223 = vmatprep.subr.mxu0 0.0
    %v6224 = vand.u32 %v5702, 4294901760
    %v6225 = vsub.f32 %v5702, %v6224
    %v6226 = vand.u32 %v6225, 4294901760
    %6227 = vmatpush1.msra.mxu0 %v6226
    %6228 = vmatprep.subr.mxu0 0.0
    %v6229 = vand.u32 %v5701, 4294901760
    %v6230 = vsub.f32 %v5701, %v6229
    %v6231 = vand.u32 %v6230, 4294901760
    %6232 = vmatpush1.msra.mxu0 %v6231
    %6233 = vmatprep.subr.mxu0 0.0
    %6234 = vmatpush2.msra.mxu0 0.0
    %6235 = vmatprep.subr.mxu0 0.0
    %6236 = vmatpush2.msra.mxu0 0.0
    %6237 = vmatprep.subr.mxu0 0.0
    %6238 = vmatpush2.msra.mxu0 0.0
    %6239 = vmatprep.subr.mxu0 0.0
    %6240 = vmatpush2.msra.mxu0 0.0
    %6241 = vmatprep.subr.mxu0 0.0
    %6242 = vmatpush2.msra.mxu0 0.0
    %6243 = vmatprep.subr.mxu0 0.0
    %6244 = vmatpush2.msra.mxu0 0.0
    %6245 = vmatprep.subr.mxu0 0.0
    %6246 = vmatpush2.msra.mxu0 0.0
    %6247 = vmatprep.subr.mxu0 0.0
    %6248 = vmatpush2.msra.mxu0 0.0
    %6249 = vmatprep.subr.mxu0 0.0
    %6250 = vmatpush2.msra.mxu0 0.0
    %6251 = vmatprep.subr.mxu0 0.0
    %6252 = vmatpush2.msra.mxu0 0.0
    %6253 = vmatprep.subr.mxu0 0.0
    %6254 = vmatpush2.msra.mxu0 0.0
    %6255 = vmatprep.subr.mxu0 0.0
    %6256 = vmatpush2.msra.mxu0 0.0
    %6257 = vmatprep.subr.mxu0 0.0
    %6258 = vmatpush2.msra.mxu0 0.0
    %6259 = vmatprep.subr.mxu0 0.0
    %6260 = vmatpush2.msra.mxu0 0.0
    %6261 = vmatprep.subr.mxu0 0.0
    %6262 = vmatpush2.msra.mxu0 0.0
    %6263 = vmatprep.subr.mxu0 0.0
    %6264 = vmatpush2.msra.mxu0 0.0
    %6265 = vmatprep.mubr.f32.mxu0 0.0
    %v6266 = vand.u32 %v5710, 4294901760
    %6267 = vmatmul.mubr.f32.gmra.mxu0 %v6266
    %v6268 = vpop.f32.mrf.mxu0
    %v6269 = vadd.f32 %v6150, %v6268
    %v6270 = vpop.f32.mrf.mxu0
    %6271 = vmatprep.mubr.f32.mxu0 0.0
    %v6272 = vand.u32 %v5713, 4294901760
    %6273 = vmatmul.mubr.f32.gmra.mxu0 %v6272
    %v6274 = vpop.f32.mrf.mxu0
    %v6275 = vadd.f32 %v6158, %v6274
    %v6276 = vpop.f32.mrf.mxu0
    %6277 = vmatprep.mubr.f32.mxu0 0.0
    %v6278 = vand.u32 %v5716, 4294901760
    %6279 = vmatmul.mubr.f32.gmra.mxu0 %v6278
    %v6280 = vpop.f32.mrf.mxu0
    %v6281 = vadd.f32 %v6166, %v6280
    %v6282 = vpop.f32.mrf.mxu0
    %6283 = vmatprep.mubr.f32.mxu0 0.0
    %v6284 = vand.u32 %v5719, 4294901760
    %6285 = vmatmul.mubr.f32.gmra.mxu0 %v6284
    %v6286 = vpop.f32.mrf.mxu0
    %v6287 = vadd.f32 %v6174, %v6286
    %v6288 = vpop.f32.mrf.mxu0
    %6289 = vdwg.mxu0
    %6290 = vmatprep.subr.mxu0 0.0
    %6291 = vmatpush1.msra.mxu0 0.0
    %6292 = vmatprep.subr.mxu0 0.0
    %6293 = vmatpush1.msra.mxu0 0.0
    %6294 = vmatprep.subr.mxu0 0.0
    %6295 = vmatpush1.msra.mxu0 0.0
    %6296 = vmatprep.subr.mxu0 0.0
    %6297 = vmatpush1.msra.mxu0 0.0
    %6298 = vmatprep.subr.mxu0 0.0
    %6299 = vmatpush1.msra.mxu0 0.0
    %6300 = vmatprep.subr.mxu0 0.0
    %6301 = vmatpush1.msra.mxu0 0.0
    %6302 = vmatprep.subr.mxu0 0.0
    %6303 = vmatpush1.msra.mxu0 0.0
    %6304 = vmatprep.subr.mxu0 0.0
    %6305 = vmatpush1.msra.mxu0 0.0
    %6306 = vmatprep.subr.mxu0 0.0
    %v6307 = vand.u32 %v5708, 4294901760
    %6308 = vmatpush1.msra.mxu0 %v6307
    %6309 = vmatprep.subr.mxu0 0.0
    %v6310 = vand.u32 %v5707, 4294901760
    %6311 = vmatpush1.msra.mxu0 %v6310
    %6312 = vmatprep.subr.mxu0 0.0
    %v6313 = vand.u32 %v5706, 4294901760
    %6314 = vmatpush1.msra.mxu0 %v6313
    %6315 = vmatprep.subr.mxu0 0.0
    %v6316 = vand.u32 %v5705, 4294901760
    %6317 = vmatpush1.msra.mxu0 %v6316
    %6318 = vmatprep.subr.mxu0 0.0
    %v6319 = vand.u32 %v5704, 4294901760
    %6320 = vmatpush1.msra.mxu0 %v6319
    %6321 = vmatprep.subr.mxu0 0.0
    %v6322 = vand.u32 %v5703, 4294901760
    %6323 = vmatpush1.msra.mxu0 %v6322
    %6324 = vmatprep.subr.mxu0 0.0
    %v6325 = vand.u32 %v5702, 4294901760
    %6326 = vmatpush1.msra.mxu0 %v6325
    %6327 = vmatprep.subr.mxu0 0.0
    %v6328 = vand.u32 %v5701, 4294901760
    %6329 = vmatpush1.msra.mxu0 %v6328
    %6330 = vmatprep.subr.mxu0 0.0
    %6331 = vmatpush2.msra.mxu0 0.0
    %6332 = vmatprep.subr.mxu0 0.0
    %6333 = vmatpush2.msra.mxu0 0.0
    %6334 = vmatprep.subr.mxu0 0.0
    %6335 = vmatpush2.msra.mxu0 0.0
    %6336 = vmatprep.subr.mxu0 0.0
    %6337 = vmatpush2.msra.mxu0 0.0
    %6338 = vmatprep.subr.mxu0 0.0
    %6339 = vmatpush2.msra.mxu0 0.0
    %6340 = vmatprep.subr.mxu0 0.0
    %6341 = vmatpush2.msra.mxu0 0.0
    %6342 = vmatprep.subr.mxu0 0.0
    %6343 = vmatpush2.msra.mxu0 0.0
    %6344 = vmatprep.subr.mxu0 0.0
    %6345 = vmatpush2.msra.mxu0 0.0
    %6346 = vmatprep.subr.mxu0 0.0
    %6347 = vmatpush2.msra.mxu0 0.0
    %6348 = vmatprep.subr.mxu0 0.0
    %6349 = vmatpush2.msra.mxu0 0.0
    %6350 = vmatprep.subr.mxu0 0.0
    %6351 = vmatpush2.msra.mxu0 0.0
    %6352 = vmatprep.subr.mxu0 0.0
    %6353 = vmatpush2.msra.mxu0 0.0
    %6354 = vmatprep.subr.mxu0 0.0
    %6355 = vmatpush2.msra.mxu0 0.0
    %6356 = vmatprep.subr.mxu0 0.0
    %6357 = vmatpush2.msra.mxu0 0.0
    %6358 = vmatprep.subr.mxu0 0.0
    %6359 = vmatpush2.msra.mxu0 0.0
    %6360 = vmatprep.subr.mxu0 0.0
    %6361 = vmatpush2.msra.mxu0 0.0
    %6362 = vmatprep.mubr.f32.mxu0 0.0
    %v6363 = vand.u32 %v5710, 4294901760
    %6364 = vmatmul.mubr.f32.gmra.mxu0 %v6363
    %v6365 = vpop.f32.mrf.mxu0
    %v6366 = vadd.f32 %v6269, %v6365
    %v6367 = vpop.f32.mrf.mxu0
    %6368 = vmatprep.mubr.f32.mxu0 0.0
    %v6369 = vand.u32 %v5713, 4294901760
    %6370 = vmatmul.mubr.f32.gmra.mxu0 %v6369
    %v6371 = vpop.f32.mrf.mxu0
    %v6372 = vadd.f32 %v6275, %v6371
    %v6373 = vpop.f32.mrf.mxu0
    %6374 = vmatprep.mubr.f32.mxu0 0.0
    %v6375 = vand.u32 %v5716, 4294901760
    %6376 = vmatmul.mubr.f32.gmra.mxu0 %v6375
    %v6377 = vpop.f32.mrf.mxu0
    %v6378 = vadd.f32 %v6281, %v6377
    %v6379 = vpop.f32.mrf.mxu0
    %6380 = vmatprep.mubr.f32.mxu0 0.0
    %v6381 = vand.u32 %v5719, 4294901760
    %6382 = vmatmul.mubr.f32.gmra.mxu0 %v6381
    %v6383 = vpop.f32.mrf.mxu0
    %v6384 = vadd.f32 %v6287, %v6383
    %v6385 = vpop.f32.mrf.mxu0
    %6386 = vdwg.mxu0
    %v6387 = vadd.f32 %v5679, %v6366
    %v6388 = vadd.f32 %v5685, %v6372
    %v6389 = vadd.f32 %v5691, %v6378
    %v6390 = vadd.f32 %v5697, %v6384
    %v6391 = vld [vmem:[%s6] sm:$0x1]
    %v6393 = vlaneseq
    %v6394 = vshrl.u32 %v6393, 7
    %v6395 = vsub.s32 0, %v6394
    %v6396 = vrot.slane %v6391, %v6395
    %v6398 = vadd.f32 %v6387, %v6396
    %v6399 = vadd.f32 %v6388, %v6396
    %v6400 = vadd.f32 %v6389, %v6396
    %v6401 = vadd.f32 %v6390, %v6396
    %v6402 = vsel %vm187, %v6398, 0.0
    %v6403 = vsel %vm187, %v6399, 0.0
    %v6404 = vadd.f32 %v6402, %v6403
    %v6405 = vsel %vm187, %v6400, 0.0
    %v6406 = vadd.f32 %v6404, %v6405
    %v6407 = vsel %vm187, %v6401, 0.0
    %v6408 = vadd.f32 %v6406, %v6407
    %v6409 = vrot.slane %v6408, 4
    %v6410 = vadd.f32 %v6408, %v6409
    %v6411 = vrot.slane %v6410, 2
    %v6412 = vadd.f32 %v6410, %v6411
    %v6413 = vrot.slane %v6412, 1
    %v6414 = vadd.f32 %v6412, %v6413
    %v6416 = vsel %vm187, %v6414, 0
    %6418 = vmatprep.subr.mxu0 0.0
    %6419 = vmatpush1.msra.mxu0 0.0
    %6420 = vmatprep.subr.mxu0 0.0
    %6421 = vmatpush1.msra.mxu0 0.0
    %6422 = vmatprep.subr.mxu0 0.0
    %6423 = vmatpush1.msra.mxu0 0.0
    %6424 = vmatprep.subr.mxu0 0.0
    %6425 = vmatpush1.msra.mxu0 0.0
    %6426 = vmatprep.subr.mxu0 0.0
    %6427 = vmatpush1.msra.mxu0 0.0
    %6428 = vmatprep.subr.mxu0 0.0
    %6429 = vmatpush1.msra.mxu0 0.0
    %6430 = vmatprep.subr.mxu0 0.0
    %6431 = vmatpush1.msra.mxu0 0.0
    %6432 = vmatprep.subr.mxu0 0.0
    %6433 = vmatpush1.msra.mxu0 0.0
    %6434 = vmatprep.subr.mxu0 0.0
    %v6435 = vand.u32 %v2262, 4294901760
    %6436 = vmatpush1.msra.mxu0 %v6435
    %6437 = vmatprep.subr.mxu0 0.0
    %v6438 = vand.u32 %v2261, 4294901760
    %6439 = vmatpush1.msra.mxu0 %v6438
    %6440 = vmatprep.subr.mxu0 0.0
    %v6441 = vand.u32 %v2260, 4294901760
    %6442 = vmatpush1.msra.mxu0 %v6441
    %6443 = vmatprep.subr.mxu0 0.0
    %v6444 = vand.u32 %v2259, 4294901760
    %6445 = vmatpush1.msra.mxu0 %v6444
    %6446 = vmatprep.subr.mxu0 0.0
    %v6447 = vand.u32 %v2258, 4294901760
    %6448 = vmatpush1.msra.mxu0 %v6447
    %6449 = vmatprep.subr.mxu0 0.0
    %v6450 = vand.u32 %v2257, 4294901760
    %6451 = vmatpush1.msra.mxu0 %v6450
    %6452 = vmatprep.subr.mxu0 0.0
    %v6453 = vand.u32 %v2256, 4294901760
    %6454 = vmatpush1.msra.mxu0 %v6453
    %6455 = vmatprep.subr.mxu0 0.0
    %v6456 = vand.u32 %v2255, 4294901760
    %6457 = vmatpush1.msra.mxu0 %v6456
    %6458 = vmatprep.subr.mxu0 0.0
    %6459 = vmatpush2.msra.mxu0 0.0
    %6460 = vmatprep.subr.mxu0 0.0
    %6461 = vmatpush2.msra.mxu0 0.0
    %6462 = vmatprep.subr.mxu0 0.0
    %6463 = vmatpush2.msra.mxu0 0.0
    %6464 = vmatprep.subr.mxu0 0.0
    %6465 = vmatpush2.msra.mxu0 0.0
    %6466 = vmatprep.subr.mxu0 0.0
    %6467 = vmatpush2.msra.mxu0 0.0
    %6468 = vmatprep.subr.mxu0 0.0
    %6469 = vmatpush2.msra.mxu0 0.0
    %6470 = vmatprep.subr.mxu0 0.0
    %6471 = vmatpush2.msra.mxu0 0.0
    %6472 = vmatprep.subr.mxu0 0.0
    %6473 = vmatpush2.msra.mxu0 0.0
    %6474 = vmatprep.subr.mxu0 0.0
    %6475 = vmatpush2.msra.mxu0 0.0
    %6476 = vmatprep.subr.mxu0 0.0
    %6477 = vmatpush2.msra.mxu0 0.0
    %6478 = vmatprep.subr.mxu0 0.0
    %6479 = vmatpush2.msra.mxu0 0.0
    %6480 = vmatprep.subr.mxu0 0.0
    %6481 = vmatpush2.msra.mxu0 0.0
    %6482 = vmatprep.subr.mxu0 0.0
    %6483 = vmatpush2.msra.mxu0 0.0
    %6484 = vmatprep.subr.mxu0 0.0
    %6485 = vmatpush2.msra.mxu0 0.0
    %6486 = vmatprep.subr.mxu0 0.0
    %6487 = vmatpush2.msra.mxu0 0.0
    %6488 = vmatprep.subr.mxu0 0.0
    %6489 = vmatpush2.msra.mxu0 0.0
    %6490 = vmatprep.mubr.f32.mxu0 0.0
    %v6491 = vand.u32 %v6416, 4294901760
    %v6492 = vsub.f32 %v6416, %v6491
    %v6493 = vand.u32 %v6492, 4294901760
    %v6494 = vsub.f32 %v6492, %v6493
    %v6495 = vand.u32 %v6494, 4294901760
    %6496 = vmatmul.mubr.f32.gmra.mxu0 %v6495
    %v6497 = vpop.f32.mrf.mxu0
    %v6498 = vadd.f32 0.0, %v6497
    %v6499 = vpop.f32.mrf.mxu0
    %6500 = vdwg.mxu0
    %6501 = vmatprep.subr.mxu0 0.0
    %6502 = vmatpush1.msra.mxu0 0.0
    %6503 = vmatprep.subr.mxu0 0.0
    %6504 = vmatpush1.msra.mxu0 0.0
    %6505 = vmatprep.subr.mxu0 0.0
    %6506 = vmatpush1.msra.mxu0 0.0
    %6507 = vmatprep.subr.mxu0 0.0
    %6508 = vmatpush1.msra.mxu0 0.0
    %6509 = vmatprep.subr.mxu0 0.0
    %6510 = vmatpush1.msra.mxu0 0.0
    %6511 = vmatprep.subr.mxu0 0.0
    %6512 = vmatpush1.msra.mxu0 0.0
    %6513 = vmatprep.subr.mxu0 0.0
    %6514 = vmatpush1.msra.mxu0 0.0
    %6515 = vmatprep.subr.mxu0 0.0
    %6516 = vmatpush1.msra.mxu0 0.0
    %6517 = vmatprep.subr.mxu0 0.0
    %v6518 = vand.u32 %v2262, 4294901760
    %v6519 = vsub.f32 %v2262, %v6518
    %v6520 = vand.u32 %v6519, 4294901760
    %v6521 = vsub.f32 %v6519, %v6520
    %v6522 = vand.u32 %v6521, 4294901760
    %6523 = vmatpush1.msra.mxu0 %v6522
    %6524 = vmatprep.subr.mxu0 0.0
    %v6525 = vand.u32 %v2261, 4294901760
    %v6526 = vsub.f32 %v2261, %v6525
    %v6527 = vand.u32 %v6526, 4294901760
    %v6528 = vsub.f32 %v6526, %v6527
    %v6529 = vand.u32 %v6528, 4294901760
    %6530 = vmatpush1.msra.mxu0 %v6529
    %6531 = vmatprep.subr.mxu0 0.0
    %v6532 = vand.u32 %v2260, 4294901760
    %v6533 = vsub.f32 %v2260, %v6532
    %v6534 = vand.u32 %v6533, 4294901760
    %v6535 = vsub.f32 %v6533, %v6534
    %v6536 = vand.u32 %v6535, 4294901760
    %6537 = vmatpush1.msra.mxu0 %v6536
    %6538 = vmatprep.subr.mxu0 0.0
    %v6539 = vand.u32 %v2259, 4294901760
    %v6540 = vsub.f32 %v2259, %v6539
    %v6541 = vand.u32 %v6540, 4294901760
    %v6542 = vsub.f32 %v6540, %v6541
    %v6543 = vand.u32 %v6542, 4294901760
    %6544 = vmatpush1.msra.mxu0 %v6543
    %6545 = vmatprep.subr.mxu0 0.0
    %v6546 = vand.u32 %v2258, 4294901760
    %v6547 = vsub.f32 %v2258, %v6546
    %v6548 = vand.u32 %v6547, 4294901760
    %v6549 = vsub.f32 %v6547, %v6548
    %v6550 = vand.u32 %v6549, 4294901760
    %6551 = vmatpush1.msra.mxu0 %v6550
    %6552 = vmatprep.subr.mxu0 0.0
    %v6553 = vand.u32 %v2257, 4294901760
    %v6554 = vsub.f32 %v2257, %v6553
    %v6555 = vand.u32 %v6554, 4294901760
    %v6556 = vsub.f32 %v6554, %v6555
    %v6557 = vand.u32 %v6556, 4294901760
    %6558 = vmatpush1.msra.mxu0 %v6557
    %6559 = vmatprep.subr.mxu0 0.0
    %v6560 = vand.u32 %v2256, 4294901760
    %v6561 = vsub.f32 %v2256, %v6560
    %v6562 = vand.u32 %v6561, 4294901760
    %v6563 = vsub.f32 %v6561, %v6562
    %v6564 = vand.u32 %v6563, 4294901760
    %6565 = vmatpush1.msra.mxu0 %v6564
    %6566 = vmatprep.subr.mxu0 0.0
    %v6567 = vand.u32 %v2255, 4294901760
    %v6568 = vsub.f32 %v2255, %v6567
    %v6569 = vand.u32 %v6568, 4294901760
    %v6570 = vsub.f32 %v6568, %v6569
    %v6571 = vand.u32 %v6570, 4294901760
    %6572 = vmatpush1.msra.mxu0 %v6571
    %6573 = vmatprep.subr.mxu0 0.0
    %6574 = vmatpush2.msra.mxu0 0.0
    %6575 = vmatprep.subr.mxu0 0.0
    %6576 = vmatpush2.msra.mxu0 0.0
    %6577 = vmatprep.subr.mxu0 0.0
    %6578 = vmatpush2.msra.mxu0 0.0
    %6579 = vmatprep.subr.mxu0 0.0
    %6580 = vmatpush2.msra.mxu0 0.0
    %6581 = vmatprep.subr.mxu0 0.0
    %6582 = vmatpush2.msra.mxu0 0.0
    %6583 = vmatprep.subr.mxu0 0.0
    %6584 = vmatpush2.msra.mxu0 0.0
    %6585 = vmatprep.subr.mxu0 0.0
    %6586 = vmatpush2.msra.mxu0 0.0
    %6587 = vmatprep.subr.mxu0 0.0
    %6588 = vmatpush2.msra.mxu0 0.0
    %6589 = vmatprep.subr.mxu0 0.0
    %6590 = vmatpush2.msra.mxu0 0.0
    %6591 = vmatprep.subr.mxu0 0.0
    %6592 = vmatpush2.msra.mxu0 0.0
    %6593 = vmatprep.subr.mxu0 0.0
    %6594 = vmatpush2.msra.mxu0 0.0
    %6595 = vmatprep.subr.mxu0 0.0
    %6596 = vmatpush2.msra.mxu0 0.0
    %6597 = vmatprep.subr.mxu0 0.0
    %6598 = vmatpush2.msra.mxu0 0.0
    %6599 = vmatprep.subr.mxu0 0.0
    %6600 = vmatpush2.msra.mxu0 0.0
    %6601 = vmatprep.subr.mxu0 0.0
    %6602 = vmatpush2.msra.mxu0 0.0
    %6603 = vmatprep.subr.mxu0 0.0
    %6604 = vmatpush2.msra.mxu0 0.0
    %6605 = vmatprep.mubr.f32.mxu0 0.0
    %v6606 = vand.u32 %v6416, 4294901760
    %6607 = vmatmul.mubr.f32.gmra.mxu0 %v6606
    %v6608 = vpop.f32.mrf.mxu0
    %v6609 = vadd.f32 %v6498, %v6608
    %v6610 = vpop.f32.mrf.mxu0
    %6611 = vdwg.mxu0
    %6612 = vmatprep.subr.mxu0 0.0
    %6613 = vmatpush1.msra.mxu0 0.0
    %6614 = vmatprep.subr.mxu0 0.0
    %6615 = vmatpush1.msra.mxu0 0.0
    %6616 = vmatprep.subr.mxu0 0.0
    %6617 = vmatpush1.msra.mxu0 0.0
    %6618 = vmatprep.subr.mxu0 0.0
    %6619 = vmatpush1.msra.mxu0 0.0
    %6620 = vmatprep.subr.mxu0 0.0
    %6621 = vmatpush1.msra.mxu0 0.0
    %6622 = vmatprep.subr.mxu0 0.0
    %6623 = vmatpush1.msra.mxu0 0.0
    %6624 = vmatprep.subr.mxu0 0.0
    %6625 = vmatpush1.msra.mxu0 0.0
    %6626 = vmatprep.subr.mxu0 0.0
    %6627 = vmatpush1.msra.mxu0 0.0
    %6628 = vmatprep.subr.mxu0 0.0
    %v6629 = vand.u32 %v2262, 4294901760
    %v6630 = vsub.f32 %v2262, %v6629
    %6631 = vmatpush1.msra.mxu0 %v6630
    %6632 = vmatprep.subr.mxu0 0.0
    %v6633 = vand.u32 %v2261, 4294901760
    %v6634 = vsub.f32 %v2261, %v6633
    %6635 = vmatpush1.msra.mxu0 %v6634
    %6636 = vmatprep.subr.mxu0 0.0
    %v6637 = vand.u32 %v2260, 4294901760
    %v6638 = vsub.f32 %v2260, %v6637
    %6639 = vmatpush1.msra.mxu0 %v6638
    %6640 = vmatprep.subr.mxu0 0.0
    %v6641 = vand.u32 %v2259, 4294901760
    %v6642 = vsub.f32 %v2259, %v6641
    %6643 = vmatpush1.msra.mxu0 %v6642
    %6644 = vmatprep.subr.mxu0 0.0
    %v6645 = vand.u32 %v2258, 4294901760
    %v6646 = vsub.f32 %v2258, %v6645
    %6647 = vmatpush1.msra.mxu0 %v6646
    %6648 = vmatprep.subr.mxu0 0.0
    %v6649 = vand.u32 %v2257, 4294901760
    %v6650 = vsub.f32 %v2257, %v6649
    %6651 = vmatpush1.msra.mxu0 %v6650
    %6652 = vmatprep.subr.mxu0 0.0
    %v6653 = vand.u32 %v2256, 4294901760
    %v6654 = vsub.f32 %v2256, %v6653
    %6655 = vmatpush1.msra.mxu0 %v6654
    %6656 = vmatprep.subr.mxu0 0.0
    %v6657 = vand.u32 %v2255, 4294901760
    %v6658 = vsub.f32 %v2255, %v6657
    %6659 = vmatpush1.msra.mxu0 %v6658
    %6660 = vmatprep.subr.mxu0 0.0
    %6661 = vmatpush2.msra.mxu0 0.0
    %6662 = vmatprep.subr.mxu0 0.0
    %6663 = vmatpush2.msra.mxu0 0.0
    %6664 = vmatprep.subr.mxu0 0.0
    %6665 = vmatpush2.msra.mxu0 0.0
    %6666 = vmatprep.subr.mxu0 0.0
    %6667 = vmatpush2.msra.mxu0 0.0
    %6668 = vmatprep.subr.mxu0 0.0
    %6669 = vmatpush2.msra.mxu0 0.0
    %6670 = vmatprep.subr.mxu0 0.0
    %6671 = vmatpush2.msra.mxu0 0.0
    %6672 = vmatprep.subr.mxu0 0.0
    %6673 = vmatpush2.msra.mxu0 0.0
    %6674 = vmatprep.subr.mxu0 0.0
    %6675 = vmatpush2.msra.mxu0 0.0
    %6676 = vmatprep.subr.mxu0 0.0
    %6677 = vmatpush2.msra.mxu0 0.0
    %6678 = vmatprep.subr.mxu0 0.0
    %6679 = vmatpush2.msra.mxu0 0.0
    %6680 = vmatprep.subr.mxu0 0.0
    %6681 = vmatpush2.msra.mxu0 0.0
    %6682 = vmatprep.subr.mxu0 0.0
    %6683 = vmatpush2.msra.mxu0 0.0
    %6684 = vmatprep.subr.mxu0 0.0
    %6685 = vmatpush2.msra.mxu0 0.0
    %6686 = vmatprep.subr.mxu0 0.0
    %6687 = vmatpush2.msra.mxu0 0.0
    %6688 = vmatprep.subr.mxu0 0.0
    %6689 = vmatpush2.msra.mxu0 0.0
    %6690 = vmatprep.subr.mxu0 0.0
    %6691 = vmatpush2.msra.mxu0 0.0
    %6692 = vmatprep.mubr.f32.mxu0 0.0
    %v6693 = vand.u32 %v6416, 4294901760
    %v6694 = vsub.f32 %v6416, %v6693
    %6695 = vmatmul.mubr.f32.gmra.mxu0 %v6694
    %v6696 = vpop.f32.mrf.mxu0
    %v6697 = vadd.f32 %v6609, %v6696
    %v6698 = vpop.f32.mrf.mxu0
    %6699 = vdwg.mxu0
    %6700 = vmatprep.subr.mxu0 0.0
    %6701 = vmatpush1.msra.mxu0 0.0
    %6702 = vmatprep.subr.mxu0 0.0
    %6703 = vmatpush1.msra.mxu0 0.0
    %6704 = vmatprep.subr.mxu0 0.0
    %6705 = vmatpush1.msra.mxu0 0.0
    %6706 = vmatprep.subr.mxu0 0.0
    %6707 = vmatpush1.msra.mxu0 0.0
    %6708 = vmatprep.subr.mxu0 0.0
    %6709 = vmatpush1.msra.mxu0 0.0
    %6710 = vmatprep.subr.mxu0 0.0
    %6711 = vmatpush1.msra.mxu0 0.0
    %6712 = vmatprep.subr.mxu0 0.0
    %6713 = vmatpush1.msra.mxu0 0.0
    %6714 = vmatprep.subr.mxu0 0.0
    %6715 = vmatpush1.msra.mxu0 0.0
    %6716 = vmatprep.subr.mxu0 0.0
    %v6717 = vand.u32 %v2262, 4294901760
    %6718 = vmatpush1.msra.mxu0 %v6717
    %6719 = vmatprep.subr.mxu0 0.0
    %v6720 = vand.u32 %v2261, 4294901760
    %6721 = vmatpush1.msra.mxu0 %v6720
    %6722 = vmatprep.subr.mxu0 0.0
    %v6723 = vand.u32 %v2260, 4294901760
    %6724 = vmatpush1.msra.mxu0 %v6723
    %6725 = vmatprep.subr.mxu0 0.0
    %v6726 = vand.u32 %v2259, 4294901760
    %6727 = vmatpush1.msra.mxu0 %v6726
    %6728 = vmatprep.subr.mxu0 0.0
    %v6729 = vand.u32 %v2258, 4294901760
    %6730 = vmatpush1.msra.mxu0 %v6729
    %6731 = vmatprep.subr.mxu0 0.0
    %v6732 = vand.u32 %v2257, 4294901760
    %6733 = vmatpush1.msra.mxu0 %v6732
    %6734 = vmatprep.subr.mxu0 0.0
    %v6735 = vand.u32 %v2256, 4294901760
    %6736 = vmatpush1.msra.mxu0 %v6735
    %6737 = vmatprep.subr.mxu0 0.0
    %v6738 = vand.u32 %v2255, 4294901760
    %6739 = vmatpush1.msra.mxu0 %v6738
    %6740 = vmatprep.subr.mxu0 0.0
    %6741 = vmatpush2.msra.mxu0 0.0
    %6742 = vmatprep.subr.mxu0 0.0
    %6743 = vmatpush2.msra.mxu0 0.0
    %6744 = vmatprep.subr.mxu0 0.0
    %6745 = vmatpush2.msra.mxu0 0.0
    %6746 = vmatprep.subr.mxu0 0.0
    %6747 = vmatpush2.msra.mxu0 0.0
    %6748 = vmatprep.subr.mxu0 0.0
    %6749 = vmatpush2.msra.mxu0 0.0
    %6750 = vmatprep.subr.mxu0 0.0
    %6751 = vmatpush2.msra.mxu0 0.0
    %6752 = vmatprep.subr.mxu0 0.0
    %6753 = vmatpush2.msra.mxu0 0.0
    %6754 = vmatprep.subr.mxu0 0.0
    %6755 = vmatpush2.msra.mxu0 0.0
    %6756 = vmatprep.subr.mxu0 0.0
    %6757 = vmatpush2.msra.mxu0 0.0
    %6758 = vmatprep.subr.mxu0 0.0
    %6759 = vmatpush2.msra.mxu0 0.0
    %6760 = vmatprep.subr.mxu0 0.0
    %6761 = vmatpush2.msra.mxu0 0.0
    %6762 = vmatprep.subr.mxu0 0.0
    %6763 = vmatpush2.msra.mxu0 0.0
    %6764 = vmatprep.subr.mxu0 0.0
    %6765 = vmatpush2.msra.mxu0 0.0
    %6766 = vmatprep.subr.mxu0 0.0
    %6767 = vmatpush2.msra.mxu0 0.0
    %6768 = vmatprep.subr.mxu0 0.0
    %6769 = vmatpush2.msra.mxu0 0.0
    %6770 = vmatprep.subr.mxu0 0.0
    %6771 = vmatpush2.msra.mxu0 0.0
    %6772 = vmatprep.mubr.f32.mxu0 0.0
    %v6773 = vand.u32 %v6416, 4294901760
    %v6774 = vsub.f32 %v6416, %v6773
    %v6775 = vand.u32 %v6774, 4294901760
    %6776 = vmatmul.mubr.f32.gmra.mxu0 %v6775
    %v6777 = vpop.f32.mrf.mxu0
    %v6778 = vadd.f32 %v6697, %v6777
    %v6779 = vpop.f32.mrf.mxu0
    %6780 = vdwg.mxu0
    %6781 = vmatprep.subr.mxu0 0.0
    %6782 = vmatpush1.msra.mxu0 0.0
    %6783 = vmatprep.subr.mxu0 0.0
    %6784 = vmatpush1.msra.mxu0 0.0
    %6785 = vmatprep.subr.mxu0 0.0
    %6786 = vmatpush1.msra.mxu0 0.0
    %6787 = vmatprep.subr.mxu0 0.0
    %6788 = vmatpush1.msra.mxu0 0.0
    %6789 = vmatprep.subr.mxu0 0.0
    %6790 = vmatpush1.msra.mxu0 0.0
    %6791 = vmatprep.subr.mxu0 0.0
    %6792 = vmatpush1.msra.mxu0 0.0
    %6793 = vmatprep.subr.mxu0 0.0
    %6794 = vmatpush1.msra.mxu0 0.0
    %6795 = vmatprep.subr.mxu0 0.0
    %6796 = vmatpush1.msra.mxu0 0.0
    %6797 = vmatprep.subr.mxu0 0.0
    %v6798 = vand.u32 %v2262, 4294901760
    %v6799 = vsub.f32 %v2262, %v6798
    %v6800 = vand.u32 %v6799, 4294901760
    %6801 = vmatpush1.msra.mxu0 %v6800
    %6802 = vmatprep.subr.mxu0 0.0
    %v6803 = vand.u32 %v2261, 4294901760
    %v6804 = vsub.f32 %v2261, %v6803
    %v6805 = vand.u32 %v6804, 4294901760
    %6806 = vmatpush1.msra.mxu0 %v6805
    %6807 = vmatprep.subr.mxu0 0.0
    %v6808 = vand.u32 %v2260, 4294901760
    %v6809 = vsub.f32 %v2260, %v6808
    %v6810 = vand.u32 %v6809, 4294901760
    %6811 = vmatpush1.msra.mxu0 %v6810
    %6812 = vmatprep.subr.mxu0 0.0
    %v6813 = vand.u32 %v2259, 4294901760
    %v6814 = vsub.f32 %v2259, %v6813
    %v6815 = vand.u32 %v6814, 4294901760
    %6816 = vmatpush1.msra.mxu0 %v6815
    %6817 = vmatprep.subr.mxu0 0.0
    %v6818 = vand.u32 %v2258, 4294901760
    %v6819 = vsub.f32 %v2258, %v6818
    %v6820 = vand.u32 %v6819, 4294901760
    %6821 = vmatpush1.msra.mxu0 %v6820
    %6822 = vmatprep.subr.mxu0 0.0
    %v6823 = vand.u32 %v2257, 4294901760
    %v6824 = vsub.f32 %v2257, %v6823
    %v6825 = vand.u32 %v6824, 4294901760
    %6826 = vmatpush1.msra.mxu0 %v6825
    %6827 = vmatprep.subr.mxu0 0.0
    %v6828 = vand.u32 %v2256, 4294901760
    %v6829 = vsub.f32 %v2256, %v6828
    %v6830 = vand.u32 %v6829, 4294901760
    %6831 = vmatpush1.msra.mxu0 %v6830
    %6832 = vmatprep.subr.mxu0 0.0
    %v6833 = vand.u32 %v2255, 4294901760
    %v6834 = vsub.f32 %v2255, %v6833
    %v6835 = vand.u32 %v6834, 4294901760
    %6836 = vmatpush1.msra.mxu0 %v6835
    %6837 = vmatprep.subr.mxu0 0.0
    %6838 = vmatpush2.msra.mxu0 0.0
    %6839 = vmatprep.subr.mxu0 0.0
    %6840 = vmatpush2.msra.mxu0 0.0
    %6841 = vmatprep.subr.mxu0 0.0
    %6842 = vmatpush2.msra.mxu0 0.0
    %6843 = vmatprep.subr.mxu0 0.0
    %6844 = vmatpush2.msra.mxu0 0.0
    %6845 = vmatprep.subr.mxu0 0.0
    %6846 = vmatpush2.msra.mxu0 0.0
    %6847 = vmatprep.subr.mxu0 0.0
    %6848 = vmatpush2.msra.mxu0 0.0
    %6849 = vmatprep.subr.mxu0 0.0
    %6850 = vmatpush2.msra.mxu0 0.0
    %6851 = vmatprep.subr.mxu0 0.0
    %6852 = vmatpush2.msra.mxu0 0.0
    %6853 = vmatprep.subr.mxu0 0.0
    %6854 = vmatpush2.msra.mxu0 0.0
    %6855 = vmatprep.subr.mxu0 0.0
    %6856 = vmatpush2.msra.mxu0 0.0
    %6857 = vmatprep.subr.mxu0 0.0
    %6858 = vmatpush2.msra.mxu0 0.0
    %6859 = vmatprep.subr.mxu0 0.0
    %6860 = vmatpush2.msra.mxu0 0.0
    %6861 = vmatprep.subr.mxu0 0.0
    %6862 = vmatpush2.msra.mxu0 0.0
    %6863 = vmatprep.subr.mxu0 0.0
    %6864 = vmatpush2.msra.mxu0 0.0
    %6865 = vmatprep.subr.mxu0 0.0
    %6866 = vmatpush2.msra.mxu0 0.0
    %6867 = vmatprep.subr.mxu0 0.0
    %6868 = vmatpush2.msra.mxu0 0.0
    %6869 = vmatprep.mubr.f32.mxu0 0.0
    %v6870 = vand.u32 %v6416, 4294901760
    %6871 = vmatmul.mubr.f32.gmra.mxu0 %v6870
    %v6872 = vpop.f32.mrf.mxu0
    %v6873 = vadd.f32 %v6778, %v6872
    %v6874 = vpop.f32.mrf.mxu0
    %6875 = vdwg.mxu0
    %6876 = vmatprep.subr.mxu0 0.0
    %6877 = vmatpush1.msra.mxu0 0.0
    %6878 = vmatprep.subr.mxu0 0.0
    %6879 = vmatpush1.msra.mxu0 0.0
    %6880 = vmatprep.subr.mxu0 0.0
    %6881 = vmatpush1.msra.mxu0 0.0
    %6882 = vmatprep.subr.mxu0 0.0
    %6883 = vmatpush1.msra.mxu0 0.0
    %6884 = vmatprep.subr.mxu0 0.0
    %6885 = vmatpush1.msra.mxu0 0.0
    %6886 = vmatprep.subr.mxu0 0.0
    %6887 = vmatpush1.msra.mxu0 0.0
    %6888 = vmatprep.subr.mxu0 0.0
    %6889 = vmatpush1.msra.mxu0 0.0
    %6890 = vmatprep.subr.mxu0 0.0
    %6891 = vmatpush1.msra.mxu0 0.0
    %6892 = vmatprep.subr.mxu0 0.0
    %v6893 = vand.u32 %v2262, 4294901760
    %6894 = vmatpush1.msra.mxu0 %v6893
    %6895 = vmatprep.subr.mxu0 0.0
    %v6896 = vand.u32 %v2261, 4294901760
    %6897 = vmatpush1.msra.mxu0 %v6896
    %6898 = vmatprep.subr.mxu0 0.0
    %v6899 = vand.u32 %v2260, 4294901760
    %6900 = vmatpush1.msra.mxu0 %v6899
    %6901 = vmatprep.subr.mxu0 0.0
    %v6902 = vand.u32 %v2259, 4294901760
    %6903 = vmatpush1.msra.mxu0 %v6902
    %6904 = vmatprep.subr.mxu0 0.0
    %v6905 = vand.u32 %v2258, 4294901760
    %6906 = vmatpush1.msra.mxu0 %v6905
    %6907 = vmatprep.subr.mxu0 0.0
    %v6908 = vand.u32 %v2257, 4294901760
    %6909 = vmatpush1.msra.mxu0 %v6908
    %6910 = vmatprep.subr.mxu0 0.0
    %v6911 = vand.u32 %v2256, 4294901760
    %6912 = vmatpush1.msra.mxu0 %v6911
    %6913 = vmatprep.subr.mxu0 0.0
    %v6914 = vand.u32 %v2255, 4294901760
    %6915 = vmatpush1.msra.mxu0 %v6914
    %6916 = vmatprep.subr.mxu0 0.0
    %6917 = vmatpush2.msra.mxu0 0.0
    %6918 = vmatprep.subr.mxu0 0.0
    %6919 = vmatpush2.msra.mxu0 0.0
    %6920 = vmatprep.subr.mxu0 0.0
    %6921 = vmatpush2.msra.mxu0 0.0
    %6922 = vmatprep.subr.mxu0 0.0
    %6923 = vmatpush2.msra.mxu0 0.0
    %6924 = vmatprep.subr.mxu0 0.0
    %6925 = vmatpush2.msra.mxu0 0.0
    %6926 = vmatprep.subr.mxu0 0.0
    %6927 = vmatpush2.msra.mxu0 0.0
    %6928 = vmatprep.subr.mxu0 0.0
    %6929 = vmatpush2.msra.mxu0 0.0
    %6930 = vmatprep.subr.mxu0 0.0
    %6931 = vmatpush2.msra.mxu0 0.0
    %6932 = vmatprep.subr.mxu0 0.0
    %6933 = vmatpush2.msra.mxu0 0.0
    %6934 = vmatprep.subr.mxu0 0.0
    %6935 = vmatpush2.msra.mxu0 0.0
    %6936 = vmatprep.subr.mxu0 0.0
    %6937 = vmatpush2.msra.mxu0 0.0
    %6938 = vmatprep.subr.mxu0 0.0
    %6939 = vmatpush2.msra.mxu0 0.0
    %6940 = vmatprep.subr.mxu0 0.0
    %6941 = vmatpush2.msra.mxu0 0.0
    %6942 = vmatprep.subr.mxu0 0.0
    %6943 = vmatpush2.msra.mxu0 0.0
    %6944 = vmatprep.subr.mxu0 0.0
    %6945 = vmatpush2.msra.mxu0 0.0
    %6946 = vmatprep.subr.mxu0 0.0
    %6947 = vmatpush2.msra.mxu0 0.0
    %6948 = vmatprep.mubr.f32.mxu0 0.0
    %v6949 = vand.u32 %v6416, 4294901760
    %6950 = vmatmul.mubr.f32.gmra.mxu0 %v6949
    %v6951 = vpop.f32.mrf.mxu0
    %v6952 = vadd.f32 %v6873, %v6951
    %v6953 = vpop.f32.mrf.mxu0
    %6954 = vdwg.mxu0
    %v6955 = vmul.f32 %v6398, %v6398
    %v6956 = vmul.f32 %v6399, %v6399
    %v6957 = vmul.f32 %v6400, %v6400
    %v6958 = vmul.f32 %v6401, %v6401
    %v6959 = vsel %vm187, %v6955, 0.0
    %v6960 = vsel %vm187, %v6956, 0.0
    %v6961 = vadd.f32 %v6959, %v6960
    %v6962 = vsel %vm187, %v6957, 0.0
    %v6963 = vadd.f32 %v6961, %v6962
    %v6964 = vsel %vm187, %v6958, 0.0
    %v6965 = vadd.f32 %v6963, %v6964
    %v6966 = vrot.slane %v6965, 4
    %v6967 = vadd.f32 %v6965, %v6966
    %v6968 = vrot.slane %v6967, 2
    %v6969 = vadd.f32 %v6967, %v6968
    %v6970 = vrot.slane %v6969, 1
    %v6971 = vadd.f32 %v6969, %v6970
    %v6973 = vsel %vm187, %v6971, 0
    %6975 = vmatprep.subr.mxu0 0.0
    %6976 = vmatpush1.msra.mxu0 0.0
    %6977 = vmatprep.subr.mxu0 0.0
    %6978 = vmatpush1.msra.mxu0 0.0
    %6979 = vmatprep.subr.mxu0 0.0
    %6980 = vmatpush1.msra.mxu0 0.0
    %6981 = vmatprep.subr.mxu0 0.0
    %6982 = vmatpush1.msra.mxu0 0.0
    %6983 = vmatprep.subr.mxu0 0.0
    %6984 = vmatpush1.msra.mxu0 0.0
    %6985 = vmatprep.subr.mxu0 0.0
    %6986 = vmatpush1.msra.mxu0 0.0
    %6987 = vmatprep.subr.mxu0 0.0
    %6988 = vmatpush1.msra.mxu0 0.0
    %6989 = vmatprep.subr.mxu0 0.0
    %6990 = vmatpush1.msra.mxu0 0.0
    %6991 = vmatprep.subr.mxu0 0.0
    %v6992 = vand.u32 %v2262, 4294901760
    %6993 = vmatpush1.msra.mxu0 %v6992
    %6994 = vmatprep.subr.mxu0 0.0
    %v6995 = vand.u32 %v2261, 4294901760
    %6996 = vmatpush1.msra.mxu0 %v6995
    %6997 = vmatprep.subr.mxu0 0.0
    %v6998 = vand.u32 %v2260, 4294901760
    %6999 = vmatpush1.msra.mxu0 %v6998
    %7000 = vmatprep.subr.mxu0 0.0
    %v7001 = vand.u32 %v2259, 4294901760
    %7002 = vmatpush1.msra.mxu0 %v7001
    %7003 = vmatprep.subr.mxu0 0.0
    %v7004 = vand.u32 %v2258, 4294901760
    %7005 = vmatpush1.msra.mxu0 %v7004
    %7006 = vmatprep.subr.mxu0 0.0
    %v7007 = vand.u32 %v2257, 4294901760
    %7008 = vmatpush1.msra.mxu0 %v7007
    %7009 = vmatprep.subr.mxu0 0.0
    %v7010 = vand.u32 %v2256, 4294901760
    %7011 = vmatpush1.msra.mxu0 %v7010
    %7012 = vmatprep.subr.mxu0 0.0
    %v7013 = vand.u32 %v2255, 4294901760
    %7014 = vmatpush1.msra.mxu0 %v7013
    %7015 = vmatprep.subr.mxu0 0.0
    %7016 = vmatpush2.msra.mxu0 0.0
    %7017 = vmatprep.subr.mxu0 0.0
    %7018 = vmatpush2.msra.mxu0 0.0
    %7019 = vmatprep.subr.mxu0 0.0
    %7020 = vmatpush2.msra.mxu0 0.0
    %7021 = vmatprep.subr.mxu0 0.0
    %7022 = vmatpush2.msra.mxu0 0.0
    %7023 = vmatprep.subr.mxu0 0.0
    %7024 = vmatpush2.msra.mxu0 0.0
    %7025 = vmatprep.subr.mxu0 0.0
    %7026 = vmatpush2.msra.mxu0 0.0
    %7027 = vmatprep.subr.mxu0 0.0
    %7028 = vmatpush2.msra.mxu0 0.0
    %7029 = vmatprep.subr.mxu0 0.0
    %7030 = vmatpush2.msra.mxu0 0.0
    %7031 = vmatprep.subr.mxu0 0.0
    %7032 = vmatpush2.msra.mxu0 0.0
    %7033 = vmatprep.subr.mxu0 0.0
    %7034 = vmatpush2.msra.mxu0 0.0
    %7035 = vmatprep.subr.mxu0 0.0
    %7036 = vmatpush2.msra.mxu0 0.0
    %7037 = vmatprep.subr.mxu0 0.0
    %7038 = vmatpush2.msra.mxu0 0.0
    %7039 = vmatprep.subr.mxu0 0.0
    %7040 = vmatpush2.msra.mxu0 0.0
    %7041 = vmatprep.subr.mxu0 0.0
    %7042 = vmatpush2.msra.mxu0 0.0
    %7043 = vmatprep.subr.mxu0 0.0
    %7044 = vmatpush2.msra.mxu0 0.0
    %7045 = vmatprep.subr.mxu0 0.0
    %7046 = vmatpush2.msra.mxu0 0.0
    %7047 = vmatprep.mubr.f32.mxu0 0.0
    %v7048 = vand.u32 %v6973, 4294901760
    %v7049 = vsub.f32 %v6973, %v7048
    %v7050 = vand.u32 %v7049, 4294901760
    %v7051 = vsub.f32 %v7049, %v7050
    %v7052 = vand.u32 %v7051, 4294901760
    %7053 = vmatmul.mubr.f32.gmra.mxu0 %v7052
    %v7054 = vpop.f32.mrf.mxu0
    %v7055 = vadd.f32 0.0, %v7054
    %v7056 = vpop.f32.mrf.mxu0
    %7057 = vdwg.mxu0
    %7058 = vmatprep.subr.mxu0 0.0
    %7059 = vmatpush1.msra.mxu0 0.0
    %7060 = vmatprep.subr.mxu0 0.0
    %7061 = vmatpush1.msra.mxu0 0.0
    %7062 = vmatprep.subr.mxu0 0.0
    %7063 = vmatpush1.msra.mxu0 0.0
    %7064 = vmatprep.subr.mxu0 0.0
    %7065 = vmatpush1.msra.mxu0 0.0
    %7066 = vmatprep.subr.mxu0 0.0
    %7067 = vmatpush1.msra.mxu0 0.0
    %7068 = vmatprep.subr.mxu0 0.0
    %7069 = vmatpush1.msra.mxu0 0.0
    %7070 = vmatprep.subr.mxu0 0.0
    %7071 = vmatpush1.msra.mxu0 0.0
    %7072 = vmatprep.subr.mxu0 0.0
    %7073 = vmatpush1.msra.mxu0 0.0
    %7074 = vmatprep.subr.mxu0 0.0
    %v7075 = vand.u32 %v2262, 4294901760
    %v7076 = vsub.f32 %v2262, %v7075
    %v7077 = vand.u32 %v7076, 4294901760
    %v7078 = vsub.f32 %v7076, %v7077
    %v7079 = vand.u32 %v7078, 4294901760
    %7080 = vmatpush1.msra.mxu0 %v7079
    %7081 = vmatprep.subr.mxu0 0.0
    %v7082 = vand.u32 %v2261, 4294901760
    %v7083 = vsub.f32 %v2261, %v7082
    %v7084 = vand.u32 %v7083, 4294901760
    %v7085 = vsub.f32 %v7083, %v7084
    %v7086 = vand.u32 %v7085, 4294901760
    %7087 = vmatpush1.msra.mxu0 %v7086
    %7088 = vmatprep.subr.mxu0 0.0
    %v7089 = vand.u32 %v2260, 4294901760
    %v7090 = vsub.f32 %v2260, %v7089
    %v7091 = vand.u32 %v7090, 4294901760
    %v7092 = vsub.f32 %v7090, %v7091
    %v7093 = vand.u32 %v7092, 4294901760
    %7094 = vmatpush1.msra.mxu0 %v7093
    %7095 = vmatprep.subr.mxu0 0.0
    %v7096 = vand.u32 %v2259, 4294901760
    %v7097 = vsub.f32 %v2259, %v7096
    %v7098 = vand.u32 %v7097, 4294901760
    %v7099 = vsub.f32 %v7097, %v7098
    %v7100 = vand.u32 %v7099, 4294901760
    %7101 = vmatpush1.msra.mxu0 %v7100
    %7102 = vmatprep.subr.mxu0 0.0
    %v7103 = vand.u32 %v2258, 4294901760
    %v7104 = vsub.f32 %v2258, %v7103
    %v7105 = vand.u32 %v7104, 4294901760
    %v7106 = vsub.f32 %v7104, %v7105
    %v7107 = vand.u32 %v7106, 4294901760
    %7108 = vmatpush1.msra.mxu0 %v7107
    %7109 = vmatprep.subr.mxu0 0.0
    %v7110 = vand.u32 %v2257, 4294901760
    %v7111 = vsub.f32 %v2257, %v7110
    %v7112 = vand.u32 %v7111, 4294901760
    %v7113 = vsub.f32 %v7111, %v7112
    %v7114 = vand.u32 %v7113, 4294901760
    %7115 = vmatpush1.msra.mxu0 %v7114
    %7116 = vmatprep.subr.mxu0 0.0
    %v7117 = vand.u32 %v2256, 4294901760
    %v7118 = vsub.f32 %v2256, %v7117
    %v7119 = vand.u32 %v7118, 4294901760
    %v7120 = vsub.f32 %v7118, %v7119
    %v7121 = vand.u32 %v7120, 4294901760
    %7122 = vmatpush1.msra.mxu0 %v7121
    %7123 = vmatprep.subr.mxu0 0.0
    %v7124 = vand.u32 %v2255, 4294901760
    %v7125 = vsub.f32 %v2255, %v7124
    %v7126 = vand.u32 %v7125, 4294901760
    %v7127 = vsub.f32 %v7125, %v7126
    %v7128 = vand.u32 %v7127, 4294901760
    %7129 = vmatpush1.msra.mxu0 %v7128
    %7130 = vmatprep.subr.mxu0 0.0
    %7131 = vmatpush2.msra.mxu0 0.0
    %7132 = vmatprep.subr.mxu0 0.0
    %7133 = vmatpush2.msra.mxu0 0.0
    %7134 = vmatprep.subr.mxu0 0.0
    %7135 = vmatpush2.msra.mxu0 0.0
    %7136 = vmatprep.subr.mxu0 0.0
    %7137 = vmatpush2.msra.mxu0 0.0
    %7138 = vmatprep.subr.mxu0 0.0
    %7139 = vmatpush2.msra.mxu0 0.0
    %7140 = vmatprep.subr.mxu0 0.0
    %7141 = vmatpush2.msra.mxu0 0.0
    %7142 = vmatprep.subr.mxu0 0.0
    %7143 = vmatpush2.msra.mxu0 0.0
    %7144 = vmatprep.subr.mxu0 0.0
    %7145 = vmatpush2.msra.mxu0 0.0
    %7146 = vmatprep.subr.mxu0 0.0
    %7147 = vmatpush2.msra.mxu0 0.0
    %7148 = vmatprep.subr.mxu0 0.0
    %7149 = vmatpush2.msra.mxu0 0.0
    %7150 = vmatprep.subr.mxu0 0.0
    %7151 = vmatpush2.msra.mxu0 0.0
    %7152 = vmatprep.subr.mxu0 0.0
    %7153 = vmatpush2.msra.mxu0 0.0
    %7154 = vmatprep.subr.mxu0 0.0
    %7155 = vmatpush2.msra.mxu0 0.0
    %7156 = vmatprep.subr.mxu0 0.0
    %7157 = vmatpush2.msra.mxu0 0.0
    %7158 = vmatprep.subr.mxu0 0.0
    %7159 = vmatpush2.msra.mxu0 0.0
    %7160 = vmatprep.subr.mxu0 0.0
    %7161 = vmatpush2.msra.mxu0 0.0
    %7162 = vmatprep.mubr.f32.mxu0 0.0
    %v7163 = vand.u32 %v6973, 4294901760
    %7164 = vmatmul.mubr.f32.gmra.mxu0 %v7163
    %v7165 = vpop.f32.mrf.mxu0
    %v7166 = vadd.f32 %v7055, %v7165
    %v7167 = vpop.f32.mrf.mxu0
    %7168 = vdwg.mxu0
    %7169 = vmatprep.subr.mxu0 0.0
    %7170 = vmatpush1.msra.mxu0 0.0
    %7171 = vmatprep.subr.mxu0 0.0
    %7172 = vmatpush1.msra.mxu0 0.0
    %7173 = vmatprep.subr.mxu0 0.0
    %7174 = vmatpush1.msra.mxu0 0.0
    %7175 = vmatprep.subr.mxu0 0.0
    %7176 = vmatpush1.msra.mxu0 0.0
    %7177 = vmatprep.subr.mxu0 0.0
    %7178 = vmatpush1.msra.mxu0 0.0
    %7179 = vmatprep.subr.mxu0 0.0
    %7180 = vmatpush1.msra.mxu0 0.0
    %7181 = vmatprep.subr.mxu0 0.0
    %7182 = vmatpush1.msra.mxu0 0.0
    %7183 = vmatprep.subr.mxu0 0.0
    %7184 = vmatpush1.msra.mxu0 0.0
    %7185 = vmatprep.subr.mxu0 0.0
    %v7186 = vand.u32 %v2262, 4294901760
    %v7187 = vsub.f32 %v2262, %v7186
    %7188 = vmatpush1.msra.mxu0 %v7187
    %7189 = vmatprep.subr.mxu0 0.0
    %v7190 = vand.u32 %v2261, 4294901760
    %v7191 = vsub.f32 %v2261, %v7190
    %7192 = vmatpush1.msra.mxu0 %v7191
    %7193 = vmatprep.subr.mxu0 0.0
    %v7194 = vand.u32 %v2260, 4294901760
    %v7195 = vsub.f32 %v2260, %v7194
    %7196 = vmatpush1.msra.mxu0 %v7195
    %7197 = vmatprep.subr.mxu0 0.0
    %v7198 = vand.u32 %v2259, 4294901760
    %v7199 = vsub.f32 %v2259, %v7198
    %7200 = vmatpush1.msra.mxu0 %v7199
    %7201 = vmatprep.subr.mxu0 0.0
    %v7202 = vand.u32 %v2258, 4294901760
    %v7203 = vsub.f32 %v2258, %v7202
    %7204 = vmatpush1.msra.mxu0 %v7203
    %7205 = vmatprep.subr.mxu0 0.0
    %v7206 = vand.u32 %v2257, 4294901760
    %v7207 = vsub.f32 %v2257, %v7206
    %7208 = vmatpush1.msra.mxu0 %v7207
    %7209 = vmatprep.subr.mxu0 0.0
    %v7210 = vand.u32 %v2256, 4294901760
    %v7211 = vsub.f32 %v2256, %v7210
    %7212 = vmatpush1.msra.mxu0 %v7211
    %7213 = vmatprep.subr.mxu0 0.0
    %v7214 = vand.u32 %v2255, 4294901760
    %v7215 = vsub.f32 %v2255, %v7214
    %7216 = vmatpush1.msra.mxu0 %v7215
    %7217 = vmatprep.subr.mxu0 0.0
    %7218 = vmatpush2.msra.mxu0 0.0
    %7219 = vmatprep.subr.mxu0 0.0
    %7220 = vmatpush2.msra.mxu0 0.0
    %7221 = vmatprep.subr.mxu0 0.0
    %7222 = vmatpush2.msra.mxu0 0.0
    %7223 = vmatprep.subr.mxu0 0.0
    %7224 = vmatpush2.msra.mxu0 0.0
    %7225 = vmatprep.subr.mxu0 0.0
    %7226 = vmatpush2.msra.mxu0 0.0
    %7227 = vmatprep.subr.mxu0 0.0
    %7228 = vmatpush2.msra.mxu0 0.0
    %7229 = vmatprep.subr.mxu0 0.0
    %7230 = vmatpush2.msra.mxu0 0.0
    %7231 = vmatprep.subr.mxu0 0.0
    %7232 = vmatpush2.msra.mxu0 0.0
    %7233 = vmatprep.subr.mxu0 0.0
    %7234 = vmatpush2.msra.mxu0 0.0
    %7235 = vmatprep.subr.mxu0 0.0
    %7236 = vmatpush2.msra.mxu0 0.0
    %7237 = vmatprep.subr.mxu0 0.0
    %7238 = vmatpush2.msra.mxu0 0.0
    %7239 = vmatprep.subr.mxu0 0.0
    %7240 = vmatpush2.msra.mxu0 0.0
    %7241 = vmatprep.subr.mxu0 0.0
    %7242 = vmatpush2.msra.mxu0 0.0
    %7243 = vmatprep.subr.mxu0 0.0
    %7244 = vmatpush2.msra.mxu0 0.0
    %7245 = vmatprep.subr.mxu0 0.0
    %7246 = vmatpush2.msra.mxu0 0.0
    %7247 = vmatprep.subr.mxu0 0.0
    %7248 = vmatpush2.msra.mxu0 0.0
    %7249 = vmatprep.mubr.f32.mxu0 0.0
    %v7250 = vand.u32 %v6973, 4294901760
    %v7251 = vsub.f32 %v6973, %v7250
    %7252 = vmatmul.mubr.f32.gmra.mxu0 %v7251
    %v7253 = vpop.f32.mrf.mxu0
    %v7254 = vadd.f32 %v7166, %v7253
    %v7255 = vpop.f32.mrf.mxu0
    %7256 = vdwg.mxu0
    %7257 = vmatprep.subr.mxu0 0.0
    %7258 = vmatpush1.msra.mxu0 0.0
    %7259 = vmatprep.subr.mxu0 0.0
    %7260 = vmatpush1.msra.mxu0 0.0
    %7261 = vmatprep.subr.mxu0 0.0
    %7262 = vmatpush1.msra.mxu0 0.0
    %7263 = vmatprep.subr.mxu0 0.0
    %7264 = vmatpush1.msra.mxu0 0.0
    %7265 = vmatprep.subr.mxu0 0.0
    %7266 = vmatpush1.msra.mxu0 0.0
    %7267 = vmatprep.subr.mxu0 0.0
    %7268 = vmatpush1.msra.mxu0 0.0
    %7269 = vmatprep.subr.mxu0 0.0
    %7270 = vmatpush1.msra.mxu0 0.0
    %7271 = vmatprep.subr.mxu0 0.0
    %7272 = vmatpush1.msra.mxu0 0.0
    %7273 = vmatprep.subr.mxu0 0.0
    %v7274 = vand.u32 %v2262, 4294901760
    %7275 = vmatpush1.msra.mxu0 %v7274
    %7276 = vmatprep.subr.mxu0 0.0
    %v7277 = vand.u32 %v2261, 4294901760
    %7278 = vmatpush1.msra.mxu0 %v7277
    %7279 = vmatprep.subr.mxu0 0.0
    %v7280 = vand.u32 %v2260, 4294901760
    %7281 = vmatpush1.msra.mxu0 %v7280
    %7282 = vmatprep.subr.mxu0 0.0
    %v7283 = vand.u32 %v2259, 4294901760
    %7284 = vmatpush1.msra.mxu0 %v7283
    %7285 = vmatprep.subr.mxu0 0.0
    %v7286 = vand.u32 %v2258, 4294901760
    %7287 = vmatpush1.msra.mxu0 %v7286
    %7288 = vmatprep.subr.mxu0 0.0
    %v7289 = vand.u32 %v2257, 4294901760
    %7290 = vmatpush1.msra.mxu0 %v7289
    %7291 = vmatprep.subr.mxu0 0.0
    %v7292 = vand.u32 %v2256, 4294901760
    %7293 = vmatpush1.msra.mxu0 %v7292
    %7294 = vmatprep.subr.mxu0 0.0
    %v7295 = vand.u32 %v2255, 4294901760
    %7296 = vmatpush1.msra.mxu0 %v7295
    %7297 = vmatprep.subr.mxu0 0.0
    %7298 = vmatpush2.msra.mxu0 0.0
    %7299 = vmatprep.subr.mxu0 0.0
    %7300 = vmatpush2.msra.mxu0 0.0
    %7301 = vmatprep.subr.mxu0 0.0
    %7302 = vmatpush2.msra.mxu0 0.0
    %7303 = vmatprep.subr.mxu0 0.0
    %7304 = vmatpush2.msra.mxu0 0.0
    %7305 = vmatprep.subr.mxu0 0.0
    %7306 = vmatpush2.msra.mxu0 0.0
    %7307 = vmatprep.subr.mxu0 0.0
    %7308 = vmatpush2.msra.mxu0 0.0
    %7309 = vmatprep.subr.mxu0 0.0
    %7310 = vmatpush2.msra.mxu0 0.0
    %7311 = vmatprep.subr.mxu0 0.0
    %7312 = vmatpush2.msra.mxu0 0.0
    %7313 = vmatprep.subr.mxu0 0.0
    %7314 = vmatpush2.msra.mxu0 0.0
    %7315 = vmatprep.subr.mxu0 0.0
    %7316 = vmatpush2.msra.mxu0 0.0
    %7317 = vmatprep.subr.mxu0 0.0
    %7318 = vmatpush2.msra.mxu0 0.0
    %7319 = vmatprep.subr.mxu0 0.0
    %7320 = vmatpush2.msra.mxu0 0.0
    %7321 = vmatprep.subr.mxu0 0.0
    %7322 = vmatpush2.msra.mxu0 0.0
    %7323 = vmatprep.subr.mxu0 0.0
    %7324 = vmatpush2.msra.mxu0 0.0
    %7325 = vmatprep.subr.mxu0 0.0
    %7326 = vmatpush2.msra.mxu0 0.0
    %7327 = vmatprep.subr.mxu0 0.0
    %7328 = vmatpush2.msra.mxu0 0.0
    %7329 = vmatprep.mubr.f32.mxu0 0.0
    %v7330 = vand.u32 %v6973, 4294901760
    %v7331 = vsub.f32 %v6973, %v7330
    %v7332 = vand.u32 %v7331, 4294901760
    %7333 = vmatmul.mubr.f32.gmra.mxu0 %v7332
    %v7334 = vpop.f32.mrf.mxu0
    %v7335 = vadd.f32 %v7254, %v7334
    %v7336 = vpop.f32.mrf.mxu0
    %7337 = vdwg.mxu0
    %7338 = vmatprep.subr.mxu0 0.0
    %7339 = vmatpush1.msra.mxu0 0.0
    %7340 = vmatprep.subr.mxu0 0.0
    %7341 = vmatpush1.msra.mxu0 0.0
    %7342 = vmatprep.subr.mxu0 0.0
    %7343 = vmatpush1.msra.mxu0 0.0
    %7344 = vmatprep.subr.mxu0 0.0
    %7345 = vmatpush1.msra.mxu0 0.0
    %7346 = vmatprep.subr.mxu0 0.0
    %7347 = vmatpush1.msra.mxu0 0.0
    %7348 = vmatprep.subr.mxu0 0.0
    %7349 = vmatpush1.msra.mxu0 0.0
    %7350 = vmatprep.subr.mxu0 0.0
    %7351 = vmatpush1.msra.mxu0 0.0
    %7352 = vmatprep.subr.mxu0 0.0
    %7353 = vmatpush1.msra.mxu0 0.0
    %7354 = vmatprep.subr.mxu0 0.0
    %v7355 = vand.u32 %v2262, 4294901760
    %v7356 = vsub.f32 %v2262, %v7355
    %v7357 = vand.u32 %v7356, 4294901760
    %7358 = vmatpush1.msra.mxu0 %v7357
    %7359 = vmatprep.subr.mxu0 0.0
    %v7360 = vand.u32 %v2261, 4294901760
    %v7361 = vsub.f32 %v2261, %v7360
    %v7362 = vand.u32 %v7361, 4294901760
    %7363 = vmatpush1.msra.mxu0 %v7362
    %7364 = vmatprep.subr.mxu0 0.0
    %v7365 = vand.u32 %v2260, 4294901760
    %v7366 = vsub.f32 %v2260, %v7365
    %v7367 = vand.u32 %v7366, 4294901760
    %7368 = vmatpush1.msra.mxu0 %v7367
    %7369 = vmatprep.subr.mxu0 0.0
    %v7370 = vand.u32 %v2259, 4294901760
    %v7371 = vsub.f32 %v2259, %v7370
    %v7372 = vand.u32 %v7371, 4294901760
    %7373 = vmatpush1.msra.mxu0 %v7372
    %7374 = vmatprep.subr.mxu0 0.0
    %v7375 = vand.u32 %v2258, 4294901760
    %v7376 = vsub.f32 %v2258, %v7375
    %v7377 = vand.u32 %v7376, 4294901760
    %7378 = vmatpush1.msra.mxu0 %v7377
    %7379 = vmatprep.subr.mxu0 0.0
    %v7380 = vand.u32 %v2257, 4294901760
    %v7381 = vsub.f32 %v2257, %v7380
    %v7382 = vand.u32 %v7381, 4294901760
    %7383 = vmatpush1.msra.mxu0 %v7382
    %7384 = vmatprep.subr.mxu0 0.0
    %v7385 = vand.u32 %v2256, 4294901760
    %v7386 = vsub.f32 %v2256, %v7385
    %v7387 = vand.u32 %v7386, 4294901760
    %7388 = vmatpush1.msra.mxu0 %v7387
    %7389 = vmatprep.subr.mxu0 0.0
    %v7390 = vand.u32 %v2255, 4294901760
    %v7391 = vsub.f32 %v2255, %v7390
    %v7392 = vand.u32 %v7391, 4294901760
    %7393 = vmatpush1.msra.mxu0 %v7392
    %7394 = vmatprep.subr.mxu0 0.0
    %7395 = vmatpush2.msra.mxu0 0.0
    %7396 = vmatprep.subr.mxu0 0.0
    %7397 = vmatpush2.msra.mxu0 0.0
    %7398 = vmatprep.subr.mxu0 0.0
    %7399 = vmatpush2.msra.mxu0 0.0
    %7400 = vmatprep.subr.mxu0 0.0
    %7401 = vmatpush2.msra.mxu0 0.0
    %7402 = vmatprep.subr.mxu0 0.0
    %7403 = vmatpush2.msra.mxu0 0.0
    %7404 = vmatprep.subr.mxu0 0.0
    %7405 = vmatpush2.msra.mxu0 0.0
    %7406 = vmatprep.subr.mxu0 0.0
    %7407 = vmatpush2.msra.mxu0 0.0
    %7408 = vmatprep.subr.mxu0 0.0
    %7409 = vmatpush2.msra.mxu0 0.0
    %7410 = vmatprep.subr.mxu0 0.0
    %7411 = vmatpush2.msra.mxu0 0.0
    %7412 = vmatprep.subr.mxu0 0.0
    %7413 = vmatpush2.msra.mxu0 0.0
    %7414 = vmatprep.subr.mxu0 0.0
    %7415 = vmatpush2.msra.mxu0 0.0
    %7416 = vmatprep.subr.mxu0 0.0
    %7417 = vmatpush2.msra.mxu0 0.0
    %7418 = vmatprep.subr.mxu0 0.0
    %7419 = vmatpush2.msra.mxu0 0.0
    %7420 = vmatprep.subr.mxu0 0.0
    %7421 = vmatpush2.msra.mxu0 0.0
    %7422 = vmatprep.subr.mxu0 0.0
    %7423 = vmatpush2.msra.mxu0 0.0
    %7424 = vmatprep.subr.mxu0 0.0
    %7425 = vmatpush2.msra.mxu0 0.0
    %7426 = vmatprep.mubr.f32.mxu0 0.0
    %v7427 = vand.u32 %v6973, 4294901760
    %7428 = vmatmul.mubr.f32.gmra.mxu0 %v7427
    %v7429 = vpop.f32.mrf.mxu0
    %v7430 = vadd.f32 %v7335, %v7429
    %v7431 = vpop.f32.mrf.mxu0
    %7432 = vdwg.mxu0
    %7433 = vmatprep.subr.mxu0 0.0
    %7434 = vmatpush1.msra.mxu0 0.0
    %7435 = vmatprep.subr.mxu0 0.0
    %7436 = vmatpush1.msra.mxu0 0.0
    %7437 = vmatprep.subr.mxu0 0.0
    %7438 = vmatpush1.msra.mxu0 0.0
    %7439 = vmatprep.subr.mxu0 0.0
    %7440 = vmatpush1.msra.mxu0 0.0
    %7441 = vmatprep.subr.mxu0 0.0
    %7442 = vmatpush1.msra.mxu0 0.0
    %7443 = vmatprep.subr.mxu0 0.0
    %7444 = vmatpush1.msra.mxu0 0.0
    %7445 = vmatprep.subr.mxu0 0.0
    %7446 = vmatpush1.msra.mxu0 0.0
    %7447 = vmatprep.subr.mxu0 0.0
    %7448 = vmatpush1.msra.mxu0 0.0
    %7449 = vmatprep.subr.mxu0 0.0
    %v7450 = vand.u32 %v2262, 4294901760
    %7451 = vmatpush1.msra.mxu0 %v7450
    %7452 = vmatprep.subr.mxu0 0.0
    %v7453 = vand.u32 %v2261, 4294901760
    %7454 = vmatpush1.msra.mxu0 %v7453
    %7455 = vmatprep.subr.mxu0 0.0
    %v7456 = vand.u32 %v2260, 4294901760
    %7457 = vmatpush1.msra.mxu0 %v7456
    %7458 = vmatprep.subr.mxu0 0.0
    %v7459 = vand.u32 %v2259, 4294901760
    %7460 = vmatpush1.msra.mxu0 %v7459
    %7461 = vmatprep.subr.mxu0 0.0
    %v7462 = vand.u32 %v2258, 4294901760
    %7463 = vmatpush1.msra.mxu0 %v7462
    %7464 = vmatprep.subr.mxu0 0.0
    %v7465 = vand.u32 %v2257, 4294901760
    %7466 = vmatpush1.msra.mxu0 %v7465
    %7467 = vmatprep.subr.mxu0 0.0
    %v7468 = vand.u32 %v2256, 4294901760
    %7469 = vmatpush1.msra.mxu0 %v7468
    %7470 = vmatprep.subr.mxu0 0.0
    %v7471 = vand.u32 %v2255, 4294901760
    %7472 = vmatpush1.msra.mxu0 %v7471
    %7473 = vmatprep.subr.mxu0 0.0
    %7474 = vmatpush2.msra.mxu0 0.0
    %7475 = vmatprep.subr.mxu0 0.0
    %7476 = vmatpush2.msra.mxu0 0.0
    %7477 = vmatprep.subr.mxu0 0.0
    %7478 = vmatpush2.msra.mxu0 0.0
    %7479 = vmatprep.subr.mxu0 0.0
    %7480 = vmatpush2.msra.mxu0 0.0
    %7481 = vmatprep.subr.mxu0 0.0
    %7482 = vmatpush2.msra.mxu0 0.0
    %7483 = vmatprep.subr.mxu0 0.0
    %7484 = vmatpush2.msra.mxu0 0.0
    %7485 = vmatprep.subr.mxu0 0.0
    %7486 = vmatpush2.msra.mxu0 0.0
    %7487 = vmatprep.subr.mxu0 0.0
    %7488 = vmatpush2.msra.mxu0 0.0
    %7489 = vmatprep.subr.mxu0 0.0
    %7490 = vmatpush2.msra.mxu0 0.0
    %7491 = vmatprep.subr.mxu0 0.0
    %7492 = vmatpush2.msra.mxu0 0.0
    %7493 = vmatprep.subr.mxu0 0.0
    %7494 = vmatpush2.msra.mxu0 0.0
    %7495 = vmatprep.subr.mxu0 0.0
    %7496 = vmatpush2.msra.mxu0 0.0
    %7497 = vmatprep.subr.mxu0 0.0
    %7498 = vmatpush2.msra.mxu0 0.0
    %7499 = vmatprep.subr.mxu0 0.0
    %7500 = vmatpush2.msra.mxu0 0.0
    %7501 = vmatprep.subr.mxu0 0.0
    %7502 = vmatpush2.msra.mxu0 0.0
    %7503 = vmatprep.subr.mxu0 0.0
    %7504 = vmatpush2.msra.mxu0 0.0
    %7505 = vmatprep.mubr.f32.mxu0 0.0
    %v7506 = vand.u32 %v6973, 4294901760
    %7507 = vmatmul.mubr.f32.gmra.mxu0 %v7506
    %v7508 = vpop.f32.mrf.mxu0
    %v7509 = vadd.f32 %v7430, %v7508
    %v7510 = vpop.f32.mrf.mxu0
    %7511 = vdwg.mxu0
    %v7512 = vmul.f32 %v6952, 0.001953125
    %v7513 = vmul.f32 %v7509, 0.001953125
    %v7514 = vmul.f32 %v7512, %v7512
    %v7515 = vsub.f32 %v7513, %v7514
    %v7516 = vld [vmem:[%s7] sm:$0x1]
    %v7517 = vadd.f32 %v7515, 1e-05
    %v7518 = vrsqrt.pop %v7517
    %v7519 = vmul.f32 %v7516, %v7518
    %v7520 = vld [vmem:[%s8] sm:$0x1]
    %v7521 = vmul.f32 %v7512, %v7519
    %v7522 = vsub.f32 %v7520, %v7521
    %v7524 = vsel %vm3372, %v7519, 0
    %7526 = vmatprep.subr.mxu0 0.0
    %7527 = vmatpush1.msra.mxu0 0.0
    %7528 = vmatprep.subr.mxu0 0.0
    %7529 = vmatpush1.msra.mxu0 0.0
    %7530 = vmatprep.subr.mxu0 0.0
    %7531 = vmatpush1.msra.mxu0 0.0
    %7532 = vmatprep.subr.mxu0 0.0
    %7533 = vmatpush1.msra.mxu0 0.0
    %7534 = vmatprep.subr.mxu0 0.0
    %7535 = vmatpush1.msra.mxu0 0.0
    %7536 = vmatprep.subr.mxu0 0.0
    %7537 = vmatpush1.msra.mxu0 0.0
    %7538 = vmatprep.subr.mxu0 0.0
    %7539 = vmatpush1.msra.mxu0 0.0
    %7540 = vmatprep.subr.mxu0 0.0
    %7541 = vmatpush1.msra.mxu0 0.0
    %7542 = vmatprep.subr.mxu0 0.0
    %7543 = vmatpush1.msra.mxu0 0.0
    %7544 = vmatprep.subr.mxu0 0.0
    %7545 = vmatpush1.msra.mxu0 0.0
    %7546 = vmatprep.subr.mxu0 0.0
    %7547 = vmatpush1.msra.mxu0 0.0
    %7548 = vmatprep.subr.mxu0 0.0
    %7549 = vmatpush1.msra.mxu0 0.0
    %7550 = vmatprep.subr.mxu0 0.0
    %7551 = vmatpush1.msra.mxu0 0.0
    %7552 = vmatprep.subr.mxu0 0.0
    %7553 = vmatpush1.msra.mxu0 0.0
    %7554 = vmatprep.subr.mxu0 0.0
    %7555 = vmatpush1.msra.mxu0 0.0
    %7556 = vmatprep.subr.mxu0 0.0
    %v7557 = vand.u32 %v3378, 4294901760
    %7558 = vmatpush1.msra.mxu0 %v7557
    %7559 = vmatprep.subr.mxu0 0.0
    %7560 = vmatpush2.msra.mxu0 0.0
    %7561 = vmatprep.subr.mxu0 0.0
    %7562 = vmatpush2.msra.mxu0 0.0
    %7563 = vmatprep.subr.mxu0 0.0
    %7564 = vmatpush2.msra.mxu0 0.0
    %7565 = vmatprep.subr.mxu0 0.0
    %7566 = vmatpush2.msra.mxu0 0.0
    %7567 = vmatprep.subr.mxu0 0.0
    %7568 = vmatpush2.msra.mxu0 0.0
    %7569 = vmatprep.subr.mxu0 0.0
    %7570 = vmatpush2.msra.mxu0 0.0
    %7571 = vmatprep.subr.mxu0 0.0
    %7572 = vmatpush2.msra.mxu0 0.0
    %7573 = vmatprep.subr.mxu0 0.0
    %7574 = vmatpush2.msra.mxu0 0.0
    %7575 = vmatprep.subr.mxu0 0.0
    %7576 = vmatpush2.msra.mxu0 0.0
    %7577 = vmatprep.subr.mxu0 0.0
    %7578 = vmatpush2.msra.mxu0 0.0
    %7579 = vmatprep.subr.mxu0 0.0
    %7580 = vmatpush2.msra.mxu0 0.0
    %7581 = vmatprep.subr.mxu0 0.0
    %7582 = vmatpush2.msra.mxu0 0.0
    %7583 = vmatprep.subr.mxu0 0.0
    %7584 = vmatpush2.msra.mxu0 0.0
    %7585 = vmatprep.subr.mxu0 0.0
    %7586 = vmatpush2.msra.mxu0 0.0
    %7587 = vmatprep.subr.mxu0 0.0
    %7588 = vmatpush2.msra.mxu0 0.0
    %7589 = vmatprep.subr.mxu0 0.0
    %7590 = vmatpush2.msra.mxu0 0.0
    %7591 = vmatprep.mubr.f32.mxu0 0.0
    %v7592 = vand.u32 %v7524, 4294901760
    %v7593 = vsub.f32 %v7524, %v7592
    %v7594 = vand.u32 %v7593, 4294901760
    %v7595 = vsub.f32 %v7593, %v7594
    %v7596 = vand.u32 %v7595, 4294901760
    %7597 = vmatmul.mubr.f32.gmra.mxu0 %v7596
    %v7598 = vpop.f32.mrf.mxu0
    %v7599 = vadd.f32 0.0, %v7598
    %v7600 = vpop.f32.mrf.mxu0
    %7601 = vdwg.mxu0
    %7602 = vmatprep.subr.mxu0 0.0
    %7603 = vmatpush1.msra.mxu0 0.0
    %7604 = vmatprep.subr.mxu0 0.0
    %7605 = vmatpush1.msra.mxu0 0.0
    %7606 = vmatprep.subr.mxu0 0.0
    %7607 = vmatpush1.msra.mxu0 0.0
    %7608 = vmatprep.subr.mxu0 0.0
    %7609 = vmatpush1.msra.mxu0 0.0
    %7610 = vmatprep.subr.mxu0 0.0
    %7611 = vmatpush1.msra.mxu0 0.0
    %7612 = vmatprep.subr.mxu0 0.0
    %7613 = vmatpush1.msra.mxu0 0.0
    %7614 = vmatprep.subr.mxu0 0.0
    %7615 = vmatpush1.msra.mxu0 0.0
    %7616 = vmatprep.subr.mxu0 0.0
    %7617 = vmatpush1.msra.mxu0 0.0
    %7618 = vmatprep.subr.mxu0 0.0
    %7619 = vmatpush1.msra.mxu0 0.0
    %7620 = vmatprep.subr.mxu0 0.0
    %7621 = vmatpush1.msra.mxu0 0.0
    %7622 = vmatprep.subr.mxu0 0.0
    %7623 = vmatpush1.msra.mxu0 0.0
    %7624 = vmatprep.subr.mxu0 0.0
    %7625 = vmatpush1.msra.mxu0 0.0
    %7626 = vmatprep.subr.mxu0 0.0
    %7627 = vmatpush1.msra.mxu0 0.0
    %7628 = vmatprep.subr.mxu0 0.0
    %7629 = vmatpush1.msra.mxu0 0.0
    %7630 = vmatprep.subr.mxu0 0.0
    %7631 = vmatpush1.msra.mxu0 0.0
    %7632 = vmatprep.subr.mxu0 0.0
    %v7633 = vand.u32 %v3378, 4294901760
    %v7634 = vsub.f32 %v3378, %v7633
    %v7635 = vand.u32 %v7634, 4294901760
    %v7636 = vsub.f32 %v7634, %v7635
    %v7637 = vand.u32 %v7636, 4294901760
    %7638 = vmatpush1.msra.mxu0 %v7637
    %7639 = vmatprep.subr.mxu0 0.0
    %7640 = vmatpush2.msra.mxu0 0.0
    %7641 = vmatprep.subr.mxu0 0.0
    %7642 = vmatpush2.msra.mxu0 0.0
    %7643 = vmatprep.subr.mxu0 0.0
    %7644 = vmatpush2.msra.mxu0 0.0
    %7645 = vmatprep.subr.mxu0 0.0
    %7646 = vmatpush2.msra.mxu0 0.0
    %7647 = vmatprep.subr.mxu0 0.0
    %7648 = vmatpush2.msra.mxu0 0.0
    %7649 = vmatprep.subr.mxu0 0.0
    %7650 = vmatpush2.msra.mxu0 0.0
    %7651 = vmatprep.subr.mxu0 0.0
    %7652 = vmatpush2.msra.mxu0 0.0
    %7653 = vmatprep.subr.mxu0 0.0
    %7654 = vmatpush2.msra.mxu0 0.0
    %7655 = vmatprep.subr.mxu0 0.0
    %7656 = vmatpush2.msra.mxu0 0.0
    %7657 = vmatprep.subr.mxu0 0.0
    %7658 = vmatpush2.msra.mxu0 0.0
    %7659 = vmatprep.subr.mxu0 0.0
    %7660 = vmatpush2.msra.mxu0 0.0
    %7661 = vmatprep.subr.mxu0 0.0
    %7662 = vmatpush2.msra.mxu0 0.0
    %7663 = vmatprep.subr.mxu0 0.0
    %7664 = vmatpush2.msra.mxu0 0.0
    %7665 = vmatprep.subr.mxu0 0.0
    %7666 = vmatpush2.msra.mxu0 0.0
    %7667 = vmatprep.subr.mxu0 0.0
    %7668 = vmatpush2.msra.mxu0 0.0
    %7669 = vmatprep.subr.mxu0 0.0
    %7670 = vmatpush2.msra.mxu0 0.0
    %7671 = vmatprep.mubr.f32.mxu0 0.0
    %v7672 = vand.u32 %v7524, 4294901760
    %7673 = vmatmul.mubr.f32.gmra.mxu0 %v7672
    %v7674 = vpop.f32.mrf.mxu0
    %v7675 = vadd.f32 %v7599, %v7674
    %v7676 = vpop.f32.mrf.mxu0
    %7677 = vdwg.mxu0
    %7678 = vmatprep.subr.mxu0 0.0
    %7679 = vmatpush1.msra.mxu0 0.0
    %7680 = vmatprep.subr.mxu0 0.0
    %7681 = vmatpush1.msra.mxu0 0.0
    %7682 = vmatprep.subr.mxu0 0.0
    %7683 = vmatpush1.msra.mxu0 0.0
    %7684 = vmatprep.subr.mxu0 0.0
    %7685 = vmatpush1.msra.mxu0 0.0
    %7686 = vmatprep.subr.mxu0 0.0
    %7687 = vmatpush1.msra.mxu0 0.0
    %7688 = vmatprep.subr.mxu0 0.0
    %7689 = vmatpush1.msra.mxu0 0.0
    %7690 = vmatprep.subr.mxu0 0.0
    %7691 = vmatpush1.msra.mxu0 0.0
    %7692 = vmatprep.subr.mxu0 0.0
    %7693 = vmatpush1.msra.mxu0 0.0
    %7694 = vmatprep.subr.mxu0 0.0
    %7695 = vmatpush1.msra.mxu0 0.0
    %7696 = vmatprep.subr.mxu0 0.0
    %7697 = vmatpush1.msra.mxu0 0.0
    %7698 = vmatprep.subr.mxu0 0.0
    %7699 = vmatpush1.msra.mxu0 0.0
    %7700 = vmatprep.subr.mxu0 0.0
    %7701 = vmatpush1.msra.mxu0 0.0
    %7702 = vmatprep.subr.mxu0 0.0
    %7703 = vmatpush1.msra.mxu0 0.0
    %7704 = vmatprep.subr.mxu0 0.0
    %7705 = vmatpush1.msra.mxu0 0.0
    %7706 = vmatprep.subr.mxu0 0.0
    %7707 = vmatpush1.msra.mxu0 0.0
    %7708 = vmatprep.subr.mxu0 0.0
    %v7709 = vand.u32 %v3378, 4294901760
    %v7710 = vsub.f32 %v3378, %v7709
    %7711 = vmatpush1.msra.mxu0 %v7710
    %7712 = vmatprep.subr.mxu0 0.0
    %7713 = vmatpush2.msra.mxu0 0.0
    %7714 = vmatprep.subr.mxu0 0.0
    %7715 = vmatpush2.msra.mxu0 0.0
    %7716 = vmatprep.subr.mxu0 0.0
    %7717 = vmatpush2.msra.mxu0 0.0
    %7718 = vmatprep.subr.mxu0 0.0
    %7719 = vmatpush2.msra.mxu0 0.0
    %7720 = vmatprep.subr.mxu0 0.0
    %7721 = vmatpush2.msra.mxu0 0.0
    %7722 = vmatprep.subr.mxu0 0.0
    %7723 = vmatpush2.msra.mxu0 0.0
    %7724 = vmatprep.subr.mxu0 0.0
    %7725 = vmatpush2.msra.mxu0 0.0
    %7726 = vmatprep.subr.mxu0 0.0
    %7727 = vmatpush2.msra.mxu0 0.0
    %7728 = vmatprep.subr.mxu0 0.0
    %7729 = vmatpush2.msra.mxu0 0.0
    %7730 = vmatprep.subr.mxu0 0.0
    %7731 = vmatpush2.msra.mxu0 0.0
    %7732 = vmatprep.subr.mxu0 0.0
    %7733 = vmatpush2.msra.mxu0 0.0
    %7734 = vmatprep.subr.mxu0 0.0
    %7735 = vmatpush2.msra.mxu0 0.0
    %7736 = vmatprep.subr.mxu0 0.0
    %7737 = vmatpush2.msra.mxu0 0.0
    %7738 = vmatprep.subr.mxu0 0.0
    %7739 = vmatpush2.msra.mxu0 0.0
    %7740 = vmatprep.subr.mxu0 0.0
    %7741 = vmatpush2.msra.mxu0 0.0
    %7742 = vmatprep.subr.mxu0 0.0
    %7743 = vmatpush2.msra.mxu0 0.0
    %7744 = vmatprep.mubr.f32.mxu0 0.0
    %v7745 = vand.u32 %v7524, 4294901760
    %v7746 = vsub.f32 %v7524, %v7745
    %7747 = vmatmul.mubr.f32.gmra.mxu0 %v7746
    %v7748 = vpop.f32.mrf.mxu0
    %v7749 = vadd.f32 %v7675, %v7748
    %v7750 = vpop.f32.mrf.mxu0
    %7751 = vdwg.mxu0
    %7752 = vmatprep.subr.mxu0 0.0
    %7753 = vmatpush1.msra.mxu0 0.0
    %7754 = vmatprep.subr.mxu0 0.0
    %7755 = vmatpush1.msra.mxu0 0.0
    %7756 = vmatprep.subr.mxu0 0.0
    %7757 = vmatpush1.msra.mxu0 0.0
    %7758 = vmatprep.subr.mxu0 0.0
    %7759 = vmatpush1.msra.mxu0 0.0
    %7760 = vmatprep.subr.mxu0 0.0
    %7761 = vmatpush1.msra.mxu0 0.0
    %7762 = vmatprep.subr.mxu0 0.0
    %7763 = vmatpush1.msra.mxu0 0.0
    %7764 = vmatprep.subr.mxu0 0.0
    %7765 = vmatpush1.msra.mxu0 0.0
    %7766 = vmatprep.subr.mxu0 0.0
    %7767 = vmatpush1.msra.mxu0 0.0
    %7768 = vmatprep.subr.mxu0 0.0
    %7769 = vmatpush1.msra.mxu0 0.0
    %7770 = vmatprep.subr.mxu0 0.0
    %7771 = vmatpush1.msra.mxu0 0.0
    %7772 = vmatprep.subr.mxu0 0.0
    %7773 = vmatpush1.msra.mxu0 0.0
    %7774 = vmatprep.subr.mxu0 0.0
    %7775 = vmatpush1.msra.mxu0 0.0
    %7776 = vmatprep.subr.mxu0 0.0
    %7777 = vmatpush1.msra.mxu0 0.0
    %7778 = vmatprep.subr.mxu0 0.0
    %7779 = vmatpush1.msra.mxu0 0.0
    %7780 = vmatprep.subr.mxu0 0.0
    %7781 = vmatpush1.msra.mxu0 0.0
    %7782 = vmatprep.subr.mxu0 0.0
    %v7783 = vand.u32 %v3378, 4294901760
    %7784 = vmatpush1.msra.mxu0 %v7783
    %7785 = vmatprep.subr.mxu0 0.0
    %7786 = vmatpush2.msra.mxu0 0.0
    %7787 = vmatprep.subr.mxu0 0.0
    %7788 = vmatpush2.msra.mxu0 0.0
    %7789 = vmatprep.subr.mxu0 0.0
    %7790 = vmatpush2.msra.mxu0 0.0
    %7791 = vmatprep.subr.mxu0 0.0
    %7792 = vmatpush2.msra.mxu0 0.0
    %7793 = vmatprep.subr.mxu0 0.0
    %7794 = vmatpush2.msra.mxu0 0.0
    %7795 = vmatprep.subr.mxu0 0.0
    %7796 = vmatpush2.msra.mxu0 0.0
    %7797 = vmatprep.subr.mxu0 0.0
    %7798 = vmatpush2.msra.mxu0 0.0
    %7799 = vmatprep.subr.mxu0 0.0
    %7800 = vmatpush2.msra.mxu0 0.0
    %7801 = vmatprep.subr.mxu0 0.0
    %7802 = vmatpush2.msra.mxu0 0.0
    %7803 = vmatprep.subr.mxu0 0.0
    %7804 = vmatpush2.msra.mxu0 0.0
    %7805 = vmatprep.subr.mxu0 0.0
    %7806 = vmatpush2.msra.mxu0 0.0
    %7807 = vmatprep.subr.mxu0 0.0
    %7808 = vmatpush2.msra.mxu0 0.0
    %7809 = vmatprep.subr.mxu0 0.0
    %7810 = vmatpush2.msra.mxu0 0.0
    %7811 = vmatprep.subr.mxu0 0.0
    %7812 = vmatpush2.msra.mxu0 0.0
    %7813 = vmatprep.subr.mxu0 0.0
    %7814 = vmatpush2.msra.mxu0 0.0
    %7815 = vmatprep.subr.mxu0 0.0
    %7816 = vmatpush2.msra.mxu0 0.0
    %7817 = vmatprep.mubr.f32.mxu0 0.0
    %v7818 = vand.u32 %v7524, 4294901760
    %v7819 = vsub.f32 %v7524, %v7818
    %v7820 = vand.u32 %v7819, 4294901760
    %7821 = vmatmul.mubr.f32.gmra.mxu0 %v7820
    %v7822 = vpop.f32.mrf.mxu0
    %v7823 = vadd.f32 %v7749, %v7822
    %v7824 = vpop.f32.mrf.mxu0
    %7825 = vdwg.mxu0
    %7826 = vmatprep.subr.mxu0 0.0
    %7827 = vmatpush1.msra.mxu0 0.0
    %7828 = vmatprep.subr.mxu0 0.0
    %7829 = vmatpush1.msra.mxu0 0.0
    %7830 = vmatprep.subr.mxu0 0.0
    %7831 = vmatpush1.msra.mxu0 0.0
    %7832 = vmatprep.subr.mxu0 0.0
    %7833 = vmatpush1.msra.mxu0 0.0
    %7834 = vmatprep.subr.mxu0 0.0
    %7835 = vmatpush1.msra.mxu0 0.0
    %7836 = vmatprep.subr.mxu0 0.0
    %7837 = vmatpush1.msra.mxu0 0.0
    %7838 = vmatprep.subr.mxu0 0.0
    %7839 = vmatpush1.msra.mxu0 0.0
    %7840 = vmatprep.subr.mxu0 0.0
    %7841 = vmatpush1.msra.mxu0 0.0
    %7842 = vmatprep.subr.mxu0 0.0
    %7843 = vmatpush1.msra.mxu0 0.0
    %7844 = vmatprep.subr.mxu0 0.0
    %7845 = vmatpush1.msra.mxu0 0.0
    %7846 = vmatprep.subr.mxu0 0.0
    %7847 = vmatpush1.msra.mxu0 0.0
    %7848 = vmatprep.subr.mxu0 0.0
    %7849 = vmatpush1.msra.mxu0 0.0
    %7850 = vmatprep.subr.mxu0 0.0
    %7851 = vmatpush1.msra.mxu0 0.0
    %7852 = vmatprep.subr.mxu0 0.0
    %7853 = vmatpush1.msra.mxu0 0.0
    %7854 = vmatprep.subr.mxu0 0.0
    %7855 = vmatpush1.msra.mxu0 0.0
    %7856 = vmatprep.subr.mxu0 0.0
    %v7857 = vand.u32 %v3378, 4294901760
    %v7858 = vsub.f32 %v3378, %v7857
    %v7859 = vand.u32 %v7858, 4294901760
    %7860 = vmatpush1.msra.mxu0 %v7859
    %7861 = vmatprep.subr.mxu0 0.0
    %7862 = vmatpush2.msra.mxu0 0.0
    %7863 = vmatprep.subr.mxu0 0.0
    %7864 = vmatpush2.msra.mxu0 0.0
    %7865 = vmatprep.subr.mxu0 0.0
    %7866 = vmatpush2.msra.mxu0 0.0
    %7867 = vmatprep.subr.mxu0 0.0
    %7868 = vmatpush2.msra.mxu0 0.0
    %7869 = vmatprep.subr.mxu0 0.0
    %7870 = vmatpush2.msra.mxu0 0.0
    %7871 = vmatprep.subr.mxu0 0.0
    %7872 = vmatpush2.msra.mxu0 0.0
    %7873 = vmatprep.subr.mxu0 0.0
    %7874 = vmatpush2.msra.mxu0 0.0
    %7875 = vmatprep.subr.mxu0 0.0
    %7876 = vmatpush2.msra.mxu0 0.0
    %7877 = vmatprep.subr.mxu0 0.0
    %7878 = vmatpush2.msra.mxu0 0.0
    %7879 = vmatprep.subr.mxu0 0.0
    %7880 = vmatpush2.msra.mxu0 0.0
    %7881 = vmatprep.subr.mxu0 0.0
    %7882 = vmatpush2.msra.mxu0 0.0
    %7883 = vmatprep.subr.mxu0 0.0
    %7884 = vmatpush2.msra.mxu0 0.0
    %7885 = vmatprep.subr.mxu0 0.0
    %7886 = vmatpush2.msra.mxu0 0.0
    %7887 = vmatprep.subr.mxu0 0.0
    %7888 = vmatpush2.msra.mxu0 0.0
    %7889 = vmatprep.subr.mxu0 0.0
    %7890 = vmatpush2.msra.mxu0 0.0
    %7891 = vmatprep.subr.mxu0 0.0
    %7892 = vmatpush2.msra.mxu0 0.0
    %7893 = vmatprep.mubr.f32.mxu0 0.0
    %v7894 = vand.u32 %v7524, 4294901760
    %7895 = vmatmul.mubr.f32.gmra.mxu0 %v7894
    %v7896 = vpop.f32.mrf.mxu0
    %v7897 = vadd.f32 %v7823, %v7896
    %v7898 = vpop.f32.mrf.mxu0
    %7899 = vdwg.mxu0
    %7900 = vmatprep.subr.mxu0 0.0
    %7901 = vmatpush1.msra.mxu0 0.0
    %7902 = vmatprep.subr.mxu0 0.0
    %7903 = vmatpush1.msra.mxu0 0.0
    %7904 = vmatprep.subr.mxu0 0.0
    %7905 = vmatpush1.msra.mxu0 0.0
    %7906 = vmatprep.subr.mxu0 0.0
    %7907 = vmatpush1.msra.mxu0 0.0
    %7908 = vmatprep.subr.mxu0 0.0
    %7909 = vmatpush1.msra.mxu0 0.0
    %7910 = vmatprep.subr.mxu0 0.0
    %7911 = vmatpush1.msra.mxu0 0.0
    %7912 = vmatprep.subr.mxu0 0.0
    %7913 = vmatpush1.msra.mxu0 0.0
    %7914 = vmatprep.subr.mxu0 0.0
    %7915 = vmatpush1.msra.mxu0 0.0
    %7916 = vmatprep.subr.mxu0 0.0
    %7917 = vmatpush1.msra.mxu0 0.0
    %7918 = vmatprep.subr.mxu0 0.0
    %7919 = vmatpush1.msra.mxu0 0.0
    %7920 = vmatprep.subr.mxu0 0.0
    %7921 = vmatpush1.msra.mxu0 0.0
    %7922 = vmatprep.subr.mxu0 0.0
    %7923 = vmatpush1.msra.mxu0 0.0
    %7924 = vmatprep.subr.mxu0 0.0
    %7925 = vmatpush1.msra.mxu0 0.0
    %7926 = vmatprep.subr.mxu0 0.0
    %7927 = vmatpush1.msra.mxu0 0.0
    %7928 = vmatprep.subr.mxu0 0.0
    %7929 = vmatpush1.msra.mxu0 0.0
    %7930 = vmatprep.subr.mxu0 0.0
    %v7931 = vand.u32 %v3378, 4294901760
    %7932 = vmatpush1.msra.mxu0 %v7931
    %7933 = vmatprep.subr.mxu0 0.0
    %7934 = vmatpush2.msra.mxu0 0.0
    %7935 = vmatprep.subr.mxu0 0.0
    %7936 = vmatpush2.msra.mxu0 0.0
    %7937 = vmatprep.subr.mxu0 0.0
    %7938 = vmatpush2.msra.mxu0 0.0
    %7939 = vmatprep.subr.mxu0 0.0
    %7940 = vmatpush2.msra.mxu0 0.0
    %7941 = vmatprep.subr.mxu0 0.0
    %7942 = vmatpush2.msra.mxu0 0.0
    %7943 = vmatprep.subr.mxu0 0.0
    %7944 = vmatpush2.msra.mxu0 0.0
    %7945 = vmatprep.subr.mxu0 0.0
    %7946 = vmatpush2.msra.mxu0 0.0
    %7947 = vmatprep.subr.mxu0 0.0
    %7948 = vmatpush2.msra.mxu0 0.0
    %7949 = vmatprep.subr.mxu0 0.0
    %7950 = vmatpush2.msra.mxu0 0.0
    %7951 = vmatprep.subr.mxu0 0.0
    %7952 = vmatpush2.msra.mxu0 0.0
    %7953 = vmatprep.subr.mxu0 0.0
    %7954 = vmatpush2.msra.mxu0 0.0
    %7955 = vmatprep.subr.mxu0 0.0
    %7956 = vmatpush2.msra.mxu0 0.0
    %7957 = vmatprep.subr.mxu0 0.0
    %7958 = vmatpush2.msra.mxu0 0.0
    %7959 = vmatprep.subr.mxu0 0.0
    %7960 = vmatpush2.msra.mxu0 0.0
    %7961 = vmatprep.subr.mxu0 0.0
    %7962 = vmatpush2.msra.mxu0 0.0
    %7963 = vmatprep.subr.mxu0 0.0
    %7964 = vmatpush2.msra.mxu0 0.0
    %7965 = vmatprep.mubr.f32.mxu0 0.0
    %v7966 = vand.u32 %v7524, 4294901760
    %7967 = vmatmul.mubr.f32.gmra.mxu0 %v7966
    %v7968 = vpop.f32.mrf.mxu0
    %v7969 = vadd.f32 %v7897, %v7968
    %v7970 = vpop.f32.mrf.mxu0
    %7971 = vdwg.mxu0
    %v7973 = vsel %vm3372, %v7522, 0
    %7975 = vmatprep.subr.mxu0 0.0
    %7976 = vmatpush1.msra.mxu0 0.0
    %7977 = vmatprep.subr.mxu0 0.0
    %7978 = vmatpush1.msra.mxu0 0.0
    %7979 = vmatprep.subr.mxu0 0.0
    %7980 = vmatpush1.msra.mxu0 0.0
    %7981 = vmatprep.subr.mxu0 0.0
    %7982 = vmatpush1.msra.mxu0 0.0
    %7983 = vmatprep.subr.mxu0 0.0
    %7984 = vmatpush1.msra.mxu0 0.0
    %7985 = vmatprep.subr.mxu0 0.0
    %7986 = vmatpush1.msra.mxu0 0.0
    %7987 = vmatprep.subr.mxu0 0.0
    %7988 = vmatpush1.msra.mxu0 0.0
    %7989 = vmatprep.subr.mxu0 0.0
    %7990 = vmatpush1.msra.mxu0 0.0
    %7991 = vmatprep.subr.mxu0 0.0
    %7992 = vmatpush1.msra.mxu0 0.0
    %7993 = vmatprep.subr.mxu0 0.0
    %7994 = vmatpush1.msra.mxu0 0.0
    %7995 = vmatprep.subr.mxu0 0.0
    %7996 = vmatpush1.msra.mxu0 0.0
    %7997 = vmatprep.subr.mxu0 0.0
    %7998 = vmatpush1.msra.mxu0 0.0
    %7999 = vmatprep.subr.mxu0 0.0
    %8000 = vmatpush1.msra.mxu0 0.0
    %8001 = vmatprep.subr.mxu0 0.0
    %8002 = vmatpush1.msra.mxu0 0.0
    %8003 = vmatprep.subr.mxu0 0.0
    %8004 = vmatpush1.msra.mxu0 0.0
    %8005 = vmatprep.subr.mxu0 0.0
    %v8006 = vand.u32 %v3378, 4294901760
    %8007 = vmatpush1.msra.mxu0 %v8006
    %8008 = vmatprep.subr.mxu0 0.0
    %8009 = vmatpush2.msra.mxu0 0.0
    %8010 = vmatprep.subr.mxu0 0.0
    %8011 = vmatpush2.msra.mxu0 0.0
    %8012 = vmatprep.subr.mxu0 0.0
    %8013 = vmatpush2.msra.mxu0 0.0
    %8014 = vmatprep.subr.mxu0 0.0
    %8015 = vmatpush2.msra.mxu0 0.0
    %8016 = vmatprep.subr.mxu0 0.0
    %8017 = vmatpush2.msra.mxu0 0.0
    %8018 = vmatprep.subr.mxu0 0.0
    %8019 = vmatpush2.msra.mxu0 0.0
    %8020 = vmatprep.subr.mxu0 0.0
    %8021 = vmatpush2.msra.mxu0 0.0
    %8022 = vmatprep.subr.mxu0 0.0
    %8023 = vmatpush2.msra.mxu0 0.0
    %8024 = vmatprep.subr.mxu0 0.0
    %8025 = vmatpush2.msra.mxu0 0.0
    %8026 = vmatprep.subr.mxu0 0.0
    %8027 = vmatpush2.msra.mxu0 0.0
    %8028 = vmatprep.subr.mxu0 0.0
    %8029 = vmatpush2.msra.mxu0 0.0
    %8030 = vmatprep.subr.mxu0 0.0
    %8031 = vmatpush2.msra.mxu0 0.0
    %8032 = vmatprep.subr.mxu0 0.0
    %8033 = vmatpush2.msra.mxu0 0.0
    %8034 = vmatprep.subr.mxu0 0.0
    %8035 = vmatpush2.msra.mxu0 0.0
    %8036 = vmatprep.subr.mxu0 0.0
    %8037 = vmatpush2.msra.mxu0 0.0
    %8038 = vmatprep.subr.mxu0 0.0
    %8039 = vmatpush2.msra.mxu0 0.0
    %8040 = vmatprep.mubr.f32.mxu0 0.0
    %v8041 = vand.u32 %v7973, 4294901760
    %v8042 = vsub.f32 %v7973, %v8041
    %v8043 = vand.u32 %v8042, 4294901760
    %v8044 = vsub.f32 %v8042, %v8043
    %v8045 = vand.u32 %v8044, 4294901760
    %8046 = vmatmul.mubr.f32.gmra.mxu0 %v8045
    %v8047 = vpop.f32.mrf.mxu0
    %v8048 = vadd.f32 0.0, %v8047
    %v8049 = vpop.f32.mrf.mxu0
    %8050 = vdwg.mxu0
    %8051 = vmatprep.subr.mxu0 0.0
    %8052 = vmatpush1.msra.mxu0 0.0
    %8053 = vmatprep.subr.mxu0 0.0
    %8054 = vmatpush1.msra.mxu0 0.0
    %8055 = vmatprep.subr.mxu0 0.0
    %8056 = vmatpush1.msra.mxu0 0.0
    %8057 = vmatprep.subr.mxu0 0.0
    %8058 = vmatpush1.msra.mxu0 0.0
    %8059 = vmatprep.subr.mxu0 0.0
    %8060 = vmatpush1.msra.mxu0 0.0
    %8061 = vmatprep.subr.mxu0 0.0
    %8062 = vmatpush1.msra.mxu0 0.0
    %8063 = vmatprep.subr.mxu0 0.0
    %8064 = vmatpush1.msra.mxu0 0.0
    %8065 = vmatprep.subr.mxu0 0.0
    %8066 = vmatpush1.msra.mxu0 0.0
    %8067 = vmatprep.subr.mxu0 0.0
    %8068 = vmatpush1.msra.mxu0 0.0
    %8069 = vmatprep.subr.mxu0 0.0
    %8070 = vmatpush1.msra.mxu0 0.0
    %8071 = vmatprep.subr.mxu0 0.0
    %8072 = vmatpush1.msra.mxu0 0.0
    %8073 = vmatprep.subr.mxu0 0.0
    %8074 = vmatpush1.msra.mxu0 0.0
    %8075 = vmatprep.subr.mxu0 0.0
    %8076 = vmatpush1.msra.mxu0 0.0
    %8077 = vmatprep.subr.mxu0 0.0
    %8078 = vmatpush1.msra.mxu0 0.0
    %8079 = vmatprep.subr.mxu0 0.0
    %8080 = vmatpush1.msra.mxu0 0.0
    %8081 = vmatprep.subr.mxu0 0.0
    %v8082 = vand.u32 %v3378, 4294901760
    %v8083 = vsub.f32 %v3378, %v8082
    %v8084 = vand.u32 %v8083, 4294901760
    %v8085 = vsub.f32 %v8083, %v8084
    %v8086 = vand.u32 %v8085, 4294901760
    %8087 = vmatpush1.msra.mxu0 %v8086
    %8088 = vmatprep.subr.mxu0 0.0
    %8089 = vmatpush2.msra.mxu0 0.0
    %8090 = vmatprep.subr.mxu0 0.0
    %8091 = vmatpush2.msra.mxu0 0.0
    %8092 = vmatprep.subr.mxu0 0.0
    %8093 = vmatpush2.msra.mxu0 0.0
    %8094 = vmatprep.subr.mxu0 0.0
    %8095 = vmatpush2.msra.mxu0 0.0
    %8096 = vmatprep.subr.mxu0 0.0
    %8097 = vmatpush2.msra.mxu0 0.0
    %8098 = vmatprep.subr.mxu0 0.0
    %8099 = vmatpush2.msra.mxu0 0.0
    %8100 = vmatprep.subr.mxu0 0.0
    %8101 = vmatpush2.msra.mxu0 0.0
    %8102 = vmatprep.subr.mxu0 0.0
    %8103 = vmatpush2.msra.mxu0 0.0
    %8104 = vmatprep.subr.mxu0 0.0
    %8105 = vmatpush2.msra.mxu0 0.0
    %8106 = vmatprep.subr.mxu0 0.0
    %8107 = vmatpush2.msra.mxu0 0.0
    %8108 = vmatprep.subr.mxu0 0.0
    %8109 = vmatpush2.msra.mxu0 0.0
    %8110 = vmatprep.subr.mxu0 0.0
    %8111 = vmatpush2.msra.mxu0 0.0
    %8112 = vmatprep.subr.mxu0 0.0
    %8113 = vmatpush2.msra.mxu0 0.0
    %8114 = vmatprep.subr.mxu0 0.0
    %8115 = vmatpush2.msra.mxu0 0.0
    %8116 = vmatprep.subr.mxu0 0.0
    %8117 = vmatpush2.msra.mxu0 0.0
    %8118 = vmatprep.subr.mxu0 0.0
    %8119 = vmatpush2.msra.mxu0 0.0
    %8120 = vmatprep.mubr.f32.mxu0 0.0
    %v8121 = vand.u32 %v7973, 4294901760
    %8122 = vmatmul.mubr.f32.gmra.mxu0 %v8121
    %v8123 = vpop.f32.mrf.mxu0
    %v8124 = vadd.f32 %v8048, %v8123
    %v8125 = vpop.f32.mrf.mxu0
    %8126 = vdwg.mxu0
    %8127 = vmatprep.subr.mxu0 0.0
    %8128 = vmatpush1.msra.mxu0 0.0
    %8129 = vmatprep.subr.mxu0 0.0
    %8130 = vmatpush1.msra.mxu0 0.0
    %8131 = vmatprep.subr.mxu0 0.0
    %8132 = vmatpush1.msra.mxu0 0.0
    %8133 = vmatprep.subr.mxu0 0.0
    %8134 = vmatpush1.msra.mxu0 0.0
    %8135 = vmatprep.subr.mxu0 0.0
    %8136 = vmatpush1.msra.mxu0 0.0
    %8137 = vmatprep.subr.mxu0 0.0
    %8138 = vmatpush1.msra.mxu0 0.0
    %8139 = vmatprep.subr.mxu0 0.0
    %8140 = vmatpush1.msra.mxu0 0.0
    %8141 = vmatprep.subr.mxu0 0.0
    %8142 = vmatpush1.msra.mxu0 0.0
    %8143 = vmatprep.subr.mxu0 0.0
    %8144 = vmatpush1.msra.mxu0 0.0
    %8145 = vmatprep.subr.mxu0 0.0
    %8146 = vmatpush1.msra.mxu0 0.0
    %8147 = vmatprep.subr.mxu0 0.0
    %8148 = vmatpush1.msra.mxu0 0.0
    %8149 = vmatprep.subr.mxu0 0.0
    %8150 = vmatpush1.msra.mxu0 0.0
    %8151 = vmatprep.subr.mxu0 0.0
    %8152 = vmatpush1.msra.mxu0 0.0
    %8153 = vmatprep.subr.mxu0 0.0
    %8154 = vmatpush1.msra.mxu0 0.0
    %8155 = vmatprep.subr.mxu0 0.0
    %8156 = vmatpush1.msra.mxu0 0.0
    %8157 = vmatprep.subr.mxu0 0.0
    %v8158 = vand.u32 %v3378, 4294901760
    %v8159 = vsub.f32 %v3378, %v8158
    %8160 = vmatpush1.msra.mxu0 %v8159
    %8161 = vmatprep.subr.mxu0 0.0
    %8162 = vmatpush2.msra.mxu0 0.0
    %8163 = vmatprep.subr.mxu0 0.0
    %8164 = vmatpush2.msra.mxu0 0.0
    %8165 = vmatprep.subr.mxu0 0.0
    %8166 = vmatpush2.msra.mxu0 0.0
    %8167 = vmatprep.subr.mxu0 0.0
    %8168 = vmatpush2.msra.mxu0 0.0
    %8169 = vmatprep.subr.mxu0 0.0
    %8170 = vmatpush2.msra.mxu0 0.0
    %8171 = vmatprep.subr.mxu0 0.0
    %8172 = vmatpush2.msra.mxu0 0.0
    %8173 = vmatprep.subr.mxu0 0.0
    %8174 = vmatpush2.msra.mxu0 0.0
    %8175 = vmatprep.subr.mxu0 0.0
    %8176 = vmatpush2.msra.mxu0 0.0
    %8177 = vmatprep.subr.mxu0 0.0
    %8178 = vmatpush2.msra.mxu0 0.0
    %8179 = vmatprep.subr.mxu0 0.0
    %8180 = vmatpush2.msra.mxu0 0.0
    %8181 = vmatprep.subr.mxu0 0.0
    %8182 = vmatpush2.msra.mxu0 0.0
    %8183 = vmatprep.subr.mxu0 0.0
    %8184 = vmatpush2.msra.mxu0 0.0
    %8185 = vmatprep.subr.mxu0 0.0
    %8186 = vmatpush2.msra.mxu0 0.0
    %8187 = vmatprep.subr.mxu0 0.0
    %8188 = vmatpush2.msra.mxu0 0.0
    %8189 = vmatprep.subr.mxu0 0.0
    %8190 = vmatpush2.msra.mxu0 0.0
    %8191 = vmatprep.subr.mxu0 0.0
    %8192 = vmatpush2.msra.mxu0 0.0
    %8193 = vmatprep.mubr.f32.mxu0 0.0
    %v8194 = vand.u32 %v7973, 4294901760
    %v8195 = vsub.f32 %v7973, %v8194
    %8196 = vmatmul.mubr.f32.gmra.mxu0 %v8195
    %v8197 = vpop.f32.mrf.mxu0
    %v8198 = vadd.f32 %v8124, %v8197
    %v8199 = vpop.f32.mrf.mxu0
    %8200 = vdwg.mxu0
    %8201 = vmatprep.subr.mxu0 0.0
    %8202 = vmatpush1.msra.mxu0 0.0
    %8203 = vmatprep.subr.mxu0 0.0
    %8204 = vmatpush1.msra.mxu0 0.0
    %8205 = vmatprep.subr.mxu0 0.0
    %8206 = vmatpush1.msra.mxu0 0.0
    %8207 = vmatprep.subr.mxu0 0.0
    %8208 = vmatpush1.msra.mxu0 0.0
    %8209 = vmatprep.subr.mxu0 0.0
    %8210 = vmatpush1.msra.mxu0 0.0
    %8211 = vmatprep.subr.mxu0 0.0
    %8212 = vmatpush1.msra.mxu0 0.0
    %8213 = vmatprep.subr.mxu0 0.0
    %8214 = vmatpush1.msra.mxu0 0.0
    %8215 = vmatprep.subr.mxu0 0.0
    %8216 = vmatpush1.msra.mxu0 0.0
    %8217 = vmatprep.subr.mxu0 0.0
    %8218 = vmatpush1.msra.mxu0 0.0
    %8219 = vmatprep.subr.mxu0 0.0
    %8220 = vmatpush1.msra.mxu0 0.0
    %8221 = vmatprep.subr.mxu0 0.0
    %8222 = vmatpush1.msra.mxu0 0.0
    %8223 = vmatprep.subr.mxu0 0.0
    %8224 = vmatpush1.msra.mxu0 0.0
    %8225 = vmatprep.subr.mxu0 0.0
    %8226 = vmatpush1.msra.mxu0 0.0
    %8227 = vmatprep.subr.mxu0 0.0
    %8228 = vmatpush1.msra.mxu0 0.0
    %8229 = vmatprep.subr.mxu0 0.0
    %8230 = vmatpush1.msra.mxu0 0.0
    %8231 = vmatprep.subr.mxu0 0.0
    %v8232 = vand.u32 %v3378, 4294901760
    %8233 = vmatpush1.msra.mxu0 %v8232
    %8234 = vmatprep.subr.mxu0 0.0
    %8235 = vmatpush2.msra.mxu0 0.0
    %8236 = vmatprep.subr.mxu0 0.0
    %8237 = vmatpush2.msra.mxu0 0.0
    %8238 = vmatprep.subr.mxu0 0.0
    %8239 = vmatpush2.msra.mxu0 0.0
    %8240 = vmatprep.subr.mxu0 0.0
    %8241 = vmatpush2.msra.mxu0 0.0
    %8242 = vmatprep.subr.mxu0 0.0
    %8243 = vmatpush2.msra.mxu0 0.0
    %8244 = vmatprep.subr.mxu0 0.0
    %8245 = vmatpush2.msra.mxu0 0.0
    %8246 = vmatprep.subr.mxu0 0.0
    %8247 = vmatpush2.msra.mxu0 0.0
    %8248 = vmatprep.subr.mxu0 0.0
    %8249 = vmatpush2.msra.mxu0 0.0
    %8250 = vmatprep.subr.mxu0 0.0
    %8251 = vmatpush2.msra.mxu0 0.0
    %8252 = vmatprep.subr.mxu0 0.0
    %8253 = vmatpush2.msra.mxu0 0.0
    %8254 = vmatprep.subr.mxu0 0.0
    %8255 = vmatpush2.msra.mxu0 0.0
    %8256 = vmatprep.subr.mxu0 0.0
    %8257 = vmatpush2.msra.mxu0 0.0
    %8258 = vmatprep.subr.mxu0 0.0
    %8259 = vmatpush2.msra.mxu0 0.0
    %8260 = vmatprep.subr.mxu0 0.0
    %8261 = vmatpush2.msra.mxu0 0.0
    %8262 = vmatprep.subr.mxu0 0.0
    %8263 = vmatpush2.msra.mxu0 0.0
    %8264 = vmatprep.subr.mxu0 0.0
    %8265 = vmatpush2.msra.mxu0 0.0
    %8266 = vmatprep.mubr.f32.mxu0 0.0
    %v8267 = vand.u32 %v7973, 4294901760
    %v8268 = vsub.f32 %v7973, %v8267
    %v8269 = vand.u32 %v8268, 4294901760
    %8270 = vmatmul.mubr.f32.gmra.mxu0 %v8269
    %v8271 = vpop.f32.mrf.mxu0
    %v8272 = vadd.f32 %v8198, %v8271
    %v8273 = vpop.f32.mrf.mxu0
    %8274 = vdwg.mxu0
    %8275 = vmatprep.subr.mxu0 0.0
    %8276 = vmatpush1.msra.mxu0 0.0
    %8277 = vmatprep.subr.mxu0 0.0
    %8278 = vmatpush1.msra.mxu0 0.0
    %8279 = vmatprep.subr.mxu0 0.0
    %8280 = vmatpush1.msra.mxu0 0.0
    %8281 = vmatprep.subr.mxu0 0.0
    %8282 = vmatpush1.msra.mxu0 0.0
    %8283 = vmatprep.subr.mxu0 0.0
    %8284 = vmatpush1.msra.mxu0 0.0
    %8285 = vmatprep.subr.mxu0 0.0
    %8286 = vmatpush1.msra.mxu0 0.0
    %8287 = vmatprep.subr.mxu0 0.0
    %8288 = vmatpush1.msra.mxu0 0.0
    %8289 = vmatprep.subr.mxu0 0.0
    %8290 = vmatpush1.msra.mxu0 0.0
    %8291 = vmatprep.subr.mxu0 0.0
    %8292 = vmatpush1.msra.mxu0 0.0
    %8293 = vmatprep.subr.mxu0 0.0
    %8294 = vmatpush1.msra.mxu0 0.0
    %8295 = vmatprep.subr.mxu0 0.0
    %8296 = vmatpush1.msra.mxu0 0.0
    %8297 = vmatprep.subr.mxu0 0.0
    %8298 = vmatpush1.msra.mxu0 0.0
    %8299 = vmatprep.subr.mxu0 0.0
    %8300 = vmatpush1.msra.mxu0 0.0
    %8301 = vmatprep.subr.mxu0 0.0
    %8302 = vmatpush1.msra.mxu0 0.0
    %8303 = vmatprep.subr.mxu0 0.0
    %8304 = vmatpush1.msra.mxu0 0.0
    %8305 = vmatprep.subr.mxu0 0.0
    %v8306 = vand.u32 %v3378, 4294901760
    %v8307 = vsub.f32 %v3378, %v8306
    %v8308 = vand.u32 %v8307, 4294901760
    %8309 = vmatpush1.msra.mxu0 %v8308
    %8310 = vmatprep.subr.mxu0 0.0
    %8311 = vmatpush2.msra.mxu0 0.0
    %8312 = vmatprep.subr.mxu0 0.0
    %8313 = vmatpush2.msra.mxu0 0.0
    %8314 = vmatprep.subr.mxu0 0.0
    %8315 = vmatpush2.msra.mxu0 0.0
    %8316 = vmatprep.subr.mxu0 0.0
    %8317 = vmatpush2.msra.mxu0 0.0
    %8318 = vmatprep.subr.mxu0 0.0
    %8319 = vmatpush2.msra.mxu0 0.0
    %8320 = vmatprep.subr.mxu0 0.0
    %8321 = vmatpush2.msra.mxu0 0.0
    %8322 = vmatprep.subr.mxu0 0.0
    %8323 = vmatpush2.msra.mxu0 0.0
    %8324 = vmatprep.subr.mxu0 0.0
    %8325 = vmatpush2.msra.mxu0 0.0
    %8326 = vmatprep.subr.mxu0 0.0
    %8327 = vmatpush2.msra.mxu0 0.0
    %8328 = vmatprep.subr.mxu0 0.0
    %8329 = vmatpush2.msra.mxu0 0.0
    %8330 = vmatprep.subr.mxu0 0.0
    %8331 = vmatpush2.msra.mxu0 0.0
    %8332 = vmatprep.subr.mxu0 0.0
    %8333 = vmatpush2.msra.mxu0 0.0
    %8334 = vmatprep.subr.mxu0 0.0
    %8335 = vmatpush2.msra.mxu0 0.0
    %8336 = vmatprep.subr.mxu0 0.0
    %8337 = vmatpush2.msra.mxu0 0.0
    %8338 = vmatprep.subr.mxu0 0.0
    %8339 = vmatpush2.msra.mxu0 0.0
    %8340 = vmatprep.subr.mxu0 0.0
    %8341 = vmatpush2.msra.mxu0 0.0
    %8342 = vmatprep.mubr.f32.mxu0 0.0
    %v8343 = vand.u32 %v7973, 4294901760
    %8344 = vmatmul.mubr.f32.gmra.mxu0 %v8343
    %v8345 = vpop.f32.mrf.mxu0
    %v8346 = vadd.f32 %v8272, %v8345
    %v8347 = vpop.f32.mrf.mxu0
    %8348 = vdwg.mxu0
    %8349 = vmatprep.subr.mxu0 0.0
    %8350 = vmatpush1.msra.mxu0 0.0
    %8351 = vmatprep.subr.mxu0 0.0
    %8352 = vmatpush1.msra.mxu0 0.0
    %8353 = vmatprep.subr.mxu0 0.0
    %8354 = vmatpush1.msra.mxu0 0.0
    %8355 = vmatprep.subr.mxu0 0.0
    %8356 = vmatpush1.msra.mxu0 0.0
    %8357 = vmatprep.subr.mxu0 0.0
    %8358 = vmatpush1.msra.mxu0 0.0
    %8359 = vmatprep.subr.mxu0 0.0
    %8360 = vmatpush1.msra.mxu0 0.0
    %8361 = vmatprep.subr.mxu0 0.0
    %8362 = vmatpush1.msra.mxu0 0.0
    %8363 = vmatprep.subr.mxu0 0.0
    %8364 = vmatpush1.msra.mxu0 0.0
    %8365 = vmatprep.subr.mxu0 0.0
    %8366 = vmatpush1.msra.mxu0 0.0
    %8367 = vmatprep.subr.mxu0 0.0
    %8368 = vmatpush1.msra.mxu0 0.0
    %8369 = vmatprep.subr.mxu0 0.0
    %8370 = vmatpush1.msra.mxu0 0.0
    %8371 = vmatprep.subr.mxu0 0.0
    %8372 = vmatpush1.msra.mxu0 0.0
    %8373 = vmatprep.subr.mxu0 0.0
    %8374 = vmatpush1.msra.mxu0 0.0
    %8375 = vmatprep.subr.mxu0 0.0
    %8376 = vmatpush1.msra.mxu0 0.0
    %8377 = vmatprep.subr.mxu0 0.0
    %8378 = vmatpush1.msra.mxu0 0.0
    %8379 = vmatprep.subr.mxu0 0.0
    %v8380 = vand.u32 %v3378, 4294901760
    %8381 = vmatpush1.msra.mxu0 %v8380
    %8382 = vmatprep.subr.mxu0 0.0
    %8383 = vmatpush2.msra.mxu0 0.0
    %8384 = vmatprep.subr.mxu0 0.0
    %8385 = vmatpush2.msra.mxu0 0.0
    %8386 = vmatprep.subr.mxu0 0.0
    %8387 = vmatpush2.msra.mxu0 0.0
    %8388 = vmatprep.subr.mxu0 0.0
    %8389 = vmatpush2.msra.mxu0 0.0
    %8390 = vmatprep.subr.mxu0 0.0
    %8391 = vmatpush2.msra.mxu0 0.0
    %8392 = vmatprep.subr.mxu0 0.0
    %8393 = vmatpush2.msra.mxu0 0.0
    %8394 = vmatprep.subr.mxu0 0.0
    %8395 = vmatpush2.msra.mxu0 0.0
    %8396 = vmatprep.subr.mxu0 0.0
    %8397 = vmatpush2.msra.mxu0 0.0
    %8398 = vmatprep.subr.mxu0 0.0
    %8399 = vmatpush2.msra.mxu0 0.0
    %8400 = vmatprep.subr.mxu0 0.0
    %8401 = vmatpush2.msra.mxu0 0.0
    %8402 = vmatprep.subr.mxu0 0.0
    %8403 = vmatpush2.msra.mxu0 0.0
    %8404 = vmatprep.subr.mxu0 0.0
    %8405 = vmatpush2.msra.mxu0 0.0
    %8406 = vmatprep.subr.mxu0 0.0
    %8407 = vmatpush2.msra.mxu0 0.0
    %8408 = vmatprep.subr.mxu0 0.0
    %8409 = vmatpush2.msra.mxu0 0.0
    %8410 = vmatprep.subr.mxu0 0.0
    %8411 = vmatpush2.msra.mxu0 0.0
    %8412 = vmatprep.subr.mxu0 0.0
    %8413 = vmatpush2.msra.mxu0 0.0
    %8414 = vmatprep.mubr.f32.mxu0 0.0
    %v8415 = vand.u32 %v7973, 4294901760
    %8416 = vmatmul.mubr.f32.gmra.mxu0 %v8415
    %v8417 = vpop.f32.mrf.mxu0
    %v8418 = vadd.f32 %v8346, %v8417
    %v8419 = vpop.f32.mrf.mxu0
    %8420 = vdwg.mxu0
    %v8421 = vlaneseq
    %v8422 = vshrl.u32 %v8421, 7
    %v8423 = vsub.s32 0, %v8422
    %v8424 = vrot.slane %v7969, %v8423
    %v8425 = vmul.f32 %v6398, %v8424
    %v8426 = vmul.f32 %v6399, %v8424
    %v8427 = vmul.f32 %v6400, %v8424
    %v8428 = vmul.f32 %v6401, %v8424
    %v8429 = vlaneseq
    %v8430 = vshrl.u32 %v8429, 7
    %v8431 = vsub.s32 0, %v8430
    %v8432 = vrot.slane %v8418, %v8431
    %v8433 = vadd.f32 %v8425, %v8432
    %v8434 = vadd.f32 %v8426, %v8432
    %v8435 = vadd.f32 %v8427, %v8432
    %v8436 = vadd.f32 %v8428, %v8432
    %v8437 = vadd.f32 %v8433, %v67
    %v8438 = vadd.f32 %v8434, %v68
    %v8439 = vadd.f32 %v8435, %v69
    %v8440 = vadd.f32 %v8436, %v70
    %v8441 = vmax.f32 %v8437, 0.0
    %v8442 = vmax.f32 %v8438, 0.0
    %v8443 = vmax.f32 %v8439, 0.0
    %v8444 = vmax.f32 %v8440, 0.0
    %8445 = vst.msk [vmem:[#allocation7] sm:$0xff] %vm187, %v8441
    %8446 = vst.msk [vmem:[#allocation7 + $0x8] sm:$0xff] %vm187, %v8442
    %8447 = vst.msk [vmem:[#allocation7 + $0x10] sm:$0xff] %vm187, %v8443
    %8448 = vst.msk [vmem:[#allocation7 + $0x18] sm:$0xff] %vm187, %v8444
    // Predicated region
    $region54: #{tpu_custom_call.1} parent=1 // pred_check
      _
    $region55: #{tpu_custom_call.1} parent=1 // pred_check_branch
      %8450 = sbr.rel (0) target = $region57
    $region56: #{tpu_custom_call.1} parent=1 // pred_region
      %s8452 = ssub.s32 512, 512
      %8453 = vsyncadd [#allocation4], %s8452
      %s8454 = sshll.u32 [#allocation7], 4
      %s8455 = int_to_ptr.vmem [resolvable:$true] %s8454
      %8460 = dma.vmem_to_hbm [thread:$0]  %s8455, 512, %s11, [#allocation4], 128, 128, 8
    $region57: #{tpu_custom_call.1} parent=1 // pred_fallthru
      _
    // Predicated region
    $region58: #{tpu_custom_call.1} parent=1 // pred_check
      _
    $region59: #{tpu_custom_call.1} parent=1 // pred_check_branch
      %8462 = sbr.rel (0) target = $region61
    $region60: #{tpu_custom_call.1} parent=1 // pred_region
      %8463 = dma.done [#allocation4], 512
    $region61: #{tpu_custom_call.1} parent=1 // pred_fallthru
      _
    %8464 = vsyncpa [#allocation3], 1
    %8465 = vsyncpa [#allocation6], 1
    %8466 = vsyncpa [#allocation4], 1

</llo_original>
